<compile_context>
chip_gen: v7x
topology: tpu7x:2x2x1
jax: 0.10.0
libtpu: 0.0.40
codegen_flags: <defaults>
</compile_context>

<pallas_src>
import functools

import jax
import jax.numpy as jnp
from jax.experimental import pallas as pl
from jax.experimental.pallas import tpu as pltpu

EPS = 1e-5
KSIZE = 3
PAD = 1
TILE_R = 256          # flattened-pixel rows per grid step (sweep for real sizes)
LANE = 128


def _round_up(x, m):
    return (x + m - 1) // m * m


# ----------------------------------------------------------------------------
# Kernel 1: one row-tile of the 3x3 conv (9 shifted bf16 matmuls, f32 acc)
#           + masked per-channel partial sum / sum-of-squares for BatchNorm.
# ----------------------------------------------------------------------------
def _conv_stats_kernel(tap_offs, x_ref, w_ref, m_ref, y_ref, st_ref):
    # x_ref : (R_in, Cin_k)  f32  padded+flattened input, VMEM-resident (one block)
    # w_ref : (9, Cin_k, CPAD) f32 per-tap weight slabs, VMEM-resident
    # m_ref : (TILE_R, 1)    f32  1.0 for rows that are valid output pixels
    # y_ref : (TILE_R, CPAD) f32  conv output (pre-BN) for this row tile
    # st_ref: (8, CPAD)      f32  row 0 = masked sum(y), row 1 = masked sum(y^2)
    tile_r = y_ref.shape[0]
    row0 = pl.multiple_of(pl.program_id(0) * tile_r, tile_r)

    acc = None
    for t, off in enumerate(tap_offs):            # statically unrolled 9 taps
        xs = x_ref[pl.ds(row0 + off, tile_r), :].astype(jnp.bfloat16)
        wt = w_ref[t].astype(jnp.bfloat16)
        d = jnp.dot(xs, wt, preferred_element_type=jnp.float32)
        acc = d if acc is None else acc + d
    y_ref[...] = acc

    m = m_ref[...]                                # (tile_r, 1), lane-broadcast
    ym = acc * m
    s = jnp.sum(ym, axis=0, keepdims=True)        # (1, CPAD)
    sq = jnp.sum(ym * acc, axis=0, keepdims=True) # (1, CPAD)  = sum(mask * y^2)
    st_ref[...] = jnp.concatenate(
        [s, sq, jnp.zeros((6, s.shape[1]), jnp.float32)], axis=0)


# ----------------------------------------------------------------------------
# Kernel 2: per-tile BatchNorm apply (y*scale + shift) + ReLU, lane-dense.
# ----------------------------------------------------------------------------
def _bn_relu_kernel(y_ref, scale_ref, shift_ref, o_ref):
    o_ref[...] = jnp.maximum(
        y_ref[...] * scale_ref[...] + shift_ref[...], 0.0).astype(o_ref.dtype)


# ----------------------------------------------------------------------------
# One conv + BN(train stats) + ReLU layer.  Input (N,H,W,Cin) f32, output
# (N,H,W,CPAD) f32 where channels >= Cout are exactly zero.
# ----------------------------------------------------------------------------
def _conv_bn_relu_layer(x_nhwc, w_hwio, gamma, beta, cpad):
    N, H, W, Cin = x_nhwc.shape
    Cin_w, Cout = w_hwio.shape[2], w_hwio.shape[3]
    Hp, Wp = H + 2 * PAD, W + 2 * PAD
    cin_k = _round_up(Cin, 8)                     # pad contraction dim (sublane align)

    # ---- plain-JAX layout plumbing (only ~1.1x the activation, no 9x blow-up) ----
    xp = jnp.pad(x_nhwc, ((0, 0), (PAD, PAD), (PAD, PAD), (0, cin_k - Cin)))
    R_full = N * Hp * Wp
    num_tiles = int(pl.cdiv(R_full, TILE_R))
    R_rows = num_tiles * TILE_R
    margin = (KSIZE - 1) * Wp + (KSIZE - 1)       # max tap row offset
    R_in = _round_up(R_rows + margin, 8)
    x_flat = jnp.pad(xp.reshape(R_full, cin_k), ((0, R_in - R_full), (0, 0)))

    # weights -> (9, Cin_k, CPAD), zero-padded (conv bias is dropped: cancels in BN)
    w9 = w_hwio.reshape(KSIZE * KSIZE, Cin_w, Cout).astype(jnp.float32)
    w9 = jnp.pad(w9, ((0, 0), (0, cin_k - Cin_w), (0, cpad - Cout)))

    # validity mask over flattened padded-grid rows (keeps BN stats exact)
    r = jnp.arange(R_rows, dtype=jnp.int32)
    p = r % (Hp * Wp)
    valid = (r < R_full) & ((p // Wp) < H) & ((p % Wp) < W)
    mask = valid.astype(jnp.float32)[:, None]     # (R_rows, 1)

    tap_offs = tuple(kh * Wp + kw for kh in range(KSIZE) for kw in range(KSIZE))

    y, part = pl.pallas_call(
        functools.partial(_conv_stats_kernel, tap_offs),
        out_shape=(jax.ShapeDtypeStruct((R_rows, cpad), jnp.float32),
                   jax.ShapeDtypeStruct((num_tiles * 8, cpad), jnp.float32)),
        grid=(num_tiles,),
        in_specs=[pl.BlockSpec((R_in, cin_k), lambda i: (0, 0)),            # resident
                  pl.BlockSpec((KSIZE * KSIZE, cin_k, cpad),
                               lambda i: (0, 0, 0)),                        # resident
                  pl.BlockSpec((TILE_R, 1), lambda i: (i, 0))],
        out_specs=(pl.BlockSpec((TILE_R, cpad), lambda i: (i, 0)),
                   pl.BlockSpec((8, cpad), lambda i: (i, 0))),
        compiler_params=pltpu.CompilerParams(dimension_semantics=("parallel",)),
    )(x_flat, w9, mask)

    # ---- tiny per-channel reduce + BN finalize (128 floats; plain-JAX glue) ----
    part = part.reshape(num_tiles, 8, cpad)
    count = float(N * H * W)
    mean = jnp.sum(part[:, 0, :], axis=0) / count
    var = jnp.sum(part[:, 1, :], axis=0) / count - mean * mean   # biased batch var
    inv = jax.lax.rsqrt(var + EPS)
    g = jnp.pad(gamma.astype(jnp.float32), (0, cpad - Cout))     # pad gamma/beta with 0
    b = jnp.pad(beta.astype(jnp.float32), (0, cpad - Cout))      #  -> junk channels stay 0
    scale = (g * inv)[None, :]                                   # (1, cpad)
    shift = (b - mean * g * inv)[None, :]                        # (1, cpad)

    a = pl.pallas_call(
        _bn_relu_kernel,
        out_shape=jax.ShapeDtypeStruct((R_rows, cpad), jnp.float32),
        grid=(num_tiles,),
        in_specs=[pl.BlockSpec((TILE_R, cpad), lambda i: (i, 0)),
                  pl.BlockSpec((1, cpad), lambda i: (0, 0)),
                  pl.BlockSpec((1, cpad), lambda i: (0, 0))],
        out_specs=pl.BlockSpec((TILE_R, cpad), lambda i: (i, 0)),
        compiler_params=pltpu.CompilerParams(dimension_semantics=("parallel",)),
    )(y, scale, shift)

    return a[:R_full].reshape(N, Hp, Wp, cpad)[:, :H, :W, :]


# ----------------------------------------------------------------------------
# Module forward: NCHW in / NCHW out (transposes only at the boundary).
# ----------------------------------------------------------------------------
def conv_block_forward(x_nchw, params):
    Cout = params["w1"].shape[-1]
    cpad = _round_up(Cout, LANE)
    x = jnp.transpose(x_nchw, (0, 2, 3, 1)).astype(jnp.float32)   # NCHW -> NHWC once
    # conv biases b1/b2 are intentionally unused: with train-mode BN they cancel.
    a1 = _conv_bn_relu_layer(x, params["w1"], params["g1"], params["be1"], cpad)
    a2 = _conv_bn_relu_layer(a1, params["w2"], params["g2"], params["be2"], cpad)
    return jnp.transpose(a2[..., :Cout], (0, 3, 1, 2))            # NHWC -> NCHW once


# ----------------------------------------------------------------------------
# Pure-JAX f32 reference (lax.conv + bias + BN(train stats) + ReLU)
# ----------------------------------------------------------------------------
def reference_forward(x_nchw, params):
    def layer(x, w_hwio, b, g, be):
        y = jax.lax.conv_general_dilated(
            x, w_hwio, window_strides=(1, 1), padding=[(PAD, PAD), (PAD, PAD)],
            dimension_numbers=("NCHW", "HWIO", "NCHW"))
        y = y + b.reshape(1, -1, 1, 1)
        mean = jnp.mean(y, axis=(0, 2, 3), keepdims=True)
        var = jnp.mean((y - mean) ** 2, axis=(0, 2, 3), keepdims=True)
        y = (y - mean) * jax.lax.rsqrt(var + EPS)
        y = y * g.reshape(1, -1, 1, 1) + be.reshape(1, -1, 1, 1)
        return jnp.maximum(y, 0.0)

    y = layer(x_nchw, params["w1"], params["b1"], params["g1"], params["be1"])
    y = layer(y, params["w2"], params["b2"], params["g2"], params["be2"])
    return y


def init_params(key, ch_in, ch_out):
    ks = jax.random.split(key, 8)
    fan1 = KSIZE * KSIZE * ch_in
    fan2 = KSIZE * KSIZE * ch_out
    return {
        # conv weights stored in HWIO: (3, 3, Cin, Cout)
        "w1": jax.random.normal(ks[0], (KSIZE, KSIZE, ch_in, ch_out), jnp.float32)
              * (1.0 / jnp.sqrt(fan1)),
        "b1": 0.1 * jax.random.normal(ks[1], (ch_out,), jnp.float32),
        "g1": 1.0 + 0.1 * jax.random.normal(ks[2], (ch_out,), jnp.float32),
        "be1": 0.1 * jax.random.normal(ks[3], (ch_out,), jnp.float32),
        "w2": jax.random.normal(ks[4], (KSIZE, KSIZE, ch_out, ch_out), jnp.float32)
              * (1.0 / jnp.sqrt(fan2)),
        "b2": 0.1 * jax.random.normal(ks[5], (ch_out,), jnp.float32),
        "g2": 1.0 + 0.1 * jax.random.normal(ks[6], (ch_out,), jnp.float32),
        "be2": 0.1 * jax.random.normal(ks[7], (ch_out,), jnp.float32),
    }


if __name__ == "__main__":
    key = jax.random.PRNGKey(0)
    kx, kp = jax.random.split(key)

    N, CH_IN, CH_OUT, H, W = 2, 4, 8, 16, 16
    x = jax.random.normal(kx, (N, CH_IN, H, W), jnp.float32)   # NCHW, like PyTorch
    params = init_params(kp, CH_IN, CH_OUT)

    out = jax.jit(conv_block_forward)(x, params)
    out = jax.block_until_ready(out)

    ref = jax.block_until_ready(reference_forward(x, params))
    max_err = float(jnp.max(jnp.abs(out - ref)))
    if not (out.shape == (N, CH_OUT, H, W) and max_err < 5e-2):
        raise RuntimeError(f"mismatch vs reference: max_err={max_err}, shape={out.shape}")

    print("KERNEL_OK")
</pallas_src>

<mosaic_0001>
module attributes {stable_mosaic.version = 11 : i64} {
  func.func @_conv_stats_kernel(%arg0: i32, %arg1: memref<808x8xf32, #tpu.memory_space<vmem>>, %arg2: memref<9x8x128xf32, #tpu.memory_space<vmem>>, %arg3: memref<256x1xf32, #tpu.memory_space<vmem>>, %arg4: memref<256x128xf32, #tpu.memory_space<vmem>>, %arg5: memref<8x128xf32, #tpu.memory_space<vmem>>) attributes {dimension_semantics = [#tpu.dimension_semantics<parallel>], iteration_bounds = array<i64: 3>, scalar_prefetch = 0 : i64, scratch_operands = 0 : i64, tpu.core_type = #tpu.core_type<tc>, window_params = [{pipeline_mode = #tpu.pipeline_mode<synchronous>, transform_indices = @transform_0, window_bounds = array<i64: 808, 8>}, {pipeline_mode = #tpu.pipeline_mode<synchronous>, transform_indices = @transform_1, window_bounds = array<i64: 9, 8, 128>}, {transform_indices = @transform_2, window_bounds = array<i64: 256, 1>}, {transform_indices = @transform_3, window_bounds = array<i64: 256, 128>}, {transform_indices = @transform_4, window_bounds = array<i64: 8, 128>}]} {
    %c256_i32 = arith.constant 256 : i32
    %0 = arith.muli %arg0, %c256_i32 : i32
    %1 = tpu.assume_multiple %0, 256 : i32
    %c0_i32 = arith.constant 0 : i32
    %2 = arith.addi %1, %c0_i32 : i32
    %3 = arith.index_cast %2 : i32 to index
    %c0 = arith.constant 0 : index
    %4 = vector.load %arg1[%3, %c0] : memref<808x8xf32, #tpu.memory_space<vmem>>, vector<256x8xf32>
    %5 = arith.truncf %4 : vector<256x8xf32> to vector<256x8xbf16>
    %c0_0 = arith.constant 0 : index
    %c0_1 = arith.constant 0 : index
    %c0_2 = arith.constant 0 : index
    %6 = vector.load %arg2[%c0_0, %c0_1, %c0_2] : memref<9x8x128xf32, #tpu.memory_space<vmem>>, vector<1x8x128xf32>
    %7 = vector.shape_cast %6 : vector<1x8x128xf32> to vector<8x128xf32>
    %8 = arith.truncf %7 : vector<8x128xf32> to vector<8x128xbf16>
    %cst = arith.constant dense<0.000000e+00> : vector<256x128xf32>
    %9 = tpu.matmul %5, %8, %cst {dimension_numbers = #tpu.dot_dimension_numbers<[1], [0], [0], [1], [0, 0, 1, 1], [], []>} : vector<256x8xbf16>, vector<8x128xbf16>, vector<256x128xf32> -> vector<256x128xf32>
    %c1_i32 = arith.constant 1 : i32
    %10 = arith.addi %1, %c1_i32 : i32
    %11 = arith.index_cast %10 : i32 to index
    %c0_3 = arith.constant 0 : index
    %12 = vector.load %arg1[%11, %c0_3] : memref<808x8xf32, #tpu.memory_space<vmem>>, vector<256x8xf32>
    %13 = arith.truncf %12 : vector<256x8xf32> to vector<256x8xbf16>
    %c1 = arith.constant 1 : index
    %c0_4 = arith.constant 0 : index
    %c0_5 = arith.constant 0 : index
    %14 = vector.load %arg2[%c1, %c0_4, %c0_5] : memref<9x8x128xf32, #tpu.memory_space<vmem>>, vector<1x8x128xf32>
    %15 = vector.shape_cast %14 : vector<1x8x128xf32> to vector<8x128xf32>
    %16 = arith.truncf %15 : vector<8x128xf32> to vector<8x128xbf16>
    %cst_6 = arith.constant dense<0.000000e+00> : vector<256x128xf32>
    %17 = tpu.matmul %13, %16, %cst_6 {dimension_numbers = #tpu.dot_dimension_numbers<[1], [0], [0], [1], [0, 0, 1, 1], [], []>} : vector<256x8xbf16>, vector<8x128xbf16>, vector<256x128xf32> -> vector<256x128xf32>
    %18 = arith.addf %9, %17 : vector<256x128xf32>
    %c2_i32 = arith.constant 2 : i32
    %19 = arith.addi %1, %c2_i32 : i32
    %20 = arith.index_cast %19 : i32 to index
    %c0_7 = arith.constant 0 : index
    %21 = vector.load %arg1[%20, %c0_7] : memref<808x8xf32, #tpu.memory_space<vmem>>, vector<256x8xf32>
    %22 = arith.truncf %21 : vector<256x8xf32> to vector<256x8xbf16>
    %c2 = arith.constant 2 : index
    %c0_8 = arith.constant 0 : index
    %c0_9 = arith.constant 0 : index
    %23 = vector.load %arg2[%c2, %c0_8, %c0_9] : memref<9x8x128xf32, #tpu.memory_space<vmem>>, vector<1x8x128xf32>
    %24 = vector.shape_cast %23 : vector<1x8x128xf32> to vector<8x128xf32>
    %25 = arith.truncf %24 : vector<8x128xf32> to vector<8x128xbf16>
    %cst_10 = arith.constant dense<0.000000e+00> : vector<256x128xf32>
    %26 = tpu.matmul %22, %25, %cst_10 {dimension_numbers = #tpu.dot_dimension_numbers<[1], [0], [0], [1], [0, 0, 1, 1], [], []>} : vector<256x8xbf16>, vector<8x128xbf16>, vector<256x128xf32> -> vector<256x128xf32>
    %27 = arith.addf %18, %26 : vector<256x128xf32>
    %c18_i32 = arith.constant 18 : i32
    %28 = arith.addi %1, %c18_i32 : i32
    %29 = arith.index_cast %28 : i32 to index
    %c0_11 = arith.constant 0 : index
    %30 = vector.load %arg1[%29, %c0_11] : memref<808x8xf32, #tpu.memory_space<vmem>>, vector<256x8xf32>
    %31 = arith.truncf %30 : vector<256x8xf32> to vector<256x8xbf16>
    %c3 = arith.constant 3 : index
    %c0_12 = arith.constant 0 : index
    %c0_13 = arith.constant 0 : index
    %32 = vector.load %arg2[%c3, %c0_12, %c0_13] : memref<9x8x128xf32, #tpu.memory_space<vmem>>, vector<1x8x128xf32>
    %33 = vector.shape_cast %32 : vector<1x8x128xf32> to vector<8x128xf32>
    %34 = arith.truncf %33 : vector<8x128xf32> to vector<8x128xbf16>
    %cst_14 = arith.constant dense<0.000000e+00> : vector<256x128xf32>
    %35 = tpu.matmul %31, %34, %cst_14 {dimension_numbers = #tpu.dot_dimension_numbers<[1], [0], [0], [1], [0, 0, 1, 1], [], []>} : vector<256x8xbf16>, vector<8x128xbf16>, vector<256x128xf32> -> vector<256x128xf32>
    %36 = arith.addf %27, %35 : vector<256x128xf32>
    %c19_i32 = arith.constant 19 : i32
    %37 = arith.addi %1, %c19_i32 : i32
    %38 = arith.index_cast %37 : i32 to index
    %c0_15 = arith.constant 0 : index
    %39 = vector.load %arg1[%38, %c0_15] : memref<808x8xf32, #tpu.memory_space<vmem>>, vector<256x8xf32>
    %40 = arith.truncf %39 : vector<256x8xf32> to vector<256x8xbf16>
    %c4 = arith.constant 4 : index
    %c0_16 = arith.constant 0 : index
    %c0_17 = arith.constant 0 : index
    %41 = vector.load %arg2[%c4, %c0_16, %c0_17] : memref<9x8x128xf32, #tpu.memory_space<vmem>>, vector<1x8x128xf32>
    %42 = vector.shape_cast %41 : vector<1x8x128xf32> to vector<8x128xf32>
    %43 = arith.truncf %42 : vector<8x128xf32> to vector<8x128xbf16>
    %cst_18 = arith.constant dense<0.000000e+00> : vector<256x128xf32>
    %44 = tpu.matmul %40, %43, %cst_18 {dimension_numbers = #tpu.dot_dimension_numbers<[1], [0], [0], [1], [0, 0, 1, 1], [], []>} : vector<256x8xbf16>, vector<8x128xbf16>, vector<256x128xf32> -> vector<256x128xf32>
    %45 = arith.addf %36, %44 : vector<256x128xf32>
    %c20_i32 = arith.constant 20 : i32
    %46 = arith.addi %1, %c20_i32 : i32
    %47 = arith.index_cast %46 : i32 to index
    %c0_19 = arith.constant 0 : index
    %48 = vector.load %arg1[%47, %c0_19] : memref<808x8xf32, #tpu.memory_space<vmem>>, vector<256x8xf32>
    %49 = arith.truncf %48 : vector<256x8xf32> to vector<256x8xbf16>
    %c5 = arith.constant 5 : index
    %c0_20 = arith.constant 0 : index
    %c0_21 = arith.constant 0 : index
    %50 = vector.load %arg2[%c5, %c0_20, %c0_21] : memref<9x8x128xf32, #tpu.memory_space<vmem>>, vector<1x8x128xf32>
    %51 = vector.shape_cast %50 : vector<1x8x128xf32> to vector<8x128xf32>
    %52 = arith.truncf %51 : vector<8x128xf32> to vector<8x128xbf16>
    %cst_22 = arith.constant dense<0.000000e+00> : vector<256x128xf32>
    %53 = tpu.matmul %49, %52, %cst_22 {dimension_numbers = #tpu.dot_dimension_numbers<[1], [0], [0], [1], [0, 0, 1, 1], [], []>} : vector<256x8xbf16>, vector<8x128xbf16>, vector<256x128xf32> -> vector<256x128xf32>
    %54 = arith.addf %45, %53 : vector<256x128xf32>
    %c36_i32 = arith.constant 36 : i32
    %55 = arith.addi %1, %c36_i32 : i32
    %56 = arith.index_cast %55 : i32 to index
    %c0_23 = arith.constant 0 : index
    %57 = vector.load %arg1[%56, %c0_23] : memref<808x8xf32, #tpu.memory_space<vmem>>, vector<256x8xf32>
    %58 = arith.truncf %57 : vector<256x8xf32> to vector<256x8xbf16>
    %c6 = arith.constant 6 : index
    %c0_24 = arith.constant 0 : index
    %c0_25 = arith.constant 0 : index
    %59 = vector.load %arg2[%c6, %c0_24, %c0_25] : memref<9x8x128xf32, #tpu.memory_space<vmem>>, vector<1x8x128xf32>
    %60 = vector.shape_cast %59 : vector<1x8x128xf32> to vector<8x128xf32>
    %61 = arith.truncf %60 : vector<8x128xf32> to vector<8x128xbf16>
    %cst_26 = arith.constant dense<0.000000e+00> : vector<256x128xf32>
    %62 = tpu.matmul %58, %61, %cst_26 {dimension_numbers = #tpu.dot_dimension_numbers<[1], [0], [0], [1], [0, 0, 1, 1], [], []>} : vector<256x8xbf16>, vector<8x128xbf16>, vector<256x128xf32> -> vector<256x128xf32>
    %63 = arith.addf %54, %62 : vector<256x128xf32>
    %c37_i32 = arith.constant 37 : i32
    %64 = arith.addi %1, %c37_i32 : i32
    %65 = arith.index_cast %64 : i32 to index
    %c0_27 = arith.constant 0 : index
    %66 = vector.load %arg1[%65, %c0_27] : memref<808x8xf32, #tpu.memory_space<vmem>>, vector<256x8xf32>
    %67 = arith.truncf %66 : vector<256x8xf32> to vector<256x8xbf16>
    %c7 = arith.constant 7 : index
    %c0_28 = arith.constant 0 : index
    %c0_29 = arith.constant 0 : index
    %68 = vector.load %arg2[%c7, %c0_28, %c0_29] : memref<9x8x128xf32, #tpu.memory_space<vmem>>, vector<1x8x128xf32>
    %69 = vector.shape_cast %68 : vector<1x8x128xf32> to vector<8x128xf32>
    %70 = arith.truncf %69 : vector<8x128xf32> to vector<8x128xbf16>
    %cst_30 = arith.constant dense<0.000000e+00> : vector<256x128xf32>
    %71 = tpu.matmul %67, %70, %cst_30 {dimension_numbers = #tpu.dot_dimension_numbers<[1], [0], [0], [1], [0, 0, 1, 1], [], []>} : vector<256x8xbf16>, vector<8x128xbf16>, vector<256x128xf32> -> vector<256x128xf32>
    %72 = arith.addf %63, %71 : vector<256x128xf32>
    %c38_i32 = arith.constant 38 : i32
    %73 = arith.addi %1, %c38_i32 : i32
    %74 = arith.index_cast %73 : i32 to index
    %c0_31 = arith.constant 0 : index
    %75 = vector.load %arg1[%74, %c0_31] : memref<808x8xf32, #tpu.memory_space<vmem>>, vector<256x8xf32>
    %76 = arith.truncf %75 : vector<256x8xf32> to vector<256x8xbf16>
    %c8 = arith.constant 8 : index
    %c0_32 = arith.constant 0 : index
    %c0_33 = arith.constant 0 : index
    %77 = vector.load %arg2[%c8, %c0_32, %c0_33] : memref<9x8x128xf32, #tpu.memory_space<vmem>>, vector<1x8x128xf32>
    %78 = vector.shape_cast %77 : vector<1x8x128xf32> to vector<8x128xf32>
    %79 = arith.truncf %78 : vector<8x128xf32> to vector<8x128xbf16>
    %cst_34 = arith.constant dense<0.000000e+00> : vector<256x128xf32>
    %80 = tpu.matmul %76, %79, %cst_34 {dimension_numbers = #tpu.dot_dimension_numbers<[1], [0], [0], [1], [0, 0, 1, 1], [], []>} : vector<256x8xbf16>, vector<8x128xbf16>, vector<256x128xf32> -> vector<256x128xf32>
    %81 = arith.addf %72, %80 : vector<256x128xf32>
    %c0_35 = arith.constant 0 : index
    %c0_36 = arith.constant 0 : index
    %82 = vector.load %arg4[%c0_35, %c0_36] : memref<256x128xf32, #tpu.memory_space<vmem>>, vector<256x128xf32>
    tpu.vector_store %arg4[%c0_35, %c0_36], %81 {strides = array<i32>} : memref<256x128xf32, #tpu.memory_space<vmem>>, vector<256x128xf32>,
    %c0_37 = arith.constant 0 : index
    %c0_38 = arith.constant 0 : index
    %83 = vector.load %arg3[%c0_37, %c0_38] : memref<256x1xf32, #tpu.memory_space<vmem>>, vector<256x1xf32>
    %84 = vector.broadcast %83 : vector<256x1xf32> to vector<256x128xf32>
    %85 = arith.mulf %81, %84 : vector<256x128xf32>
    %cst_39 = arith.constant dense<0.000000e+00> : vector<128xf32>
    %86 = vector.multi_reduction <add>, %85, %cst_39 [0] : vector<256x128xf32> to vector<128xf32>
    %87 = vector.shape_cast %86 : vector<128xf32> to vector<1x128xf32>
    %88 = arith.mulf %85, %81 : vector<256x128xf32>
    %cst_40 = arith.constant dense<0.000000e+00> : vector<128xf32>
    %89 = vector.multi_reduction <add>, %88, %cst_40 [0] : vector<256x128xf32> to vector<128xf32>
    %90 = vector.shape_cast %89 : vector<128xf32> to vector<1x128xf32>
    %cst_41 = arith.constant 0.000000e+00 : f32
    %91 = vector.broadcast %cst_41 : f32 to vector<6x128xf32>
    %92 = tpu.concatenate %87, %90, %91 in 0 : vector<1x128xf32>, vector<1x128xf32>, vector<6x128xf32> -> vector<8x128xf32>
    %c0_42 = arith.constant 0 : index
    %c0_43 = arith.constant 0 : index
    %93 = vector.load %arg5[%c0_42, %c0_43] : memref<8x128xf32, #tpu.memory_space<vmem>>, vector<8x128xf32>
    tpu.vector_store %arg5[%c0_42, %c0_43], %92 {strides = array<i32>} : memref<8x128xf32, #tpu.memory_space<vmem>>, vector<8x128xf32>,
    return
  }
  func.func @transform_0(%arg0: i32) -> (i32, i32) {
    %c0_i32 = arith.constant 0 : i32
    %c0_i32_0 = arith.constant 0 : i32
    %c0_i32_1 = arith.constant 0 : i32
    return %c0_i32, %c0_i32_0 : i32, i32
  }
  func.func @transform_1(%arg0: i32) -> (i32, i32, i32) {
    %c0_i32 = arith.constant 0 : i32
    %c0_i32_0 = arith.constant 0 : i32
    %c0_i32_1 = arith.constant 0 : i32
    %c0_i32_2 = arith.constant 0 : i32
    return %c0_i32, %c0_i32_0, %c0_i32_1 : i32, i32, i32
  }
  func.func @transform_2(%arg0: i32) -> (i32, i32) {
    %c0_i32 = arith.constant 0 : i32
    %c0_i32_0 = arith.constant 0 : i32
    return %arg0, %c0_i32 : i32, i32
  }
  func.func @transform_3(%arg0: i32) -> (i32, i32) {
    %c0_i32 = arith.constant 0 : i32
    %c0_i32_0 = arith.constant 0 : i32
    return %arg0, %c0_i32 : i32, i32
  }
  func.func @transform_4(%arg0: i32) -> (i32, i32) {
    %c0_i32 = arith.constant 0 : i32
    %c0_i32_0 = arith.constant 0 : i32
    return %arg0, %c0_i32 : i32, i32
  }
}

module attributes {stable_mosaic.version = 11 : i64} {
  func.func @_bn_relu_kernel(%arg0: i32, %arg1: memref<256x128xf32, #tpu.memory_space<vmem>>, %arg2: memref<1x128xf32, #tpu.memory_space<vmem>>, %arg3: memref<1x128xf32, #tpu.memory_space<vmem>>, %arg4: memref<256x128xf32, #tpu.memory_space<vmem>>) attributes {dimension_semantics = [#tpu.dimension_semantics<parallel>], iteration_bounds = array<i64: 3>, scalar_prefetch = 0 : i64, scratch_operands = 0 : i64, tpu.core_type = #tpu.core_type<tc>, window_params = [{transform_indices = @transform_0, window_bounds = array<i64: 256, 128>}, {pipeline_mode = #tpu.pipeline_mode<synchronous>, transform_indices = @transform_1, window_bounds = array<i64: 1, 128>}, {pipeline_mode = #tpu.pipeline_mode<synchronous>, transform_indices = @transform_2, window_bounds = array<i64: 1, 128>}, {transform_indices = @transform_3, window_bounds = array<i64: 256, 128>}]} {
    %c0 = arith.constant 0 : index
    %c0_0 = arith.constant 0 : index
    %0 = vector.load %arg1[%c0, %c0_0] : memref<256x128xf32, #tpu.memory_space<vmem>>, vector<256x128xf32>
    %c0_1 = arith.constant 0 : index
    %c0_2 = arith.constant 0 : index
    %1 = vector.load %arg2[%c0_1, %c0_2] : memref<1x128xf32, #tpu.memory_space<vmem>>, vector<1x128xf32>
    %2 = vector.broadcast %1 : vector<1x128xf32> to vector<256x128xf32>
    %3 = arith.mulf %0, %2 : vector<256x128xf32>
    %c0_3 = arith.constant 0 : index
    %c0_4 = arith.constant 0 : index
    %4 = vector.load %arg3[%c0_3, %c0_4] : memref<1x128xf32, #tpu.memory_space<vmem>>, vector<1x128xf32>
    %5 = vector.broadcast %4 : vector<1x128xf32> to vector<256x128xf32>
    %6 = arith.addf %3, %5 : vector<256x128xf32>
    %cst = arith.constant 0.000000e+00 : f32
    %7 = vector.broadcast %cst : f32 to vector<256x128xf32>
    %8 = arith.maximumf %6, %7 : vector<256x128xf32>
    %c0_5 = arith.constant 0 : index
    %c0_6 = arith.constant 0 : index
    %9 = vector.load %arg4[%c0_5, %c0_6] : memref<256x128xf32, #tpu.memory_space<vmem>>, vector<256x128xf32>
    tpu.vector_store %arg4[%c0_5, %c0_6], %8 {strides = array<i32>} : memref<256x128xf32, #tpu.memory_space<vmem>>, vector<256x128xf32>,
    return
  }
  func.func @transform_0(%arg0: i32) -> (i32, i32) {
    %c0_i32 = arith.constant 0 : i32
    %c0_i32_0 = arith.constant 0 : i32
    return %arg0, %c0_i32 : i32, i32
  }
  func.func @transform_1(%arg0: i32) -> (i32, i32) {
    %c0_i32 = arith.constant 0 : i32
    %c0_i32_0 = arith.constant 0 : i32
    %c0_i32_1 = arith.constant 0 : i32
    return %c0_i32, %c0_i32_0 : i32, i32
  }
  func.func @transform_2(%arg0: i32) -> (i32, i32) {
    %c0_i32 = arith.constant 0 : i32
    %c0_i32_0 = arith.constant 0 : i32
    %c0_i32_1 = arith.constant 0 : i32
    return %c0_i32, %c0_i32_0 : i32, i32
  }
  func.func @transform_3(%arg0: i32) -> (i32, i32) {
    %c0_i32 = arith.constant 0 : i32
    %c0_i32_0 = arith.constant 0 : i32
    return %arg0, %c0_i32 : i32, i32
  }
}

module attributes {stable_mosaic.version = 11 : i64} {
  func.func @_conv_stats_kernel(%arg0: i32, %arg1: memref<808x128xf32, #tpu.memory_space<vmem>>, %arg2: memref<9x128x128xf32, #tpu.memory_space<vmem>>, %arg3: memref<256x1xf32, #tpu.memory_space<vmem>>, %arg4: memref<256x128xf32, #tpu.memory_space<vmem>>, %arg5: memref<8x128xf32, #tpu.memory_space<vmem>>) attributes {dimension_semantics = [#tpu.dimension_semantics<parallel>], iteration_bounds = array<i64: 3>, scalar_prefetch = 0 : i64, scratch_operands = 0 : i64, tpu.core_type = #tpu.core_type<tc>, window_params = [{pipeline_mode = #tpu.pipeline_mode<synchronous>, transform_indices = @transform_0, window_bounds = array<i64: 808, 128>}, {pipeline_mode = #tpu.pipeline_mode<synchronous>, transform_indices = @transform_1, window_bounds = array<i64: 9, 128, 128>}, {transform_indices = @transform_2, window_bounds = array<i64: 256, 1>}, {transform_indices = @transform_3, window_bounds = array<i64: 256, 128>}, {transform_indices = @transform_4, window_bounds = array<i64: 8, 128>}]} {
    %c256_i32 = arith.constant 256 : i32
    %0 = arith.muli %arg0, %c256_i32 : i32
    %1 = tpu.assume_multiple %0, 256 : i32
    %c0_i32 = arith.constant 0 : i32
    %2 = arith.addi %1, %c0_i32 : i32
    %3 = arith.index_cast %2 : i32 to index
    %c0 = arith.constant 0 : index
    %4 = vector.load %arg1[%3, %c0] : memref<808x128xf32, #tpu.memory_space<vmem>>, vector<256x128xf32>
    %5 = arith.truncf %4 : vector<256x128xf32> to vector<256x128xbf16>
    %c0_0 = arith.constant 0 : index
    %c0_1 = arith.constant 0 : index
    %c0_2 = arith.constant 0 : index
    %6 = vector.load %arg2[%c0_0, %c0_1, %c0_2] : memref<9x128x128xf32, #tpu.memory_space<vmem>>, vector<1x128x128xf32>
    %7 = vector.shape_cast %6 : vector<1x128x128xf32> to vector<128x128xf32>
    %8 = arith.truncf %7 : vector<128x128xf32> to vector<128x128xbf16>
    %cst = arith.constant dense<0.000000e+00> : vector<256x128xf32>
    %9 = tpu.matmul %5, %8, %cst {dimension_numbers = #tpu.dot_dimension_numbers<[1], [0], [0], [1], [0, 0, 1, 1], [], []>} : vector<256x128xbf16>, vector<128x128xbf16>, vector<256x128xf32> -> vector<256x128xf32>
    %c1_i32 = arith.constant 1 : i32
    %10 = arith.addi %1, %c1_i32 : i32
    %11 = arith.index_cast %10 : i32 to index
    %c0_3 = arith.constant 0 : index
    %12 = vector.load %arg1[%11, %c0_3] : memref<808x128xf32, #tpu.memory_space<vmem>>, vector<256x128xf32>
    %13 = arith.truncf %12 : vector<256x128xf32> to vector<256x128xbf16>
    %c1 = arith.constant 1 : index
    %c0_4 = arith.constant 0 : index
    %c0_5 = arith.constant 0 : index
    %14 = vector.load %arg2[%c1, %c0_4, %c0_5] : memref<9x128x128xf32, #tpu.memory_space<vmem>>, vector<1x128x128xf32>
    %15 = vector.shape_cast %14 : vector<1x128x128xf32> to vector<128x128xf32>
    %16 = arith.truncf %15 : vector<128x128xf32> to vector<128x128xbf16>
    %cst_6 = arith.constant dense<0.000000e+00> : vector<256x128xf32>
    %17 = tpu.matmul %13, %16, %cst_6 {dimension_numbers = #tpu.dot_dimension_numbers<[1], [0], [0], [1], [0, 0, 1, 1], [], []>} : vector<256x128xbf16>, vector<128x128xbf16>, vector<256x128xf32> -> vector<256x128xf32>
    %18 = arith.addf %9, %17 : vector<256x128xf32>
    %c2_i32 = arith.constant 2 : i32
    %19 = arith.addi %1, %c2_i32 : i32
    %20 = arith.index_cast %19 : i32 to index
    %c0_7 = arith.constant 0 : index
    %21 = vector.load %arg1[%20, %c0_7] : memref<808x128xf32, #tpu.memory_space<vmem>>, vector<256x128xf32>
    %22 = arith.truncf %21 : vector<256x128xf32> to vector<256x128xbf16>
    %c2 = arith.constant 2 : index
    %c0_8 = arith.constant 0 : index
    %c0_9 = arith.constant 0 : index
    %23 = vector.load %arg2[%c2, %c0_8, %c0_9] : memref<9x128x128xf32, #tpu.memory_space<vmem>>, vector<1x128x128xf32>
    %24 = vector.shape_cast %23 : vector<1x128x128xf32> to vector<128x128xf32>
    %25 = arith.truncf %24 : vector<128x128xf32> to vector<128x128xbf16>
    %cst_10 = arith.constant dense<0.000000e+00> : vector<256x128xf32>
    %26 = tpu.matmul %22, %25, %cst_10 {dimension_numbers = #tpu.dot_dimension_numbers<[1], [0], [0], [1], [0, 0, 1, 1], [], []>} : vector<256x128xbf16>, vector<128x128xbf16>, vector<256x128xf32> -> vector<256x128xf32>
    %27 = arith.addf %18, %26 : vector<256x128xf32>
    %c18_i32 = arith.constant 18 : i32
    %28 = arith.addi %1, %c18_i32 : i32
    %29 = arith.index_cast %28 : i32 to index
    %c0_11 = arith.constant 0 : index
    %30 = vector.load %arg1[%29, %c0_11] : memref<808x128xf32, #tpu.memory_space<vmem>>, vector<256x128xf32>
    %31 = arith.truncf %30 : vector<256x128xf32> to vector<256x128xbf16>
    %c3 = arith.constant 3 : index
    %c0_12 = arith.constant 0 : index
    %c0_13 = arith.constant 0 : index
    %32 = vector.load %arg2[%c3, %c0_12, %c0_13] : memref<9x128x128xf32, #tpu.memory_space<vmem>>, vector<1x128x128xf32>
    %33 = vector.shape_cast %32 : vector<1x128x128xf32> to vector<128x128xf32>
    %34 = arith.truncf %33 : vector<128x128xf32> to vector<128x128xbf16>
    %cst_14 = arith.constant dense<0.000000e+00> : vector<256x128xf32>
    %35 = tpu.matmul %31, %34, %cst_14 {dimension_numbers = #tpu.dot_dimension_numbers<[1], [0], [0], [1], [0, 0, 1, 1], [], []>} : vector<256x128xbf16>, vector<128x128xbf16>, vector<256x128xf32> -> vector<256x128xf32>
    %36 = arith.addf %27, %35 : vector<256x128xf32>
    %c19_i32 = arith.constant 19 : i32
    %37 = arith.addi %1, %c19_i32 : i32
    %38 = arith.index_cast %37 : i32 to index
    %c0_15 = arith.constant 0 : index
    %39 = vector.load %arg1[%38, %c0_15] : memref<808x128xf32, #tpu.memory_space<vmem>>, vector<256x128xf32>
    %40 = arith.truncf %39 : vector<256x128xf32> to vector<256x128xbf16>
    %c4 = arith.constant 4 : index
    %c0_16 = arith.constant 0 : index
    %c0_17 = arith.constant 0 : index
    %41 = vector.load %arg2[%c4, %c0_16, %c0_17] : memref<9x128x128xf32, #tpu.memory_space<vmem>>, vector<1x128x128xf32>
    %42 = vector.shape_cast %41 : vector<1x128x128xf32> to vector<128x128xf32>
    %43 = arith.truncf %42 : vector<128x128xf32> to vector<128x128xbf16>
    %cst_18 = arith.constant dense<0.000000e+00> : vector<256x128xf32>
    %44 = tpu.matmul %40, %43, %cst_18 {dimension_numbers = #tpu.dot_dimension_numbers<[1], [0], [0], [1], [0, 0, 1, 1], [], []>} : vector<256x128xbf16>, vector<128x128xbf16>, vector<256x128xf32> -> vector<256x128xf32>
    %45 = arith.addf %36, %44 : vector<256x128xf32>
    %c20_i32 = arith.constant 20 : i32
    %46 = arith.addi %1, %c20_i32 : i32
    %47 = arith.index_cast %46 : i32 to index
    %c0_19 = arith.constant 0 : index
    %48 = vector.load %arg1[%47, %c0_19] : memref<808x128xf32, #tpu.memory_space<vmem>>, vector<256x128xf32>
    %49 = arith.truncf %48 : vector<256x128xf32> to vector<256x128xbf16>
    %c5 = arith.constant 5 : index
    %c0_20 = arith.constant 0 : index
    %c0_21 = arith.constant 0 : index
    %50 = vector.load %arg2[%c5, %c0_20, %c0_21] : memref<9x128x128xf32, #tpu.memory_space<vmem>>, vector<1x128x128xf32>
    %51 = vector.shape_cast %50 : vector<1x128x128xf32> to vector<128x128xf32>
    %52 = arith.truncf %51 : vector<128x128xf32> to vector<128x128xbf16>
    %cst_22 = arith.constant dense<0.000000e+00> : vector<256x128xf32>
    %53 = tpu.matmul %49, %52, %cst_22 {dimension_numbers = #tpu.dot_dimension_numbers<[1], [0], [0], [1], [0, 0, 1, 1], [], []>} : vector<256x128xbf16>, vector<128x128xbf16>, vector<256x128xf32> -> vector<256x128xf32>
    %54 = arith.addf %45, %53 : vector<256x128xf32>
    %c36_i32 = arith.constant 36 : i32
    %55 = arith.addi %1, %c36_i32 : i32
    %56 = arith.index_cast %55 : i32 to index
    %c0_23 = arith.constant 0 : index
    %57 = vector.load %arg1[%56, %c0_23] : memref<808x128xf32, #tpu.memory_space<vmem>>, vector<256x128xf32>
    %58 = arith.truncf %57 : vector<256x128xf32> to vector<256x128xbf16>
    %c6 = arith.constant 6 : index
    %c0_24 = arith.constant 0 : index
    %c0_25 = arith.constant 0 : index
    %59 = vector.load %arg2[%c6, %c0_24, %c0_25] : memref<9x128x128xf32, #tpu.memory_space<vmem>>, vector<1x128x128xf32>
    %60 = vector.shape_cast %59 : vector<1x128x128xf32> to vector<128x128xf32>
    %61 = arith.truncf %60 : vector<128x128xf32> to vector<128x128xbf16>
    %cst_26 = arith.constant dense<0.000000e+00> : vector<256x128xf32>
    %62 = tpu.matmul %58, %61, %cst_26 {dimension_numbers = #tpu.dot_dimension_numbers<[1], [0], [0], [1], [0, 0, 1, 1], [], []>} : vector<256x128xbf16>, vector<128x128xbf16>, vector<256x128xf32> -> vector<256x128xf32>
    %63 = arith.addf %54, %62 : vector<256x128xf32>
    %c37_i32 = arith.constant 37 : i32
    %64 = arith.addi %1, %c37_i32 : i32
    %65 = arith.index_cast %64 : i32 to index
    %c0_27 = arith.constant 0 : index
    %66 = vector.load %arg1[%65, %c0_27] : memref<808x128xf32, #tpu.memory_space<vmem>>, vector<256x128xf32>
    %67 = arith.truncf %66 : vector<256x128xf32> to vector<256x128xbf16>
    %c7 = arith.constant 7 : index
    %c0_28 = arith.constant 0 : index
    %c0_29 = arith.constant 0 : index
    %68 = vector.load %arg2[%c7, %c0_28, %c0_29] : memref<9x128x128xf32, #tpu.memory_space<vmem>>, vector<1x128x128xf32>
    %69 = vector.shape_cast %68 : vector<1x128x128xf32> to vector<128x128xf32>
    %70 = arith.truncf %69 : vector<128x128xf32> to vector<128x128xbf16>
    %cst_30 = arith.constant dense<0.000000e+00> : vector<256x128xf32>
    %71 = tpu.matmul %67, %70, %cst_30 {dimension_numbers = #tpu.dot_dimension_numbers<[1], [0], [0], [1], [0, 0, 1, 1], [], []>} : vector<256x128xbf16>, vector<128x128xbf16>, vector<256x128xf32> -> vector<256x128xf32>
    %72 = arith.addf %63, %71 : vector<256x128xf32>
    %c38_i32 = arith.constant 38 : i32
    %73 = arith.addi %1, %c38_i32 : i32
    %74 = arith.index_cast %73 : i32 to index
    %c0_31 = arith.constant 0 : index
    %75 = vector.load %arg1[%74, %c0_31] : memref<808x128xf32, #tpu.memory_space<vmem>>, vector<256x128xf32>
    %76 = arith.truncf %75 : vector<256x128xf32> to vector<256x128xbf16>
    %c8 = arith.constant 8 : index
    %c0_32 = arith.constant 0 : index
    %c0_33 = arith.constant 0 : index
    %77 = vector.load %arg2[%c8, %c0_32, %c0_33] : memref<9x128x128xf32, #tpu.memory_space<vmem>>, vector<1x128x128xf32>
    %78 = vector.shape_cast %77 : vector<1x128x128xf32> to vector<128x128xf32>
    %79 = arith.truncf %78 : vector<128x128xf32> to vector<128x128xbf16>
    %cst_34 = arith.constant dense<0.000000e+00> : vector<256x128xf32>
    %80 = tpu.matmul %76, %79, %cst_34 {dimension_numbers = #tpu.dot_dimension_numbers<[1], [0], [0], [1], [0, 0, 1, 1], [], []>} : vector<256x128xbf16>, vector<128x128xbf16>, vector<256x128xf32> -> vector<256x128xf32>
    %81 = arith.addf %72, %80 : vector<256x128xf32>
    %c0_35 = arith.constant 0 : index
    %c0_36 = arith.constant 0 : index
    %82 = vector.load %arg4[%c0_35, %c0_36] : memref<256x128xf32, #tpu.memory_space<vmem>>, vector<256x128xf32>
    tpu.vector_store %arg4[%c0_35, %c0_36], %81 {strides = array<i32>} : memref<256x128xf32, #tpu.memory_space<vmem>>, vector<256x128xf32>,
    %c0_37 = arith.constant 0 : index
    %c0_38 = arith.constant 0 : index
    %83 = vector.load %arg3[%c0_37, %c0_38] : memref<256x1xf32, #tpu.memory_space<vmem>>, vector<256x1xf32>
    %84 = vector.broadcast %83 : vector<256x1xf32> to vector<256x128xf32>
    %85 = arith.mulf %81, %84 : vector<256x128xf32>
    %cst_39 = arith.constant dense<0.000000e+00> : vector<128xf32>
    %86 = vector.multi_reduction <add>, %85, %cst_39 [0] : vector<256x128xf32> to vector<128xf32>
    %87 = vector.shape_cast %86 : vector<128xf32> to vector<1x128xf32>
    %88 = arith.mulf %85, %81 : vector<256x128xf32>
    %cst_40 = arith.constant dense<0.000000e+00> : vector<128xf32>
    %89 = vector.multi_reduction <add>, %88, %cst_40 [0] : vector<256x128xf32> to vector<128xf32>
    %90 = vector.shape_cast %89 : vector<128xf32> to vector<1x128xf32>
    %cst_41 = arith.constant 0.000000e+00 : f32
    %91 = vector.broadcast %cst_41 : f32 to vector<6x128xf32>
    %92 = tpu.concatenate %87, %90, %91 in 0 : vector<1x128xf32>, vector<1x128xf32>, vector<6x128xf32> -> vector<8x128xf32>
    %c0_42 = arith.constant 0 : index
    %c0_43 = arith.constant 0 : index
    %93 = vector.load %arg5[%c0_42, %c0_43] : memref<8x128xf32, #tpu.memory_space<vmem>>, vector<8x128xf32>
    tpu.vector_store %arg5[%c0_42, %c0_43], %92 {strides = array<i32>} : memref<8x128xf32, #tpu.memory_space<vmem>>, vector<8x128xf32>,
    return
  }
  func.func @transform_0(%arg0: i32) -> (i32, i32) {
    %c0_i32 = arith.constant 0 : i32
    %c0_i32_0 = arith.constant 0 : i32
    %c0_i32_1 = arith.constant 0 : i32
    return %c0_i32, %c0_i32_0 : i32, i32
  }
  func.func @transform_1(%arg0: i32) -> (i32, i32, i32) {
    %c0_i32 = arith.constant 0 : i32
    %c0_i32_0 = arith.constant 0 : i32
    %c0_i32_1 = arith.constant 0 : i32
    %c0_i32_2 = arith.constant 0 : i32
    return %c0_i32, %c0_i32_0, %c0_i32_1 : i32, i32, i32
  }
  func.func @transform_2(%arg0: i32) -> (i32, i32) {
    %c0_i32 = arith.constant 0 : i32
    %c0_i32_0 = arith.constant 0 : i32
    return %arg0, %c0_i32 : i32, i32
  }
  func.func @transform_3(%arg0: i32) -> (i32, i32) {
    %c0_i32 = arith.constant 0 : i32
    %c0_i32_0 = arith.constant 0 : i32
    return %arg0, %c0_i32 : i32, i32
  }
  func.func @transform_4(%arg0: i32) -> (i32, i32) {
    %c0_i32 = arith.constant 0 : i32
    %c0_i32_0 = arith.constant 0 : i32
    return %arg0, %c0_i32 : i32, i32
  }
}

</mosaic_0001>

<llo_original>
// kernel: conv_block_forward.5
$region0: #{conv_block_forward.5}
  #allocation0 [shape = 'u32[]', space=smem, size = 0x4, offset = 0x4, fixed_abs, tag = 'smem constant byte address 0x4 - core index']
  #allocation1 [shape = 'u32[144,128]{1,0:T(1,128)}', space=vmem, size = 0x12000, scoped, tag = 'internal scratch']
  %s0 = inlined_call_operand.vmem [shape: f32[768,128], index: 0, kind: input, shape index: {}]
  %s1 = inlined_call_operand.vmem [shape: f32[1,128], index: 1, kind: input, shape index: {}]
  %s2 = inlined_call_operand.vmem [shape: f32[1,128], index: 2, kind: input, shape index: {}]
  %s3 = inlined_call_operand.vmem [shape: f32[768,128], index: 3, kind: output, shape index: {}]
  %s4 = sld [smem:[#allocation0]]
  $region45: #{conv_block_forward.5} parent=0
    _
  %s6 = ssub.s32 1, %s4
  %s7 = scalar_select 0, %s6, %s4
  loop: start=0, step=1, limit=5
  $region2: #{conv_block_forward.5} parent=0 // loop_pre_header
    _
  $region3: #{conv_block_forward.5} parent=0 // loop_header
    %s9 = sphi 0, %s13
    %p10 = scmp.ge.s32.totalorder %s9, 5
    %s19 = sphi 0, %s21
    %s22 = sphi 0, %s19
    %s23 = sphi 0, %s22
    %s39 = sphi 0, %s23
    %s43 = sphi 0, %s43
    %s45 = sphi 0, %s43
    %s46 = sphi 0, %s45
    %s60 = sphi 0, %s46
    %s64 = sphi 0, %s64
    %s66 = sphi 0, %s64
    %s67 = sphi 0, %s66
    %s81 = sphi 0, %s67
    %s87 = sphi 0, %s89
    %s90 = sphi 0, %s87
    %s91 = sphi 0, %s90
    %s107 = sphi 0, %s91
  $region4: #{conv_block_forward.5} parent=0 // loop_header_branch
    %12 = sbr.rel (%p10) target = $region8
  $region5: #{conv_block_forward.5} parent=0 // loop_body
    %s14 = ssub.s32 %s9, 1
    %s15 = ssub.s32 %s9, 2
    %s16 = sadd.s32 %s9, 1
    %s17 = ssub.s32 %s9, %s16
    %p18 = scmp.eq.s32.totalorder %s17, 0
    %s20 = sadd.s32 %s19, 1
    %s21 = scalar_select %p18, %s19, %s20
    %p24 = pneg %p18
    %p25 = scmp.eq.s32.totalorder %s9, 2
    %p26 = por %p24, %p25
    %p27 = scmp.ne.s32.totalorder %s19, %s22
    %p28 = scmp.eq.s32.totalorder %s9, 0
    %p29 = por %p27, %p28
    %p30 = scmp.ne.s32.totalorder %s19, %s22
    %p31 = scmp.eq.s32.totalorder %s14, 2
    %p32 = por %p30, %p31
    %p33 = scmp.ne.s32.totalorder %s22, %s23
    %p34 = scmp.eq.s32.totalorder %s14, 0
    %p35 = por %p33, %p34
    %p36 = scmp.ne.s32.totalorder %s22, %s23
    %p37 = scmp.eq.s32.totalorder %s15, 2
    %p38 = por %p36, %p37
    %p40 = scmp.ne.s32.totalorder %s23, %s39
    %p41 = scmp.eq.s32.totalorder %s15, 0
    %p42 = por %p40, %p41
    %s44 = sadd.s32 %s43, 1
    %p47 = scmp.eq.s32.totalorder %s9, 2
    %p48 = scmp.ne.s32.totalorder %s43, %s45
    %p49 = scmp.eq.s32.totalorder %s9, 0
    %p50 = por %p48, %p49
    %p51 = scmp.ne.s32.totalorder %s43, %s45
    %p52 = scmp.eq.s32.totalorder %s14, 2
    %p53 = por %p51, %p52
    %p54 = scmp.ne.s32.totalorder %s45, %s46
    %p55 = scmp.eq.s32.totalorder %s14, 0
    %p56 = por %p54, %p55
    %p57 = scmp.ne.s32.totalorder %s45, %s46
    %p58 = scmp.eq.s32.totalorder %s15, 2
    %p59 = por %p57, %p58
    %p61 = scmp.ne.s32.totalorder %s46, %s60
    %p62 = scmp.eq.s32.totalorder %s15, 0
    %p63 = por %p61, %p62
    %s65 = sadd.s32 %s64, 1
    %p68 = scmp.eq.s32.totalorder %s9, 2
    %p69 = scmp.ne.s32.totalorder %s64, %s66
    %p70 = scmp.eq.s32.totalorder %s9, 0
    %p71 = por %p69, %p70
    %p72 = scmp.ne.s32.totalorder %s64, %s66
    %p73 = scmp.eq.s32.totalorder %s14, 2
    %p74 = por %p72, %p73
    %p75 = scmp.ne.s32.totalorder %s66, %s67
    %p76 = scmp.eq.s32.totalorder %s14, 0
    %p77 = por %p75, %p76
    %p78 = scmp.ne.s32.totalorder %s66, %s67
    %p79 = scmp.eq.s32.totalorder %s15, 2
    %p80 = por %p78, %p79
    %p82 = scmp.ne.s32.totalorder %s67, %s81
    %p83 = scmp.eq.s32.totalorder %s15, 0
    %p84 = por %p82, %p83
    %s85 = ssub.s32 %s9, %s16
    %p86 = scmp.eq.s32.totalorder %s85, 0
    %s88 = sadd.s32 %s87, 1
    %s89 = scalar_select %p86, %s87, %s88
    %p92 = pneg %p86
    %p93 = scmp.eq.s32.totalorder %s9, 2
    %p94 = por %p92, %p93
    %p95 = scmp.ne.s32.totalorder %s87, %s90
    %p96 = scmp.eq.s32.totalorder %s9, 0
    %p97 = por %p95, %p96
    %p98 = scmp.ne.s32.totalorder %s87, %s90
    %p99 = scmp.eq.s32.totalorder %s14, 2
    %p100 = por %p98, %p99
    %p101 = scmp.ne.s32.totalorder %s90, %s91
    %p102 = scmp.eq.s32.totalorder %s14, 0
    %p103 = por %p101, %p102
    %p104 = scmp.ne.s32.totalorder %s90, %s91
    %p105 = scmp.eq.s32.totalorder %s15, 2
    %p106 = por %p104, %p105
    %p108 = scmp.ne.s32.totalorder %s91, %s107
    %p109 = scmp.eq.s32.totalorder %s15, 0
    %p110 = por %p108, %p109
    %p111 = scmp.le.s32.totalorder 1, %s9
    %p112 = scmp.lt.s32.totalorder %s9, 4
    %p113 = pnand %p111, %p112
    %p114 = pneg %p113
    // Predicated region
    $region9: #{conv_block_forward.5} parent=5 // pred_check
      _
    $region10: #{conv_block_forward.5} parent=5 // pred_check_branch
      %116 = sbr.rel (%p113) target = $region12
    $region11: #{conv_block_forward.5} parent=5 // pred_region
      %s117 = ssub.s32 %s9, 1
      // Predicated region
      $region13: #{conv_block_forward.5} parent=11 // pred_check
        %p118 = pneg %p56
      $region14: #{conv_block_forward.5} parent=11 // pred_check_branch
        %120 = sbr.rel (%p118) target = $region16
      $region15: #{conv_block_forward.5} parent=11 // pred_region
        _
      $region16: #{conv_block_forward.5} parent=11 // pred_fallthru
        _
      // Predicated region
      $region17: #{conv_block_forward.5} parent=11 // pred_check
        %p121 = pneg %p77
      $region18: #{conv_block_forward.5} parent=11 // pred_check_branch
        %123 = sbr.rel (%p121) target = $region20
      $region19: #{conv_block_forward.5} parent=11 // pred_region
        _
      $region20: #{conv_block_forward.5} parent=11 // pred_fallthru
        _
    $region12: #{conv_block_forward.5} parent=5 // pred_fallthru
      _
    %p124 = scmp.lt.s32.totalorder %s9, 3
    // Predicated region
    $region21: #{conv_block_forward.5} parent=5 // pred_check
      %p125 = pneg %p124
    $region22: #{conv_block_forward.5} parent=5 // pred_check_branch
      %127 = sbr.rel (%p125) target = $region24
    $region23: #{conv_block_forward.5} parent=5 // pred_region
      // Predicated region
      $region25: #{conv_block_forward.5} parent=23 // pred_check
        %p128 = pneg %p29
      $region26: #{conv_block_forward.5} parent=23 // pred_check_branch
        %130 = sbr.rel (%p128) target = $region28
      $region27: #{conv_block_forward.5} parent=23 // pred_region
        %s131 = smul.u32 32, %s9
        %p132 = scmp.lt.s32.totalorder %s131, 95
        %s133 = scalar_select %p132, %s131, 95
        %s134 = smul.addr %s133, 8
        %s135 = scalar_lea.vmem %s0, %s134
        %s136 = smul.u32 32, %s9
      $region28: #{conv_block_forward.5} parent=23 // pred_fallthru
        _
    $region24: #{conv_block_forward.5} parent=5 // pred_fallthru
      _
    %p137 = scmp.le.s32.totalorder 1, %s9
    %p138 = scmp.lt.s32.totalorder %s9, 4
    %p139 = pnand %p137, %p138
    %p140 = pneg %p139
    // Predicated region
    $region29: #{conv_block_forward.5} parent=5 // pred_check
      _
    $region30: #{conv_block_forward.5} parent=5 // pred_check_branch
      %142 = sbr.rel (%p139) target = $region32
    $region31: #{conv_block_forward.5} parent=5 // pred_region
      %s143 = ssub.s32 %s9, 1
      %s144 = smul.u32 32, %s14
      %p145 = scmp.lt.s32.totalorder %s144, 95
      %s146 = scalar_select %p145, %s144, 95
      %s147 = smul.addr %s146, 8
      %s148 = scalar_lea.vmem %s0, %s147
      %p149 = pneg %p35
      %p150 = pneg %p32
      %p151 = pneg %p56
      %p152 = pneg %p53
      %p153 = pneg %p77
      %p154 = pneg %p74
      %p155 = pneg %p103
      %p156 = pneg %p100
      %s157 = smul.u32 32, %s14
      %p158 = scmp.lt.s32.totalorder %s157, 95
      %s159 = scalar_select %p158, %s157, 95
      %s160 = smul.addr %s159, 8
      %s161 = scalar_lea.vmem %s3, %s160
      %s162 = smul.u32 32, %s14
      %p163 = scmp.lt.s32.totalorder %s162, 95
      %s164 = scalar_select %p163, %s162, 95
      %s165 = smul.addr %s164, 8
      %s166 = scalar_lea.vmem %s0, %s165
      %s167 = smul.u32 32, %s14
      %s168 = smul.u32 32, %s14
      %p169 = scmp.lt.s32.totalorder %s168, 95
      %s170 = scalar_select %p169, %s168, 95
      %s171 = smul.addr %s170, 8
      %s172 = scalar_lea.vmem %s3, %s171
      %s173 = smul.u32 32, %s14
      %v174 = vld [vmem:[%s166] sm:$0xff]
      %v175 = vld [vmem:[%s166 + $0x8] sm:$0xff]
      %v176 = vld [vmem:[%s166 + $0x10] sm:$0xff]
      %v177 = vld [vmem:[%s166 + $0x18] sm:$0xff]
      %v178 = vld [vmem:[%s166 + $0x20] sm:$0xff]
      %v179 = vld [vmem:[%s166 + $0x28] sm:$0xff]
      %v180 = vld [vmem:[%s166 + $0x30] sm:$0xff]
      %v181 = vld [vmem:[%s166 + $0x38] sm:$0xff]
      %v182 = vld [vmem:[%s166 + $0x40] sm:$0xff]
      %v183 = vld [vmem:[%s166 + $0x48] sm:$0xff]
      %v184 = vld [vmem:[%s166 + $0x50] sm:$0xff]
      %v185 = vld [vmem:[%s166 + $0x58] sm:$0xff]
      %v186 = vld [vmem:[%s166 + $0x60] sm:$0xff]
      %v187 = vld [vmem:[%s166 + $0x68] sm:$0xff]
      %v188 = vld [vmem:[%s166 + $0x70] sm:$0xff]
      %v189 = vld [vmem:[%s166 + $0x78] sm:$0xff]
      %v190 = vld [vmem:[%s166 + $0x80] sm:$0xff]
      %v191 = vld [vmem:[%s166 + $0x88] sm:$0xff]
      %v192 = vld [vmem:[%s166 + $0x90] sm:$0xff]
      %v193 = vld [vmem:[%s166 + $0x98] sm:$0xff]
      %v194 = vld [vmem:[%s166 + $0xa0] sm:$0xff]
      %v195 = vld [vmem:[%s166 + $0xa8] sm:$0xff]
      %v196 = vld [vmem:[%s166 + $0xb0] sm:$0xff]
      %v197 = vld [vmem:[%s166 + $0xb8] sm:$0xff]
      %v198 = vld [vmem:[%s166 + $0xc0] sm:$0xff]
      %v199 = vld [vmem:[%s166 + $0xc8] sm:$0xff]
      %v200 = vld [vmem:[%s166 + $0xd0] sm:$0xff]
      %v201 = vld [vmem:[%s166 + $0xd8] sm:$0xff]
      %v202 = vld [vmem:[%s166 + $0xe0] sm:$0xff]
      %v203 = vld [vmem:[%s166 + $0xe8] sm:$0xff]
      %v204 = vld [vmem:[%s166 + $0xf0] sm:$0xff]
      %v205 = vld [vmem:[%s166 + $0xf8] sm:$0xff]
      %v206 = vld [vmem:[%s1] sm:$0x1]
      %v208 = vlaneseq
      %v209 = vshrl.u32 %v208, 7
      %v210 = vsub.s32 0, %v209
      %v211 = vrot.slane %v206, %v210
      %v213 = vmul.f32 %v174, %v211
      %v214 = vmul.f32 %v175, %v211
      %v215 = vmul.f32 %v176, %v211
      %v216 = vmul.f32 %v177, %v211
      %v217 = vmul.f32 %v178, %v211
      %v218 = vmul.f32 %v179, %v211
      %v219 = vmul.f32 %v180, %v211
      %v220 = vmul.f32 %v181, %v211
      %v221 = vmul.f32 %v182, %v211
      %v222 = vmul.f32 %v183, %v211
      %v223 = vmul.f32 %v184, %v211
      %v224 = vmul.f32 %v185, %v211
      %v225 = vmul.f32 %v186, %v211
      %v226 = vmul.f32 %v187, %v211
      %v227 = vmul.f32 %v188, %v211
      %v228 = vmul.f32 %v189, %v211
      %v229 = vmul.f32 %v190, %v211
      %v230 = vmul.f32 %v191, %v211
      %v231 = vmul.f32 %v192, %v211
      %v232 = vmul.f32 %v193, %v211
      %v233 = vmul.f32 %v194, %v211
      %v234 = vmul.f32 %v195, %v211
      %v235 = vmul.f32 %v196, %v211
      %v236 = vmul.f32 %v197, %v211
      %v237 = vmul.f32 %v198, %v211
      %v238 = vmul.f32 %v199, %v211
      %v239 = vmul.f32 %v200, %v211
      %v240 = vmul.f32 %v201, %v211
      %v241 = vmul.f32 %v202, %v211
      %v242 = vmul.f32 %v203, %v211
      %v243 = vmul.f32 %v204, %v211
      %v244 = vmul.f32 %v205, %v211
      %v245 = vld [vmem:[%s2] sm:$0x1]
      %v247 = vlaneseq
      %v248 = vshrl.u32 %v247, 7
      %v249 = vsub.s32 0, %v248
      %v250 = vrot.slane %v245, %v249
      %v252 = vadd.f32 %v213, %v250
      %v253 = vadd.f32 %v214, %v250
      %v254 = vadd.f32 %v215, %v250
      %v255 = vadd.f32 %v216, %v250
      %v256 = vadd.f32 %v217, %v250
      %v257 = vadd.f32 %v218, %v250
      %v258 = vadd.f32 %v219, %v250
      %v259 = vadd.f32 %v220, %v250
      %v260 = vadd.f32 %v221, %v250
      %v261 = vadd.f32 %v222, %v250
      %v262 = vadd.f32 %v223, %v250
      %v263 = vadd.f32 %v224, %v250
      %v264 = vadd.f32 %v225, %v250
      %v265 = vadd.f32 %v226, %v250
      %v266 = vadd.f32 %v227, %v250
      %v267 = vadd.f32 %v228, %v250
      %v268 = vadd.f32 %v229, %v250
      %v269 = vadd.f32 %v230, %v250
      %v270 = vadd.f32 %v231, %v250
      %v271 = vadd.f32 %v232, %v250
      %v272 = vadd.f32 %v233, %v250
      %v273 = vadd.f32 %v234, %v250
      %v274 = vadd.f32 %v235, %v250
      %v275 = vadd.f32 %v236, %v250
      %v276 = vadd.f32 %v237, %v250
      %v277 = vadd.f32 %v238, %v250
      %v278 = vadd.f32 %v239, %v250
      %v279 = vadd.f32 %v240, %v250
      %v280 = vadd.f32 %v241, %v250
      %v281 = vadd.f32 %v242, %v250
      %v282 = vadd.f32 %v243, %v250
      %v283 = vadd.f32 %v244, %v250
      %v284 = vmax.f32 %v252, 0.0
      %v285 = vmax.f32 %v253, 0.0
      %v286 = vmax.f32 %v254, 0.0
      %v287 = vmax.f32 %v255, 0.0
      %v288 = vmax.f32 %v256, 0.0
      %v289 = vmax.f32 %v257, 0.0
      %v290 = vmax.f32 %v258, 0.0
      %v291 = vmax.f32 %v259, 0.0
      %v292 = vmax.f32 %v260, 0.0
      %v293 = vmax.f32 %v261, 0.0
      %v294 = vmax.f32 %v262, 0.0
      %v295 = vmax.f32 %v263, 0.0
      %v296 = vmax.f32 %v264, 0.0
      %v297 = vmax.f32 %v265, 0.0
      %v298 = vmax.f32 %v266, 0.0
      %v299 = vmax.f32 %v267, 0.0
      %v300 = vmax.f32 %v268, 0.0
      %v301 = vmax.f32 %v269, 0.0
      %v302 = vmax.f32 %v270, 0.0
      %v303 = vmax.f32 %v271, 0.0
      %v304 = vmax.f32 %v272, 0.0
      %v305 = vmax.f32 %v273, 0.0
      %v306 = vmax.f32 %v274, 0.0
      %v307 = vmax.f32 %v275, 0.0
      %v308 = vmax.f32 %v276, 0.0
      %v309 = vmax.f32 %v277, 0.0
      %v310 = vmax.f32 %v278, 0.0
      %v311 = vmax.f32 %v279, 0.0
      %v312 = vmax.f32 %v280, 0.0
      %v313 = vmax.f32 %v281, 0.0
      %v314 = vmax.f32 %v282, 0.0
      %v315 = vmax.f32 %v283, 0.0
      %316 = vst [vmem:[%s172] sm:$0xff] %v284
      %317 = vst [vmem:[%s172 + $0x8] sm:$0xff] %v285
      %318 = vst [vmem:[%s172 + $0x10] sm:$0xff] %v286
      %319 = vst [vmem:[%s172 + $0x18] sm:$0xff] %v287
      %320 = vst [vmem:[%s172 + $0x20] sm:$0xff] %v288
      %321 = vst [vmem:[%s172 + $0x28] sm:$0xff] %v289
      %322 = vst [vmem:[%s172 + $0x30] sm:$0xff] %v290
      %323 = vst [vmem:[%s172 + $0x38] sm:$0xff] %v291
      %324 = vst [vmem:[%s172 + $0x40] sm:$0xff] %v292
      %325 = vst [vmem:[%s172 + $0x48] sm:$0xff] %v293
      %326 = vst [vmem:[%s172 + $0x50] sm:$0xff] %v294
      %327 = vst [vmem:[%s172 + $0x58] sm:$0xff] %v295
      %328 = vst [vmem:[%s172 + $0x60] sm:$0xff] %v296
      %329 = vst [vmem:[%s172 + $0x68] sm:$0xff] %v297
      %330 = vst [vmem:[%s172 + $0x70] sm:$0xff] %v298
      %331 = vst [vmem:[%s172 + $0x78] sm:$0xff] %v299
      %332 = vst [vmem:[%s172 + $0x80] sm:$0xff] %v300
      %333 = vst [vmem:[%s172 + $0x88] sm:$0xff] %v301
      %334 = vst [vmem:[%s172 + $0x90] sm:$0xff] %v302
      %335 = vst [vmem:[%s172 + $0x98] sm:$0xff] %v303
      %336 = vst [vmem:[%s172 + $0xa0] sm:$0xff] %v304
      %337 = vst [vmem:[%s172 + $0xa8] sm:$0xff] %v305
      %338 = vst [vmem:[%s172 + $0xb0] sm:$0xff] %v306
      %339 = vst [vmem:[%s172 + $0xb8] sm:$0xff] %v307
      %340 = vst [vmem:[%s172 + $0xc0] sm:$0xff] %v308
      %341 = vst [vmem:[%s172 + $0xc8] sm:$0xff] %v309
      %342 = vst [vmem:[%s172 + $0xd0] sm:$0xff] %v310
      %343 = vst [vmem:[%s172 + $0xd8] sm:$0xff] %v311
      %344 = vst [vmem:[%s172 + $0xe0] sm:$0xff] %v312
      %345 = vst [vmem:[%s172 + $0xe8] sm:$0xff] %v313
      %346 = vst [vmem:[%s172 + $0xf0] sm:$0xff] %v314
      %347 = vst [vmem:[%s172 + $0xf8] sm:$0xff] %v315
      %s348 = smul.u32 32, %s14
      %p349 = scmp.lt.s32.totalorder %s348, 95
      %s350 = scalar_select %p349, %s348, 95
      %s351 = smul.addr %s350, 8
      %s352 = scalar_lea.vmem %s3, %s351
      // Predicated region
      $region33: #{conv_block_forward.5} parent=31 // pred_check
        %p353 = pneg %p100
      $region34: #{conv_block_forward.5} parent=31 // pred_check_branch
        %355 = sbr.rel (%p353) target = $region36
      $region35: #{conv_block_forward.5} parent=31 // pred_region
        %s356 = smul.u32 32, %s14
      $region36: #{conv_block_forward.5} parent=31 // pred_fallthru
        _
    $region32: #{conv_block_forward.5} parent=5 // pred_fallthru
      _
    %p357 = scmp.le.s32.totalorder 2, %s9
    // Predicated region
    $region37: #{conv_block_forward.5} parent=5 // pred_check
      %p358 = pneg %p357
    $region38: #{conv_block_forward.5} parent=5 // pred_check_branch
      %360 = sbr.rel (%p358) target = $region40
    $region39: #{conv_block_forward.5} parent=5 // pred_region
      %s361 = ssub.s32 %s9, 2
      // Predicated region
      $region41: #{conv_block_forward.5} parent=39 // pred_check
        %p362 = pneg %p106
      $region42: #{conv_block_forward.5} parent=39 // pred_check_branch
        %364 = sbr.rel (%p362) target = $region44
      $region43: #{conv_block_forward.5} parent=39 // pred_region
        %s365 = smul.u32 32, %s15
        %p366 = scmp.lt.s32.totalorder %s365, 95
        %s367 = scalar_select %p366, %s365, 95
        %s368 = smul.addr %s367, 8
        %s369 = scalar_lea.vmem %s3, %s368
      $region44: #{conv_block_forward.5} parent=39 // pred_fallthru
        _
    $region40: #{conv_block_forward.5} parent=5 // pred_fallthru
      _
  $region6: #{conv_block_forward.5} parent=0 // loop_footer
    %s13 = sadd.s32 1, %s9
  $region7: #{conv_block_forward.5} parent=0 // loop_footer_branch
    %8 = sbr.rel target = $region3
  $region8: #{conv_block_forward.5} parent=0 // loop_exit
    _

// kernel: conv_block_forward.4
$region0: #{conv_block_forward.4}
  #allocation0 [shape = 'u32[]', space=smem, size = 0x4, offset = 0x4, fixed_abs, tag = 'smem constant byte address 0x4 - core index']
  #allocation1 [shape = 'u32[144,128]{1,0:T(1,128)}', space=vmem, size = 0x12000, scoped, tag = 'internal scratch']
  %s0 = inlined_call_operand.vmem [shape: f32[808,8], index: 0, kind: input, shape index: {}]
  %s1 = inlined_call_operand.vmem [shape: f32[9,8,128], index: 1, kind: input, shape index: {}]
  %s2 = inlined_call_operand.vmem [shape: f32[768,1], index: 2, kind: input, shape index: {}]
  %s3 = inlined_call_operand.vmem [shape: f32[768,128], index: 3, kind: output, shape index: {0}]
  %s4 = inlined_call_operand.vmem [shape: f32[24,128], index: 4, kind: output, shape index: {1}]
  %5 = xla_tuple %s3, %s4
  %s6 = sld [smem:[#allocation0]]
  $region53: #{conv_block_forward.4} parent=0
    _
  %s8 = ssub.s32 1, %s6
  %s9 = scalar_select 0, %s8, %s6
  loop: start=0, step=1, limit=5
  $region2: #{conv_block_forward.4} parent=0 // loop_pre_header
    _
  $region3: #{conv_block_forward.4} parent=0 // loop_header
    %s11 = sphi 0, %s15
    %p12 = scmp.ge.s32.totalorder %s11, 5
    %s19 = sphi 0, %s19
    %s21 = sphi 0, %s19
    %s22 = sphi 0, %s21
    %s36 = sphi 0, %s22
    %s40 = sphi 0, %s40
    %s42 = sphi 0, %s40
    %s43 = sphi 0, %s42
    %s57 = sphi 0, %s43
    %s63 = sphi 0, %s65
    %s66 = sphi 0, %s63
    %s67 = sphi 0, %s66
    %s83 = sphi 0, %s67
    %s89 = sphi 0, %s91
    %s92 = sphi 0, %s89
    %s93 = sphi 0, %s92
    %s109 = sphi 0, %s93
    %s115 = sphi 0, %s117
    %s118 = sphi 0, %s115
    %s119 = sphi 0, %s118
    %s135 = sphi 0, %s119
  $region4: #{conv_block_forward.4} parent=0 // loop_header_branch
    %14 = sbr.rel (%p12) target = $region8
  $region5: #{conv_block_forward.4} parent=0 // loop_body
    %s16 = ssub.s32 %s11, 1
    %s17 = ssub.s32 %s11, 2
    %s18 = sadd.s32 %s11, 1
    %s20 = sadd.s32 %s19, 1
    %p23 = scmp.eq.s32.totalorder %s11, 2
    %p24 = scmp.ne.s32.totalorder %s19, %s21
    %p25 = scmp.eq.s32.totalorder %s11, 0
    %p26 = por %p24, %p25
    %p27 = scmp.ne.s32.totalorder %s19, %s21
    %p28 = scmp.eq.s32.totalorder %s16, 2
    %p29 = por %p27, %p28
    %p30 = scmp.ne.s32.totalorder %s21, %s22
    %p31 = scmp.eq.s32.totalorder %s16, 0
    %p32 = por %p30, %p31
    %p33 = scmp.ne.s32.totalorder %s21, %s22
    %p34 = scmp.eq.s32.totalorder %s17, 2
    %p35 = por %p33, %p34
    %p37 = scmp.ne.s32.totalorder %s22, %s36
    %p38 = scmp.eq.s32.totalorder %s17, 0
    %p39 = por %p37, %p38
    %s41 = sadd.s32 %s40, 1
    %p44 = scmp.eq.s32.totalorder %s11, 2
    %p45 = scmp.ne.s32.totalorder %s40, %s42
    %p46 = scmp.eq.s32.totalorder %s11, 0
    %p47 = por %p45, %p46
    %p48 = scmp.ne.s32.totalorder %s40, %s42
    %p49 = scmp.eq.s32.totalorder %s16, 2
    %p50 = por %p48, %p49
    %p51 = scmp.ne.s32.totalorder %s42, %s43
    %p52 = scmp.eq.s32.totalorder %s16, 0
    %p53 = por %p51, %p52
    %p54 = scmp.ne.s32.totalorder %s42, %s43
    %p55 = scmp.eq.s32.totalorder %s17, 2
    %p56 = por %p54, %p55
    %p58 = scmp.ne.s32.totalorder %s43, %s57
    %p59 = scmp.eq.s32.totalorder %s17, 0
    %p60 = por %p58, %p59
    %s61 = ssub.s32 %s11, %s18
    %p62 = scmp.eq.s32.totalorder %s61, 0
    %s64 = sadd.s32 %s63, 1
    %s65 = scalar_select %p62, %s63, %s64
    %p68 = pneg %p62
    %p69 = scmp.eq.s32.totalorder %s11, 2
    %p70 = por %p68, %p69
    %p71 = scmp.ne.s32.totalorder %s63, %s66
    %p72 = scmp.eq.s32.totalorder %s11, 0
    %p73 = por %p71, %p72
    %p74 = scmp.ne.s32.totalorder %s63, %s66
    %p75 = scmp.eq.s32.totalorder %s16, 2
    %p76 = por %p74, %p75
    %p77 = scmp.ne.s32.totalorder %s66, %s67
    %p78 = scmp.eq.s32.totalorder %s16, 0
    %p79 = por %p77, %p78
    %p80 = scmp.ne.s32.totalorder %s66, %s67
    %p81 = scmp.eq.s32.totalorder %s17, 2
    %p82 = por %p80, %p81
    %p84 = scmp.ne.s32.totalorder %s67, %s83
    %p85 = scmp.eq.s32.totalorder %s17, 0
    %p86 = por %p84, %p85
    %s87 = ssub.s32 %s11, %s18
    %p88 = scmp.eq.s32.totalorder %s87, 0
    %s90 = sadd.s32 %s89, 1
    %s91 = scalar_select %p88, %s89, %s90
    %p94 = pneg %p88
    %p95 = scmp.eq.s32.totalorder %s11, 2
    %p96 = por %p94, %p95
    %p97 = scmp.ne.s32.totalorder %s89, %s92
    %p98 = scmp.eq.s32.totalorder %s11, 0
    %p99 = por %p97, %p98
    %p100 = scmp.ne.s32.totalorder %s89, %s92
    %p101 = scmp.eq.s32.totalorder %s16, 2
    %p102 = por %p100, %p101
    %p103 = scmp.ne.s32.totalorder %s92, %s93
    %p104 = scmp.eq.s32.totalorder %s16, 0
    %p105 = por %p103, %p104
    %p106 = scmp.ne.s32.totalorder %s92, %s93
    %p107 = scmp.eq.s32.totalorder %s17, 2
    %p108 = por %p106, %p107
    %p110 = scmp.ne.s32.totalorder %s93, %s109
    %p111 = scmp.eq.s32.totalorder %s17, 0
    %p112 = por %p110, %p111
    %s113 = ssub.s32 %s11, %s18
    %p114 = scmp.eq.s32.totalorder %s113, 0
    %s116 = sadd.s32 %s115, 1
    %s117 = scalar_select %p114, %s115, %s116
    %p120 = pneg %p114
    %p121 = scmp.eq.s32.totalorder %s11, 2
    %p122 = por %p120, %p121
    %p123 = scmp.ne.s32.totalorder %s115, %s118
    %p124 = scmp.eq.s32.totalorder %s11, 0
    %p125 = por %p123, %p124
    %p126 = scmp.ne.s32.totalorder %s115, %s118
    %p127 = scmp.eq.s32.totalorder %s16, 2
    %p128 = por %p126, %p127
    %p129 = scmp.ne.s32.totalorder %s118, %s119
    %p130 = scmp.eq.s32.totalorder %s16, 0
    %p131 = por %p129, %p130
    %p132 = scmp.ne.s32.totalorder %s118, %s119
    %p133 = scmp.eq.s32.totalorder %s17, 2
    %p134 = por %p132, %p133
    %p136 = scmp.ne.s32.totalorder %s119, %s135
    %p137 = scmp.eq.s32.totalorder %s17, 0
    %p138 = por %p136, %p137
    %p139 = scmp.le.s32.totalorder 1, %s11
    %p140 = scmp.lt.s32.totalorder %s11, 4
    %p141 = pnand %p139, %p140
    %p142 = pneg %p141
    // Predicated region
    $region9: #{conv_block_forward.4} parent=5 // pred_check
      _
    $region10: #{conv_block_forward.4} parent=5 // pred_check_branch
      %144 = sbr.rel (%p141) target = $region12
    $region11: #{conv_block_forward.4} parent=5 // pred_region
      %s145 = ssub.s32 %s11, 1
      // Predicated region
      $region13: #{conv_block_forward.4} parent=11 // pred_check
        %p146 = pneg %p32
      $region14: #{conv_block_forward.4} parent=11 // pred_check_branch
        %148 = sbr.rel (%p146) target = $region16
      $region15: #{conv_block_forward.4} parent=11 // pred_region
        _
      $region16: #{conv_block_forward.4} parent=11 // pred_fallthru
        _
      // Predicated region
      $region17: #{conv_block_forward.4} parent=11 // pred_check
        %p149 = pneg %p53
      $region18: #{conv_block_forward.4} parent=11 // pred_check_branch
        %151 = sbr.rel (%p149) target = $region20
      $region19: #{conv_block_forward.4} parent=11 // pred_region
        _
      $region20: #{conv_block_forward.4} parent=11 // pred_fallthru
        _
    $region12: #{conv_block_forward.4} parent=5 // pred_fallthru
      _
    %p152 = scmp.lt.s32.totalorder %s11, 3
    // Predicated region
    $region21: #{conv_block_forward.4} parent=5 // pred_check
      %p153 = pneg %p152
    $region22: #{conv_block_forward.4} parent=5 // pred_check_branch
      %155 = sbr.rel (%p153) target = $region24
    $region23: #{conv_block_forward.4} parent=5 // pred_region
      // Predicated region
      $region25: #{conv_block_forward.4} parent=23 // pred_check
        %p156 = pneg %p73
      $region26: #{conv_block_forward.4} parent=23 // pred_check_branch
        %158 = sbr.rel (%p156) target = $region28
      $region27: #{conv_block_forward.4} parent=23 // pred_region
        %s159 = smul.u32 32, %s11
        %p160 = scmp.lt.s32.totalorder %s159, 95
        %s161 = scalar_select %p160, %s159, 95
        %s162 = smul.addr %s161, 8
        %s163 = scalar_lea.vmem %s2, %s162
        %s164 = smul.u32 32, %s11
      $region28: #{conv_block_forward.4} parent=23 // pred_fallthru
        _
    $region24: #{conv_block_forward.4} parent=5 // pred_fallthru
      _
    %p165 = scmp.le.s32.totalorder 1, %s11
    %p166 = scmp.lt.s32.totalorder %s11, 4
    %p167 = pnand %p165, %p166
    %p168 = pneg %p167
    // Predicated region
    $region29: #{conv_block_forward.4} parent=5 // pred_check
      _
    $region30: #{conv_block_forward.4} parent=5 // pred_check_branch
      %170 = sbr.rel (%p167) target = $region32
    $region31: #{conv_block_forward.4} parent=5 // pred_region
      %s171 = ssub.s32 %s11, 1
      %p172 = pneg %p32
      %p173 = pneg %p29
      %p174 = pneg %p53
      %p175 = pneg %p50
      %s176 = smul.u32 32, %s16
      %p177 = scmp.lt.s32.totalorder %s176, 95
      %s178 = scalar_select %p177, %s176, 95
      %s179 = smul.addr %s178, 8
      %s180 = scalar_lea.vmem %s2, %s179
      %p181 = pneg %p79
      %p182 = pneg %p76
      %p183 = pneg %p105
      %p184 = pneg %p102
      %s185 = smul.u32 32, %s16
      %p186 = scmp.lt.s32.totalorder %s185, 95
      %s187 = scalar_select %p186, %s185, 95
      %s188 = smul.addr %s187, 8
      %s189 = scalar_lea.vmem %s3, %s188
      %p190 = pneg %p131
      %p191 = pneg %p128
      %p192 = scmp.lt.s32.totalorder %s16, 2
      %s193 = scalar_select %p192, %s16, 2
      %s194 = smul.addr %s193, 8
      %s195 = scalar_lea.vmem %s4, %s194
      %s196 = smul.u32 32, %s16
      %p197 = scmp.lt.s32.totalorder %s196, 95
      %s198 = scalar_select %p197, %s196, 95
      %s199 = smul.addr %s198, 8
      %s200 = scalar_lea.vmem %s2, %s199
      %s201 = smul.u32 32, %s16
      %s202 = smul.u32 32, %s16
      %p203 = scmp.lt.s32.totalorder %s202, 95
      %s204 = scalar_select %p203, %s202, 95
      %s205 = smul.addr %s204, 8
      %s206 = scalar_lea.vmem %s3, %s205
      %s207 = smul.u32 32, %s16
      %p208 = scmp.lt.s32.totalorder %s16, 2
      %s209 = scalar_select %p208, %s16, 2
      %s210 = smul.addr %s209, 8
      %s211 = scalar_lea.vmem %s4, %s210
      %s213 = smul.u32 %s16, 256
      %s214 = scalar_lea.vmem %s0, %s213
      %v215 = vld [vmem:[%s214] sm:$0xff]
      %v216 = vld [vmem:[%s214 + $0x8] sm:$0xff]
      %v217 = vld [vmem:[%s214 + $0x10] sm:$0xff]
      %v218 = vld [vmem:[%s214 + $0x18] sm:$0xff]
      %v219 = vld [vmem:[%s214 + $0x20] sm:$0xff]
      %v220 = vld [vmem:[%s214 + $0x28] sm:$0xff]
      %v221 = vld [vmem:[%s214 + $0x30] sm:$0xff]
      %v222 = vld [vmem:[%s214 + $0x38] sm:$0xff]
      %v223 = vld [vmem:[%s214 + $0x40] sm:$0xff]
      %v224 = vld [vmem:[%s214 + $0x48] sm:$0xff]
      %v225 = vld [vmem:[%s214 + $0x50] sm:$0xff]
      %v226 = vld [vmem:[%s214 + $0x58] sm:$0xff]
      %v227 = vld [vmem:[%s214 + $0x60] sm:$0xff]
      %v228 = vld [vmem:[%s214 + $0x68] sm:$0xff]
      %v229 = vld [vmem:[%s214 + $0x70] sm:$0xff]
      %v230 = vld [vmem:[%s214 + $0x78] sm:$0xff]
      %v231 = vld [vmem:[%s214 + $0x80] sm:$0xff]
      %v232 = vld [vmem:[%s214 + $0x88] sm:$0xff]
      %v233 = vld [vmem:[%s214 + $0x90] sm:$0xff]
      %v234 = vld [vmem:[%s214 + $0x98] sm:$0xff]
      %v235 = vld [vmem:[%s214 + $0xa0] sm:$0xff]
      %v236 = vld [vmem:[%s214 + $0xa8] sm:$0xff]
      %v237 = vld [vmem:[%s214 + $0xb0] sm:$0xff]
      %v238 = vld [vmem:[%s214 + $0xb8] sm:$0xff]
      %v239 = vld [vmem:[%s214 + $0xc0] sm:$0xff]
      %v240 = vld [vmem:[%s214 + $0xc8] sm:$0xff]
      %v241 = vld [vmem:[%s214 + $0xd0] sm:$0xff]
      %v242 = vld [vmem:[%s214 + $0xd8] sm:$0xff]
      %v243 = vld [vmem:[%s214 + $0xe0] sm:$0xff]
      %v244 = vld [vmem:[%s214 + $0xe8] sm:$0xff]
      %v245 = vld [vmem:[%s214 + $0xf0] sm:$0xff]
      %v246 = vld [vmem:[%s214 + $0xf8] sm:$0xff]
      %v247 = vpack.c.bf16 %v216, %v215
      %v248 = vpack.c.bf16 %v218, %v217
      %v249 = vpack.c.bf16 %v220, %v219
      %v250 = vpack.c.bf16 %v222, %v221
      %v251 = vpack.c.bf16 %v224, %v223
      %v252 = vpack.c.bf16 %v226, %v225
      %v253 = vpack.c.bf16 %v228, %v227
      %v254 = vpack.c.bf16 %v230, %v229
      %v255 = vpack.c.bf16 %v232, %v231
      %v256 = vpack.c.bf16 %v234, %v233
      %v257 = vpack.c.bf16 %v236, %v235
      %v258 = vpack.c.bf16 %v238, %v237
      %v259 = vpack.c.bf16 %v240, %v239
      %v260 = vpack.c.bf16 %v242, %v241
      %v261 = vpack.c.bf16 %v244, %v243
      %v262 = vpack.c.bf16 %v246, %v245
      %v263 = vld [vmem:[%s1] sm:$0xff]
      %v264 = vpack.c.bf16 %v263, %v263
      %s265 = sadd.s32 %s213, 1
      %s266 = scalar_lea.vmem %s0, %s265
      %v267 = vld [vmem:[%s266] sm:$0xff]
      %v268 = vld [vmem:[%s266 + $0x8] sm:$0xff]
      %v269 = vld [vmem:[%s266 + $0x10] sm:$0xff]
      %v270 = vld [vmem:[%s266 + $0x18] sm:$0xff]
      %v271 = vld [vmem:[%s266 + $0x20] sm:$0xff]
      %v272 = vld [vmem:[%s266 + $0x28] sm:$0xff]
      %v273 = vld [vmem:[%s266 + $0x30] sm:$0xff]
      %v274 = vld [vmem:[%s266 + $0x38] sm:$0xff]
      %v275 = vld [vmem:[%s266 + $0x40] sm:$0xff]
      %v276 = vld [vmem:[%s266 + $0x48] sm:$0xff]
      %v277 = vld [vmem:[%s266 + $0x50] sm:$0xff]
      %v278 = vld [vmem:[%s266 + $0x58] sm:$0xff]
      %v279 = vld [vmem:[%s266 + $0x60] sm:$0xff]
      %v280 = vld [vmem:[%s266 + $0x68] sm:$0xff]
      %v281 = vld [vmem:[%s266 + $0x70] sm:$0xff]
      %v282 = vld [vmem:[%s266 + $0x78] sm:$0xff]
      %v283 = vld [vmem:[%s266 + $0x80] sm:$0xff]
      %v284 = vld [vmem:[%s266 + $0x88] sm:$0xff]
      %v285 = vld [vmem:[%s266 + $0x90] sm:$0xff]
      %v286 = vld [vmem:[%s266 + $0x98] sm:$0xff]
      %v287 = vld [vmem:[%s266 + $0xa0] sm:$0xff]
      %v288 = vld [vmem:[%s266 + $0xa8] sm:$0xff]
      %v289 = vld [vmem:[%s266 + $0xb0] sm:$0xff]
      %v290 = vld [vmem:[%s266 + $0xb8] sm:$0xff]
      %v291 = vld [vmem:[%s266 + $0xc0] sm:$0xff]
      %v292 = vld [vmem:[%s266 + $0xc8] sm:$0xff]
      %v293 = vld [vmem:[%s266 + $0xd0] sm:$0xff]
      %v294 = vld [vmem:[%s266 + $0xd8] sm:$0xff]
      %v295 = vld [vmem:[%s266 + $0xe0] sm:$0xff]
      %v296 = vld [vmem:[%s266 + $0xe8] sm:$0xff]
      %v297 = vld [vmem:[%s266 + $0xf0] sm:$0xff]
      %v298 = vld [vmem:[%s266 + $0xf8] sm:$0xff]
      %v299 = vpack.c.bf16 %v268, %v267
      %v300 = vpack.c.bf16 %v270, %v269
      %v301 = vpack.c.bf16 %v272, %v271
      %v302 = vpack.c.bf16 %v274, %v273
      %v303 = vpack.c.bf16 %v276, %v275
      %v304 = vpack.c.bf16 %v278, %v277
      %v305 = vpack.c.bf16 %v280, %v279
      %v306 = vpack.c.bf16 %v282, %v281
      %v307 = vpack.c.bf16 %v284, %v283
      %v308 = vpack.c.bf16 %v286, %v285
      %v309 = vpack.c.bf16 %v288, %v287
      %v310 = vpack.c.bf16 %v290, %v289
      %v311 = vpack.c.bf16 %v292, %v291
      %v312 = vpack.c.bf16 %v294, %v293
      %v313 = vpack.c.bf16 %v296, %v295
      %v314 = vpack.c.bf16 %v298, %v297
      %s315 = scalar_lea.vmem %s1, 8
      %v316 = vld [vmem:[%s315] sm:$0xff]
      %v317 = vpack.c.bf16 %v316, %v316
      %vm318 = vcmask 64512
      %v320 = vsel %vm318, %v299, 0
      %v323 = vsel %vm318, %v300, 0
      %v326 = vsel %vm318, %v301, 0
      %v329 = vsel %vm318, %v302, 0
      %v332 = vsel %vm318, %v303, 0
      %v335 = vsel %vm318, %v304, 0
      %v338 = vsel %vm318, %v305, 0
      %v341 = vsel %vm318, %v306, 0
      %v344 = vsel %vm318, %v307, 0
      %v347 = vsel %vm318, %v308, 0
      %v350 = vsel %vm318, %v309, 0
      %v353 = vsel %vm318, %v310, 0
      %v356 = vsel %vm318, %v311, 0
      %v359 = vsel %vm318, %v312, 0
      %v362 = vsel %vm318, %v313, 0
      %v365 = vsel %vm318, %v314, 0
      %vm367 = vcmask 1043456
      %v369 = vsel %vm367, %v317, 0
      %371 = vmatprep.subr.bf16.mxu0 0
      %372 = vmatpush1.bf16.msra.mxu0 %v369
      %373 = vmatprep.subr.bf16.mxu0 0
      %374 = vmatpush1.bf16.msra.mxu0 0
      %375 = vmatprep.subr.bf16.mxu0 0
      %376 = vmatpush1.bf16.msra.mxu0 0
      %377 = vmatprep.subr.bf16.mxu0 0
      %378 = vmatpush1.bf16.msra.mxu0 0
      %379 = vmatprep.subr.bf16.mxu0 0
      %380 = vmatpush1.bf16.msra.mxu0 0
      %381 = vmatprep.subr.bf16.mxu0 0
      %382 = vmatpush1.bf16.msra.mxu0 0
      %383 = vmatprep.subr.bf16.mxu0 0
      %384 = vmatpush1.bf16.msra.mxu0 0
      %385 = vmatprep.subr.bf16.mxu0 0
      %386 = vmatpush1.bf16.msra.mxu0 0
      %387 = vmatprep.subr.bf16.mxu0 0
      %388 = vmatpush1.bf16.msra.mxu0 0
      %389 = vmatprep.subr.bf16.mxu0 0
      %390 = vmatpush1.bf16.msra.mxu0 0
      %391 = vmatprep.subr.bf16.mxu0 0
      %392 = vmatpush1.bf16.msra.mxu0 0
      %393 = vmatprep.subr.bf16.mxu0 0
      %394 = vmatpush1.bf16.msra.mxu0 0
      %395 = vmatprep.subr.bf16.mxu0 0
      %396 = vmatpush1.bf16.msra.mxu0 0
      %397 = vmatprep.subr.bf16.mxu0 0
      %398 = vmatpush1.bf16.msra.mxu0 0
      %399 = vmatprep.subr.bf16.mxu0 0
      %400 = vmatpush1.bf16.msra.mxu0 0
      %401 = vmatprep.subr.bf16.mxu0 0
      %402 = vmatpush1.bf16.msra.mxu0 0
      %403 = vmatprep.mubr.bf16.mxu0 0
      %404 = vmatmul.mubr.bf16.gmra.mrb[0].mxu0 %v320
      %v405 = vpop.f32.mrb[0].mxu0
      %v406 = vadd.f32 0.0, %v405
      %v407 = vpop.f32.mrb[0].mxu0
      %v408 = vpop.f32.mrb[0].mxu0
      %v409 = vadd.f32 0.0, %v408
      %v410 = vpop.f32.mrb[0].mxu0
      %411 = vmatprep.mubr.bf16.mxu0 0
      %412 = vmatmul.mubr.bf16.gmra.mrb[0].mxu0 %v323
      %v413 = vpop.f32.mrb[0].mxu0
      %v414 = vadd.f32 0.0, %v413
      %v415 = vpop.f32.mrb[0].mxu0
      %v416 = vpop.f32.mrb[0].mxu0
      %v417 = vadd.f32 0.0, %v416
      %v418 = vpop.f32.mrb[0].mxu0
      %419 = vmatprep.mubr.bf16.mxu0 0
      %420 = vmatmul.mubr.bf16.gmra.mrb[0].mxu0 %v326
      %v421 = vpop.f32.mrb[0].mxu0
      %v422 = vadd.f32 0.0, %v421
      %v423 = vpop.f32.mrb[0].mxu0
      %v424 = vpop.f32.mrb[0].mxu0
      %v425 = vadd.f32 0.0, %v424
      %v426 = vpop.f32.mrb[0].mxu0
      %427 = vmatprep.mubr.bf16.mxu0 0
      %428 = vmatmul.mubr.bf16.gmra.mrb[0].mxu0 %v329
      %v429 = vpop.f32.mrb[0].mxu0
      %v430 = vadd.f32 0.0, %v429
      %v431 = vpop.f32.mrb[0].mxu0
      %v432 = vpop.f32.mrb[0].mxu0
      %v433 = vadd.f32 0.0, %v432
      %v434 = vpop.f32.mrb[0].mxu0
      %435 = vmatprep.mubr.bf16.mxu0 0
      %436 = vmatmul.mubr.bf16.gmra.mrb[0].mxu0 %v332
      %v437 = vpop.f32.mrb[0].mxu0
      %v438 = vadd.f32 0.0, %v437
      %v439 = vpop.f32.mrb[0].mxu0
      %v440 = vpop.f32.mrb[0].mxu0
      %v441 = vadd.f32 0.0, %v440
      %v442 = vpop.f32.mrb[0].mxu0
      %443 = vmatprep.mubr.bf16.mxu0 0
      %444 = vmatmul.mubr.bf16.gmra.mrb[0].mxu0 %v335
      %v445 = vpop.f32.mrb[0].mxu0
      %v446 = vadd.f32 0.0, %v445
      %v447 = vpop.f32.mrb[0].mxu0
      %v448 = vpop.f32.mrb[0].mxu0
      %v449 = vadd.f32 0.0, %v448
      %v450 = vpop.f32.mrb[0].mxu0
      %451 = vmatprep.mubr.bf16.mxu0 0
      %452 = vmatmul.mubr.bf16.gmra.mrb[0].mxu0 %v338
      %v453 = vpop.f32.mrb[0].mxu0
      %v454 = vadd.f32 0.0, %v453
      %v455 = vpop.f32.mrb[0].mxu0
      %v456 = vpop.f32.mrb[0].mxu0
      %v457 = vadd.f32 0.0, %v456
      %v458 = vpop.f32.mrb[0].mxu0
      %459 = vmatprep.mubr.bf16.mxu0 0
      %460 = vmatmul.mubr.bf16.gmra.mrb[0].mxu0 %v341
      %v461 = vpop.f32.mrb[0].mxu0
      %v462 = vadd.f32 0.0, %v461
      %v463 = vpop.f32.mrb[0].mxu0
      %v464 = vpop.f32.mrb[0].mxu0
      %v465 = vadd.f32 0.0, %v464
      %v466 = vpop.f32.mrb[0].mxu0
      %467 = vmatprep.mubr.bf16.mxu0 0
      %468 = vmatmul.mubr.bf16.gmra.mrb[0].mxu0 %v344
      %v469 = vpop.f32.mrb[0].mxu0
      %v470 = vadd.f32 0.0, %v469
      %v471 = vpop.f32.mrb[0].mxu0
      %v472 = vpop.f32.mrb[0].mxu0
      %v473 = vadd.f32 0.0, %v472
      %v474 = vpop.f32.mrb[0].mxu0
      %475 = vmatprep.mubr.bf16.mxu0 0
      %476 = vmatmul.mubr.bf16.gmra.mrb[0].mxu0 %v347
      %v477 = vpop.f32.mrb[0].mxu0
      %v478 = vadd.f32 0.0, %v477
      %v479 = vpop.f32.mrb[0].mxu0
      %v480 = vpop.f32.mrb[0].mxu0
      %v481 = vadd.f32 0.0, %v480
      %v482 = vpop.f32.mrb[0].mxu0
      %483 = vmatprep.mubr.bf16.mxu0 0
      %484 = vmatmul.mubr.bf16.gmra.mrb[0].mxu0 %v350
      %v485 = vpop.f32.mrb[0].mxu0
      %v486 = vadd.f32 0.0, %v485
      %v487 = vpop.f32.mrb[0].mxu0
      %v488 = vpop.f32.mrb[0].mxu0
      %v489 = vadd.f32 0.0, %v488
      %v490 = vpop.f32.mrb[0].mxu0
      %491 = vmatprep.mubr.bf16.mxu0 0
      %492 = vmatmul.mubr.bf16.gmra.mrb[0].mxu0 %v353
      %v493 = vpop.f32.mrb[0].mxu0
      %v494 = vadd.f32 0.0, %v493
      %v495 = vpop.f32.mrb[0].mxu0
      %v496 = vpop.f32.mrb[0].mxu0
      %v497 = vadd.f32 0.0, %v496
      %v498 = vpop.f32.mrb[0].mxu0
      %499 = vmatprep.mubr.bf16.mxu0 0
      %500 = vmatmul.mubr.bf16.gmra.mrb[0].mxu0 %v356
      %v501 = vpop.f32.mrb[0].mxu0
      %v502 = vadd.f32 0.0, %v501
      %v503 = vpop.f32.mrb[0].mxu0
      %v504 = vpop.f32.mrb[0].mxu0
      %v505 = vadd.f32 0.0, %v504
      %v506 = vpop.f32.mrb[0].mxu0
      %507 = vmatprep.mubr.bf16.mxu0 0
      %508 = vmatmul.mubr.bf16.gmra.mrb[0].mxu0 %v359
      %v509 = vpop.f32.mrb[0].mxu0
      %v510 = vadd.f32 0.0, %v509
      %v511 = vpop.f32.mrb[0].mxu0
      %v512 = vpop.f32.mrb[0].mxu0
      %v513 = vadd.f32 0.0, %v512
      %v514 = vpop.f32.mrb[0].mxu0
      %515 = vmatprep.mubr.bf16.mxu0 0
      %516 = vmatmul.mubr.bf16.gmra.mrb[0].mxu0 %v362
      %v517 = vpop.f32.mrb[0].mxu0
      %v518 = vadd.f32 0.0, %v517
      %v519 = vpop.f32.mrb[0].mxu0
      %v520 = vpop.f32.mrb[0].mxu0
      %v521 = vadd.f32 0.0, %v520
      %v522 = vpop.f32.mrb[0].mxu0
      %523 = vmatprep.mubr.bf16.mxu0 0
      %524 = vmatmul.mubr.bf16.gmra.mrb[0].mxu0 %v365
      %v525 = vpop.f32.mrb[0].mxu0
      %v526 = vadd.f32 0.0, %v525
      %v527 = vpop.f32.mrb[0].mxu0
      %v528 = vpop.f32.mrb[0].mxu0
      %v529 = vadd.f32 0.0, %v528
      %v530 = vpop.f32.mrb[0].mxu0
      %531 = vdwg.mxu0
      %v533 = vsel %vm318, %v247, 0
      %v536 = vsel %vm318, %v248, 0
      %v539 = vsel %vm318, %v249, 0
      %v542 = vsel %vm318, %v250, 0
      %v545 = vsel %vm318, %v251, 0
      %v548 = vsel %vm318, %v252, 0
      %v551 = vsel %vm318, %v253, 0
      %v554 = vsel %vm318, %v254, 0
      %v557 = vsel %vm318, %v255, 0
      %v560 = vsel %vm318, %v256, 0
      %v563 = vsel %vm318, %v257, 0
      %v566 = vsel %vm318, %v258, 0
      %v569 = vsel %vm318, %v259, 0
      %v572 = vsel %vm318, %v260, 0
      %v575 = vsel %vm318, %v261, 0
      %v578 = vsel %vm318, %v262, 0
      %v581 = vsel %vm367, %v264, 0
      %583 = vmatprep.subr.bf16.mxu0 0
      %584 = vmatpush1.bf16.msra.mxu0 %v581
      %585 = vmatprep.subr.bf16.mxu0 0
      %586 = vmatpush1.bf16.msra.mxu0 0
      %587 = vmatprep.subr.bf16.mxu0 0
      %588 = vmatpush1.bf16.msra.mxu0 0
      %589 = vmatprep.subr.bf16.mxu0 0
      %590 = vmatpush1.bf16.msra.mxu0 0
      %591 = vmatprep.subr.bf16.mxu0 0
      %592 = vmatpush1.bf16.msra.mxu0 0
      %593 = vmatprep.subr.bf16.mxu0 0
      %594 = vmatpush1.bf16.msra.mxu0 0
      %595 = vmatprep.subr.bf16.mxu0 0
      %596 = vmatpush1.bf16.msra.mxu0 0
      %597 = vmatprep.subr.bf16.mxu0 0
      %598 = vmatpush1.bf16.msra.mxu0 0
      %599 = vmatprep.subr.bf16.mxu0 0
      %600 = vmatpush1.bf16.msra.mxu0 0
      %601 = vmatprep.subr.bf16.mxu0 0
      %602 = vmatpush1.bf16.msra.mxu0 0
      %603 = vmatprep.subr.bf16.mxu0 0
      %604 = vmatpush1.bf16.msra.mxu0 0
      %605 = vmatprep.subr.bf16.mxu0 0
      %606 = vmatpush1.bf16.msra.mxu0 0
      %607 = vmatprep.subr.bf16.mxu0 0
      %608 = vmatpush1.bf16.msra.mxu0 0
      %609 = vmatprep.subr.bf16.mxu0 0
      %610 = vmatpush1.bf16.msra.mxu0 0
      %611 = vmatprep.subr.bf16.mxu0 0
      %612 = vmatpush1.bf16.msra.mxu0 0
      %613 = vmatprep.subr.bf16.mxu0 0
      %614 = vmatpush1.bf16.msra.mxu0 0
      %615 = vmatprep.mubr.bf16.mxu0 0
      %616 = vmatmul.mubr.bf16.gmra.mrb[0].mxu0 %v533
      %v617 = vpop.f32.mrb[0].mxu0
      %v618 = vadd.f32 %v406, %v617
      %v619 = vpop.f32.mrb[0].mxu0
      %v620 = vpop.f32.mrb[0].mxu0
      %v621 = vadd.f32 %v409, %v620
      %v622 = vpop.f32.mrb[0].mxu0
      %623 = vmatprep.mubr.bf16.mxu0 0
      %624 = vmatmul.mubr.bf16.gmra.mrb[0].mxu0 %v536
      %v625 = vpop.f32.mrb[0].mxu0
      %v626 = vadd.f32 %v414, %v625
      %v627 = vpop.f32.mrb[0].mxu0
      %v628 = vpop.f32.mrb[0].mxu0
      %v629 = vadd.f32 %v417, %v628
      %v630 = vpop.f32.mrb[0].mxu0
      %631 = vmatprep.mubr.bf16.mxu0 0
      %632 = vmatmul.mubr.bf16.gmra.mrb[0].mxu0 %v539
      %v633 = vpop.f32.mrb[0].mxu0
      %v634 = vadd.f32 %v422, %v633
      %v635 = vpop.f32.mrb[0].mxu0
      %v636 = vpop.f32.mrb[0].mxu0
      %v637 = vadd.f32 %v425, %v636
      %v638 = vpop.f32.mrb[0].mxu0
      %639 = vmatprep.mubr.bf16.mxu0 0
      %640 = vmatmul.mubr.bf16.gmra.mrb[0].mxu0 %v542
      %v641 = vpop.f32.mrb[0].mxu0
      %v642 = vadd.f32 %v430, %v641
      %v643 = vpop.f32.mrb[0].mxu0
      %v644 = vpop.f32.mrb[0].mxu0
      %v645 = vadd.f32 %v433, %v644
      %v646 = vpop.f32.mrb[0].mxu0
      %647 = vmatprep.mubr.bf16.mxu0 0
      %648 = vmatmul.mubr.bf16.gmra.mrb[0].mxu0 %v545
      %v649 = vpop.f32.mrb[0].mxu0
      %v650 = vadd.f32 %v438, %v649
      %v651 = vpop.f32.mrb[0].mxu0
      %v652 = vpop.f32.mrb[0].mxu0
      %v653 = vadd.f32 %v441, %v652
      %v654 = vpop.f32.mrb[0].mxu0
      %655 = vmatprep.mubr.bf16.mxu0 0
      %656 = vmatmul.mubr.bf16.gmra.mrb[0].mxu0 %v548
      %v657 = vpop.f32.mrb[0].mxu0
      %v658 = vadd.f32 %v446, %v657
      %v659 = vpop.f32.mrb[0].mxu0
      %v660 = vpop.f32.mrb[0].mxu0
      %v661 = vadd.f32 %v449, %v660
      %v662 = vpop.f32.mrb[0].mxu0
      %663 = vmatprep.mubr.bf16.mxu0 0
      %664 = vmatmul.mubr.bf16.gmra.mrb[0].mxu0 %v551
      %v665 = vpop.f32.mrb[0].mxu0
      %v666 = vadd.f32 %v454, %v665
      %v667 = vpop.f32.mrb[0].mxu0
      %v668 = vpop.f32.mrb[0].mxu0
      %v669 = vadd.f32 %v457, %v668
      %v670 = vpop.f32.mrb[0].mxu0
      %671 = vmatprep.mubr.bf16.mxu0 0
      %672 = vmatmul.mubr.bf16.gmra.mrb[0].mxu0 %v554
      %v673 = vpop.f32.mrb[0].mxu0
      %v674 = vadd.f32 %v462, %v673
      %v675 = vpop.f32.mrb[0].mxu0
      %v676 = vpop.f32.mrb[0].mxu0
      %v677 = vadd.f32 %v465, %v676
      %v678 = vpop.f32.mrb[0].mxu0
      %679 = vmatprep.mubr.bf16.mxu0 0
      %680 = vmatmul.mubr.bf16.gmra.mrb[0].mxu0 %v557
      %v681 = vpop.f32.mrb[0].mxu0
      %v682 = vadd.f32 %v470, %v681
      %v683 = vpop.f32.mrb[0].mxu0
      %v684 = vpop.f32.mrb[0].mxu0
      %v685 = vadd.f32 %v473, %v684
      %v686 = vpop.f32.mrb[0].mxu0
      %687 = vmatprep.mubr.bf16.mxu0 0
      %688 = vmatmul.mubr.bf16.gmra.mrb[0].mxu0 %v560
      %v689 = vpop.f32.mrb[0].mxu0
      %v690 = vadd.f32 %v478, %v689
      %v691 = vpop.f32.mrb[0].mxu0
      %v692 = vpop.f32.mrb[0].mxu0
      %v693 = vadd.f32 %v481, %v692
      %v694 = vpop.f32.mrb[0].mxu0
      %695 = vmatprep.mubr.bf16.mxu0 0
      %696 = vmatmul.mubr.bf16.gmra.mrb[0].mxu0 %v563
      %v697 = vpop.f32.mrb[0].mxu0
      %v698 = vadd.f32 %v486, %v697
      %v699 = vpop.f32.mrb[0].mxu0
      %v700 = vpop.f32.mrb[0].mxu0
      %v701 = vadd.f32 %v489, %v700
      %v702 = vpop.f32.mrb[0].mxu0
      %703 = vmatprep.mubr.bf16.mxu0 0
      %704 = vmatmul.mubr.bf16.gmra.mrb[0].mxu0 %v566
      %v705 = vpop.f32.mrb[0].mxu0
      %v706 = vadd.f32 %v494, %v705
      %v707 = vpop.f32.mrb[0].mxu0
      %v708 = vpop.f32.mrb[0].mxu0
      %v709 = vadd.f32 %v497, %v708
      %v710 = vpop.f32.mrb[0].mxu0
      %711 = vmatprep.mubr.bf16.mxu0 0
      %712 = vmatmul.mubr.bf16.gmra.mrb[0].mxu0 %v569
      %v713 = vpop.f32.mrb[0].mxu0
      %v714 = vadd.f32 %v502, %v713
      %v715 = vpop.f32.mrb[0].mxu0
      %v716 = vpop.f32.mrb[0].mxu0
      %v717 = vadd.f32 %v505, %v716
      %v718 = vpop.f32.mrb[0].mxu0
      %719 = vmatprep.mubr.bf16.mxu0 0
      %720 = vmatmul.mubr.bf16.gmra.mrb[0].mxu0 %v572
      %v721 = vpop.f32.mrb[0].mxu0
      %v722 = vadd.f32 %v510, %v721
      %v723 = vpop.f32.mrb[0].mxu0
      %v724 = vpop.f32.mrb[0].mxu0
      %v725 = vadd.f32 %v513, %v724
      %v726 = vpop.f32.mrb[0].mxu0
      %727 = vmatprep.mubr.bf16.mxu0 0
      %728 = vmatmul.mubr.bf16.gmra.mrb[0].mxu0 %v575
      %v729 = vpop.f32.mrb[0].mxu0
      %v730 = vadd.f32 %v518, %v729
      %v731 = vpop.f32.mrb[0].mxu0
      %v732 = vpop.f32.mrb[0].mxu0
      %v733 = vadd.f32 %v521, %v732
      %v734 = vpop.f32.mrb[0].mxu0
      %735 = vmatprep.mubr.bf16.mxu0 0
      %736 = vmatmul.mubr.bf16.gmra.mrb[0].mxu0 %v578
      %v737 = vpop.f32.mrb[0].mxu0
      %v738 = vadd.f32 %v526, %v737
      %v739 = vpop.f32.mrb[0].mxu0
      %v740 = vpop.f32.mrb[0].mxu0
      %v741 = vadd.f32 %v529, %v740
      %v742 = vpop.f32.mrb[0].mxu0
      %743 = vdwg.mxu0
      %s744 = sadd.s32 %s213, 2
      %s745 = scalar_lea.vmem %s0, %s744
      %v746 = vld [vmem:[%s745] sm:$0xff]
      %v747 = vld [vmem:[%s745 + $0x8] sm:$0xff]
      %v748 = vld [vmem:[%s745 + $0x10] sm:$0xff]
      %v749 = vld [vmem:[%s745 + $0x18] sm:$0xff]
      %v750 = vld [vmem:[%s745 + $0x20] sm:$0xff]
      %v751 = vld [vmem:[%s745 + $0x28] sm:$0xff]
      %v752 = vld [vmem:[%s745 + $0x30] sm:$0xff]
      %v753 = vld [vmem:[%s745 + $0x38] sm:$0xff]
      %v754 = vld [vmem:[%s745 + $0x40] sm:$0xff]
      %v755 = vld [vmem:[%s745 + $0x48] sm:$0xff]
      %v756 = vld [vmem:[%s745 + $0x50] sm:$0xff]
      %v757 = vld [vmem:[%s745 + $0x58] sm:$0xff]
      %v758 = vld [vmem:[%s745 + $0x60] sm:$0xff]
      %v759 = vld [vmem:[%s745 + $0x68] sm:$0xff]
      %v760 = vld [vmem:[%s745 + $0x70] sm:$0xff]
      %v761 = vld [vmem:[%s745 + $0x78] sm:$0xff]
      %v762 = vld [vmem:[%s745 + $0x80] sm:$0xff]
      %v763 = vld [vmem:[%s745 + $0x88] sm:$0xff]
      %v764 = vld [vmem:[%s745 + $0x90] sm:$0xff]
      %v765 = vld [vmem:[%s745 + $0x98] sm:$0xff]
      %v766 = vld [vmem:[%s745 + $0xa0] sm:$0xff]
      %v767 = vld [vmem:[%s745 + $0xa8] sm:$0xff]
      %v768 = vld [vmem:[%s745 + $0xb0] sm:$0xff]
      %v769 = vld [vmem:[%s745 + $0xb8] sm:$0xff]
      %v770 = vld [vmem:[%s745 + $0xc0] sm:$0xff]
      %v771 = vld [vmem:[%s745 + $0xc8] sm:$0xff]
      %v772 = vld [vmem:[%s745 + $0xd0] sm:$0xff]
      %v773 = vld [vmem:[%s745 + $0xd8] sm:$0xff]
      %v774 = vld [vmem:[%s745 + $0xe0] sm:$0xff]
      %v775 = vld [vmem:[%s745 + $0xe8] sm:$0xff]
      %v776 = vld [vmem:[%s745 + $0xf0] sm:$0xff]
      %v777 = vld [vmem:[%s745 + $0xf8] sm:$0xff]
      %v778 = vpack.c.bf16 %v747, %v746
      %v779 = vpack.c.bf16 %v749, %v748
      %v780 = vpack.c.bf16 %v751, %v750
      %v781 = vpack.c.bf16 %v753, %v752
      %v782 = vpack.c.bf16 %v755, %v754
      %v783 = vpack.c.bf16 %v757, %v756
      %v784 = vpack.c.bf16 %v759, %v758
      %v785 = vpack.c.bf16 %v761, %v760
      %v786 = vpack.c.bf16 %v763, %v762
      %v787 = vpack.c.bf16 %v765, %v764
      %v788 = vpack.c.bf16 %v767, %v766
      %v789 = vpack.c.bf16 %v769, %v768
      %v790 = vpack.c.bf16 %v771, %v770
      %v791 = vpack.c.bf16 %v773, %v772
      %v792 = vpack.c.bf16 %v775, %v774
      %v793 = vpack.c.bf16 %v777, %v776
      %s794 = scalar_lea.vmem %s1, 16
      %v795 = vld [vmem:[%s794] sm:$0xff]
      %v796 = vpack.c.bf16 %v795, %v795
      %v798 = vsel %vm318, %v778, 0
      %v801 = vsel %vm318, %v779, 0
      %v804 = vsel %vm318, %v780, 0
      %v807 = vsel %vm318, %v781, 0
      %v810 = vsel %vm318, %v782, 0
      %v813 = vsel %vm318, %v783, 0
      %v816 = vsel %vm318, %v784, 0
      %v819 = vsel %vm318, %v785, 0
      %v822 = vsel %vm318, %v786, 0
      %v825 = vsel %vm318, %v787, 0
      %v828 = vsel %vm318, %v788, 0
      %v831 = vsel %vm318, %v789, 0
      %v834 = vsel %vm318, %v790, 0
      %v837 = vsel %vm318, %v791, 0
      %v840 = vsel %vm318, %v792, 0
      %v843 = vsel %vm318, %v793, 0
      %v846 = vsel %vm367, %v796, 0
      %848 = vmatprep.subr.bf16.mxu0 0
      %849 = vmatpush1.bf16.msra.mxu0 %v846
      %850 = vmatprep.subr.bf16.mxu0 0
      %851 = vmatpush1.bf16.msra.mxu0 0
      %852 = vmatprep.subr.bf16.mxu0 0
      %853 = vmatpush1.bf16.msra.mxu0 0
      %854 = vmatprep.subr.bf16.mxu0 0
      %855 = vmatpush1.bf16.msra.mxu0 0
      %856 = vmatprep.subr.bf16.mxu0 0
      %857 = vmatpush1.bf16.msra.mxu0 0
      %858 = vmatprep.subr.bf16.mxu0 0
      %859 = vmatpush1.bf16.msra.mxu0 0
      %860 = vmatprep.subr.bf16.mxu0 0
      %861 = vmatpush1.bf16.msra.mxu0 0
      %862 = vmatprep.subr.bf16.mxu0 0
      %863 = vmatpush1.bf16.msra.mxu0 0
      %864 = vmatprep.subr.bf16.mxu0 0
      %865 = vmatpush1.bf16.msra.mxu0 0
      %866 = vmatprep.subr.bf16.mxu0 0
      %867 = vmatpush1.bf16.msra.mxu0 0
      %868 = vmatprep.subr.bf16.mxu0 0
      %869 = vmatpush1.bf16.msra.mxu0 0
      %870 = vmatprep.subr.bf16.mxu0 0
      %871 = vmatpush1.bf16.msra.mxu0 0
      %872 = vmatprep.subr.bf16.mxu0 0
      %873 = vmatpush1.bf16.msra.mxu0 0
      %874 = vmatprep.subr.bf16.mxu0 0
      %875 = vmatpush1.bf16.msra.mxu0 0
      %876 = vmatprep.subr.bf16.mxu0 0
      %877 = vmatpush1.bf16.msra.mxu0 0
      %878 = vmatprep.subr.bf16.mxu0 0
      %879 = vmatpush1.bf16.msra.mxu0 0
      %880 = vmatprep.mubr.bf16.mxu0 0
      %881 = vmatmul.mubr.bf16.gmra.mrb[0].mxu0 %v798
      %v882 = vpop.f32.mrb[0].mxu0
      %v883 = vadd.f32 0.0, %v882
      %v884 = vpop.f32.mrb[0].mxu0
      %v885 = vpop.f32.mrb[0].mxu0
      %v886 = vadd.f32 0.0, %v885
      %v887 = vpop.f32.mrb[0].mxu0
      %888 = vmatprep.mubr.bf16.mxu0 0
      %889 = vmatmul.mubr.bf16.gmra.mrb[0].mxu0 %v801
      %v890 = vpop.f32.mrb[0].mxu0
      %v891 = vadd.f32 0.0, %v890
      %v892 = vpop.f32.mrb[0].mxu0
      %v893 = vpop.f32.mrb[0].mxu0
      %v894 = vadd.f32 0.0, %v893
      %v895 = vpop.f32.mrb[0].mxu0
      %896 = vmatprep.mubr.bf16.mxu0 0
      %897 = vmatmul.mubr.bf16.gmra.mrb[0].mxu0 %v804
      %v898 = vpop.f32.mrb[0].mxu0
      %v899 = vadd.f32 0.0, %v898
      %v900 = vpop.f32.mrb[0].mxu0
      %v901 = vpop.f32.mrb[0].mxu0
      %v902 = vadd.f32 0.0, %v901
      %v903 = vpop.f32.mrb[0].mxu0
      %904 = vmatprep.mubr.bf16.mxu0 0
      %905 = vmatmul.mubr.bf16.gmra.mrb[0].mxu0 %v807
      %v906 = vpop.f32.mrb[0].mxu0
      %v907 = vadd.f32 0.0, %v906
      %v908 = vpop.f32.mrb[0].mxu0
      %v909 = vpop.f32.mrb[0].mxu0
      %v910 = vadd.f32 0.0, %v909
      %v911 = vpop.f32.mrb[0].mxu0
      %912 = vmatprep.mubr.bf16.mxu0 0
      %913 = vmatmul.mubr.bf16.gmra.mrb[0].mxu0 %v810
      %v914 = vpop.f32.mrb[0].mxu0
      %v915 = vadd.f32 0.0, %v914
      %v916 = vpop.f32.mrb[0].mxu0
      %v917 = vpop.f32.mrb[0].mxu0
      %v918 = vadd.f32 0.0, %v917
      %v919 = vpop.f32.mrb[0].mxu0
      %920 = vmatprep.mubr.bf16.mxu0 0
      %921 = vmatmul.mubr.bf16.gmra.mrb[0].mxu0 %v813
      %v922 = vpop.f32.mrb[0].mxu0
      %v923 = vadd.f32 0.0, %v922
      %v924 = vpop.f32.mrb[0].mxu0
      %v925 = vpop.f32.mrb[0].mxu0
      %v926 = vadd.f32 0.0, %v925
      %v927 = vpop.f32.mrb[0].mxu0
      %928 = vmatprep.mubr.bf16.mxu0 0
      %929 = vmatmul.mubr.bf16.gmra.mrb[0].mxu0 %v816
      %v930 = vpop.f32.mrb[0].mxu0
      %v931 = vadd.f32 0.0, %v930
      %v932 = vpop.f32.mrb[0].mxu0
      %v933 = vpop.f32.mrb[0].mxu0
      %v934 = vadd.f32 0.0, %v933
      %v935 = vpop.f32.mrb[0].mxu0
      %936 = vmatprep.mubr.bf16.mxu0 0
      %937 = vmatmul.mubr.bf16.gmra.mrb[0].mxu0 %v819
      %v938 = vpop.f32.mrb[0].mxu0
      %v939 = vadd.f32 0.0, %v938
      %v940 = vpop.f32.mrb[0].mxu0
      %v941 = vpop.f32.mrb[0].mxu0
      %v942 = vadd.f32 0.0, %v941
      %v943 = vpop.f32.mrb[0].mxu0
      %944 = vmatprep.mubr.bf16.mxu0 0
      %945 = vmatmul.mubr.bf16.gmra.mrb[0].mxu0 %v822
      %v946 = vpop.f32.mrb[0].mxu0
      %v947 = vadd.f32 0.0, %v946
      %v948 = vpop.f32.mrb[0].mxu0
      %v949 = vpop.f32.mrb[0].mxu0
      %v950 = vadd.f32 0.0, %v949
      %v951 = vpop.f32.mrb[0].mxu0
      %952 = vmatprep.mubr.bf16.mxu0 0
      %953 = vmatmul.mubr.bf16.gmra.mrb[0].mxu0 %v825
      %v954 = vpop.f32.mrb[0].mxu0
      %v955 = vadd.f32 0.0, %v954
      %v956 = vpop.f32.mrb[0].mxu0
      %v957 = vpop.f32.mrb[0].mxu0
      %v958 = vadd.f32 0.0, %v957
      %v959 = vpop.f32.mrb[0].mxu0
      %960 = vmatprep.mubr.bf16.mxu0 0
      %961 = vmatmul.mubr.bf16.gmra.mrb[0].mxu0 %v828
      %v962 = vpop.f32.mrb[0].mxu0
      %v963 = vadd.f32 0.0, %v962
      %v964 = vpop.f32.mrb[0].mxu0
      %v965 = vpop.f32.mrb[0].mxu0
      %v966 = vadd.f32 0.0, %v965
      %v967 = vpop.f32.mrb[0].mxu0
      %968 = vmatprep.mubr.bf16.mxu0 0
      %969 = vmatmul.mubr.bf16.gmra.mrb[0].mxu0 %v831
      %v970 = vpop.f32.mrb[0].mxu0
      %v971 = vadd.f32 0.0, %v970
      %v972 = vpop.f32.mrb[0].mxu0
      %v973 = vpop.f32.mrb[0].mxu0
      %v974 = vadd.f32 0.0, %v973
      %v975 = vpop.f32.mrb[0].mxu0
      %976 = vmatprep.mubr.bf16.mxu0 0
      %977 = vmatmul.mubr.bf16.gmra.mrb[0].mxu0 %v834
      %v978 = vpop.f32.mrb[0].mxu0
      %v979 = vadd.f32 0.0, %v978
      %v980 = vpop.f32.mrb[0].mxu0
      %v981 = vpop.f32.mrb[0].mxu0
      %v982 = vadd.f32 0.0, %v981
      %v983 = vpop.f32.mrb[0].mxu0
      %984 = vmatprep.mubr.bf16.mxu0 0
      %985 = vmatmul.mubr.bf16.gmra.mrb[0].mxu0 %v837
      %v986 = vpop.f32.mrb[0].mxu0
      %v987 = vadd.f32 0.0, %v986
      %v988 = vpop.f32.mrb[0].mxu0
      %v989 = vpop.f32.mrb[0].mxu0
      %v990 = vadd.f32 0.0, %v989
      %v991 = vpop.f32.mrb[0].mxu0
      %992 = vmatprep.mubr.bf16.mxu0 0
      %993 = vmatmul.mubr.bf16.gmra.mrb[0].mxu0 %v840
      %v994 = vpop.f32.mrb[0].mxu0
      %v995 = vadd.f32 0.0, %v994
      %v996 = vpop.f32.mrb[0].mxu0
      %v997 = vpop.f32.mrb[0].mxu0
      %v998 = vadd.f32 0.0, %v997
      %v999 = vpop.f32.mrb[0].mxu0
      %1000 = vmatprep.mubr.bf16.mxu0 0
      %1001 = vmatmul.mubr.bf16.gmra.mrb[0].mxu0 %v843
      %v1002 = vpop.f32.mrb[0].mxu0
      %v1003 = vadd.f32 0.0, %v1002
      %v1004 = vpop.f32.mrb[0].mxu0
      %v1005 = vpop.f32.mrb[0].mxu0
      %v1006 = vadd.f32 0.0, %v1005
      %v1007 = vpop.f32.mrb[0].mxu0
      %1008 = vdwg.mxu0
      %v1009 = vadd.f32 %v618, %v883
      %v1010 = vadd.f32 %v621, %v886
      %v1011 = vadd.f32 %v626, %v891
      %v1012 = vadd.f32 %v629, %v894
      %v1013 = vadd.f32 %v634, %v899
      %v1014 = vadd.f32 %v637, %v902
      %v1015 = vadd.f32 %v642, %v907
      %v1016 = vadd.f32 %v645, %v910
      %v1017 = vadd.f32 %v650, %v915
      %v1018 = vadd.f32 %v653, %v918
      %v1019 = vadd.f32 %v658, %v923
      %v1020 = vadd.f32 %v661, %v926
      %v1021 = vadd.f32 %v666, %v931
      %v1022 = vadd.f32 %v669, %v934
      %v1023 = vadd.f32 %v674, %v939
      %v1024 = vadd.f32 %v677, %v942
      %v1025 = vadd.f32 %v682, %v947
      %v1026 = vadd.f32 %v685, %v950
      %v1027 = vadd.f32 %v690, %v955
      %v1028 = vadd.f32 %v693, %v958
      %v1029 = vadd.f32 %v698, %v963
      %v1030 = vadd.f32 %v701, %v966
      %v1031 = vadd.f32 %v706, %v971
      %v1032 = vadd.f32 %v709, %v974
      %v1033 = vadd.f32 %v714, %v979
      %v1034 = vadd.f32 %v717, %v982
      %v1035 = vadd.f32 %v722, %v987
      %v1036 = vadd.f32 %v725, %v990
      %v1037 = vadd.f32 %v730, %v995
      %v1038 = vadd.f32 %v733, %v998
      %v1039 = vadd.f32 %v738, %v1003
      %v1040 = vadd.f32 %v741, %v1006
      %s1041 = sadd.s32 %s213, 18
      %s1042 = scalar_lea.vmem %s0, %s1041
      %v1043 = vld [vmem:[%s1042] sm:$0xff]
      %v1044 = vld [vmem:[%s1042 + $0x8] sm:$0xff]
      %v1045 = vld [vmem:[%s1042 + $0x10] sm:$0xff]
      %v1046 = vld [vmem:[%s1042 + $0x18] sm:$0xff]
      %v1047 = vld [vmem:[%s1042 + $0x20] sm:$0xff]
      %v1048 = vld [vmem:[%s1042 + $0x28] sm:$0xff]
      %v1049 = vld [vmem:[%s1042 + $0x30] sm:$0xff]
      %v1050 = vld [vmem:[%s1042 + $0x38] sm:$0xff]
      %v1051 = vld [vmem:[%s1042 + $0x40] sm:$0xff]
      %v1052 = vld [vmem:[%s1042 + $0x48] sm:$0xff]
      %v1053 = vld [vmem:[%s1042 + $0x50] sm:$0xff]
      %v1054 = vld [vmem:[%s1042 + $0x58] sm:$0xff]
      %v1055 = vld [vmem:[%s1042 + $0x60] sm:$0xff]
      %v1056 = vld [vmem:[%s1042 + $0x68] sm:$0xff]
      %v1057 = vld [vmem:[%s1042 + $0x70] sm:$0xff]
      %v1058 = vld [vmem:[%s1042 + $0x78] sm:$0xff]
      %v1059 = vld [vmem:[%s1042 + $0x80] sm:$0xff]
      %v1060 = vld [vmem:[%s1042 + $0x88] sm:$0xff]
      %v1061 = vld [vmem:[%s1042 + $0x90] sm:$0xff]
      %v1062 = vld [vmem:[%s1042 + $0x98] sm:$0xff]
      %v1063 = vld [vmem:[%s1042 + $0xa0] sm:$0xff]
      %v1064 = vld [vmem:[%s1042 + $0xa8] sm:$0xff]
      %v1065 = vld [vmem:[%s1042 + $0xb0] sm:$0xff]
      %v1066 = vld [vmem:[%s1042 + $0xb8] sm:$0xff]
      %v1067 = vld [vmem:[%s1042 + $0xc0] sm:$0xff]
      %v1068 = vld [vmem:[%s1042 + $0xc8] sm:$0xff]
      %v1069 = vld [vmem:[%s1042 + $0xd0] sm:$0xff]
      %v1070 = vld [vmem:[%s1042 + $0xd8] sm:$0xff]
      %v1071 = vld [vmem:[%s1042 + $0xe0] sm:$0xff]
      %v1072 = vld [vmem:[%s1042 + $0xe8] sm:$0xff]
      %v1073 = vld [vmem:[%s1042 + $0xf0] sm:$0xff]
      %v1074 = vld [vmem:[%s1042 + $0xf8] sm:$0xff]
      %v1075 = vpack.c.bf16 %v1044, %v1043
      %v1076 = vpack.c.bf16 %v1046, %v1045
      %v1077 = vpack.c.bf16 %v1048, %v1047
      %v1078 = vpack.c.bf16 %v1050, %v1049
      %v1079 = vpack.c.bf16 %v1052, %v1051
      %v1080 = vpack.c.bf16 %v1054, %v1053
      %v1081 = vpack.c.bf16 %v1056, %v1055
      %v1082 = vpack.c.bf16 %v1058, %v1057
      %v1083 = vpack.c.bf16 %v1060, %v1059
      %v1084 = vpack.c.bf16 %v1062, %v1061
      %v1085 = vpack.c.bf16 %v1064, %v1063
      %v1086 = vpack.c.bf16 %v1066, %v1065
      %v1087 = vpack.c.bf16 %v1068, %v1067
      %v1088 = vpack.c.bf16 %v1070, %v1069
      %v1089 = vpack.c.bf16 %v1072, %v1071
      %v1090 = vpack.c.bf16 %v1074, %v1073
      %s1091 = scalar_lea.vmem %s1, 24
      %v1092 = vld [vmem:[%s1091] sm:$0xff]
      %v1093 = vpack.c.bf16 %v1092, %v1092
      %v1095 = vsel %vm318, %v1075, 0
      %v1098 = vsel %vm318, %v1076, 0
      %v1101 = vsel %vm318, %v1077, 0
      %v1104 = vsel %vm318, %v1078, 0
      %v1107 = vsel %vm318, %v1079, 0
      %v1110 = vsel %vm318, %v1080, 0
      %v1113 = vsel %vm318, %v1081, 0
      %v1116 = vsel %vm318, %v1082, 0
      %v1119 = vsel %vm318, %v1083, 0
      %v1122 = vsel %vm318, %v1084, 0
      %v1125 = vsel %vm318, %v1085, 0
      %v1128 = vsel %vm318, %v1086, 0
      %v1131 = vsel %vm318, %v1087, 0
      %v1134 = vsel %vm318, %v1088, 0
      %v1137 = vsel %vm318, %v1089, 0
      %v1140 = vsel %vm318, %v1090, 0
      %v1143 = vsel %vm367, %v1093, 0
      %1145 = vmatprep.subr.bf16.mxu0 0
      %1146 = vmatpush1.bf16.msra.mxu0 %v1143
      %1147 = vmatprep.subr.bf16.mxu0 0
      %1148 = vmatpush1.bf16.msra.mxu0 0
      %1149 = vmatprep.subr.bf16.mxu0 0
      %1150 = vmatpush1.bf16.msra.mxu0 0
      %1151 = vmatprep.subr.bf16.mxu0 0
      %1152 = vmatpush1.bf16.msra.mxu0 0
      %1153 = vmatprep.subr.bf16.mxu0 0
      %1154 = vmatpush1.bf16.msra.mxu0 0
      %1155 = vmatprep.subr.bf16.mxu0 0
      %1156 = vmatpush1.bf16.msra.mxu0 0
      %1157 = vmatprep.subr.bf16.mxu0 0
      %1158 = vmatpush1.bf16.msra.mxu0 0
      %1159 = vmatprep.subr.bf16.mxu0 0
      %1160 = vmatpush1.bf16.msra.mxu0 0
      %1161 = vmatprep.subr.bf16.mxu0 0
      %1162 = vmatpush1.bf16.msra.mxu0 0
      %1163 = vmatprep.subr.bf16.mxu0 0
      %1164 = vmatpush1.bf16.msra.mxu0 0
      %1165 = vmatprep.subr.bf16.mxu0 0
      %1166 = vmatpush1.bf16.msra.mxu0 0
      %1167 = vmatprep.subr.bf16.mxu0 0
      %1168 = vmatpush1.bf16.msra.mxu0 0
      %1169 = vmatprep.subr.bf16.mxu0 0
      %1170 = vmatpush1.bf16.msra.mxu0 0
      %1171 = vmatprep.subr.bf16.mxu0 0
      %1172 = vmatpush1.bf16.msra.mxu0 0
      %1173 = vmatprep.subr.bf16.mxu0 0
      %1174 = vmatpush1.bf16.msra.mxu0 0
      %1175 = vmatprep.subr.bf16.mxu0 0
      %1176 = vmatpush1.bf16.msra.mxu0 0
      %1177 = vmatprep.mubr.bf16.mxu0 0
      %1178 = vmatmul.mubr.bf16.gmra.mrb[0].mxu0 %v1095
      %v1179 = vpop.f32.mrb[0].mxu0
      %v1180 = vadd.f32 0.0, %v1179
      %v1181 = vpop.f32.mrb[0].mxu0
      %v1182 = vpop.f32.mrb[0].mxu0
      %v1183 = vadd.f32 0.0, %v1182
      %v1184 = vpop.f32.mrb[0].mxu0
      %1185 = vmatprep.mubr.bf16.mxu0 0
      %1186 = vmatmul.mubr.bf16.gmra.mrb[0].mxu0 %v1098
      %v1187 = vpop.f32.mrb[0].mxu0
      %v1188 = vadd.f32 0.0, %v1187
      %v1189 = vpop.f32.mrb[0].mxu0
      %v1190 = vpop.f32.mrb[0].mxu0
      %v1191 = vadd.f32 0.0, %v1190
      %v1192 = vpop.f32.mrb[0].mxu0
      %1193 = vmatprep.mubr.bf16.mxu0 0
      %1194 = vmatmul.mubr.bf16.gmra.mrb[0].mxu0 %v1101
      %v1195 = vpop.f32.mrb[0].mxu0
      %v1196 = vadd.f32 0.0, %v1195
      %v1197 = vpop.f32.mrb[0].mxu0
      %v1198 = vpop.f32.mrb[0].mxu0
      %v1199 = vadd.f32 0.0, %v1198
      %v1200 = vpop.f32.mrb[0].mxu0
      %1201 = vmatprep.mubr.bf16.mxu0 0
      %1202 = vmatmul.mubr.bf16.gmra.mrb[0].mxu0 %v1104
      %v1203 = vpop.f32.mrb[0].mxu0
      %v1204 = vadd.f32 0.0, %v1203
      %v1205 = vpop.f32.mrb[0].mxu0
      %v1206 = vpop.f32.mrb[0].mxu0
      %v1207 = vadd.f32 0.0, %v1206
      %v1208 = vpop.f32.mrb[0].mxu0
      %1209 = vmatprep.mubr.bf16.mxu0 0
      %1210 = vmatmul.mubr.bf16.gmra.mrb[0].mxu0 %v1107
      %v1211 = vpop.f32.mrb[0].mxu0
      %v1212 = vadd.f32 0.0, %v1211
      %v1213 = vpop.f32.mrb[0].mxu0
      %v1214 = vpop.f32.mrb[0].mxu0
      %v1215 = vadd.f32 0.0, %v1214
      %v1216 = vpop.f32.mrb[0].mxu0
      %1217 = vmatprep.mubr.bf16.mxu0 0
      %1218 = vmatmul.mubr.bf16.gmra.mrb[0].mxu0 %v1110
      %v1219 = vpop.f32.mrb[0].mxu0
      %v1220 = vadd.f32 0.0, %v1219
      %v1221 = vpop.f32.mrb[0].mxu0
      %v1222 = vpop.f32.mrb[0].mxu0
      %v1223 = vadd.f32 0.0, %v1222
      %v1224 = vpop.f32.mrb[0].mxu0
      %1225 = vmatprep.mubr.bf16.mxu0 0
      %1226 = vmatmul.mubr.bf16.gmra.mrb[0].mxu0 %v1113
      %v1227 = vpop.f32.mrb[0].mxu0
      %v1228 = vadd.f32 0.0, %v1227
      %v1229 = vpop.f32.mrb[0].mxu0
      %v1230 = vpop.f32.mrb[0].mxu0
      %v1231 = vadd.f32 0.0, %v1230
      %v1232 = vpop.f32.mrb[0].mxu0
      %1233 = vmatprep.mubr.bf16.mxu0 0
      %1234 = vmatmul.mubr.bf16.gmra.mrb[0].mxu0 %v1116
      %v1235 = vpop.f32.mrb[0].mxu0
      %v1236 = vadd.f32 0.0, %v1235
      %v1237 = vpop.f32.mrb[0].mxu0
      %v1238 = vpop.f32.mrb[0].mxu0
      %v1239 = vadd.f32 0.0, %v1238
      %v1240 = vpop.f32.mrb[0].mxu0
      %1241 = vmatprep.mubr.bf16.mxu0 0
      %1242 = vmatmul.mubr.bf16.gmra.mrb[0].mxu0 %v1119
      %v1243 = vpop.f32.mrb[0].mxu0
      %v1244 = vadd.f32 0.0, %v1243
      %v1245 = vpop.f32.mrb[0].mxu0
      %v1246 = vpop.f32.mrb[0].mxu0
      %v1247 = vadd.f32 0.0, %v1246
      %v1248 = vpop.f32.mrb[0].mxu0
      %1249 = vmatprep.mubr.bf16.mxu0 0
      %1250 = vmatmul.mubr.bf16.gmra.mrb[0].mxu0 %v1122
      %v1251 = vpop.f32.mrb[0].mxu0
      %v1252 = vadd.f32 0.0, %v1251
      %v1253 = vpop.f32.mrb[0].mxu0
      %v1254 = vpop.f32.mrb[0].mxu0
      %v1255 = vadd.f32 0.0, %v1254
      %v1256 = vpop.f32.mrb[0].mxu0
      %1257 = vmatprep.mubr.bf16.mxu0 0
      %1258 = vmatmul.mubr.bf16.gmra.mrb[0].mxu0 %v1125
      %v1259 = vpop.f32.mrb[0].mxu0
      %v1260 = vadd.f32 0.0, %v1259
      %v1261 = vpop.f32.mrb[0].mxu0
      %v1262 = vpop.f32.mrb[0].mxu0
      %v1263 = vadd.f32 0.0, %v1262
      %v1264 = vpop.f32.mrb[0].mxu0
      %1265 = vmatprep.mubr.bf16.mxu0 0
      %1266 = vmatmul.mubr.bf16.gmra.mrb[0].mxu0 %v1128
      %v1267 = vpop.f32.mrb[0].mxu0
      %v1268 = vadd.f32 0.0, %v1267
      %v1269 = vpop.f32.mrb[0].mxu0
      %v1270 = vpop.f32.mrb[0].mxu0
      %v1271 = vadd.f32 0.0, %v1270
      %v1272 = vpop.f32.mrb[0].mxu0
      %1273 = vmatprep.mubr.bf16.mxu0 0
      %1274 = vmatmul.mubr.bf16.gmra.mrb[0].mxu0 %v1131
      %v1275 = vpop.f32.mrb[0].mxu0
      %v1276 = vadd.f32 0.0, %v1275
      %v1277 = vpop.f32.mrb[0].mxu0
      %v1278 = vpop.f32.mrb[0].mxu0
      %v1279 = vadd.f32 0.0, %v1278
      %v1280 = vpop.f32.mrb[0].mxu0
      %1281 = vmatprep.mubr.bf16.mxu0 0
      %1282 = vmatmul.mubr.bf16.gmra.mrb[0].mxu0 %v1134
      %v1283 = vpop.f32.mrb[0].mxu0
      %v1284 = vadd.f32 0.0, %v1283
      %v1285 = vpop.f32.mrb[0].mxu0
      %v1286 = vpop.f32.mrb[0].mxu0
      %v1287 = vadd.f32 0.0, %v1286
      %v1288 = vpop.f32.mrb[0].mxu0
      %1289 = vmatprep.mubr.bf16.mxu0 0
      %1290 = vmatmul.mubr.bf16.gmra.mrb[0].mxu0 %v1137
      %v1291 = vpop.f32.mrb[0].mxu0
      %v1292 = vadd.f32 0.0, %v1291
      %v1293 = vpop.f32.mrb[0].mxu0
      %v1294 = vpop.f32.mrb[0].mxu0
      %v1295 = vadd.f32 0.0, %v1294
      %v1296 = vpop.f32.mrb[0].mxu0
      %1297 = vmatprep.mubr.bf16.mxu0 0
      %1298 = vmatmul.mubr.bf16.gmra.mrb[0].mxu0 %v1140
      %v1299 = vpop.f32.mrb[0].mxu0
      %v1300 = vadd.f32 0.0, %v1299
      %v1301 = vpop.f32.mrb[0].mxu0
      %v1302 = vpop.f32.mrb[0].mxu0
      %v1303 = vadd.f32 0.0, %v1302
      %v1304 = vpop.f32.mrb[0].mxu0
      %1305 = vdwg.mxu0
      %v1306 = vadd.f32 %v1009, %v1180
      %v1307 = vadd.f32 %v1010, %v1183
      %v1308 = vadd.f32 %v1011, %v1188
      %v1309 = vadd.f32 %v1012, %v1191
      %v1310 = vadd.f32 %v1013, %v1196
      %v1311 = vadd.f32 %v1014, %v1199
      %v1312 = vadd.f32 %v1015, %v1204
      %v1313 = vadd.f32 %v1016, %v1207
      %v1314 = vadd.f32 %v1017, %v1212
      %v1315 = vadd.f32 %v1018, %v1215
      %v1316 = vadd.f32 %v1019, %v1220
      %v1317 = vadd.f32 %v1020, %v1223
      %v1318 = vadd.f32 %v1021, %v1228
      %v1319 = vadd.f32 %v1022, %v1231
      %v1320 = vadd.f32 %v1023, %v1236
      %v1321 = vadd.f32 %v1024, %v1239
      %v1322 = vadd.f32 %v1025, %v1244
      %v1323 = vadd.f32 %v1026, %v1247
      %v1324 = vadd.f32 %v1027, %v1252
      %v1325 = vadd.f32 %v1028, %v1255
      %v1326 = vadd.f32 %v1029, %v1260
      %v1327 = vadd.f32 %v1030, %v1263
      %v1328 = vadd.f32 %v1031, %v1268
      %v1329 = vadd.f32 %v1032, %v1271
      %v1330 = vadd.f32 %v1033, %v1276
      %v1331 = vadd.f32 %v1034, %v1279
      %v1332 = vadd.f32 %v1035, %v1284
      %v1333 = vadd.f32 %v1036, %v1287
      %v1334 = vadd.f32 %v1037, %v1292
      %v1335 = vadd.f32 %v1038, %v1295
      %v1336 = vadd.f32 %v1039, %v1300
      %v1337 = vadd.f32 %v1040, %v1303
      %s1338 = sadd.s32 %s213, 19
      %s1339 = scalar_lea.vmem %s0, %s1338
      %v1340 = vld [vmem:[%s1339] sm:$0xff]
      %v1341 = vld [vmem:[%s1339 + $0x8] sm:$0xff]
      %v1342 = vld [vmem:[%s1339 + $0x10] sm:$0xff]
      %v1343 = vld [vmem:[%s1339 + $0x18] sm:$0xff]
      %v1344 = vld [vmem:[%s1339 + $0x20] sm:$0xff]
      %v1345 = vld [vmem:[%s1339 + $0x28] sm:$0xff]
      %v1346 = vld [vmem:[%s1339 + $0x30] sm:$0xff]
      %v1347 = vld [vmem:[%s1339 + $0x38] sm:$0xff]
      %v1348 = vld [vmem:[%s1339 + $0x40] sm:$0xff]
      %v1349 = vld [vmem:[%s1339 + $0x48] sm:$0xff]
      %v1350 = vld [vmem:[%s1339 + $0x50] sm:$0xff]
      %v1351 = vld [vmem:[%s1339 + $0x58] sm:$0xff]
      %v1352 = vld [vmem:[%s1339 + $0x60] sm:$0xff]
      %v1353 = vld [vmem:[%s1339 + $0x68] sm:$0xff]
      %v1354 = vld [vmem:[%s1339 + $0x70] sm:$0xff]
      %v1355 = vld [vmem:[%s1339 + $0x78] sm:$0xff]
      %v1356 = vld [vmem:[%s1339 + $0x80] sm:$0xff]
      %v1357 = vld [vmem:[%s1339 + $0x88] sm:$0xff]
      %v1358 = vld [vmem:[%s1339 + $0x90] sm:$0xff]
      %v1359 = vld [vmem:[%s1339 + $0x98] sm:$0xff]
      %v1360 = vld [vmem:[%s1339 + $0xa0] sm:$0xff]
      %v1361 = vld [vmem:[%s1339 + $0xa8] sm:$0xff]
      %v1362 = vld [vmem:[%s1339 + $0xb0] sm:$0xff]
      %v1363 = vld [vmem:[%s1339 + $0xb8] sm:$0xff]
      %v1364 = vld [vmem:[%s1339 + $0xc0] sm:$0xff]
      %v1365 = vld [vmem:[%s1339 + $0xc8] sm:$0xff]
      %v1366 = vld [vmem:[%s1339 + $0xd0] sm:$0xff]
      %v1367 = vld [vmem:[%s1339 + $0xd8] sm:$0xff]
      %v1368 = vld [vmem:[%s1339 + $0xe0] sm:$0xff]
      %v1369 = vld [vmem:[%s1339 + $0xe8] sm:$0xff]
      %v1370 = vld [vmem:[%s1339 + $0xf0] sm:$0xff]
      %v1371 = vld [vmem:[%s1339 + $0xf8] sm:$0xff]
      %v1372 = vpack.c.bf16 %v1341, %v1340
      %v1373 = vpack.c.bf16 %v1343, %v1342
      %v1374 = vpack.c.bf16 %v1345, %v1344
      %v1375 = vpack.c.bf16 %v1347, %v1346
      %v1376 = vpack.c.bf16 %v1349, %v1348
      %v1377 = vpack.c.bf16 %v1351, %v1350
      %v1378 = vpack.c.bf16 %v1353, %v1352
      %v1379 = vpack.c.bf16 %v1355, %v1354
      %v1380 = vpack.c.bf16 %v1357, %v1356
      %v1381 = vpack.c.bf16 %v1359, %v1358
      %v1382 = vpack.c.bf16 %v1361, %v1360
      %v1383 = vpack.c.bf16 %v1363, %v1362
      %v1384 = vpack.c.bf16 %v1365, %v1364
      %v1385 = vpack.c.bf16 %v1367, %v1366
      %v1386 = vpack.c.bf16 %v1369, %v1368
      %v1387 = vpack.c.bf16 %v1371, %v1370
      %s1388 = scalar_lea.vmem %s1, 32
      %v1389 = vld [vmem:[%s1388] sm:$0xff]
      %v1390 = vpack.c.bf16 %v1389, %v1389
      %v1392 = vsel %vm318, %v1372, 0
      %v1395 = vsel %vm318, %v1373, 0
      %v1398 = vsel %vm318, %v1374, 0
      %v1401 = vsel %vm318, %v1375, 0
      %v1404 = vsel %vm318, %v1376, 0
      %v1407 = vsel %vm318, %v1377, 0
      %v1410 = vsel %vm318, %v1378, 0
      %v1413 = vsel %vm318, %v1379, 0
      %v1416 = vsel %vm318, %v1380, 0
      %v1419 = vsel %vm318, %v1381, 0
      %v1422 = vsel %vm318, %v1382, 0
      %v1425 = vsel %vm318, %v1383, 0
      %v1428 = vsel %vm318, %v1384, 0
      %v1431 = vsel %vm318, %v1385, 0
      %v1434 = vsel %vm318, %v1386, 0
      %v1437 = vsel %vm318, %v1387, 0
      %v1440 = vsel %vm367, %v1390, 0
      %1442 = vmatprep.subr.bf16.mxu0 0
      %1443 = vmatpush1.bf16.msra.mxu0 %v1440
      %1444 = vmatprep.subr.bf16.mxu0 0
      %1445 = vmatpush1.bf16.msra.mxu0 0
      %1446 = vmatprep.subr.bf16.mxu0 0
      %1447 = vmatpush1.bf16.msra.mxu0 0
      %1448 = vmatprep.subr.bf16.mxu0 0
      %1449 = vmatpush1.bf16.msra.mxu0 0
      %1450 = vmatprep.subr.bf16.mxu0 0
      %1451 = vmatpush1.bf16.msra.mxu0 0
      %1452 = vmatprep.subr.bf16.mxu0 0
      %1453 = vmatpush1.bf16.msra.mxu0 0
      %1454 = vmatprep.subr.bf16.mxu0 0
      %1455 = vmatpush1.bf16.msra.mxu0 0
      %1456 = vmatprep.subr.bf16.mxu0 0
      %1457 = vmatpush1.bf16.msra.mxu0 0
      %1458 = vmatprep.subr.bf16.mxu0 0
      %1459 = vmatpush1.bf16.msra.mxu0 0
      %1460 = vmatprep.subr.bf16.mxu0 0
      %1461 = vmatpush1.bf16.msra.mxu0 0
      %1462 = vmatprep.subr.bf16.mxu0 0
      %1463 = vmatpush1.bf16.msra.mxu0 0
      %1464 = vmatprep.subr.bf16.mxu0 0
      %1465 = vmatpush1.bf16.msra.mxu0 0
      %1466 = vmatprep.subr.bf16.mxu0 0
      %1467 = vmatpush1.bf16.msra.mxu0 0
      %1468 = vmatprep.subr.bf16.mxu0 0
      %1469 = vmatpush1.bf16.msra.mxu0 0
      %1470 = vmatprep.subr.bf16.mxu0 0
      %1471 = vmatpush1.bf16.msra.mxu0 0
      %1472 = vmatprep.subr.bf16.mxu0 0
      %1473 = vmatpush1.bf16.msra.mxu0 0
      %1474 = vmatprep.mubr.bf16.mxu0 0
      %1475 = vmatmul.mubr.bf16.gmra.mrb[0].mxu0 %v1392
      %v1476 = vpop.f32.mrb[0].mxu0
      %v1477 = vadd.f32 0.0, %v1476
      %v1478 = vpop.f32.mrb[0].mxu0
      %v1479 = vpop.f32.mrb[0].mxu0
      %v1480 = vadd.f32 0.0, %v1479
      %v1481 = vpop.f32.mrb[0].mxu0
      %1482 = vmatprep.mubr.bf16.mxu0 0
      %1483 = vmatmul.mubr.bf16.gmra.mrb[0].mxu0 %v1395
      %v1484 = vpop.f32.mrb[0].mxu0
      %v1485 = vadd.f32 0.0, %v1484
      %v1486 = vpop.f32.mrb[0].mxu0
      %v1487 = vpop.f32.mrb[0].mxu0
      %v1488 = vadd.f32 0.0, %v1487
      %v1489 = vpop.f32.mrb[0].mxu0
      %1490 = vmatprep.mubr.bf16.mxu0 0
      %1491 = vmatmul.mubr.bf16.gmra.mrb[0].mxu0 %v1398
      %v1492 = vpop.f32.mrb[0].mxu0
      %v1493 = vadd.f32 0.0, %v1492
      %v1494 = vpop.f32.mrb[0].mxu0
      %v1495 = vpop.f32.mrb[0].mxu0
      %v1496 = vadd.f32 0.0, %v1495
      %v1497 = vpop.f32.mrb[0].mxu0
      %1498 = vmatprep.mubr.bf16.mxu0 0
      %1499 = vmatmul.mubr.bf16.gmra.mrb[0].mxu0 %v1401
      %v1500 = vpop.f32.mrb[0].mxu0
      %v1501 = vadd.f32 0.0, %v1500
      %v1502 = vpop.f32.mrb[0].mxu0
      %v1503 = vpop.f32.mrb[0].mxu0
      %v1504 = vadd.f32 0.0, %v1503
      %v1505 = vpop.f32.mrb[0].mxu0
      %1506 = vmatprep.mubr.bf16.mxu0 0
      %1507 = vmatmul.mubr.bf16.gmra.mrb[0].mxu0 %v1404
      %v1508 = vpop.f32.mrb[0].mxu0
      %v1509 = vadd.f32 0.0, %v1508
      %v1510 = vpop.f32.mrb[0].mxu0
      %v1511 = vpop.f32.mrb[0].mxu0
      %v1512 = vadd.f32 0.0, %v1511
      %v1513 = vpop.f32.mrb[0].mxu0
      %1514 = vmatprep.mubr.bf16.mxu0 0
      %1515 = vmatmul.mubr.bf16.gmra.mrb[0].mxu0 %v1407
      %v1516 = vpop.f32.mrb[0].mxu0
      %v1517 = vadd.f32 0.0, %v1516
      %v1518 = vpop.f32.mrb[0].mxu0
      %v1519 = vpop.f32.mrb[0].mxu0
      %v1520 = vadd.f32 0.0, %v1519
      %v1521 = vpop.f32.mrb[0].mxu0
      %1522 = vmatprep.mubr.bf16.mxu0 0
      %1523 = vmatmul.mubr.bf16.gmra.mrb[0].mxu0 %v1410
      %v1524 = vpop.f32.mrb[0].mxu0
      %v1525 = vadd.f32 0.0, %v1524
      %v1526 = vpop.f32.mrb[0].mxu0
      %v1527 = vpop.f32.mrb[0].mxu0
      %v1528 = vadd.f32 0.0, %v1527
      %v1529 = vpop.f32.mrb[0].mxu0
      %1530 = vmatprep.mubr.bf16.mxu0 0
      %1531 = vmatmul.mubr.bf16.gmra.mrb[0].mxu0 %v1413
      %v1532 = vpop.f32.mrb[0].mxu0
      %v1533 = vadd.f32 0.0, %v1532
      %v1534 = vpop.f32.mrb[0].mxu0
      %v1535 = vpop.f32.mrb[0].mxu0
      %v1536 = vadd.f32 0.0, %v1535
      %v1537 = vpop.f32.mrb[0].mxu0
      %1538 = vmatprep.mubr.bf16.mxu0 0
      %1539 = vmatmul.mubr.bf16.gmra.mrb[0].mxu0 %v1416
      %v1540 = vpop.f32.mrb[0].mxu0
      %v1541 = vadd.f32 0.0, %v1540
      %v1542 = vpop.f32.mrb[0].mxu0
      %v1543 = vpop.f32.mrb[0].mxu0
      %v1544 = vadd.f32 0.0, %v1543
      %v1545 = vpop.f32.mrb[0].mxu0
      %1546 = vmatprep.mubr.bf16.mxu0 0
      %1547 = vmatmul.mubr.bf16.gmra.mrb[0].mxu0 %v1419
      %v1548 = vpop.f32.mrb[0].mxu0
      %v1549 = vadd.f32 0.0, %v1548
      %v1550 = vpop.f32.mrb[0].mxu0
      %v1551 = vpop.f32.mrb[0].mxu0
      %v1552 = vadd.f32 0.0, %v1551
      %v1553 = vpop.f32.mrb[0].mxu0
      %1554 = vmatprep.mubr.bf16.mxu0 0
      %1555 = vmatmul.mubr.bf16.gmra.mrb[0].mxu0 %v1422
      %v1556 = vpop.f32.mrb[0].mxu0
      %v1557 = vadd.f32 0.0, %v1556
      %v1558 = vpop.f32.mrb[0].mxu0
      %v1559 = vpop.f32.mrb[0].mxu0
      %v1560 = vadd.f32 0.0, %v1559
      %v1561 = vpop.f32.mrb[0].mxu0
      %1562 = vmatprep.mubr.bf16.mxu0 0
      %1563 = vmatmul.mubr.bf16.gmra.mrb[0].mxu0 %v1425
      %v1564 = vpop.f32.mrb[0].mxu0
      %v1565 = vadd.f32 0.0, %v1564
      %v1566 = vpop.f32.mrb[0].mxu0
      %v1567 = vpop.f32.mrb[0].mxu0
      %v1568 = vadd.f32 0.0, %v1567
      %v1569 = vpop.f32.mrb[0].mxu0
      %1570 = vmatprep.mubr.bf16.mxu0 0
      %1571 = vmatmul.mubr.bf16.gmra.mrb[0].mxu0 %v1428
      %v1572 = vpop.f32.mrb[0].mxu0
      %v1573 = vadd.f32 0.0, %v1572
      %v1574 = vpop.f32.mrb[0].mxu0
      %v1575 = vpop.f32.mrb[0].mxu0
      %v1576 = vadd.f32 0.0, %v1575
      %v1577 = vpop.f32.mrb[0].mxu0
      %1578 = vmatprep.mubr.bf16.mxu0 0
      %1579 = vmatmul.mubr.bf16.gmra.mrb[0].mxu0 %v1431
      %v1580 = vpop.f32.mrb[0].mxu0
      %v1581 = vadd.f32 0.0, %v1580
      %v1582 = vpop.f32.mrb[0].mxu0
      %v1583 = vpop.f32.mrb[0].mxu0
      %v1584 = vadd.f32 0.0, %v1583
      %v1585 = vpop.f32.mrb[0].mxu0
      %1586 = vmatprep.mubr.bf16.mxu0 0
      %1587 = vmatmul.mubr.bf16.gmra.mrb[0].mxu0 %v1434
      %v1588 = vpop.f32.mrb[0].mxu0
      %v1589 = vadd.f32 0.0, %v1588
      %v1590 = vpop.f32.mrb[0].mxu0
      %v1591 = vpop.f32.mrb[0].mxu0
      %v1592 = vadd.f32 0.0, %v1591
      %v1593 = vpop.f32.mrb[0].mxu0
      %1594 = vmatprep.mubr.bf16.mxu0 0
      %1595 = vmatmul.mubr.bf16.gmra.mrb[0].mxu0 %v1437
      %v1596 = vpop.f32.mrb[0].mxu0
      %v1597 = vadd.f32 0.0, %v1596
      %v1598 = vpop.f32.mrb[0].mxu0
      %v1599 = vpop.f32.mrb[0].mxu0
      %v1600 = vadd.f32 0.0, %v1599
      %v1601 = vpop.f32.mrb[0].mxu0
      %1602 = vdwg.mxu0
      %v1603 = vadd.f32 %v1306, %v1477
      %v1604 = vadd.f32 %v1307, %v1480
      %v1605 = vadd.f32 %v1308, %v1485
      %v1606 = vadd.f32 %v1309, %v1488
      %v1607 = vadd.f32 %v1310, %v1493
      %v1608 = vadd.f32 %v1311, %v1496
      %v1609 = vadd.f32 %v1312, %v1501
      %v1610 = vadd.f32 %v1313, %v1504
      %v1611 = vadd.f32 %v1314, %v1509
      %v1612 = vadd.f32 %v1315, %v1512
      %v1613 = vadd.f32 %v1316, %v1517
      %v1614 = vadd.f32 %v1317, %v1520
      %v1615 = vadd.f32 %v1318, %v1525
      %v1616 = vadd.f32 %v1319, %v1528
      %v1617 = vadd.f32 %v1320, %v1533
      %v1618 = vadd.f32 %v1321, %v1536
      %v1619 = vadd.f32 %v1322, %v1541
      %v1620 = vadd.f32 %v1323, %v1544
      %v1621 = vadd.f32 %v1324, %v1549
      %v1622 = vadd.f32 %v1325, %v1552
      %v1623 = vadd.f32 %v1326, %v1557
      %v1624 = vadd.f32 %v1327, %v1560
      %v1625 = vadd.f32 %v1328, %v1565
      %v1626 = vadd.f32 %v1329, %v1568
      %v1627 = vadd.f32 %v1330, %v1573
      %v1628 = vadd.f32 %v1331, %v1576
      %v1629 = vadd.f32 %v1332, %v1581
      %v1630 = vadd.f32 %v1333, %v1584
      %v1631 = vadd.f32 %v1334, %v1589
      %v1632 = vadd.f32 %v1335, %v1592
      %v1633 = vadd.f32 %v1336, %v1597
      %v1634 = vadd.f32 %v1337, %v1600
      %s1635 = sadd.s32 %s213, 20
      %s1636 = scalar_lea.vmem %s0, %s1635
      %v1637 = vld [vmem:[%s1636] sm:$0xff]
      %v1638 = vld [vmem:[%s1636 + $0x8] sm:$0xff]
      %v1639 = vld [vmem:[%s1636 + $0x10] sm:$0xff]
      %v1640 = vld [vmem:[%s1636 + $0x18] sm:$0xff]
      %v1641 = vld [vmem:[%s1636 + $0x20] sm:$0xff]
      %v1642 = vld [vmem:[%s1636 + $0x28] sm:$0xff]
      %v1643 = vld [vmem:[%s1636 + $0x30] sm:$0xff]
      %v1644 = vld [vmem:[%s1636 + $0x38] sm:$0xff]
      %v1645 = vld [vmem:[%s1636 + $0x40] sm:$0xff]
      %v1646 = vld [vmem:[%s1636 + $0x48] sm:$0xff]
      %v1647 = vld [vmem:[%s1636 + $0x50] sm:$0xff]
      %v1648 = vld [vmem:[%s1636 + $0x58] sm:$0xff]
      %v1649 = vld [vmem:[%s1636 + $0x60] sm:$0xff]
      %v1650 = vld [vmem:[%s1636 + $0x68] sm:$0xff]
      %v1651 = vld [vmem:[%s1636 + $0x70] sm:$0xff]
      %v1652 = vld [vmem:[%s1636 + $0x78] sm:$0xff]
      %v1653 = vld [vmem:[%s1636 + $0x80] sm:$0xff]
      %v1654 = vld [vmem:[%s1636 + $0x88] sm:$0xff]
      %v1655 = vld [vmem:[%s1636 + $0x90] sm:$0xff]
      %v1656 = vld [vmem:[%s1636 + $0x98] sm:$0xff]
      %v1657 = vld [vmem:[%s1636 + $0xa0] sm:$0xff]
      %v1658 = vld [vmem:[%s1636 + $0xa8] sm:$0xff]
      %v1659 = vld [vmem:[%s1636 + $0xb0] sm:$0xff]
      %v1660 = vld [vmem:[%s1636 + $0xb8] sm:$0xff]
      %v1661 = vld [vmem:[%s1636 + $0xc0] sm:$0xff]
      %v1662 = vld [vmem:[%s1636 + $0xc8] sm:$0xff]
      %v1663 = vld [vmem:[%s1636 + $0xd0] sm:$0xff]
      %v1664 = vld [vmem:[%s1636 + $0xd8] sm:$0xff]
      %v1665 = vld [vmem:[%s1636 + $0xe0] sm:$0xff]
      %v1666 = vld [vmem:[%s1636 + $0xe8] sm:$0xff]
      %v1667 = vld [vmem:[%s1636 + $0xf0] sm:$0xff]
      %v1668 = vld [vmem:[%s1636 + $0xf8] sm:$0xff]
      %v1669 = vpack.c.bf16 %v1638, %v1637
      %v1670 = vpack.c.bf16 %v1640, %v1639
      %v1671 = vpack.c.bf16 %v1642, %v1641
      %v1672 = vpack.c.bf16 %v1644, %v1643
      %v1673 = vpack.c.bf16 %v1646, %v1645
      %v1674 = vpack.c.bf16 %v1648, %v1647
      %v1675 = vpack.c.bf16 %v1650, %v1649
      %v1676 = vpack.c.bf16 %v1652, %v1651
      %v1677 = vpack.c.bf16 %v1654, %v1653
      %v1678 = vpack.c.bf16 %v1656, %v1655
      %v1679 = vpack.c.bf16 %v1658, %v1657
      %v1680 = vpack.c.bf16 %v1660, %v1659
      %v1681 = vpack.c.bf16 %v1662, %v1661
      %v1682 = vpack.c.bf16 %v1664, %v1663
      %v1683 = vpack.c.bf16 %v1666, %v1665
      %v1684 = vpack.c.bf16 %v1668, %v1667
      %s1685 = scalar_lea.vmem %s1, 40
      %v1686 = vld [vmem:[%s1685] sm:$0xff]
      %v1687 = vpack.c.bf16 %v1686, %v1686
      %v1689 = vsel %vm318, %v1669, 0
      %v1692 = vsel %vm318, %v1670, 0
      %v1695 = vsel %vm318, %v1671, 0
      %v1698 = vsel %vm318, %v1672, 0
      %v1701 = vsel %vm318, %v1673, 0
      %v1704 = vsel %vm318, %v1674, 0
      %v1707 = vsel %vm318, %v1675, 0
      %v1710 = vsel %vm318, %v1676, 0
      %v1713 = vsel %vm318, %v1677, 0
      %v1716 = vsel %vm318, %v1678, 0
      %v1719 = vsel %vm318, %v1679, 0
      %v1722 = vsel %vm318, %v1680, 0
      %v1725 = vsel %vm318, %v1681, 0
      %v1728 = vsel %vm318, %v1682, 0
      %v1731 = vsel %vm318, %v1683, 0
      %v1734 = vsel %vm318, %v1684, 0
      %v1737 = vsel %vm367, %v1687, 0
      %1739 = vmatprep.subr.bf16.mxu0 0
      %1740 = vmatpush1.bf16.msra.mxu0 %v1737
      %1741 = vmatprep.subr.bf16.mxu0 0
      %1742 = vmatpush1.bf16.msra.mxu0 0
      %1743 = vmatprep.subr.bf16.mxu0 0
      %1744 = vmatpush1.bf16.msra.mxu0 0
      %1745 = vmatprep.subr.bf16.mxu0 0
      %1746 = vmatpush1.bf16.msra.mxu0 0
      %1747 = vmatprep.subr.bf16.mxu0 0
      %1748 = vmatpush1.bf16.msra.mxu0 0
      %1749 = vmatprep.subr.bf16.mxu0 0
      %1750 = vmatpush1.bf16.msra.mxu0 0
      %1751 = vmatprep.subr.bf16.mxu0 0
      %1752 = vmatpush1.bf16.msra.mxu0 0
      %1753 = vmatprep.subr.bf16.mxu0 0
      %1754 = vmatpush1.bf16.msra.mxu0 0
      %1755 = vmatprep.subr.bf16.mxu0 0
      %1756 = vmatpush1.bf16.msra.mxu0 0
      %1757 = vmatprep.subr.bf16.mxu0 0
      %1758 = vmatpush1.bf16.msra.mxu0 0
      %1759 = vmatprep.subr.bf16.mxu0 0
      %1760 = vmatpush1.bf16.msra.mxu0 0
      %1761 = vmatprep.subr.bf16.mxu0 0
      %1762 = vmatpush1.bf16.msra.mxu0 0
      %1763 = vmatprep.subr.bf16.mxu0 0
      %1764 = vmatpush1.bf16.msra.mxu0 0
      %1765 = vmatprep.subr.bf16.mxu0 0
      %1766 = vmatpush1.bf16.msra.mxu0 0
      %1767 = vmatprep.subr.bf16.mxu0 0
      %1768 = vmatpush1.bf16.msra.mxu0 0
      %1769 = vmatprep.subr.bf16.mxu0 0
      %1770 = vmatpush1.bf16.msra.mxu0 0
      %1771 = vmatprep.mubr.bf16.mxu0 0
      %1772 = vmatmul.mubr.bf16.gmra.mrb[0].mxu0 %v1689
      %v1773 = vpop.f32.mrb[0].mxu0
      %v1774 = vadd.f32 0.0, %v1773
      %v1775 = vpop.f32.mrb[0].mxu0
      %v1776 = vpop.f32.mrb[0].mxu0
      %v1777 = vadd.f32 0.0, %v1776
      %v1778 = vpop.f32.mrb[0].mxu0
      %1779 = vmatprep.mubr.bf16.mxu0 0
      %1780 = vmatmul.mubr.bf16.gmra.mrb[0].mxu0 %v1692
      %v1781 = vpop.f32.mrb[0].mxu0
      %v1782 = vadd.f32 0.0, %v1781
      %v1783 = vpop.f32.mrb[0].mxu0
      %v1784 = vpop.f32.mrb[0].mxu0
      %v1785 = vadd.f32 0.0, %v1784
      %v1786 = vpop.f32.mrb[0].mxu0
      %1787 = vmatprep.mubr.bf16.mxu0 0
      %1788 = vmatmul.mubr.bf16.gmra.mrb[0].mxu0 %v1695
      %v1789 = vpop.f32.mrb[0].mxu0
      %v1790 = vadd.f32 0.0, %v1789
      %v1791 = vpop.f32.mrb[0].mxu0
      %v1792 = vpop.f32.mrb[0].mxu0
      %v1793 = vadd.f32 0.0, %v1792
      %v1794 = vpop.f32.mrb[0].mxu0
      %1795 = vmatprep.mubr.bf16.mxu0 0
      %1796 = vmatmul.mubr.bf16.gmra.mrb[0].mxu0 %v1698
      %v1797 = vpop.f32.mrb[0].mxu0
      %v1798 = vadd.f32 0.0, %v1797
      %v1799 = vpop.f32.mrb[0].mxu0
      %v1800 = vpop.f32.mrb[0].mxu0
      %v1801 = vadd.f32 0.0, %v1800
      %v1802 = vpop.f32.mrb[0].mxu0
      %1803 = vmatprep.mubr.bf16.mxu0 0
      %1804 = vmatmul.mubr.bf16.gmra.mrb[0].mxu0 %v1701
      %v1805 = vpop.f32.mrb[0].mxu0
      %v1806 = vadd.f32 0.0, %v1805
      %v1807 = vpop.f32.mrb[0].mxu0
      %v1808 = vpop.f32.mrb[0].mxu0
      %v1809 = vadd.f32 0.0, %v1808
      %v1810 = vpop.f32.mrb[0].mxu0
      %1811 = vmatprep.mubr.bf16.mxu0 0
      %1812 = vmatmul.mubr.bf16.gmra.mrb[0].mxu0 %v1704
      %v1813 = vpop.f32.mrb[0].mxu0
      %v1814 = vadd.f32 0.0, %v1813
      %v1815 = vpop.f32.mrb[0].mxu0
      %v1816 = vpop.f32.mrb[0].mxu0
      %v1817 = vadd.f32 0.0, %v1816
      %v1818 = vpop.f32.mrb[0].mxu0
      %1819 = vmatprep.mubr.bf16.mxu0 0
      %1820 = vmatmul.mubr.bf16.gmra.mrb[0].mxu0 %v1707
      %v1821 = vpop.f32.mrb[0].mxu0
      %v1822 = vadd.f32 0.0, %v1821
      %v1823 = vpop.f32.mrb[0].mxu0
      %v1824 = vpop.f32.mrb[0].mxu0
      %v1825 = vadd.f32 0.0, %v1824
      %v1826 = vpop.f32.mrb[0].mxu0
      %1827 = vmatprep.mubr.bf16.mxu0 0
      %1828 = vmatmul.mubr.bf16.gmra.mrb[0].mxu0 %v1710
      %v1829 = vpop.f32.mrb[0].mxu0
      %v1830 = vadd.f32 0.0, %v1829
      %v1831 = vpop.f32.mrb[0].mxu0
      %v1832 = vpop.f32.mrb[0].mxu0
      %v1833 = vadd.f32 0.0, %v1832
      %v1834 = vpop.f32.mrb[0].mxu0
      %1835 = vmatprep.mubr.bf16.mxu0 0
      %1836 = vmatmul.mubr.bf16.gmra.mrb[0].mxu0 %v1713
      %v1837 = vpop.f32.mrb[0].mxu0
      %v1838 = vadd.f32 0.0, %v1837
      %v1839 = vpop.f32.mrb[0].mxu0
      %v1840 = vpop.f32.mrb[0].mxu0
      %v1841 = vadd.f32 0.0, %v1840
      %v1842 = vpop.f32.mrb[0].mxu0
      %1843 = vmatprep.mubr.bf16.mxu0 0
      %1844 = vmatmul.mubr.bf16.gmra.mrb[0].mxu0 %v1716
      %v1845 = vpop.f32.mrb[0].mxu0
      %v1846 = vadd.f32 0.0, %v1845
      %v1847 = vpop.f32.mrb[0].mxu0
      %v1848 = vpop.f32.mrb[0].mxu0
      %v1849 = vadd.f32 0.0, %v1848
      %v1850 = vpop.f32.mrb[0].mxu0
      %1851 = vmatprep.mubr.bf16.mxu0 0
      %1852 = vmatmul.mubr.bf16.gmra.mrb[0].mxu0 %v1719
      %v1853 = vpop.f32.mrb[0].mxu0
      %v1854 = vadd.f32 0.0, %v1853
      %v1855 = vpop.f32.mrb[0].mxu0
      %v1856 = vpop.f32.mrb[0].mxu0
      %v1857 = vadd.f32 0.0, %v1856
      %v1858 = vpop.f32.mrb[0].mxu0
      %1859 = vmatprep.mubr.bf16.mxu0 0
      %1860 = vmatmul.mubr.bf16.gmra.mrb[0].mxu0 %v1722
      %v1861 = vpop.f32.mrb[0].mxu0
      %v1862 = vadd.f32 0.0, %v1861
      %v1863 = vpop.f32.mrb[0].mxu0
      %v1864 = vpop.f32.mrb[0].mxu0
      %v1865 = vadd.f32 0.0, %v1864
      %v1866 = vpop.f32.mrb[0].mxu0
      %1867 = vmatprep.mubr.bf16.mxu0 0
      %1868 = vmatmul.mubr.bf16.gmra.mrb[0].mxu0 %v1725
      %v1869 = vpop.f32.mrb[0].mxu0
      %v1870 = vadd.f32 0.0, %v1869
      %v1871 = vpop.f32.mrb[0].mxu0
      %v1872 = vpop.f32.mrb[0].mxu0
      %v1873 = vadd.f32 0.0, %v1872
      %v1874 = vpop.f32.mrb[0].mxu0
      %1875 = vmatprep.mubr.bf16.mxu0 0
      %1876 = vmatmul.mubr.bf16.gmra.mrb[0].mxu0 %v1728
      %v1877 = vpop.f32.mrb[0].mxu0
      %v1878 = vadd.f32 0.0, %v1877
      %v1879 = vpop.f32.mrb[0].mxu0
      %v1880 = vpop.f32.mrb[0].mxu0
      %v1881 = vadd.f32 0.0, %v1880
      %v1882 = vpop.f32.mrb[0].mxu0
      %1883 = vmatprep.mubr.bf16.mxu0 0
      %1884 = vmatmul.mubr.bf16.gmra.mrb[0].mxu0 %v1731
      %v1885 = vpop.f32.mrb[0].mxu0
      %v1886 = vadd.f32 0.0, %v1885
      %v1887 = vpop.f32.mrb[0].mxu0
      %v1888 = vpop.f32.mrb[0].mxu0
      %v1889 = vadd.f32 0.0, %v1888
      %v1890 = vpop.f32.mrb[0].mxu0
      %1891 = vmatprep.mubr.bf16.mxu0 0
      %1892 = vmatmul.mubr.bf16.gmra.mrb[0].mxu0 %v1734
      %v1893 = vpop.f32.mrb[0].mxu0
      %v1894 = vadd.f32 0.0, %v1893
      %v1895 = vpop.f32.mrb[0].mxu0
      %v1896 = vpop.f32.mrb[0].mxu0
      %v1897 = vadd.f32 0.0, %v1896
      %v1898 = vpop.f32.mrb[0].mxu0
      %1899 = vdwg.mxu0
      %v1900 = vadd.f32 %v1603, %v1774
      %v1901 = vadd.f32 %v1604, %v1777
      %v1902 = vadd.f32 %v1605, %v1782
      %v1903 = vadd.f32 %v1606, %v1785
      %v1904 = vadd.f32 %v1607, %v1790
      %v1905 = vadd.f32 %v1608, %v1793
      %v1906 = vadd.f32 %v1609, %v1798
      %v1907 = vadd.f32 %v1610, %v1801
      %v1908 = vadd.f32 %v1611, %v1806
      %v1909 = vadd.f32 %v1612, %v1809
      %v1910 = vadd.f32 %v1613, %v1814
      %v1911 = vadd.f32 %v1614, %v1817
      %v1912 = vadd.f32 %v1615, %v1822
      %v1913 = vadd.f32 %v1616, %v1825
      %v1914 = vadd.f32 %v1617, %v1830
      %v1915 = vadd.f32 %v1618, %v1833
      %v1916 = vadd.f32 %v1619, %v1838
      %v1917 = vadd.f32 %v1620, %v1841
      %v1918 = vadd.f32 %v1621, %v1846
      %v1919 = vadd.f32 %v1622, %v1849
      %v1920 = vadd.f32 %v1623, %v1854
      %v1921 = vadd.f32 %v1624, %v1857
      %v1922 = vadd.f32 %v1625, %v1862
      %v1923 = vadd.f32 %v1626, %v1865
      %v1924 = vadd.f32 %v1627, %v1870
      %v1925 = vadd.f32 %v1628, %v1873
      %v1926 = vadd.f32 %v1629, %v1878
      %v1927 = vadd.f32 %v1630, %v1881
      %v1928 = vadd.f32 %v1631, %v1886
      %v1929 = vadd.f32 %v1632, %v1889
      %v1930 = vadd.f32 %v1633, %v1894
      %v1931 = vadd.f32 %v1634, %v1897
      %s1932 = sadd.s32 %s213, 36
      %s1933 = scalar_lea.vmem %s0, %s1932
      %v1934 = vld [vmem:[%s1933] sm:$0xff]
      %v1935 = vld [vmem:[%s1933 + $0x8] sm:$0xff]
      %v1936 = vld [vmem:[%s1933 + $0x10] sm:$0xff]
      %v1937 = vld [vmem:[%s1933 + $0x18] sm:$0xff]
      %v1938 = vld [vmem:[%s1933 + $0x20] sm:$0xff]
      %v1939 = vld [vmem:[%s1933 + $0x28] sm:$0xff]
      %v1940 = vld [vmem:[%s1933 + $0x30] sm:$0xff]
      %v1941 = vld [vmem:[%s1933 + $0x38] sm:$0xff]
      %v1942 = vld [vmem:[%s1933 + $0x40] sm:$0xff]
      %v1943 = vld [vmem:[%s1933 + $0x48] sm:$0xff]
      %v1944 = vld [vmem:[%s1933 + $0x50] sm:$0xff]
      %v1945 = vld [vmem:[%s1933 + $0x58] sm:$0xff]
      %v1946 = vld [vmem:[%s1933 + $0x60] sm:$0xff]
      %v1947 = vld [vmem:[%s1933 + $0x68] sm:$0xff]
      %v1948 = vld [vmem:[%s1933 + $0x70] sm:$0xff]
      %v1949 = vld [vmem:[%s1933 + $0x78] sm:$0xff]
      %v1950 = vld [vmem:[%s1933 + $0x80] sm:$0xff]
      %v1951 = vld [vmem:[%s1933 + $0x88] sm:$0xff]
      %v1952 = vld [vmem:[%s1933 + $0x90] sm:$0xff]
      %v1953 = vld [vmem:[%s1933 + $0x98] sm:$0xff]
      %v1954 = vld [vmem:[%s1933 + $0xa0] sm:$0xff]
      %v1955 = vld [vmem:[%s1933 + $0xa8] sm:$0xff]
      %v1956 = vld [vmem:[%s1933 + $0xb0] sm:$0xff]
      %v1957 = vld [vmem:[%s1933 + $0xb8] sm:$0xff]
      %v1958 = vld [vmem:[%s1933 + $0xc0] sm:$0xff]
      %v1959 = vld [vmem:[%s1933 + $0xc8] sm:$0xff]
      %v1960 = vld [vmem:[%s1933 + $0xd0] sm:$0xff]
      %v1961 = vld [vmem:[%s1933 + $0xd8] sm:$0xff]
      %v1962 = vld [vmem:[%s1933 + $0xe0] sm:$0xff]
      %v1963 = vld [vmem:[%s1933 + $0xe8] sm:$0xff]
      %v1964 = vld [vmem:[%s1933 + $0xf0] sm:$0xff]
      %v1965 = vld [vmem:[%s1933 + $0xf8] sm:$0xff]
      %v1966 = vpack.c.bf16 %v1935, %v1934
      %v1967 = vpack.c.bf16 %v1937, %v1936
      %v1968 = vpack.c.bf16 %v1939, %v1938
      %v1969 = vpack.c.bf16 %v1941, %v1940
      %v1970 = vpack.c.bf16 %v1943, %v1942
      %v1971 = vpack.c.bf16 %v1945, %v1944
      %v1972 = vpack.c.bf16 %v1947, %v1946
      %v1973 = vpack.c.bf16 %v1949, %v1948
      %v1974 = vpack.c.bf16 %v1951, %v1950
      %v1975 = vpack.c.bf16 %v1953, %v1952
      %v1976 = vpack.c.bf16 %v1955, %v1954
      %v1977 = vpack.c.bf16 %v1957, %v1956
      %v1978 = vpack.c.bf16 %v1959, %v1958
      %v1979 = vpack.c.bf16 %v1961, %v1960
      %v1980 = vpack.c.bf16 %v1963, %v1962
      %v1981 = vpack.c.bf16 %v1965, %v1964
      %s1982 = scalar_lea.vmem %s1, 48
      %v1983 = vld [vmem:[%s1982] sm:$0xff]
      %v1984 = vpack.c.bf16 %v1983, %v1983
      %v1986 = vsel %vm318, %v1966, 0
      %v1989 = vsel %vm318, %v1967, 0
      %v1992 = vsel %vm318, %v1968, 0
      %v1995 = vsel %vm318, %v1969, 0
      %v1998 = vsel %vm318, %v1970, 0
      %v2001 = vsel %vm318, %v1971, 0
      %v2004 = vsel %vm318, %v1972, 0
      %v2007 = vsel %vm318, %v1973, 0
      %v2010 = vsel %vm318, %v1974, 0
      %v2013 = vsel %vm318, %v1975, 0
      %v2016 = vsel %vm318, %v1976, 0
      %v2019 = vsel %vm318, %v1977, 0
      %v2022 = vsel %vm318, %v1978, 0
      %v2025 = vsel %vm318, %v1979, 0
      %v2028 = vsel %vm318, %v1980, 0
      %v2031 = vsel %vm318, %v1981, 0
      %v2034 = vsel %vm367, %v1984, 0
      %2036 = vmatprep.subr.bf16.mxu0 0
      %2037 = vmatpush1.bf16.msra.mxu0 %v2034
      %2038 = vmatprep.subr.bf16.mxu0 0
      %2039 = vmatpush1.bf16.msra.mxu0 0
      %2040 = vmatprep.subr.bf16.mxu0 0
      %2041 = vmatpush1.bf16.msra.mxu0 0
      %2042 = vmatprep.subr.bf16.mxu0 0
      %2043 = vmatpush1.bf16.msra.mxu0 0
      %2044 = vmatprep.subr.bf16.mxu0 0
      %2045 = vmatpush1.bf16.msra.mxu0 0
      %2046 = vmatprep.subr.bf16.mxu0 0
      %2047 = vmatpush1.bf16.msra.mxu0 0
      %2048 = vmatprep.subr.bf16.mxu0 0
      %2049 = vmatpush1.bf16.msra.mxu0 0
      %2050 = vmatprep.subr.bf16.mxu0 0
      %2051 = vmatpush1.bf16.msra.mxu0 0
      %2052 = vmatprep.subr.bf16.mxu0 0
      %2053 = vmatpush1.bf16.msra.mxu0 0
      %2054 = vmatprep.subr.bf16.mxu0 0
      %2055 = vmatpush1.bf16.msra.mxu0 0
      %2056 = vmatprep.subr.bf16.mxu0 0
      %2057 = vmatpush1.bf16.msra.mxu0 0
      %2058 = vmatprep.subr.bf16.mxu0 0
      %2059 = vmatpush1.bf16.msra.mxu0 0
      %2060 = vmatprep.subr.bf16.mxu0 0
      %2061 = vmatpush1.bf16.msra.mxu0 0
      %2062 = vmatprep.subr.bf16.mxu0 0
      %2063 = vmatpush1.bf16.msra.mxu0 0
      %2064 = vmatprep.subr.bf16.mxu0 0
      %2065 = vmatpush1.bf16.msra.mxu0 0
      %2066 = vmatprep.subr.bf16.mxu0 0
      %2067 = vmatpush1.bf16.msra.mxu0 0
      %2068 = vmatprep.mubr.bf16.mxu0 0
      %2069 = vmatmul.mubr.bf16.gmra.mrb[0].mxu0 %v1986
      %v2070 = vpop.f32.mrb[0].mxu0
      %v2071 = vadd.f32 0.0, %v2070
      %v2072 = vpop.f32.mrb[0].mxu0
      %v2073 = vpop.f32.mrb[0].mxu0
      %v2074 = vadd.f32 0.0, %v2073
      %v2075 = vpop.f32.mrb[0].mxu0
      %2076 = vmatprep.mubr.bf16.mxu0 0
      %2077 = vmatmul.mubr.bf16.gmra.mrb[0].mxu0 %v1989
      %v2078 = vpop.f32.mrb[0].mxu0
      %v2079 = vadd.f32 0.0, %v2078
      %v2080 = vpop.f32.mrb[0].mxu0
      %v2081 = vpop.f32.mrb[0].mxu0
      %v2082 = vadd.f32 0.0, %v2081
      %v2083 = vpop.f32.mrb[0].mxu0
      %2084 = vmatprep.mubr.bf16.mxu0 0
      %2085 = vmatmul.mubr.bf16.gmra.mrb[0].mxu0 %v1992
      %v2086 = vpop.f32.mrb[0].mxu0
      %v2087 = vadd.f32 0.0, %v2086
      %v2088 = vpop.f32.mrb[0].mxu0
      %v2089 = vpop.f32.mrb[0].mxu0
      %v2090 = vadd.f32 0.0, %v2089
      %v2091 = vpop.f32.mrb[0].mxu0
      %2092 = vmatprep.mubr.bf16.mxu0 0
      %2093 = vmatmul.mubr.bf16.gmra.mrb[0].mxu0 %v1995
      %v2094 = vpop.f32.mrb[0].mxu0
      %v2095 = vadd.f32 0.0, %v2094
      %v2096 = vpop.f32.mrb[0].mxu0
      %v2097 = vpop.f32.mrb[0].mxu0
      %v2098 = vadd.f32 0.0, %v2097
      %v2099 = vpop.f32.mrb[0].mxu0
      %2100 = vmatprep.mubr.bf16.mxu0 0
      %2101 = vmatmul.mubr.bf16.gmra.mrb[0].mxu0 %v1998
      %v2102 = vpop.f32.mrb[0].mxu0
      %v2103 = vadd.f32 0.0, %v2102
      %v2104 = vpop.f32.mrb[0].mxu0
      %v2105 = vpop.f32.mrb[0].mxu0
      %v2106 = vadd.f32 0.0, %v2105
      %v2107 = vpop.f32.mrb[0].mxu0
      %2108 = vmatprep.mubr.bf16.mxu0 0
      %2109 = vmatmul.mubr.bf16.gmra.mrb[0].mxu0 %v2001
      %v2110 = vpop.f32.mrb[0].mxu0
      %v2111 = vadd.f32 0.0, %v2110
      %v2112 = vpop.f32.mrb[0].mxu0
      %v2113 = vpop.f32.mrb[0].mxu0
      %v2114 = vadd.f32 0.0, %v2113
      %v2115 = vpop.f32.mrb[0].mxu0
      %2116 = vmatprep.mubr.bf16.mxu0 0
      %2117 = vmatmul.mubr.bf16.gmra.mrb[0].mxu0 %v2004
      %v2118 = vpop.f32.mrb[0].mxu0
      %v2119 = vadd.f32 0.0, %v2118
      %v2120 = vpop.f32.mrb[0].mxu0
      %v2121 = vpop.f32.mrb[0].mxu0
      %v2122 = vadd.f32 0.0, %v2121
      %v2123 = vpop.f32.mrb[0].mxu0
      %2124 = vmatprep.mubr.bf16.mxu0 0
      %2125 = vmatmul.mubr.bf16.gmra.mrb[0].mxu0 %v2007
      %v2126 = vpop.f32.mrb[0].mxu0
      %v2127 = vadd.f32 0.0, %v2126
      %v2128 = vpop.f32.mrb[0].mxu0
      %v2129 = vpop.f32.mrb[0].mxu0
      %v2130 = vadd.f32 0.0, %v2129
      %v2131 = vpop.f32.mrb[0].mxu0
      %2132 = vmatprep.mubr.bf16.mxu0 0
      %2133 = vmatmul.mubr.bf16.gmra.mrb[0].mxu0 %v2010
      %v2134 = vpop.f32.mrb[0].mxu0
      %v2135 = vadd.f32 0.0, %v2134
      %v2136 = vpop.f32.mrb[0].mxu0
      %v2137 = vpop.f32.mrb[0].mxu0
      %v2138 = vadd.f32 0.0, %v2137
      %v2139 = vpop.f32.mrb[0].mxu0
      %2140 = vmatprep.mubr.bf16.mxu0 0
      %2141 = vmatmul.mubr.bf16.gmra.mrb[0].mxu0 %v2013
      %v2142 = vpop.f32.mrb[0].mxu0
      %v2143 = vadd.f32 0.0, %v2142
      %v2144 = vpop.f32.mrb[0].mxu0
      %v2145 = vpop.f32.mrb[0].mxu0
      %v2146 = vadd.f32 0.0, %v2145
      %v2147 = vpop.f32.mrb[0].mxu0
      %2148 = vmatprep.mubr.bf16.mxu0 0
      %2149 = vmatmul.mubr.bf16.gmra.mrb[0].mxu0 %v2016
      %v2150 = vpop.f32.mrb[0].mxu0
      %v2151 = vadd.f32 0.0, %v2150
      %v2152 = vpop.f32.mrb[0].mxu0
      %v2153 = vpop.f32.mrb[0].mxu0
      %v2154 = vadd.f32 0.0, %v2153
      %v2155 = vpop.f32.mrb[0].mxu0
      %2156 = vmatprep.mubr.bf16.mxu0 0
      %2157 = vmatmul.mubr.bf16.gmra.mrb[0].mxu0 %v2019
      %v2158 = vpop.f32.mrb[0].mxu0
      %v2159 = vadd.f32 0.0, %v2158
      %v2160 = vpop.f32.mrb[0].mxu0
      %v2161 = vpop.f32.mrb[0].mxu0
      %v2162 = vadd.f32 0.0, %v2161
      %v2163 = vpop.f32.mrb[0].mxu0
      %2164 = vmatprep.mubr.bf16.mxu0 0
      %2165 = vmatmul.mubr.bf16.gmra.mrb[0].mxu0 %v2022
      %v2166 = vpop.f32.mrb[0].mxu0
      %v2167 = vadd.f32 0.0, %v2166
      %v2168 = vpop.f32.mrb[0].mxu0
      %v2169 = vpop.f32.mrb[0].mxu0
      %v2170 = vadd.f32 0.0, %v2169
      %v2171 = vpop.f32.mrb[0].mxu0
      %2172 = vmatprep.mubr.bf16.mxu0 0
      %2173 = vmatmul.mubr.bf16.gmra.mrb[0].mxu0 %v2025
      %v2174 = vpop.f32.mrb[0].mxu0
      %v2175 = vadd.f32 0.0, %v2174
      %v2176 = vpop.f32.mrb[0].mxu0
      %v2177 = vpop.f32.mrb[0].mxu0
      %v2178 = vadd.f32 0.0, %v2177
      %v2179 = vpop.f32.mrb[0].mxu0
      %2180 = vmatprep.mubr.bf16.mxu0 0
      %2181 = vmatmul.mubr.bf16.gmra.mrb[0].mxu0 %v2028
      %v2182 = vpop.f32.mrb[0].mxu0
      %v2183 = vadd.f32 0.0, %v2182
      %v2184 = vpop.f32.mrb[0].mxu0
      %v2185 = vpop.f32.mrb[0].mxu0
      %v2186 = vadd.f32 0.0, %v2185
      %v2187 = vpop.f32.mrb[0].mxu0
      %2188 = vmatprep.mubr.bf16.mxu0 0
      %2189 = vmatmul.mubr.bf16.gmra.mrb[0].mxu0 %v2031
      %v2190 = vpop.f32.mrb[0].mxu0
      %v2191 = vadd.f32 0.0, %v2190
      %v2192 = vpop.f32.mrb[0].mxu0
      %v2193 = vpop.f32.mrb[0].mxu0
      %v2194 = vadd.f32 0.0, %v2193
      %v2195 = vpop.f32.mrb[0].mxu0
      %2196 = vdwg.mxu0
      %v2197 = vadd.f32 %v1900, %v2071
      %v2198 = vadd.f32 %v1901, %v2074
      %v2199 = vadd.f32 %v1902, %v2079
      %v2200 = vadd.f32 %v1903, %v2082
      %v2201 = vadd.f32 %v1904, %v2087
      %v2202 = vadd.f32 %v1905, %v2090
      %v2203 = vadd.f32 %v1906, %v2095
      %v2204 = vadd.f32 %v1907, %v2098
      %v2205 = vadd.f32 %v1908, %v2103
      %v2206 = vadd.f32 %v1909, %v2106
      %v2207 = vadd.f32 %v1910, %v2111
      %v2208 = vadd.f32 %v1911, %v2114
      %v2209 = vadd.f32 %v1912, %v2119
      %v2210 = vadd.f32 %v1913, %v2122
      %v2211 = vadd.f32 %v1914, %v2127
      %v2212 = vadd.f32 %v1915, %v2130
      %v2213 = vadd.f32 %v1916, %v2135
      %v2214 = vadd.f32 %v1917, %v2138
      %v2215 = vadd.f32 %v1918, %v2143
      %v2216 = vadd.f32 %v1919, %v2146
      %v2217 = vadd.f32 %v1920, %v2151
      %v2218 = vadd.f32 %v1921, %v2154
      %v2219 = vadd.f32 %v1922, %v2159
      %v2220 = vadd.f32 %v1923, %v2162
      %v2221 = vadd.f32 %v1924, %v2167
      %v2222 = vadd.f32 %v1925, %v2170
      %v2223 = vadd.f32 %v1926, %v2175
      %v2224 = vadd.f32 %v1927, %v2178
      %v2225 = vadd.f32 %v1928, %v2183
      %v2226 = vadd.f32 %v1929, %v2186
      %v2227 = vadd.f32 %v1930, %v2191
      %v2228 = vadd.f32 %v1931, %v2194
      %s2229 = sadd.s32 %s213, 37
      %s2230 = scalar_lea.vmem %s0, %s2229
      %v2231 = vld [vmem:[%s2230] sm:$0xff]
      %v2232 = vld [vmem:[%s2230 + $0x8] sm:$0xff]
      %v2233 = vld [vmem:[%s2230 + $0x10] sm:$0xff]
      %v2234 = vld [vmem:[%s2230 + $0x18] sm:$0xff]
      %v2235 = vld [vmem:[%s2230 + $0x20] sm:$0xff]
      %v2236 = vld [vmem:[%s2230 + $0x28] sm:$0xff]
      %v2237 = vld [vmem:[%s2230 + $0x30] sm:$0xff]
      %v2238 = vld [vmem:[%s2230 + $0x38] sm:$0xff]
      %v2239 = vld [vmem:[%s2230 + $0x40] sm:$0xff]
      %v2240 = vld [vmem:[%s2230 + $0x48] sm:$0xff]
      %v2241 = vld [vmem:[%s2230 + $0x50] sm:$0xff]
      %v2242 = vld [vmem:[%s2230 + $0x58] sm:$0xff]
      %v2243 = vld [vmem:[%s2230 + $0x60] sm:$0xff]
      %v2244 = vld [vmem:[%s2230 + $0x68] sm:$0xff]
      %v2245 = vld [vmem:[%s2230 + $0x70] sm:$0xff]
      %v2246 = vld [vmem:[%s2230 + $0x78] sm:$0xff]
      %v2247 = vld [vmem:[%s2230 + $0x80] sm:$0xff]
      %v2248 = vld [vmem:[%s2230 + $0x88] sm:$0xff]
      %v2249 = vld [vmem:[%s2230 + $0x90] sm:$0xff]
      %v2250 = vld [vmem:[%s2230 + $0x98] sm:$0xff]
      %v2251 = vld [vmem:[%s2230 + $0xa0] sm:$0xff]
      %v2252 = vld [vmem:[%s2230 + $0xa8] sm:$0xff]
      %v2253 = vld [vmem:[%s2230 + $0xb0] sm:$0xff]
      %v2254 = vld [vmem:[%s2230 + $0xb8] sm:$0xff]
      %v2255 = vld [vmem:[%s2230 + $0xc0] sm:$0xff]
      %v2256 = vld [vmem:[%s2230 + $0xc8] sm:$0xff]
      %v2257 = vld [vmem:[%s2230 + $0xd0] sm:$0xff]
      %v2258 = vld [vmem:[%s2230 + $0xd8] sm:$0xff]
      %v2259 = vld [vmem:[%s2230 + $0xe0] sm:$0xff]
      %v2260 = vld [vmem:[%s2230 + $0xe8] sm:$0xff]
      %v2261 = vld [vmem:[%s2230 + $0xf0] sm:$0xff]
      %v2262 = vld [vmem:[%s2230 + $0xf8] sm:$0xff]
      %v2263 = vpack.c.bf16 %v2232, %v2231
      %v2264 = vpack.c.bf16 %v2234, %v2233
      %v2265 = vpack.c.bf16 %v2236, %v2235
      %v2266 = vpack.c.bf16 %v2238, %v2237
      %v2267 = vpack.c.bf16 %v2240, %v2239
      %v2268 = vpack.c.bf16 %v2242, %v2241
      %v2269 = vpack.c.bf16 %v2244, %v2243
      %v2270 = vpack.c.bf16 %v2246, %v2245
      %v2271 = vpack.c.bf16 %v2248, %v2247
      %v2272 = vpack.c.bf16 %v2250, %v2249
      %v2273 = vpack.c.bf16 %v2252, %v2251
      %v2274 = vpack.c.bf16 %v2254, %v2253
      %v2275 = vpack.c.bf16 %v2256, %v2255
      %v2276 = vpack.c.bf16 %v2258, %v2257
      %v2277 = vpack.c.bf16 %v2260, %v2259
      %v2278 = vpack.c.bf16 %v2262, %v2261
      %s2279 = scalar_lea.vmem %s1, 56
      %v2280 = vld [vmem:[%s2279] sm:$0xff]
      %v2281 = vpack.c.bf16 %v2280, %v2280
      %v2283 = vsel %vm318, %v2263, 0
      %v2286 = vsel %vm318, %v2264, 0
      %v2289 = vsel %vm318, %v2265, 0
      %v2292 = vsel %vm318, %v2266, 0
      %v2295 = vsel %vm318, %v2267, 0
      %v2298 = vsel %vm318, %v2268, 0
      %v2301 = vsel %vm318, %v2269, 0
      %v2304 = vsel %vm318, %v2270, 0
      %v2307 = vsel %vm318, %v2271, 0
      %v2310 = vsel %vm318, %v2272, 0
      %v2313 = vsel %vm318, %v2273, 0
      %v2316 = vsel %vm318, %v2274, 0
      %v2319 = vsel %vm318, %v2275, 0
      %v2322 = vsel %vm318, %v2276, 0
      %v2325 = vsel %vm318, %v2277, 0
      %v2328 = vsel %vm318, %v2278, 0
      %v2331 = vsel %vm367, %v2281, 0
      %2333 = vmatprep.subr.bf16.mxu0 0
      %2334 = vmatpush1.bf16.msra.mxu0 %v2331
      %2335 = vmatprep.subr.bf16.mxu0 0
      %2336 = vmatpush1.bf16.msra.mxu0 0
      %2337 = vmatprep.subr.bf16.mxu0 0
      %2338 = vmatpush1.bf16.msra.mxu0 0
      %2339 = vmatprep.subr.bf16.mxu0 0
      %2340 = vmatpush1.bf16.msra.mxu0 0
      %2341 = vmatprep.subr.bf16.mxu0 0
      %2342 = vmatpush1.bf16.msra.mxu0 0
      %2343 = vmatprep.subr.bf16.mxu0 0
      %2344 = vmatpush1.bf16.msra.mxu0 0
      %2345 = vmatprep.subr.bf16.mxu0 0
      %2346 = vmatpush1.bf16.msra.mxu0 0
      %2347 = vmatprep.subr.bf16.mxu0 0
      %2348 = vmatpush1.bf16.msra.mxu0 0
      %2349 = vmatprep.subr.bf16.mxu0 0
      %2350 = vmatpush1.bf16.msra.mxu0 0
      %2351 = vmatprep.subr.bf16.mxu0 0
      %2352 = vmatpush1.bf16.msra.mxu0 0
      %2353 = vmatprep.subr.bf16.mxu0 0
      %2354 = vmatpush1.bf16.msra.mxu0 0
      %2355 = vmatprep.subr.bf16.mxu0 0
      %2356 = vmatpush1.bf16.msra.mxu0 0
      %2357 = vmatprep.subr.bf16.mxu0 0
      %2358 = vmatpush1.bf16.msra.mxu0 0
      %2359 = vmatprep.subr.bf16.mxu0 0
      %2360 = vmatpush1.bf16.msra.mxu0 0
      %2361 = vmatprep.subr.bf16.mxu0 0
      %2362 = vmatpush1.bf16.msra.mxu0 0
      %2363 = vmatprep.subr.bf16.mxu0 0
      %2364 = vmatpush1.bf16.msra.mxu0 0
      %2365 = vmatprep.mubr.bf16.mxu0 0
      %2366 = vmatmul.mubr.bf16.gmra.mrb[0].mxu0 %v2283
      %v2367 = vpop.f32.mrb[0].mxu0
      %v2368 = vadd.f32 0.0, %v2367
      %v2369 = vpop.f32.mrb[0].mxu0
      %v2370 = vpop.f32.mrb[0].mxu0
      %v2371 = vadd.f32 0.0, %v2370
      %v2372 = vpop.f32.mrb[0].mxu0
      %2373 = vmatprep.mubr.bf16.mxu0 0
      %2374 = vmatmul.mubr.bf16.gmra.mrb[0].mxu0 %v2286
      %v2375 = vpop.f32.mrb[0].mxu0
      %v2376 = vadd.f32 0.0, %v2375
      %v2377 = vpop.f32.mrb[0].mxu0
      %v2378 = vpop.f32.mrb[0].mxu0
      %v2379 = vadd.f32 0.0, %v2378
      %v2380 = vpop.f32.mrb[0].mxu0
      %2381 = vmatprep.mubr.bf16.mxu0 0
      %2382 = vmatmul.mubr.bf16.gmra.mrb[0].mxu0 %v2289
      %v2383 = vpop.f32.mrb[0].mxu0
      %v2384 = vadd.f32 0.0, %v2383
      %v2385 = vpop.f32.mrb[0].mxu0
      %v2386 = vpop.f32.mrb[0].mxu0
      %v2387 = vadd.f32 0.0, %v2386
      %v2388 = vpop.f32.mrb[0].mxu0
      %2389 = vmatprep.mubr.bf16.mxu0 0
      %2390 = vmatmul.mubr.bf16.gmra.mrb[0].mxu0 %v2292
      %v2391 = vpop.f32.mrb[0].mxu0
      %v2392 = vadd.f32 0.0, %v2391
      %v2393 = vpop.f32.mrb[0].mxu0
      %v2394 = vpop.f32.mrb[0].mxu0
      %v2395 = vadd.f32 0.0, %v2394
      %v2396 = vpop.f32.mrb[0].mxu0
      %2397 = vmatprep.mubr.bf16.mxu0 0
      %2398 = vmatmul.mubr.bf16.gmra.mrb[0].mxu0 %v2295
      %v2399 = vpop.f32.mrb[0].mxu0
      %v2400 = vadd.f32 0.0, %v2399
      %v2401 = vpop.f32.mrb[0].mxu0
      %v2402 = vpop.f32.mrb[0].mxu0
      %v2403 = vadd.f32 0.0, %v2402
      %v2404 = vpop.f32.mrb[0].mxu0
      %2405 = vmatprep.mubr.bf16.mxu0 0
      %2406 = vmatmul.mubr.bf16.gmra.mrb[0].mxu0 %v2298
      %v2407 = vpop.f32.mrb[0].mxu0
      %v2408 = vadd.f32 0.0, %v2407
      %v2409 = vpop.f32.mrb[0].mxu0
      %v2410 = vpop.f32.mrb[0].mxu0
      %v2411 = vadd.f32 0.0, %v2410
      %v2412 = vpop.f32.mrb[0].mxu0
      %2413 = vmatprep.mubr.bf16.mxu0 0
      %2414 = vmatmul.mubr.bf16.gmra.mrb[0].mxu0 %v2301
      %v2415 = vpop.f32.mrb[0].mxu0
      %v2416 = vadd.f32 0.0, %v2415
      %v2417 = vpop.f32.mrb[0].mxu0
      %v2418 = vpop.f32.mrb[0].mxu0
      %v2419 = vadd.f32 0.0, %v2418
      %v2420 = vpop.f32.mrb[0].mxu0
      %2421 = vmatprep.mubr.bf16.mxu0 0
      %2422 = vmatmul.mubr.bf16.gmra.mrb[0].mxu0 %v2304
      %v2423 = vpop.f32.mrb[0].mxu0
      %v2424 = vadd.f32 0.0, %v2423
      %v2425 = vpop.f32.mrb[0].mxu0
      %v2426 = vpop.f32.mrb[0].mxu0
      %v2427 = vadd.f32 0.0, %v2426
      %v2428 = vpop.f32.mrb[0].mxu0
      %2429 = vmatprep.mubr.bf16.mxu0 0
      %2430 = vmatmul.mubr.bf16.gmra.mrb[0].mxu0 %v2307
      %v2431 = vpop.f32.mrb[0].mxu0
      %v2432 = vadd.f32 0.0, %v2431
      %v2433 = vpop.f32.mrb[0].mxu0
      %v2434 = vpop.f32.mrb[0].mxu0
      %v2435 = vadd.f32 0.0, %v2434
      %v2436 = vpop.f32.mrb[0].mxu0
      %2437 = vmatprep.mubr.bf16.mxu0 0
      %2438 = vmatmul.mubr.bf16.gmra.mrb[0].mxu0 %v2310
      %v2439 = vpop.f32.mrb[0].mxu0
      %v2440 = vadd.f32 0.0, %v2439
      %v2441 = vpop.f32.mrb[0].mxu0
      %v2442 = vpop.f32.mrb[0].mxu0
      %v2443 = vadd.f32 0.0, %v2442
      %v2444 = vpop.f32.mrb[0].mxu0
      %2445 = vmatprep.mubr.bf16.mxu0 0
      %2446 = vmatmul.mubr.bf16.gmra.mrb[0].mxu0 %v2313
      %v2447 = vpop.f32.mrb[0].mxu0
      %v2448 = vadd.f32 0.0, %v2447
      %v2449 = vpop.f32.mrb[0].mxu0
      %v2450 = vpop.f32.mrb[0].mxu0
      %v2451 = vadd.f32 0.0, %v2450
      %v2452 = vpop.f32.mrb[0].mxu0
      %2453 = vmatprep.mubr.bf16.mxu0 0
      %2454 = vmatmul.mubr.bf16.gmra.mrb[0].mxu0 %v2316
      %v2455 = vpop.f32.mrb[0].mxu0
      %v2456 = vadd.f32 0.0, %v2455
      %v2457 = vpop.f32.mrb[0].mxu0
      %v2458 = vpop.f32.mrb[0].mxu0
      %v2459 = vadd.f32 0.0, %v2458
      %v2460 = vpop.f32.mrb[0].mxu0
      %2461 = vmatprep.mubr.bf16.mxu0 0
      %2462 = vmatmul.mubr.bf16.gmra.mrb[0].mxu0 %v2319
      %v2463 = vpop.f32.mrb[0].mxu0
      %v2464 = vadd.f32 0.0, %v2463
      %v2465 = vpop.f32.mrb[0].mxu0
      %v2466 = vpop.f32.mrb[0].mxu0
      %v2467 = vadd.f32 0.0, %v2466
      %v2468 = vpop.f32.mrb[0].mxu0
      %2469 = vmatprep.mubr.bf16.mxu0 0
      %2470 = vmatmul.mubr.bf16.gmra.mrb[0].mxu0 %v2322
      %v2471 = vpop.f32.mrb[0].mxu0
      %v2472 = vadd.f32 0.0, %v2471
      %v2473 = vpop.f32.mrb[0].mxu0
      %v2474 = vpop.f32.mrb[0].mxu0
      %v2475 = vadd.f32 0.0, %v2474
      %v2476 = vpop.f32.mrb[0].mxu0
      %2477 = vmatprep.mubr.bf16.mxu0 0
      %2478 = vmatmul.mubr.bf16.gmra.mrb[0].mxu0 %v2325
      %v2479 = vpop.f32.mrb[0].mxu0
      %v2480 = vadd.f32 0.0, %v2479
      %v2481 = vpop.f32.mrb[0].mxu0
      %v2482 = vpop.f32.mrb[0].mxu0
      %v2483 = vadd.f32 0.0, %v2482
      %v2484 = vpop.f32.mrb[0].mxu0
      %2485 = vmatprep.mubr.bf16.mxu0 0
      %2486 = vmatmul.mubr.bf16.gmra.mrb[0].mxu0 %v2328
      %v2487 = vpop.f32.mrb[0].mxu0
      %v2488 = vadd.f32 0.0, %v2487
      %v2489 = vpop.f32.mrb[0].mxu0
      %v2490 = vpop.f32.mrb[0].mxu0
      %v2491 = vadd.f32 0.0, %v2490
      %v2492 = vpop.f32.mrb[0].mxu0
      %2493 = vdwg.mxu0
      %v2494 = vadd.f32 %v2197, %v2368
      %v2495 = vadd.f32 %v2198, %v2371
      %v2496 = vadd.f32 %v2199, %v2376
      %v2497 = vadd.f32 %v2200, %v2379
      %v2498 = vadd.f32 %v2201, %v2384
      %v2499 = vadd.f32 %v2202, %v2387
      %v2500 = vadd.f32 %v2203, %v2392
      %v2501 = vadd.f32 %v2204, %v2395
      %v2502 = vadd.f32 %v2205, %v2400
      %v2503 = vadd.f32 %v2206, %v2403
      %v2504 = vadd.f32 %v2207, %v2408
      %v2505 = vadd.f32 %v2208, %v2411
      %v2506 = vadd.f32 %v2209, %v2416
      %v2507 = vadd.f32 %v2210, %v2419
      %v2508 = vadd.f32 %v2211, %v2424
      %v2509 = vadd.f32 %v2212, %v2427
      %v2510 = vadd.f32 %v2213, %v2432
      %v2511 = vadd.f32 %v2214, %v2435
      %v2512 = vadd.f32 %v2215, %v2440
      %v2513 = vadd.f32 %v2216, %v2443
      %v2514 = vadd.f32 %v2217, %v2448
      %v2515 = vadd.f32 %v2218, %v2451
      %v2516 = vadd.f32 %v2219, %v2456
      %v2517 = vadd.f32 %v2220, %v2459
      %v2518 = vadd.f32 %v2221, %v2464
      %v2519 = vadd.f32 %v2222, %v2467
      %v2520 = vadd.f32 %v2223, %v2472
      %v2521 = vadd.f32 %v2224, %v2475
      %v2522 = vadd.f32 %v2225, %v2480
      %v2523 = vadd.f32 %v2226, %v2483
      %v2524 = vadd.f32 %v2227, %v2488
      %v2525 = vadd.f32 %v2228, %v2491
      %s2526 = sadd.s32 %s213, 38
      %s2527 = scalar_lea.vmem %s0, %s2526
      %v2528 = vld [vmem:[%s2527] sm:$0xff]
      %v2529 = vld [vmem:[%s2527 + $0x8] sm:$0xff]
      %v2530 = vld [vmem:[%s2527 + $0x10] sm:$0xff]
      %v2531 = vld [vmem:[%s2527 + $0x18] sm:$0xff]
      %v2532 = vld [vmem:[%s2527 + $0x20] sm:$0xff]
      %v2533 = vld [vmem:[%s2527 + $0x28] sm:$0xff]
      %v2534 = vld [vmem:[%s2527 + $0x30] sm:$0xff]
      %v2535 = vld [vmem:[%s2527 + $0x38] sm:$0xff]
      %v2536 = vld [vmem:[%s2527 + $0x40] sm:$0xff]
      %v2537 = vld [vmem:[%s2527 + $0x48] sm:$0xff]
      %v2538 = vld [vmem:[%s2527 + $0x50] sm:$0xff]
      %v2539 = vld [vmem:[%s2527 + $0x58] sm:$0xff]
      %v2540 = vld [vmem:[%s2527 + $0x60] sm:$0xff]
      %v2541 = vld [vmem:[%s2527 + $0x68] sm:$0xff]
      %v2542 = vld [vmem:[%s2527 + $0x70] sm:$0xff]
      %v2543 = vld [vmem:[%s2527 + $0x78] sm:$0xff]
      %v2544 = vld [vmem:[%s2527 + $0x80] sm:$0xff]
      %v2545 = vld [vmem:[%s2527 + $0x88] sm:$0xff]
      %v2546 = vld [vmem:[%s2527 + $0x90] sm:$0xff]
      %v2547 = vld [vmem:[%s2527 + $0x98] sm:$0xff]
      %v2548 = vld [vmem:[%s2527 + $0xa0] sm:$0xff]
      %v2549 = vld [vmem:[%s2527 + $0xa8] sm:$0xff]
      %v2550 = vld [vmem:[%s2527 + $0xb0] sm:$0xff]
      %v2551 = vld [vmem:[%s2527 + $0xb8] sm:$0xff]
      %v2552 = vld [vmem:[%s2527 + $0xc0] sm:$0xff]
      %v2553 = vld [vmem:[%s2527 + $0xc8] sm:$0xff]
      %v2554 = vld [vmem:[%s2527 + $0xd0] sm:$0xff]
      %v2555 = vld [vmem:[%s2527 + $0xd8] sm:$0xff]
      %v2556 = vld [vmem:[%s2527 + $0xe0] sm:$0xff]
      %v2557 = vld [vmem:[%s2527 + $0xe8] sm:$0xff]
      %v2558 = vld [vmem:[%s2527 + $0xf0] sm:$0xff]
      %v2559 = vld [vmem:[%s2527 + $0xf8] sm:$0xff]
      %v2560 = vpack.c.bf16 %v2529, %v2528
      %v2561 = vpack.c.bf16 %v2531, %v2530
      %v2562 = vpack.c.bf16 %v2533, %v2532
      %v2563 = vpack.c.bf16 %v2535, %v2534
      %v2564 = vpack.c.bf16 %v2537, %v2536
      %v2565 = vpack.c.bf16 %v2539, %v2538
      %v2566 = vpack.c.bf16 %v2541, %v2540
      %v2567 = vpack.c.bf16 %v2543, %v2542
      %v2568 = vpack.c.bf16 %v2545, %v2544
      %v2569 = vpack.c.bf16 %v2547, %v2546
      %v2570 = vpack.c.bf16 %v2549, %v2548
      %v2571 = vpack.c.bf16 %v2551, %v2550
      %v2572 = vpack.c.bf16 %v2553, %v2552
      %v2573 = vpack.c.bf16 %v2555, %v2554
      %v2574 = vpack.c.bf16 %v2557, %v2556
      %v2575 = vpack.c.bf16 %v2559, %v2558
      %s2576 = scalar_lea.vmem %s1, 64
      %v2577 = vld [vmem:[%s2576] sm:$0xff]
      %v2578 = vpack.c.bf16 %v2577, %v2577
      %v2580 = vsel %vm318, %v2560, 0
      %v2583 = vsel %vm318, %v2561, 0
      %v2586 = vsel %vm318, %v2562, 0
      %v2589 = vsel %vm318, %v2563, 0
      %v2592 = vsel %vm318, %v2564, 0
      %v2595 = vsel %vm318, %v2565, 0
      %v2598 = vsel %vm318, %v2566, 0
      %v2601 = vsel %vm318, %v2567, 0
      %v2604 = vsel %vm318, %v2568, 0
      %v2607 = vsel %vm318, %v2569, 0
      %v2610 = vsel %vm318, %v2570, 0
      %v2613 = vsel %vm318, %v2571, 0
      %v2616 = vsel %vm318, %v2572, 0
      %v2619 = vsel %vm318, %v2573, 0
      %v2622 = vsel %vm318, %v2574, 0
      %v2625 = vsel %vm318, %v2575, 0
      %v2628 = vsel %vm367, %v2578, 0
      %2630 = vmatprep.subr.bf16.mxu0 0
      %2631 = vmatpush1.bf16.msra.mxu0 %v2628
      %2632 = vmatprep.subr.bf16.mxu0 0
      %2633 = vmatpush1.bf16.msra.mxu0 0
      %2634 = vmatprep.subr.bf16.mxu0 0
      %2635 = vmatpush1.bf16.msra.mxu0 0
      %2636 = vmatprep.subr.bf16.mxu0 0
      %2637 = vmatpush1.bf16.msra.mxu0 0
      %2638 = vmatprep.subr.bf16.mxu0 0
      %2639 = vmatpush1.bf16.msra.mxu0 0
      %2640 = vmatprep.subr.bf16.mxu0 0
      %2641 = vmatpush1.bf16.msra.mxu0 0
      %2642 = vmatprep.subr.bf16.mxu0 0
      %2643 = vmatpush1.bf16.msra.mxu0 0
      %2644 = vmatprep.subr.bf16.mxu0 0
      %2645 = vmatpush1.bf16.msra.mxu0 0
      %2646 = vmatprep.subr.bf16.mxu0 0
      %2647 = vmatpush1.bf16.msra.mxu0 0
      %2648 = vmatprep.subr.bf16.mxu0 0
      %2649 = vmatpush1.bf16.msra.mxu0 0
      %2650 = vmatprep.subr.bf16.mxu0 0
      %2651 = vmatpush1.bf16.msra.mxu0 0
      %2652 = vmatprep.subr.bf16.mxu0 0
      %2653 = vmatpush1.bf16.msra.mxu0 0
      %2654 = vmatprep.subr.bf16.mxu0 0
      %2655 = vmatpush1.bf16.msra.mxu0 0
      %2656 = vmatprep.subr.bf16.mxu0 0
      %2657 = vmatpush1.bf16.msra.mxu0 0
      %2658 = vmatprep.subr.bf16.mxu0 0
      %2659 = vmatpush1.bf16.msra.mxu0 0
      %2660 = vmatprep.subr.bf16.mxu0 0
      %2661 = vmatpush1.bf16.msra.mxu0 0
      %2662 = vmatprep.mubr.bf16.mxu0 0
      %2663 = vmatmul.mubr.bf16.gmra.mrb[0].mxu0 %v2580
      %v2664 = vpop.f32.mrb[0].mxu0
      %v2665 = vadd.f32 0.0, %v2664
      %v2666 = vpop.f32.mrb[0].mxu0
      %v2667 = vpop.f32.mrb[0].mxu0
      %v2668 = vadd.f32 0.0, %v2667
      %v2669 = vpop.f32.mrb[0].mxu0
      %2670 = vmatprep.mubr.bf16.mxu0 0
      %2671 = vmatmul.mubr.bf16.gmra.mrb[0].mxu0 %v2583
      %v2672 = vpop.f32.mrb[0].mxu0
      %v2673 = vadd.f32 0.0, %v2672
      %v2674 = vpop.f32.mrb[0].mxu0
      %v2675 = vpop.f32.mrb[0].mxu0
      %v2676 = vadd.f32 0.0, %v2675
      %v2677 = vpop.f32.mrb[0].mxu0
      %2678 = vmatprep.mubr.bf16.mxu0 0
      %2679 = vmatmul.mubr.bf16.gmra.mrb[0].mxu0 %v2586
      %v2680 = vpop.f32.mrb[0].mxu0
      %v2681 = vadd.f32 0.0, %v2680
      %v2682 = vpop.f32.mrb[0].mxu0
      %v2683 = vpop.f32.mrb[0].mxu0
      %v2684 = vadd.f32 0.0, %v2683
      %v2685 = vpop.f32.mrb[0].mxu0
      %2686 = vmatprep.mubr.bf16.mxu0 0
      %2687 = vmatmul.mubr.bf16.gmra.mrb[0].mxu0 %v2589
      %v2688 = vpop.f32.mrb[0].mxu0
      %v2689 = vadd.f32 0.0, %v2688
      %v2690 = vpop.f32.mrb[0].mxu0
      %v2691 = vpop.f32.mrb[0].mxu0
      %v2692 = vadd.f32 0.0, %v2691
      %v2693 = vpop.f32.mrb[0].mxu0
      %2694 = vmatprep.mubr.bf16.mxu0 0
      %2695 = vmatmul.mubr.bf16.gmra.mrb[0].mxu0 %v2592
      %v2696 = vpop.f32.mrb[0].mxu0
      %v2697 = vadd.f32 0.0, %v2696
      %v2698 = vpop.f32.mrb[0].mxu0
      %v2699 = vpop.f32.mrb[0].mxu0
      %v2700 = vadd.f32 0.0, %v2699
      %v2701 = vpop.f32.mrb[0].mxu0
      %2702 = vmatprep.mubr.bf16.mxu0 0
      %2703 = vmatmul.mubr.bf16.gmra.mrb[0].mxu0 %v2595
      %v2704 = vpop.f32.mrb[0].mxu0
      %v2705 = vadd.f32 0.0, %v2704
      %v2706 = vpop.f32.mrb[0].mxu0
      %v2707 = vpop.f32.mrb[0].mxu0
      %v2708 = vadd.f32 0.0, %v2707
      %v2709 = vpop.f32.mrb[0].mxu0
      %2710 = vmatprep.mubr.bf16.mxu0 0
      %2711 = vmatmul.mubr.bf16.gmra.mrb[0].mxu0 %v2598
      %v2712 = vpop.f32.mrb[0].mxu0
      %v2713 = vadd.f32 0.0, %v2712
      %v2714 = vpop.f32.mrb[0].mxu0
      %v2715 = vpop.f32.mrb[0].mxu0
      %v2716 = vadd.f32 0.0, %v2715
      %v2717 = vpop.f32.mrb[0].mxu0
      %2718 = vmatprep.mubr.bf16.mxu0 0
      %2719 = vmatmul.mubr.bf16.gmra.mrb[0].mxu0 %v2601
      %v2720 = vpop.f32.mrb[0].mxu0
      %v2721 = vadd.f32 0.0, %v2720
      %v2722 = vpop.f32.mrb[0].mxu0
      %v2723 = vpop.f32.mrb[0].mxu0
      %v2724 = vadd.f32 0.0, %v2723
      %v2725 = vpop.f32.mrb[0].mxu0
      %2726 = vmatprep.mubr.bf16.mxu0 0
      %2727 = vmatmul.mubr.bf16.gmra.mrb[0].mxu0 %v2604
      %v2728 = vpop.f32.mrb[0].mxu0
      %v2729 = vadd.f32 0.0, %v2728
      %v2730 = vpop.f32.mrb[0].mxu0
      %v2731 = vpop.f32.mrb[0].mxu0
      %v2732 = vadd.f32 0.0, %v2731
      %v2733 = vpop.f32.mrb[0].mxu0
      %2734 = vmatprep.mubr.bf16.mxu0 0
      %2735 = vmatmul.mubr.bf16.gmra.mrb[0].mxu0 %v2607
      %v2736 = vpop.f32.mrb[0].mxu0
      %v2737 = vadd.f32 0.0, %v2736
      %v2738 = vpop.f32.mrb[0].mxu0
      %v2739 = vpop.f32.mrb[0].mxu0
      %v2740 = vadd.f32 0.0, %v2739
      %v2741 = vpop.f32.mrb[0].mxu0
      %2742 = vmatprep.mubr.bf16.mxu0 0
      %2743 = vmatmul.mubr.bf16.gmra.mrb[0].mxu0 %v2610
      %v2744 = vpop.f32.mrb[0].mxu0
      %v2745 = vadd.f32 0.0, %v2744
      %v2746 = vpop.f32.mrb[0].mxu0
      %v2747 = vpop.f32.mrb[0].mxu0
      %v2748 = vadd.f32 0.0, %v2747
      %v2749 = vpop.f32.mrb[0].mxu0
      %2750 = vmatprep.mubr.bf16.mxu0 0
      %2751 = vmatmul.mubr.bf16.gmra.mrb[0].mxu0 %v2613
      %v2752 = vpop.f32.mrb[0].mxu0
      %v2753 = vadd.f32 0.0, %v2752
      %v2754 = vpop.f32.mrb[0].mxu0
      %v2755 = vpop.f32.mrb[0].mxu0
      %v2756 = vadd.f32 0.0, %v2755
      %v2757 = vpop.f32.mrb[0].mxu0
      %2758 = vmatprep.mubr.bf16.mxu0 0
      %2759 = vmatmul.mubr.bf16.gmra.mrb[0].mxu0 %v2616
      %v2760 = vpop.f32.mrb[0].mxu0
      %v2761 = vadd.f32 0.0, %v2760
      %v2762 = vpop.f32.mrb[0].mxu0
      %v2763 = vpop.f32.mrb[0].mxu0
      %v2764 = vadd.f32 0.0, %v2763
      %v2765 = vpop.f32.mrb[0].mxu0
      %2766 = vmatprep.mubr.bf16.mxu0 0
      %2767 = vmatmul.mubr.bf16.gmra.mrb[0].mxu0 %v2619
      %v2768 = vpop.f32.mrb[0].mxu0
      %v2769 = vadd.f32 0.0, %v2768
      %v2770 = vpop.f32.mrb[0].mxu0
      %v2771 = vpop.f32.mrb[0].mxu0
      %v2772 = vadd.f32 0.0, %v2771
      %v2773 = vpop.f32.mrb[0].mxu0
      %2774 = vmatprep.mubr.bf16.mxu0 0
      %2775 = vmatmul.mubr.bf16.gmra.mrb[0].mxu0 %v2622
      %v2776 = vpop.f32.mrb[0].mxu0
      %v2777 = vadd.f32 0.0, %v2776
      %v2778 = vpop.f32.mrb[0].mxu0
      %v2779 = vpop.f32.mrb[0].mxu0
      %v2780 = vadd.f32 0.0, %v2779
      %v2781 = vpop.f32.mrb[0].mxu0
      %2782 = vmatprep.mubr.bf16.mxu0 0
      %2783 = vmatmul.mubr.bf16.gmra.mrb[0].mxu0 %v2625
      %v2784 = vpop.f32.mrb[0].mxu0
      %v2785 = vadd.f32 0.0, %v2784
      %v2786 = vpop.f32.mrb[0].mxu0
      %v2787 = vpop.f32.mrb[0].mxu0
      %v2788 = vadd.f32 0.0, %v2787
      %v2789 = vpop.f32.mrb[0].mxu0
      %2790 = vdwg.mxu0
      %v2791 = vadd.f32 %v2494, %v2665
      %v2792 = vadd.f32 %v2495, %v2668
      %v2793 = vadd.f32 %v2496, %v2673
      %v2794 = vadd.f32 %v2497, %v2676
      %v2795 = vadd.f32 %v2498, %v2681
      %v2796 = vadd.f32 %v2499, %v2684
      %v2797 = vadd.f32 %v2500, %v2689
      %v2798 = vadd.f32 %v2501, %v2692
      %v2799 = vadd.f32 %v2502, %v2697
      %v2800 = vadd.f32 %v2503, %v2700
      %v2801 = vadd.f32 %v2504, %v2705
      %v2802 = vadd.f32 %v2505, %v2708
      %v2803 = vadd.f32 %v2506, %v2713
      %v2804 = vadd.f32 %v2507, %v2716
      %v2805 = vadd.f32 %v2508, %v2721
      %v2806 = vadd.f32 %v2509, %v2724
      %v2807 = vadd.f32 %v2510, %v2729
      %v2808 = vadd.f32 %v2511, %v2732
      %v2809 = vadd.f32 %v2512, %v2737
      %v2810 = vadd.f32 %v2513, %v2740
      %v2811 = vadd.f32 %v2514, %v2745
      %v2812 = vadd.f32 %v2515, %v2748
      %v2813 = vadd.f32 %v2516, %v2753
      %v2814 = vadd.f32 %v2517, %v2756
      %v2815 = vadd.f32 %v2518, %v2761
      %v2816 = vadd.f32 %v2519, %v2764
      %v2817 = vadd.f32 %v2520, %v2769
      %v2818 = vadd.f32 %v2521, %v2772
      %v2819 = vadd.f32 %v2522, %v2777
      %v2820 = vadd.f32 %v2523, %v2780
      %v2821 = vadd.f32 %v2524, %v2785
      %v2822 = vadd.f32 %v2525, %v2788
      %2823 = vst [vmem:[%s206] sm:$0xff] %v2791
      %2824 = vst [vmem:[%s206 + $0x8] sm:$0xff] %v2792
      %2825 = vst [vmem:[%s206 + $0x10] sm:$0xff] %v2793
      %2826 = vst [vmem:[%s206 + $0x18] sm:$0xff] %v2794
      %2827 = vst [vmem:[%s206 + $0x20] sm:$0xff] %v2795
      %2828 = vst [vmem:[%s206 + $0x28] sm:$0xff] %v2796
      %2829 = vst [vmem:[%s206 + $0x30] sm:$0xff] %v2797
      %2830 = vst [vmem:[%s206 + $0x38] sm:$0xff] %v2798
      %2831 = vst [vmem:[%s206 + $0x40] sm:$0xff] %v2799
      %2832 = vst [vmem:[%s206 + $0x48] sm:$0xff] %v2800
      %2833 = vst [vmem:[%s206 + $0x50] sm:$0xff] %v2801
      %2834 = vst [vmem:[%s206 + $0x58] sm:$0xff] %v2802
      %2835 = vst [vmem:[%s206 + $0x60] sm:$0xff] %v2803
      %2836 = vst [vmem:[%s206 + $0x68] sm:$0xff] %v2804
      %2837 = vst [vmem:[%s206 + $0x70] sm:$0xff] %v2805
      %2838 = vst [vmem:[%s206 + $0x78] sm:$0xff] %v2806
      %2839 = vst [vmem:[%s206 + $0x80] sm:$0xff] %v2807
      %2840 = vst [vmem:[%s206 + $0x88] sm:$0xff] %v2808
      %2841 = vst [vmem:[%s206 + $0x90] sm:$0xff] %v2809
      %2842 = vst [vmem:[%s206 + $0x98] sm:$0xff] %v2810
      %2843 = vst [vmem:[%s206 + $0xa0] sm:$0xff] %v2811
      %2844 = vst [vmem:[%s206 + $0xa8] sm:$0xff] %v2812
      %2845 = vst [vmem:[%s206 + $0xb0] sm:$0xff] %v2813
      %2846 = vst [vmem:[%s206 + $0xb8] sm:$0xff] %v2814
      %2847 = vst [vmem:[%s206 + $0xc0] sm:$0xff] %v2815
      %2848 = vst [vmem:[%s206 + $0xc8] sm:$0xff] %v2816
      %2849 = vst [vmem:[%s206 + $0xd0] sm:$0xff] %v2817
      %2850 = vst [vmem:[%s206 + $0xd8] sm:$0xff] %v2818
      %2851 = vst [vmem:[%s206 + $0xe0] sm:$0xff] %v2819
      %2852 = vst [vmem:[%s206 + $0xe8] sm:$0xff] %v2820
      %2853 = vst [vmem:[%s206 + $0xf0] sm:$0xff] %v2821
      %2854 = vst [vmem:[%s206 + $0xf8] sm:$0xff] %v2822
      %v2855 = vld [vmem:[%s200] sm:$0xff]
      %v2856 = vld [vmem:[%s200 + $0x8] sm:$0xff]
      %v2857 = vld [vmem:[%s200 + $0x10] sm:$0xff]
      %v2858 = vld [vmem:[%s200 + $0x18] sm:$0xff]
      %v2859 = vld [vmem:[%s200 + $0x20] sm:$0xff]
      %v2860 = vld [vmem:[%s200 + $0x28] sm:$0xff]
      %v2861 = vld [vmem:[%s200 + $0x30] sm:$0xff]
      %v2862 = vld [vmem:[%s200 + $0x38] sm:$0xff]
      %v2863 = vld [vmem:[%s200 + $0x40] sm:$0xff]
      %v2864 = vld [vmem:[%s200 + $0x48] sm:$0xff]
      %v2865 = vld [vmem:[%s200 + $0x50] sm:$0xff]
      %v2866 = vld [vmem:[%s200 + $0x58] sm:$0xff]
      %v2867 = vld [vmem:[%s200 + $0x60] sm:$0xff]
      %v2868 = vld [vmem:[%s200 + $0x68] sm:$0xff]
      %v2869 = vld [vmem:[%s200 + $0x70] sm:$0xff]
      %v2870 = vld [vmem:[%s200 + $0x78] sm:$0xff]
      %v2871 = vld [vmem:[%s200 + $0x80] sm:$0xff]
      %v2872 = vld [vmem:[%s200 + $0x88] sm:$0xff]
      %v2873 = vld [vmem:[%s200 + $0x90] sm:$0xff]
      %v2874 = vld [vmem:[%s200 + $0x98] sm:$0xff]
      %v2875 = vld [vmem:[%s200 + $0xa0] sm:$0xff]
      %v2876 = vld [vmem:[%s200 + $0xa8] sm:$0xff]
      %v2877 = vld [vmem:[%s200 + $0xb0] sm:$0xff]
      %v2878 = vld [vmem:[%s200 + $0xb8] sm:$0xff]
      %v2879 = vld [vmem:[%s200 + $0xc0] sm:$0xff]
      %v2880 = vld [vmem:[%s200 + $0xc8] sm:$0xff]
      %v2881 = vld [vmem:[%s200 + $0xd0] sm:$0xff]
      %v2882 = vld [vmem:[%s200 + $0xd8] sm:$0xff]
      %v2883 = vld [vmem:[%s200 + $0xe0] sm:$0xff]
      %v2884 = vld [vmem:[%s200 + $0xe8] sm:$0xff]
      %v2885 = vld [vmem:[%s200 + $0xf0] sm:$0xff]
      %v2886 = vld [vmem:[%s200 + $0xf8] sm:$0xff]
      %2888 = vset.pattern.permute.xlu0 0
      %2889 = vperm.xlu0 %2888, %v2855
      %v2890 = vpop.permute.xlu0 %2889
      %2893 = vset.pattern.permute.xlu0 0
      %2894 = vperm.xlu0 %2893, %v2856
      %v2895 = vpop.permute.xlu0 %2894
      %2898 = vset.pattern.permute.xlu0 0
      %2899 = vperm.xlu0 %2898, %v2857
      %v2900 = vpop.permute.xlu0 %2899
      %2903 = vset.pattern.permute.xlu0 0
      %2904 = vperm.xlu0 %2903, %v2858
      %v2905 = vpop.permute.xlu0 %2904
      %2908 = vset.pattern.permute.xlu0 0
      %2909 = vperm.xlu0 %2908, %v2859
      %v2910 = vpop.permute.xlu0 %2909
      %2913 = vset.pattern.permute.xlu0 0
      %2914 = vperm.xlu0 %2913, %v2860
      %v2915 = vpop.permute.xlu0 %2914
      %2918 = vset.pattern.permute.xlu0 0
      %2919 = vperm.xlu0 %2918, %v2861
      %v2920 = vpop.permute.xlu0 %2919
      %2923 = vset.pattern.permute.xlu0 0
      %2924 = vperm.xlu0 %2923, %v2862
      %v2925 = vpop.permute.xlu0 %2924
      %2928 = vset.pattern.permute.xlu0 0
      %2929 = vperm.xlu0 %2928, %v2863
      %v2930 = vpop.permute.xlu0 %2929
      %2933 = vset.pattern.permute.xlu0 0
      %2934 = vperm.xlu0 %2933, %v2864
      %v2935 = vpop.permute.xlu0 %2934
      %2938 = vset.pattern.permute.xlu0 0
      %2939 = vperm.xlu0 %2938, %v2865
      %v2940 = vpop.permute.xlu0 %2939
      %2943 = vset.pattern.permute.xlu0 0
      %2944 = vperm.xlu0 %2943, %v2866
      %v2945 = vpop.permute.xlu0 %2944
      %2948 = vset.pattern.permute.xlu0 0
      %2949 = vperm.xlu0 %2948, %v2867
      %v2950 = vpop.permute.xlu0 %2949
      %2953 = vset.pattern.permute.xlu0 0
      %2954 = vperm.xlu0 %2953, %v2868
      %v2955 = vpop.permute.xlu0 %2954
      %2958 = vset.pattern.permute.xlu0 0
      %2959 = vperm.xlu0 %2958, %v2869
      %v2960 = vpop.permute.xlu0 %2959
      %2963 = vset.pattern.permute.xlu0 0
      %2964 = vperm.xlu0 %2963, %v2870
      %v2965 = vpop.permute.xlu0 %2964
      %2968 = vset.pattern.permute.xlu0 0
      %2969 = vperm.xlu0 %2968, %v2871
      %v2970 = vpop.permute.xlu0 %2969
      %2973 = vset.pattern.permute.xlu0 0
      %2974 = vperm.xlu0 %2973, %v2872
      %v2975 = vpop.permute.xlu0 %2974
      %2978 = vset.pattern.permute.xlu0 0
      %2979 = vperm.xlu0 %2978, %v2873
      %v2980 = vpop.permute.xlu0 %2979
      %2983 = vset.pattern.permute.xlu0 0
      %2984 = vperm.xlu0 %2983, %v2874
      %v2985 = vpop.permute.xlu0 %2984
      %2988 = vset.pattern.permute.xlu0 0
      %2989 = vperm.xlu0 %2988, %v2875
      %v2990 = vpop.permute.xlu0 %2989
      %2993 = vset.pattern.permute.xlu0 0
      %2994 = vperm.xlu0 %2993, %v2876
      %v2995 = vpop.permute.xlu0 %2994
      %2998 = vset.pattern.permute.xlu0 0
      %2999 = vperm.xlu0 %2998, %v2877
      %v3000 = vpop.permute.xlu0 %2999
      %3003 = vset.pattern.permute.xlu0 0
      %3004 = vperm.xlu0 %3003, %v2878
      %v3005 = vpop.permute.xlu0 %3004
      %3008 = vset.pattern.permute.xlu0 0
      %3009 = vperm.xlu0 %3008, %v2879
      %v3010 = vpop.permute.xlu0 %3009
      %3013 = vset.pattern.permute.xlu0 0
      %3014 = vperm.xlu0 %3013, %v2880
      %v3015 = vpop.permute.xlu0 %3014
      %3018 = vset.pattern.permute.xlu0 0
      %3019 = vperm.xlu0 %3018, %v2881
      %v3020 = vpop.permute.xlu0 %3019
      %3023 = vset.pattern.permute.xlu0 0
      %3024 = vperm.xlu0 %3023, %v2882
      %v3025 = vpop.permute.xlu0 %3024
      %3028 = vset.pattern.permute.xlu0 0
      %3029 = vperm.xlu0 %3028, %v2883
      %v3030 = vpop.permute.xlu0 %3029
      %3033 = vset.pattern.permute.xlu0 0
      %3034 = vperm.xlu0 %3033, %v2884
      %v3035 = vpop.permute.xlu0 %3034
      %3038 = vset.pattern.permute.xlu0 0
      %3039 = vperm.xlu0 %3038, %v2885
      %v3040 = vpop.permute.xlu0 %3039
      %3043 = vset.pattern.permute.xlu0 0
      %3044 = vperm.xlu0 %3043, %v2886
      %v3045 = vpop.permute.xlu0 %3044
      %v3047 = vmul.f32 %v2791, %v2890
      %v3048 = vmul.f32 %v2792, %v2895
      %v3049 = vmul.f32 %v2793, %v2900
      %v3050 = vmul.f32 %v2794, %v2905
      %v3051 = vmul.f32 %v2795, %v2910
      %v3052 = vmul.f32 %v2796, %v2915
      %v3053 = vmul.f32 %v2797, %v2920
      %v3054 = vmul.f32 %v2798, %v2925
      %v3055 = vmul.f32 %v2799, %v2930
      %v3056 = vmul.f32 %v2800, %v2935
      %v3057 = vmul.f32 %v2801, %v2940
      %v3058 = vmul.f32 %v2802, %v2945
      %v3059 = vmul.f32 %v2803, %v2950
      %v3060 = vmul.f32 %v2804, %v2955
      %v3061 = vmul.f32 %v2805, %v2960
      %v3062 = vmul.f32 %v2806, %v2965
      %v3063 = vmul.f32 %v2807, %v2970
      %v3064 = vmul.f32 %v2808, %v2975
      %v3065 = vmul.f32 %v2809, %v2980
      %v3066 = vmul.f32 %v2810, %v2985
      %v3067 = vmul.f32 %v2811, %v2990
      %v3068 = vmul.f32 %v2812, %v2995
      %v3069 = vmul.f32 %v2813, %v3000
      %v3070 = vmul.f32 %v2814, %v3005
      %v3071 = vmul.f32 %v2815, %v3010
      %v3072 = vmul.f32 %v2816, %v3015
      %v3073 = vmul.f32 %v2817, %v3020
      %v3074 = vmul.f32 %v2818, %v3025
      %v3075 = vmul.f32 %v2819, %v3030
      %v3076 = vmul.f32 %v2820, %v3035
      %v3077 = vmul.f32 %v2821, %v3040
      %v3078 = vmul.f32 %v2822, %v3045
      %v3079 = vadd.f32 %v3047, %v3048
      %v3080 = vadd.f32 %v3079, %v3049
      %v3081 = vadd.f32 %v3080, %v3050
      %v3082 = vadd.f32 %v3081, %v3051
      %v3083 = vadd.f32 %v3082, %v3052
      %v3084 = vadd.f32 %v3083, %v3053
      %v3085 = vadd.f32 %v3084, %v3054
      %v3086 = vadd.f32 %v3085, %v3055
      %v3087 = vadd.f32 %v3086, %v3056
      %v3088 = vadd.f32 %v3087, %v3057
      %v3089 = vadd.f32 %v3088, %v3058
      %v3090 = vadd.f32 %v3089, %v3059
      %v3091 = vadd.f32 %v3090, %v3060
      %v3092 = vadd.f32 %v3091, %v3061
      %v3093 = vadd.f32 %v3092, %v3062
      %v3094 = vadd.f32 %v3093, %v3063
      %v3095 = vadd.f32 %v3094, %v3064
      %v3096 = vadd.f32 %v3095, %v3065
      %v3097 = vadd.f32 %v3096, %v3066
      %v3098 = vadd.f32 %v3097, %v3067
      %v3099 = vadd.f32 %v3098, %v3068
      %v3100 = vadd.f32 %v3099, %v3069
      %v3101 = vadd.f32 %v3100, %v3070
      %v3102 = vadd.f32 %v3101, %v3071
      %v3103 = vadd.f32 %v3102, %v3072
      %v3104 = vadd.f32 %v3103, %v3073
      %v3105 = vadd.f32 %v3104, %v3074
      %v3106 = vadd.f32 %v3105, %v3075
      %v3107 = vadd.f32 %v3106, %v3076
      %v3108 = vadd.f32 %v3107, %v3077
      %v3109 = vadd.f32 %v3108, %v3078
      %v3110 = vrot.slane %v3109, 4
      %v3111 = vadd.f32 %v3109, %v3110
      %v3112 = vrot.slane %v3111, 2
      %v3113 = vadd.f32 %v3111, %v3112
      %v3114 = vrot.slane %v3113, 1
      %v3115 = vadd.f32 %v3113, %v3114
      %v3116 = vmul.f32 %v3047, %v2791
      %v3117 = vmul.f32 %v3048, %v2792
      %v3118 = vmul.f32 %v3049, %v2793
      %v3119 = vmul.f32 %v3050, %v2794
      %v3120 = vmul.f32 %v3051, %v2795
      %v3121 = vmul.f32 %v3052, %v2796
      %v3122 = vmul.f32 %v3053, %v2797
      %v3123 = vmul.f32 %v3054, %v2798
      %v3124 = vmul.f32 %v3055, %v2799
      %v3125 = vmul.f32 %v3056, %v2800
      %v3126 = vmul.f32 %v3057, %v2801
      %v3127 = vmul.f32 %v3058, %v2802
      %v3128 = vmul.f32 %v3059, %v2803
      %v3129 = vmul.f32 %v3060, %v2804
      %v3130 = vmul.f32 %v3061, %v2805
      %v3131 = vmul.f32 %v3062, %v2806
      %v3132 = vmul.f32 %v3063, %v2807
      %v3133 = vmul.f32 %v3064, %v2808
      %v3134 = vmul.f32 %v3065, %v2809
      %v3135 = vmul.f32 %v3066, %v2810
      %v3136 = vmul.f32 %v3067, %v2811
      %v3137 = vmul.f32 %v3068, %v2812
      %v3138 = vmul.f32 %v3069, %v2813
      %v3139 = vmul.f32 %v3070, %v2814
      %v3140 = vmul.f32 %v3071, %v2815
      %v3141 = vmul.f32 %v3072, %v2816
      %v3142 = vmul.f32 %v3073, %v2817
      %v3143 = vmul.f32 %v3074, %v2818
      %v3144 = vmul.f32 %v3075, %v2819
      %v3145 = vmul.f32 %v3076, %v2820
      %v3146 = vmul.f32 %v3077, %v2821
      %v3147 = vmul.f32 %v3078, %v2822
      %v3148 = vadd.f32 %v3116, %v3117
      %v3149 = vadd.f32 %v3148, %v3118
      %v3150 = vadd.f32 %v3149, %v3119
      %v3151 = vadd.f32 %v3150, %v3120
      %v3152 = vadd.f32 %v3151, %v3121
      %v3153 = vadd.f32 %v3152, %v3122
      %v3154 = vadd.f32 %v3153, %v3123
      %v3155 = vadd.f32 %v3154, %v3124
      %v3156 = vadd.f32 %v3155, %v3125
      %v3157 = vadd.f32 %v3156, %v3126
      %v3158 = vadd.f32 %v3157, %v3127
      %v3159 = vadd.f32 %v3158, %v3128
      %v3160 = vadd.f32 %v3159, %v3129
      %v3161 = vadd.f32 %v3160, %v3130
      %v3162 = vadd.f32 %v3161, %v3131
      %v3163 = vadd.f32 %v3162, %v3132
      %v3164 = vadd.f32 %v3163, %v3133
      %v3165 = vadd.f32 %v3164, %v3134
      %v3166 = vadd.f32 %v3165, %v3135
      %v3167 = vadd.f32 %v3166, %v3136
      %v3168 = vadd.f32 %v3167, %v3137
      %v3169 = vadd.f32 %v3168, %v3138
      %v3170 = vadd.f32 %v3169, %v3139
      %v3171 = vadd.f32 %v3170, %v3140
      %v3172 = vadd.f32 %v3171, %v3141
      %v3173 = vadd.f32 %v3172, %v3142
      %v3174 = vadd.f32 %v3173, %v3143
      %v3175 = vadd.f32 %v3174, %v3144
      %v3176 = vadd.f32 %v3175, %v3145
      %v3177 = vadd.f32 %v3176, %v3146
      %v3178 = vadd.f32 %v3177, %v3147
      %v3179 = vrot.slane %v3178, 4
      %v3180 = vadd.f32 %v3178, %v3179
      %v3181 = vrot.slane %v3180, 2
      %v3182 = vadd.f32 %v3180, %v3181
      %v3183 = vrot.slane %v3182, 1
      %v3184 = vadd.f32 %v3182, %v3183
      %vm3185 = vcmask 1040384
      %v3186 = vsel %vm3185, %v3115, %v3184
      %vm3187 = vcmask 1041408
      %v3188 = vsel %vm3187, %v3186, 0.0
      %3189 = vst [vmem:[%s211] sm:$0xff] %v3188
      %s3190 = smul.u32 32, %s16
      %p3191 = scmp.lt.s32.totalorder %s3190, 95
      %s3192 = scalar_select %p3191, %s3190, 95
      %s3193 = smul.addr %s3192, 8
      %s3194 = scalar_lea.vmem %s3, %s3193
      %p3195 = scmp.lt.s32.totalorder %s16, 2
      %s3196 = scalar_select %p3195, %s16, 2
      %s3197 = smul.addr %s3196, 8
      %s3198 = scalar_lea.vmem %s4, %s3197
      // Predicated region
      $region33: #{conv_block_forward.4} parent=31 // pred_check
        %p3199 = pneg %p102
      $region34: #{conv_block_forward.4} parent=31 // pred_check_branch
        %3201 = sbr.rel (%p3199) target = $region36
      $region35: #{conv_block_forward.4} parent=31 // pred_region
        %s3202 = smul.u32 32, %s16
      $region36: #{conv_block_forward.4} parent=31 // pred_fallthru
        _
      // Predicated region
      $region37: #{conv_block_forward.4} parent=31 // pred_check
        %p3203 = pneg %p128
      $region38: #{conv_block_forward.4} parent=31 // pred_check_branch
        %3205 = sbr.rel (%p3203) target = $region40
      $region39: #{conv_block_forward.4} parent=31 // pred_region
        _
      $region40: #{conv_block_forward.4} parent=31 // pred_fallthru
        _
    $region32: #{conv_block_forward.4} parent=5 // pred_fallthru
      _
    %p3206 = scmp.le.s32.totalorder 2, %s11
    // Predicated region
    $region41: #{conv_block_forward.4} parent=5 // pred_check
      %p3207 = pneg %p3206
    $region42: #{conv_block_forward.4} parent=5 // pred_check_branch
      %3209 = sbr.rel (%p3207) target = $region44
    $region43: #{conv_block_forward.4} parent=5 // pred_region
      %s3210 = ssub.s32 %s11, 2
      // Predicated region
      $region45: #{conv_block_forward.4} parent=43 // pred_check
        %p3211 = pneg %p108
      $region46: #{conv_block_forward.4} parent=43 // pred_check_branch
        %3213 = sbr.rel (%p3211) target = $region48
      $region47: #{conv_block_forward.4} parent=43 // pred_region
        %s3214 = smul.u32 32, %s17
        %p3215 = scmp.lt.s32.totalorder %s3214, 95
        %s3216 = scalar_select %p3215, %s3214, 95
        %s3217 = smul.addr %s3216, 8
        %s3218 = scalar_lea.vmem %s3, %s3217
      $region48: #{conv_block_forward.4} parent=43 // pred_fallthru
        _
      // Predicated region
      $region49: #{conv_block_forward.4} parent=43 // pred_check
        %p3219 = pneg %p134
      $region50: #{conv_block_forward.4} parent=43 // pred_check_branch
        %3221 = sbr.rel (%p3219) target = $region52
      $region51: #{conv_block_forward.4} parent=43 // pred_region
        %p3222 = scmp.lt.s32.totalorder %s17, 2
        %s3223 = scalar_select %p3222, %s17, 2
        %s3224 = smul.addr %s3223, 8
        %s3225 = scalar_lea.vmem %s4, %s3224
      $region52: #{conv_block_forward.4} parent=43 // pred_fallthru
        _
    $region44: #{conv_block_forward.4} parent=5 // pred_fallthru
      _
  $region6: #{conv_block_forward.4} parent=0 // loop_footer
    %s15 = sadd.s32 1, %s11
  $region7: #{conv_block_forward.4} parent=0 // loop_footer_branch
    %10 = sbr.rel target = $region3
  $region8: #{conv_block_forward.4} parent=0 // loop_exit
    _

// kernel: conv_block_forward.6
$region0: #{conv_block_forward.6}
  #allocation0 [shape = 'u32[]', space=smem, size = 0x4, offset = 0x4, fixed_abs, tag = 'smem constant byte address 0x4 - core index']
  #allocation1 [shape = 'u32[144,128]{1,0:T(1,128)}', space=vmem, size = 0x12000, scoped, tag = 'internal scratch']
  %s0 = inlined_call_operand.vmem [shape: f32[808,128], index: 0, kind: input, shape index: {}]
  %s1 = inlined_call_operand.vmem [shape: f32[9,128,128], index: 1, kind: input, shape index: {}]
  %s2 = inlined_call_operand.vmem [shape: f32[768,1], index: 2, kind: input, shape index: {}]
  %s3 = inlined_call_operand.vmem [shape: f32[768,128], index: 3, kind: output, shape index: {0}]
  %s4 = inlined_call_operand.vmem [shape: f32[24,128], index: 4, kind: output, shape index: {1}]
  %5 = xla_tuple %s3, %s4
  %s6 = sld [smem:[#allocation0]]
  $region53: #{conv_block_forward.6} parent=0
    _
  %s8 = ssub.s32 1, %s6
  %s9 = scalar_select 0, %s8, %s6
  loop: start=0, step=1, limit=5
  $region2: #{conv_block_forward.6} parent=0 // loop_pre_header
    _
  $region3: #{conv_block_forward.6} parent=0 // loop_header
    %s11 = sphi 0, %s15
    %p12 = scmp.ge.s32.totalorder %s11, 5
    %s19 = sphi 0, %s19
    %s21 = sphi 0, %s19
    %s22 = sphi 0, %s21
    %s36 = sphi 0, %s22
    %s40 = sphi 0, %s40
    %s42 = sphi 0, %s40
    %s43 = sphi 0, %s42
    %s57 = sphi 0, %s43
    %s63 = sphi 0, %s65
    %s66 = sphi 0, %s63
    %s67 = sphi 0, %s66
    %s83 = sphi 0, %s67
    %s89 = sphi 0, %s91
    %s92 = sphi 0, %s89
    %s93 = sphi 0, %s92
    %s109 = sphi 0, %s93
    %s115 = sphi 0, %s117
    %s118 = sphi 0, %s115
    %s119 = sphi 0, %s118
    %s135 = sphi 0, %s119
  $region4: #{conv_block_forward.6} parent=0 // loop_header_branch
    %14 = sbr.rel (%p12) target = $region8
  $region5: #{conv_block_forward.6} parent=0 // loop_body
    %s16 = ssub.s32 %s11, 1
    %s17 = ssub.s32 %s11, 2
    %s18 = sadd.s32 %s11, 1
    %s20 = sadd.s32 %s19, 1
    %p23 = scmp.eq.s32.totalorder %s11, 2
    %p24 = scmp.ne.s32.totalorder %s19, %s21
    %p25 = scmp.eq.s32.totalorder %s11, 0
    %p26 = por %p24, %p25
    %p27 = scmp.ne.s32.totalorder %s19, %s21
    %p28 = scmp.eq.s32.totalorder %s16, 2
    %p29 = por %p27, %p28
    %p30 = scmp.ne.s32.totalorder %s21, %s22
    %p31 = scmp.eq.s32.totalorder %s16, 0
    %p32 = por %p30, %p31
    %p33 = scmp.ne.s32.totalorder %s21, %s22
    %p34 = scmp.eq.s32.totalorder %s17, 2
    %p35 = por %p33, %p34
    %p37 = scmp.ne.s32.totalorder %s22, %s36
    %p38 = scmp.eq.s32.totalorder %s17, 0
    %p39 = por %p37, %p38
    %s41 = sadd.s32 %s40, 1
    %p44 = scmp.eq.s32.totalorder %s11, 2
    %p45 = scmp.ne.s32.totalorder %s40, %s42
    %p46 = scmp.eq.s32.totalorder %s11, 0
    %p47 = por %p45, %p46
    %p48 = scmp.ne.s32.totalorder %s40, %s42
    %p49 = scmp.eq.s32.totalorder %s16, 2
    %p50 = por %p48, %p49
    %p51 = scmp.ne.s32.totalorder %s42, %s43
    %p52 = scmp.eq.s32.totalorder %s16, 0
    %p53 = por %p51, %p52
    %p54 = scmp.ne.s32.totalorder %s42, %s43
    %p55 = scmp.eq.s32.totalorder %s17, 2
    %p56 = por %p54, %p55
    %p58 = scmp.ne.s32.totalorder %s43, %s57
    %p59 = scmp.eq.s32.totalorder %s17, 0
    %p60 = por %p58, %p59
    %s61 = ssub.s32 %s11, %s18
    %p62 = scmp.eq.s32.totalorder %s61, 0
    %s64 = sadd.s32 %s63, 1
    %s65 = scalar_select %p62, %s63, %s64
    %p68 = pneg %p62
    %p69 = scmp.eq.s32.totalorder %s11, 2
    %p70 = por %p68, %p69
    %p71 = scmp.ne.s32.totalorder %s63, %s66
    %p72 = scmp.eq.s32.totalorder %s11, 0
    %p73 = por %p71, %p72
    %p74 = scmp.ne.s32.totalorder %s63, %s66
    %p75 = scmp.eq.s32.totalorder %s16, 2
    %p76 = por %p74, %p75
    %p77 = scmp.ne.s32.totalorder %s66, %s67
    %p78 = scmp.eq.s32.totalorder %s16, 0
    %p79 = por %p77, %p78
    %p80 = scmp.ne.s32.totalorder %s66, %s67
    %p81 = scmp.eq.s32.totalorder %s17, 2
    %p82 = por %p80, %p81
    %p84 = scmp.ne.s32.totalorder %s67, %s83
    %p85 = scmp.eq.s32.totalorder %s17, 0
    %p86 = por %p84, %p85
    %s87 = ssub.s32 %s11, %s18
    %p88 = scmp.eq.s32.totalorder %s87, 0
    %s90 = sadd.s32 %s89, 1
    %s91 = scalar_select %p88, %s89, %s90
    %p94 = pneg %p88
    %p95 = scmp.eq.s32.totalorder %s11, 2
    %p96 = por %p94, %p95
    %p97 = scmp.ne.s32.totalorder %s89, %s92
    %p98 = scmp.eq.s32.totalorder %s11, 0
    %p99 = por %p97, %p98
    %p100 = scmp.ne.s32.totalorder %s89, %s92
    %p101 = scmp.eq.s32.totalorder %s16, 2
    %p102 = por %p100, %p101
    %p103 = scmp.ne.s32.totalorder %s92, %s93
    %p104 = scmp.eq.s32.totalorder %s16, 0
    %p105 = por %p103, %p104
    %p106 = scmp.ne.s32.totalorder %s92, %s93
    %p107 = scmp.eq.s32.totalorder %s17, 2
    %p108 = por %p106, %p107
    %p110 = scmp.ne.s32.totalorder %s93, %s109
    %p111 = scmp.eq.s32.totalorder %s17, 0
    %p112 = por %p110, %p111
    %s113 = ssub.s32 %s11, %s18
    %p114 = scmp.eq.s32.totalorder %s113, 0
    %s116 = sadd.s32 %s115, 1
    %s117 = scalar_select %p114, %s115, %s116
    %p120 = pneg %p114
    %p121 = scmp.eq.s32.totalorder %s11, 2
    %p122 = por %p120, %p121
    %p123 = scmp.ne.s32.totalorder %s115, %s118
    %p124 = scmp.eq.s32.totalorder %s11, 0
    %p125 = por %p123, %p124
    %p126 = scmp.ne.s32.totalorder %s115, %s118
    %p127 = scmp.eq.s32.totalorder %s16, 2
    %p128 = por %p126, %p127
    %p129 = scmp.ne.s32.totalorder %s118, %s119
    %p130 = scmp.eq.s32.totalorder %s16, 0
    %p131 = por %p129, %p130
    %p132 = scmp.ne.s32.totalorder %s118, %s119
    %p133 = scmp.eq.s32.totalorder %s17, 2
    %p134 = por %p132, %p133
    %p136 = scmp.ne.s32.totalorder %s119, %s135
    %p137 = scmp.eq.s32.totalorder %s17, 0
    %p138 = por %p136, %p137
    %p139 = scmp.le.s32.totalorder 1, %s11
    %p140 = scmp.lt.s32.totalorder %s11, 4
    %p141 = pnand %p139, %p140
    %p142 = pneg %p141
    // Predicated region
    $region9: #{conv_block_forward.6} parent=5 // pred_check
      _
    $region10: #{conv_block_forward.6} parent=5 // pred_check_branch
      %144 = sbr.rel (%p141) target = $region12
    $region11: #{conv_block_forward.6} parent=5 // pred_region
      %s145 = ssub.s32 %s11, 1
      // Predicated region
      $region13: #{conv_block_forward.6} parent=11 // pred_check
        %p146 = pneg %p32
      $region14: #{conv_block_forward.6} parent=11 // pred_check_branch
        %148 = sbr.rel (%p146) target = $region16
      $region15: #{conv_block_forward.6} parent=11 // pred_region
        _
      $region16: #{conv_block_forward.6} parent=11 // pred_fallthru
        _
      // Predicated region
      $region17: #{conv_block_forward.6} parent=11 // pred_check
        %p149 = pneg %p53
      $region18: #{conv_block_forward.6} parent=11 // pred_check_branch
        %151 = sbr.rel (%p149) target = $region20
      $region19: #{conv_block_forward.6} parent=11 // pred_region
        _
      $region20: #{conv_block_forward.6} parent=11 // pred_fallthru
        _
    $region12: #{conv_block_forward.6} parent=5 // pred_fallthru
      _
    %p152 = scmp.lt.s32.totalorder %s11, 3
    // Predicated region
    $region21: #{conv_block_forward.6} parent=5 // pred_check
      %p153 = pneg %p152
    $region22: #{conv_block_forward.6} parent=5 // pred_check_branch
      %155 = sbr.rel (%p153) target = $region24
    $region23: #{conv_block_forward.6} parent=5 // pred_region
      // Predicated region
      $region25: #{conv_block_forward.6} parent=23 // pred_check
        %p156 = pneg %p73
      $region26: #{conv_block_forward.6} parent=23 // pred_check_branch
        %158 = sbr.rel (%p156) target = $region28
      $region27: #{conv_block_forward.6} parent=23 // pred_region
        %s159 = smul.u32 32, %s11
        %p160 = scmp.lt.s32.totalorder %s159, 95
        %s161 = scalar_select %p160, %s159, 95
        %s162 = smul.addr %s161, 8
        %s163 = scalar_lea.vmem %s2, %s162
        %s164 = smul.u32 32, %s11
      $region28: #{conv_block_forward.6} parent=23 // pred_fallthru
        _
    $region24: #{conv_block_forward.6} parent=5 // pred_fallthru
      _
    %p165 = scmp.le.s32.totalorder 1, %s11
    %p166 = scmp.lt.s32.totalorder %s11, 4
    %p167 = pnand %p165, %p166
    %p168 = pneg %p167
    // Predicated region
    $region29: #{conv_block_forward.6} parent=5 // pred_check
      _
    $region30: #{conv_block_forward.6} parent=5 // pred_check_branch
      %170 = sbr.rel (%p167) target = $region32
    $region31: #{conv_block_forward.6} parent=5 // pred_region
      %s171 = ssub.s32 %s11, 1
      %p172 = pneg %p32
      %p173 = pneg %p29
      %p174 = pneg %p53
      %p175 = pneg %p50
      %s176 = smul.u32 32, %s16
      %p177 = scmp.lt.s32.totalorder %s176, 95
      %s178 = scalar_select %p177, %s176, 95
      %s179 = smul.addr %s178, 8
      %s180 = scalar_lea.vmem %s2, %s179
      %p181 = pneg %p79
      %p182 = pneg %p76
      %p183 = pneg %p105
      %p184 = pneg %p102
      %s185 = smul.u32 32, %s16
      %p186 = scmp.lt.s32.totalorder %s185, 95
      %s187 = scalar_select %p186, %s185, 95
      %s188 = smul.addr %s187, 8
      %s189 = scalar_lea.vmem %s3, %s188
      %p190 = pneg %p131
      %p191 = pneg %p128
      %p192 = scmp.lt.s32.totalorder %s16, 2
      %s193 = scalar_select %p192, %s16, 2
      %s194 = smul.addr %s193, 8
      %s195 = scalar_lea.vmem %s4, %s194
      %s196 = smul.u32 32, %s16
      %p197 = scmp.lt.s32.totalorder %s196, 95
      %s198 = scalar_select %p197, %s196, 95
      %s199 = smul.addr %s198, 8
      %s200 = scalar_lea.vmem %s2, %s199
      %s201 = smul.u32 32, %s16
      %s202 = smul.u32 32, %s16
      %p203 = scmp.lt.s32.totalorder %s202, 95
      %s204 = scalar_select %p203, %s202, 95
      %s205 = smul.addr %s204, 8
      %s206 = scalar_lea.vmem %s3, %s205
      %s207 = smul.u32 32, %s16
      %p208 = scmp.lt.s32.totalorder %s16, 2
      %s209 = scalar_select %p208, %s16, 2
      %s210 = smul.addr %s209, 8
      %s211 = scalar_lea.vmem %s4, %s210
      %s213 = smul.u32 %s16, 256
      %s214 = scalar_lea.vmem %s0, %s213
      %v215 = vld [vmem:[%s214] sm:$0xff]
      %v216 = vld [vmem:[%s214 + $0x8] sm:$0xff]
      %v217 = vld [vmem:[%s214 + $0x10] sm:$0xff]
      %v218 = vld [vmem:[%s214 + $0x18] sm:$0xff]
      %v219 = vld [vmem:[%s214 + $0x20] sm:$0xff]
      %v220 = vld [vmem:[%s214 + $0x28] sm:$0xff]
      %v221 = vld [vmem:[%s214 + $0x30] sm:$0xff]
      %v222 = vld [vmem:[%s214 + $0x38] sm:$0xff]
      %v223 = vld [vmem:[%s214 + $0x40] sm:$0xff]
      %v224 = vld [vmem:[%s214 + $0x48] sm:$0xff]
      %v225 = vld [vmem:[%s214 + $0x50] sm:$0xff]
      %v226 = vld [vmem:[%s214 + $0x58] sm:$0xff]
      %v227 = vld [vmem:[%s214 + $0x60] sm:$0xff]
      %v228 = vld [vmem:[%s214 + $0x68] sm:$0xff]
      %v229 = vld [vmem:[%s214 + $0x70] sm:$0xff]
      %v230 = vld [vmem:[%s214 + $0x78] sm:$0xff]
      %v231 = vld [vmem:[%s214 + $0x80] sm:$0xff]
      %v232 = vld [vmem:[%s214 + $0x88] sm:$0xff]
      %v233 = vld [vmem:[%s214 + $0x90] sm:$0xff]
      %v234 = vld [vmem:[%s214 + $0x98] sm:$0xff]
      %v235 = vld [vmem:[%s214 + $0xa0] sm:$0xff]
      %v236 = vld [vmem:[%s214 + $0xa8] sm:$0xff]
      %v237 = vld [vmem:[%s214 + $0xb0] sm:$0xff]
      %v238 = vld [vmem:[%s214 + $0xb8] sm:$0xff]
      %v239 = vld [vmem:[%s214 + $0xc0] sm:$0xff]
      %v240 = vld [vmem:[%s214 + $0xc8] sm:$0xff]
      %v241 = vld [vmem:[%s214 + $0xd0] sm:$0xff]
      %v242 = vld [vmem:[%s214 + $0xd8] sm:$0xff]
      %v243 = vld [vmem:[%s214 + $0xe0] sm:$0xff]
      %v244 = vld [vmem:[%s214 + $0xe8] sm:$0xff]
      %v245 = vld [vmem:[%s214 + $0xf0] sm:$0xff]
      %v246 = vld [vmem:[%s214 + $0xf8] sm:$0xff]
      %v247 = vpack.c.bf16 %v216, %v215
      %v248 = vpack.c.bf16 %v218, %v217
      %v249 = vpack.c.bf16 %v220, %v219
      %v250 = vpack.c.bf16 %v222, %v221
      %v251 = vpack.c.bf16 %v224, %v223
      %v252 = vpack.c.bf16 %v226, %v225
      %v253 = vpack.c.bf16 %v228, %v227
      %v254 = vpack.c.bf16 %v230, %v229
      %v255 = vpack.c.bf16 %v232, %v231
      %v256 = vpack.c.bf16 %v234, %v233
      %v257 = vpack.c.bf16 %v236, %v235
      %v258 = vpack.c.bf16 %v238, %v237
      %v259 = vpack.c.bf16 %v240, %v239
      %v260 = vpack.c.bf16 %v242, %v241
      %v261 = vpack.c.bf16 %v244, %v243
      %v262 = vpack.c.bf16 %v246, %v245
      %v263 = vld [vmem:[%s1] sm:$0xff]
      %v264 = vld [vmem:[%s1 + $0x8] sm:$0xff]
      %v265 = vld [vmem:[%s1 + $0x10] sm:$0xff]
      %v266 = vld [vmem:[%s1 + $0x18] sm:$0xff]
      %v267 = vld [vmem:[%s1 + $0x20] sm:$0xff]
      %v268 = vld [vmem:[%s1 + $0x28] sm:$0xff]
      %v269 = vld [vmem:[%s1 + $0x30] sm:$0xff]
      %v270 = vld [vmem:[%s1 + $0x38] sm:$0xff]
      %v271 = vld [vmem:[%s1 + $0x40] sm:$0xff]
      %v272 = vld [vmem:[%s1 + $0x48] sm:$0xff]
      %v273 = vld [vmem:[%s1 + $0x50] sm:$0xff]
      %v274 = vld [vmem:[%s1 + $0x58] sm:$0xff]
      %v275 = vld [vmem:[%s1 + $0x60] sm:$0xff]
      %v276 = vld [vmem:[%s1 + $0x68] sm:$0xff]
      %v277 = vld [vmem:[%s1 + $0x70] sm:$0xff]
      %v278 = vld [vmem:[%s1 + $0x78] sm:$0xff]
      %v279 = vpack.c.bf16 %v264, %v263
      %v280 = vpack.c.bf16 %v266, %v265
      %v281 = vpack.c.bf16 %v268, %v267
      %v282 = vpack.c.bf16 %v270, %v269
      %v283 = vpack.c.bf16 %v272, %v271
      %v284 = vpack.c.bf16 %v274, %v273
      %v285 = vpack.c.bf16 %v276, %v275
      %v286 = vpack.c.bf16 %v278, %v277
      %s287 = sadd.s32 %s213, 1
      %s288 = scalar_lea.vmem %s0, %s287
      %v289 = vld [vmem:[%s288] sm:$0xff]
      %v290 = vld [vmem:[%s288 + $0x8] sm:$0xff]
      %v291 = vld [vmem:[%s288 + $0x10] sm:$0xff]
      %v292 = vld [vmem:[%s288 + $0x18] sm:$0xff]
      %v293 = vld [vmem:[%s288 + $0x20] sm:$0xff]
      %v294 = vld [vmem:[%s288 + $0x28] sm:$0xff]
      %v295 = vld [vmem:[%s288 + $0x30] sm:$0xff]
      %v296 = vld [vmem:[%s288 + $0x38] sm:$0xff]
      %v297 = vld [vmem:[%s288 + $0x40] sm:$0xff]
      %v298 = vld [vmem:[%s288 + $0x48] sm:$0xff]
      %v299 = vld [vmem:[%s288 + $0x50] sm:$0xff]
      %v300 = vld [vmem:[%s288 + $0x58] sm:$0xff]
      %v301 = vld [vmem:[%s288 + $0x60] sm:$0xff]
      %v302 = vld [vmem:[%s288 + $0x68] sm:$0xff]
      %v303 = vld [vmem:[%s288 + $0x70] sm:$0xff]
      %v304 = vld [vmem:[%s288 + $0x78] sm:$0xff]
      %v305 = vld [vmem:[%s288 + $0x80] sm:$0xff]
      %v306 = vld [vmem:[%s288 + $0x88] sm:$0xff]
      %v307 = vld [vmem:[%s288 + $0x90] sm:$0xff]
      %v308 = vld [vmem:[%s288 + $0x98] sm:$0xff]
      %v309 = vld [vmem:[%s288 + $0xa0] sm:$0xff]
      %v310 = vld [vmem:[%s288 + $0xa8] sm:$0xff]
      %v311 = vld [vmem:[%s288 + $0xb0] sm:$0xff]
      %v312 = vld [vmem:[%s288 + $0xb8] sm:$0xff]
      %v313 = vld [vmem:[%s288 + $0xc0] sm:$0xff]
      %v314 = vld [vmem:[%s288 + $0xc8] sm:$0xff]
      %v315 = vld [vmem:[%s288 + $0xd0] sm:$0xff]
      %v316 = vld [vmem:[%s288 + $0xd8] sm:$0xff]
      %v317 = vld [vmem:[%s288 + $0xe0] sm:$0xff]
      %v318 = vld [vmem:[%s288 + $0xe8] sm:$0xff]
      %v319 = vld [vmem:[%s288 + $0xf0] sm:$0xff]
      %v320 = vld [vmem:[%s288 + $0xf8] sm:$0xff]
      %v321 = vpack.c.bf16 %v290, %v289
      %v322 = vpack.c.bf16 %v292, %v291
      %v323 = vpack.c.bf16 %v294, %v293
      %v324 = vpack.c.bf16 %v296, %v295
      %v325 = vpack.c.bf16 %v298, %v297
      %v326 = vpack.c.bf16 %v300, %v299
      %v327 = vpack.c.bf16 %v302, %v301
      %v328 = vpack.c.bf16 %v304, %v303
      %v329 = vpack.c.bf16 %v306, %v305
      %v330 = vpack.c.bf16 %v308, %v307
      %v331 = vpack.c.bf16 %v310, %v309
      %v332 = vpack.c.bf16 %v312, %v311
      %v333 = vpack.c.bf16 %v314, %v313
      %v334 = vpack.c.bf16 %v316, %v315
      %v335 = vpack.c.bf16 %v318, %v317
      %v336 = vpack.c.bf16 %v320, %v319
      %s337 = scalar_lea.vmem %s1, 128
      %v338 = vld [vmem:[%s337] sm:$0xff]
      %v339 = vld [vmem:[%s337 + $0x8] sm:$0xff]
      %v340 = vld [vmem:[%s337 + $0x10] sm:$0xff]
      %v341 = vld [vmem:[%s337 + $0x18] sm:$0xff]
      %v342 = vld [vmem:[%s337 + $0x20] sm:$0xff]
      %v343 = vld [vmem:[%s337 + $0x28] sm:$0xff]
      %v344 = vld [vmem:[%s337 + $0x30] sm:$0xff]
      %v345 = vld [vmem:[%s337 + $0x38] sm:$0xff]
      %v346 = vld [vmem:[%s337 + $0x40] sm:$0xff]
      %v347 = vld [vmem:[%s337 + $0x48] sm:$0xff]
      %v348 = vld [vmem:[%s337 + $0x50] sm:$0xff]
      %v349 = vld [vmem:[%s337 + $0x58] sm:$0xff]
      %v350 = vld [vmem:[%s337 + $0x60] sm:$0xff]
      %v351 = vld [vmem:[%s337 + $0x68] sm:$0xff]
      %v352 = vld [vmem:[%s337 + $0x70] sm:$0xff]
      %v353 = vld [vmem:[%s337 + $0x78] sm:$0xff]
      %v354 = vpack.c.bf16 %v339, %v338
      %v355 = vpack.c.bf16 %v341, %v340
      %v356 = vpack.c.bf16 %v343, %v342
      %v357 = vpack.c.bf16 %v345, %v344
      %v358 = vpack.c.bf16 %v347, %v346
      %v359 = vpack.c.bf16 %v349, %v348
      %v360 = vpack.c.bf16 %v351, %v350
      %v361 = vpack.c.bf16 %v353, %v352
      %362 = vmatprep.subr.bf16.mxu0 0
      %363 = vmatpush1.bf16.msra.mxu0 %v354
      %364 = vmatprep.subr.bf16.mxu0 0
      %365 = vmatpush1.bf16.msra.mxu0 %v355
      %366 = vmatprep.subr.bf16.mxu0 0
      %367 = vmatpush1.bf16.msra.mxu0 %v356
      %368 = vmatprep.subr.bf16.mxu0 0
      %369 = vmatpush1.bf16.msra.mxu0 %v357
      %370 = vmatprep.subr.bf16.mxu0 0
      %371 = vmatpush1.bf16.msra.mxu0 %v358
      %372 = vmatprep.subr.bf16.mxu0 0
      %373 = vmatpush1.bf16.msra.mxu0 %v359
      %374 = vmatprep.subr.bf16.mxu0 0
      %375 = vmatpush1.bf16.msra.mxu0 %v360
      %376 = vmatprep.subr.bf16.mxu0 0
      %377 = vmatpush1.bf16.msra.mxu0 %v361
      %378 = vmatprep.subr.bf16.mxu0 0
      %379 = vmatpush1.bf16.msra.mxu0 0
      %380 = vmatprep.subr.bf16.mxu0 0
      %381 = vmatpush1.bf16.msra.mxu0 0
      %382 = vmatprep.subr.bf16.mxu0 0
      %383 = vmatpush1.bf16.msra.mxu0 0
      %384 = vmatprep.subr.bf16.mxu0 0
      %385 = vmatpush1.bf16.msra.mxu0 0
      %386 = vmatprep.subr.bf16.mxu0 0
      %387 = vmatpush1.bf16.msra.mxu0 0
      %388 = vmatprep.subr.bf16.mxu0 0
      %389 = vmatpush1.bf16.msra.mxu0 0
      %390 = vmatprep.subr.bf16.mxu0 0
      %391 = vmatpush1.bf16.msra.mxu0 0
      %392 = vmatprep.subr.bf16.mxu0 0
      %393 = vmatpush1.bf16.msra.mxu0 0
      %394 = vmatprep.mubr.bf16.mxu0 0
      %395 = vmatmul.mubr.bf16.gmra.mrb[0].mxu0 %v321
      %v396 = vpop.f32.mrb[0].mxu0
      %v397 = vadd.f32 0.0, %v396
      %v398 = vpop.f32.mrb[0].mxu0
      %v399 = vpop.f32.mrb[0].mxu0
      %v400 = vadd.f32 0.0, %v399
      %v401 = vpop.f32.mrb[0].mxu0
      %402 = vmatprep.mubr.bf16.mxu0 0
      %403 = vmatmul.mubr.bf16.gmra.mrb[0].mxu0 %v322
      %v404 = vpop.f32.mrb[0].mxu0
      %v405 = vadd.f32 0.0, %v404
      %v406 = vpop.f32.mrb[0].mxu0
      %v407 = vpop.f32.mrb[0].mxu0
      %v408 = vadd.f32 0.0, %v407
      %v409 = vpop.f32.mrb[0].mxu0
      %410 = vmatprep.mubr.bf16.mxu0 0
      %411 = vmatmul.mubr.bf16.gmra.mrb[0].mxu0 %v323
      %v412 = vpop.f32.mrb[0].mxu0
      %v413 = vadd.f32 0.0, %v412
      %v414 = vpop.f32.mrb[0].mxu0
      %v415 = vpop.f32.mrb[0].mxu0
      %v416 = vadd.f32 0.0, %v415
      %v417 = vpop.f32.mrb[0].mxu0
      %418 = vmatprep.mubr.bf16.mxu0 0
      %419 = vmatmul.mubr.bf16.gmra.mrb[0].mxu0 %v324
      %v420 = vpop.f32.mrb[0].mxu0
      %v421 = vadd.f32 0.0, %v420
      %v422 = vpop.f32.mrb[0].mxu0
      %v423 = vpop.f32.mrb[0].mxu0
      %v424 = vadd.f32 0.0, %v423
      %v425 = vpop.f32.mrb[0].mxu0
      %426 = vmatprep.mubr.bf16.mxu0 0
      %427 = vmatmul.mubr.bf16.gmra.mrb[0].mxu0 %v325
      %v428 = vpop.f32.mrb[0].mxu0
      %v429 = vadd.f32 0.0, %v428
      %v430 = vpop.f32.mrb[0].mxu0
      %v431 = vpop.f32.mrb[0].mxu0
      %v432 = vadd.f32 0.0, %v431
      %v433 = vpop.f32.mrb[0].mxu0
      %434 = vmatprep.mubr.bf16.mxu0 0
      %435 = vmatmul.mubr.bf16.gmra.mrb[0].mxu0 %v326
      %v436 = vpop.f32.mrb[0].mxu0
      %v437 = vadd.f32 0.0, %v436
      %v438 = vpop.f32.mrb[0].mxu0
      %v439 = vpop.f32.mrb[0].mxu0
      %v440 = vadd.f32 0.0, %v439
      %v441 = vpop.f32.mrb[0].mxu0
      %442 = vmatprep.mubr.bf16.mxu0 0
      %443 = vmatmul.mubr.bf16.gmra.mrb[0].mxu0 %v327
      %v444 = vpop.f32.mrb[0].mxu0
      %v445 = vadd.f32 0.0, %v444
      %v446 = vpop.f32.mrb[0].mxu0
      %v447 = vpop.f32.mrb[0].mxu0
      %v448 = vadd.f32 0.0, %v447
      %v449 = vpop.f32.mrb[0].mxu0
      %450 = vmatprep.mubr.bf16.mxu0 0
      %451 = vmatmul.mubr.bf16.gmra.mrb[0].mxu0 %v328
      %v452 = vpop.f32.mrb[0].mxu0
      %v453 = vadd.f32 0.0, %v452
      %v454 = vpop.f32.mrb[0].mxu0
      %v455 = vpop.f32.mrb[0].mxu0
      %v456 = vadd.f32 0.0, %v455
      %v457 = vpop.f32.mrb[0].mxu0
      %458 = vmatprep.mubr.bf16.mxu0 0
      %459 = vmatmul.mubr.bf16.gmra.mrb[0].mxu0 %v329
      %v460 = vpop.f32.mrb[0].mxu0
      %v461 = vadd.f32 0.0, %v460
      %v462 = vpop.f32.mrb[0].mxu0
      %v463 = vpop.f32.mrb[0].mxu0
      %v464 = vadd.f32 0.0, %v463
      %v465 = vpop.f32.mrb[0].mxu0
      %466 = vmatprep.mubr.bf16.mxu0 0
      %467 = vmatmul.mubr.bf16.gmra.mrb[0].mxu0 %v330
      %v468 = vpop.f32.mrb[0].mxu0
      %v469 = vadd.f32 0.0, %v468
      %v470 = vpop.f32.mrb[0].mxu0
      %v471 = vpop.f32.mrb[0].mxu0
      %v472 = vadd.f32 0.0, %v471
      %v473 = vpop.f32.mrb[0].mxu0
      %474 = vmatprep.mubr.bf16.mxu0 0
      %475 = vmatmul.mubr.bf16.gmra.mrb[0].mxu0 %v331
      %v476 = vpop.f32.mrb[0].mxu0
      %v477 = vadd.f32 0.0, %v476
      %v478 = vpop.f32.mrb[0].mxu0
      %v479 = vpop.f32.mrb[0].mxu0
      %v480 = vadd.f32 0.0, %v479
      %v481 = vpop.f32.mrb[0].mxu0
      %482 = vmatprep.mubr.bf16.mxu0 0
      %483 = vmatmul.mubr.bf16.gmra.mrb[0].mxu0 %v332
      %v484 = vpop.f32.mrb[0].mxu0
      %v485 = vadd.f32 0.0, %v484
      %v486 = vpop.f32.mrb[0].mxu0
      %v487 = vpop.f32.mrb[0].mxu0
      %v488 = vadd.f32 0.0, %v487
      %v489 = vpop.f32.mrb[0].mxu0
      %490 = vmatprep.mubr.bf16.mxu0 0
      %491 = vmatmul.mubr.bf16.gmra.mrb[0].mxu0 %v333
      %v492 = vpop.f32.mrb[0].mxu0
      %v493 = vadd.f32 0.0, %v492
      %v494 = vpop.f32.mrb[0].mxu0
      %v495 = vpop.f32.mrb[0].mxu0
      %v496 = vadd.f32 0.0, %v495
      %v497 = vpop.f32.mrb[0].mxu0
      %498 = vmatprep.mubr.bf16.mxu0 0
      %499 = vmatmul.mubr.bf16.gmra.mrb[0].mxu0 %v334
      %v500 = vpop.f32.mrb[0].mxu0
      %v501 = vadd.f32 0.0, %v500
      %v502 = vpop.f32.mrb[0].mxu0
      %v503 = vpop.f32.mrb[0].mxu0
      %v504 = vadd.f32 0.0, %v503
      %v505 = vpop.f32.mrb[0].mxu0
      %506 = vmatprep.mubr.bf16.mxu0 0
      %507 = vmatmul.mubr.bf16.gmra.mrb[0].mxu0 %v335
      %v508 = vpop.f32.mrb[0].mxu0
      %v509 = vadd.f32 0.0, %v508
      %v510 = vpop.f32.mrb[0].mxu0
      %v511 = vpop.f32.mrb[0].mxu0
      %v512 = vadd.f32 0.0, %v511
      %v513 = vpop.f32.mrb[0].mxu0
      %514 = vmatprep.mubr.bf16.mxu0 0
      %515 = vmatmul.mubr.bf16.gmra.mrb[0].mxu0 %v336
      %v516 = vpop.f32.mrb[0].mxu0
      %v517 = vadd.f32 0.0, %v516
      %v518 = vpop.f32.mrb[0].mxu0
      %v519 = vpop.f32.mrb[0].mxu0
      %v520 = vadd.f32 0.0, %v519
      %v521 = vpop.f32.mrb[0].mxu0
      %522 = vdwg.mxu0
      %523 = vmatprep.subr.bf16.mxu0 0
      %524 = vmatpush1.bf16.msra.mxu0 %v279
      %525 = vmatprep.subr.bf16.mxu0 0
      %526 = vmatpush1.bf16.msra.mxu0 %v280
      %527 = vmatprep.subr.bf16.mxu0 0
      %528 = vmatpush1.bf16.msra.mxu0 %v281
      %529 = vmatprep.subr.bf16.mxu0 0
      %530 = vmatpush1.bf16.msra.mxu0 %v282
      %531 = vmatprep.subr.bf16.mxu0 0
      %532 = vmatpush1.bf16.msra.mxu0 %v283
      %533 = vmatprep.subr.bf16.mxu0 0
      %534 = vmatpush1.bf16.msra.mxu0 %v284
      %535 = vmatprep.subr.bf16.mxu0 0
      %536 = vmatpush1.bf16.msra.mxu0 %v285
      %537 = vmatprep.subr.bf16.mxu0 0
      %538 = vmatpush1.bf16.msra.mxu0 %v286
      %539 = vmatprep.subr.bf16.mxu0 0
      %540 = vmatpush1.bf16.msra.mxu0 0
      %541 = vmatprep.subr.bf16.mxu0 0
      %542 = vmatpush1.bf16.msra.mxu0 0
      %543 = vmatprep.subr.bf16.mxu0 0
      %544 = vmatpush1.bf16.msra.mxu0 0
      %545 = vmatprep.subr.bf16.mxu0 0
      %546 = vmatpush1.bf16.msra.mxu0 0
      %547 = vmatprep.subr.bf16.mxu0 0
      %548 = vmatpush1.bf16.msra.mxu0 0
      %549 = vmatprep.subr.bf16.mxu0 0
      %550 = vmatpush1.bf16.msra.mxu0 0
      %551 = vmatprep.subr.bf16.mxu0 0
      %552 = vmatpush1.bf16.msra.mxu0 0
      %553 = vmatprep.subr.bf16.mxu0 0
      %554 = vmatpush1.bf16.msra.mxu0 0
      %555 = vmatprep.mubr.bf16.mxu0 0
      %556 = vmatmul.mubr.bf16.gmra.mrb[0].mxu0 %v247
      %v557 = vpop.f32.mrb[0].mxu0
      %v558 = vadd.f32 %v397, %v557
      %v559 = vpop.f32.mrb[0].mxu0
      %v560 = vpop.f32.mrb[0].mxu0
      %v561 = vadd.f32 %v400, %v560
      %v562 = vpop.f32.mrb[0].mxu0
      %563 = vmatprep.mubr.bf16.mxu0 0
      %564 = vmatmul.mubr.bf16.gmra.mrb[0].mxu0 %v248
      %v565 = vpop.f32.mrb[0].mxu0
      %v566 = vadd.f32 %v405, %v565
      %v567 = vpop.f32.mrb[0].mxu0
      %v568 = vpop.f32.mrb[0].mxu0
      %v569 = vadd.f32 %v408, %v568
      %v570 = vpop.f32.mrb[0].mxu0
      %571 = vmatprep.mubr.bf16.mxu0 0
      %572 = vmatmul.mubr.bf16.gmra.mrb[0].mxu0 %v249
      %v573 = vpop.f32.mrb[0].mxu0
      %v574 = vadd.f32 %v413, %v573
      %v575 = vpop.f32.mrb[0].mxu0
      %v576 = vpop.f32.mrb[0].mxu0
      %v577 = vadd.f32 %v416, %v576
      %v578 = vpop.f32.mrb[0].mxu0
      %579 = vmatprep.mubr.bf16.mxu0 0
      %580 = vmatmul.mubr.bf16.gmra.mrb[0].mxu0 %v250
      %v581 = vpop.f32.mrb[0].mxu0
      %v582 = vadd.f32 %v421, %v581
      %v583 = vpop.f32.mrb[0].mxu0
      %v584 = vpop.f32.mrb[0].mxu0
      %v585 = vadd.f32 %v424, %v584
      %v586 = vpop.f32.mrb[0].mxu0
      %587 = vmatprep.mubr.bf16.mxu0 0
      %588 = vmatmul.mubr.bf16.gmra.mrb[0].mxu0 %v251
      %v589 = vpop.f32.mrb[0].mxu0
      %v590 = vadd.f32 %v429, %v589
      %v591 = vpop.f32.mrb[0].mxu0
      %v592 = vpop.f32.mrb[0].mxu0
      %v593 = vadd.f32 %v432, %v592
      %v594 = vpop.f32.mrb[0].mxu0
      %595 = vmatprep.mubr.bf16.mxu0 0
      %596 = vmatmul.mubr.bf16.gmra.mrb[0].mxu0 %v252
      %v597 = vpop.f32.mrb[0].mxu0
      %v598 = vadd.f32 %v437, %v597
      %v599 = vpop.f32.mrb[0].mxu0
      %v600 = vpop.f32.mrb[0].mxu0
      %v601 = vadd.f32 %v440, %v600
      %v602 = vpop.f32.mrb[0].mxu0
      %603 = vmatprep.mubr.bf16.mxu0 0
      %604 = vmatmul.mubr.bf16.gmra.mrb[0].mxu0 %v253
      %v605 = vpop.f32.mrb[0].mxu0
      %v606 = vadd.f32 %v445, %v605
      %v607 = vpop.f32.mrb[0].mxu0
      %v608 = vpop.f32.mrb[0].mxu0
      %v609 = vadd.f32 %v448, %v608
      %v610 = vpop.f32.mrb[0].mxu0
      %611 = vmatprep.mubr.bf16.mxu0 0
      %612 = vmatmul.mubr.bf16.gmra.mrb[0].mxu0 %v254
      %v613 = vpop.f32.mrb[0].mxu0
      %v614 = vadd.f32 %v453, %v613
      %v615 = vpop.f32.mrb[0].mxu0
      %v616 = vpop.f32.mrb[0].mxu0
      %v617 = vadd.f32 %v456, %v616
      %v618 = vpop.f32.mrb[0].mxu0
      %619 = vmatprep.mubr.bf16.mxu0 0
      %620 = vmatmul.mubr.bf16.gmra.mrb[0].mxu0 %v255
      %v621 = vpop.f32.mrb[0].mxu0
      %v622 = vadd.f32 %v461, %v621
      %v623 = vpop.f32.mrb[0].mxu0
      %v624 = vpop.f32.mrb[0].mxu0
      %v625 = vadd.f32 %v464, %v624
      %v626 = vpop.f32.mrb[0].mxu0
      %627 = vmatprep.mubr.bf16.mxu0 0
      %628 = vmatmul.mubr.bf16.gmra.mrb[0].mxu0 %v256
      %v629 = vpop.f32.mrb[0].mxu0
      %v630 = vadd.f32 %v469, %v629
      %v631 = vpop.f32.mrb[0].mxu0
      %v632 = vpop.f32.mrb[0].mxu0
      %v633 = vadd.f32 %v472, %v632
      %v634 = vpop.f32.mrb[0].mxu0
      %635 = vmatprep.mubr.bf16.mxu0 0
      %636 = vmatmul.mubr.bf16.gmra.mrb[0].mxu0 %v257
      %v637 = vpop.f32.mrb[0].mxu0
      %v638 = vadd.f32 %v477, %v637
      %v639 = vpop.f32.mrb[0].mxu0
      %v640 = vpop.f32.mrb[0].mxu0
      %v641 = vadd.f32 %v480, %v640
      %v642 = vpop.f32.mrb[0].mxu0
      %643 = vmatprep.mubr.bf16.mxu0 0
      %644 = vmatmul.mubr.bf16.gmra.mrb[0].mxu0 %v258
      %v645 = vpop.f32.mrb[0].mxu0
      %v646 = vadd.f32 %v485, %v645
      %v647 = vpop.f32.mrb[0].mxu0
      %v648 = vpop.f32.mrb[0].mxu0
      %v649 = vadd.f32 %v488, %v648
      %v650 = vpop.f32.mrb[0].mxu0
      %651 = vmatprep.mubr.bf16.mxu0 0
      %652 = vmatmul.mubr.bf16.gmra.mrb[0].mxu0 %v259
      %v653 = vpop.f32.mrb[0].mxu0
      %v654 = vadd.f32 %v493, %v653
      %v655 = vpop.f32.mrb[0].mxu0
      %v656 = vpop.f32.mrb[0].mxu0
      %v657 = vadd.f32 %v496, %v656
      %v658 = vpop.f32.mrb[0].mxu0
      %659 = vmatprep.mubr.bf16.mxu0 0
      %660 = vmatmul.mubr.bf16.gmra.mrb[0].mxu0 %v260
      %v661 = vpop.f32.mrb[0].mxu0
      %v662 = vadd.f32 %v501, %v661
      %v663 = vpop.f32.mrb[0].mxu0
      %v664 = vpop.f32.mrb[0].mxu0
      %v665 = vadd.f32 %v504, %v664
      %v666 = vpop.f32.mrb[0].mxu0
      %667 = vmatprep.mubr.bf16.mxu0 0
      %668 = vmatmul.mubr.bf16.gmra.mrb[0].mxu0 %v261
      %v669 = vpop.f32.mrb[0].mxu0
      %v670 = vadd.f32 %v509, %v669
      %v671 = vpop.f32.mrb[0].mxu0
      %v672 = vpop.f32.mrb[0].mxu0
      %v673 = vadd.f32 %v512, %v672
      %v674 = vpop.f32.mrb[0].mxu0
      %675 = vmatprep.mubr.bf16.mxu0 0
      %676 = vmatmul.mubr.bf16.gmra.mrb[0].mxu0 %v262
      %v677 = vpop.f32.mrb[0].mxu0
      %v678 = vadd.f32 %v517, %v677
      %v679 = vpop.f32.mrb[0].mxu0
      %v680 = vpop.f32.mrb[0].mxu0
      %v681 = vadd.f32 %v520, %v680
      %v682 = vpop.f32.mrb[0].mxu0
      %683 = vdwg.mxu0
      %s684 = sadd.s32 %s213, 2
      %s685 = scalar_lea.vmem %s0, %s684
      %v686 = vld [vmem:[%s685] sm:$0xff]
      %v687 = vld [vmem:[%s685 + $0x8] sm:$0xff]
      %v688 = vld [vmem:[%s685 + $0x10] sm:$0xff]
      %v689 = vld [vmem:[%s685 + $0x18] sm:$0xff]
      %v690 = vld [vmem:[%s685 + $0x20] sm:$0xff]
      %v691 = vld [vmem:[%s685 + $0x28] sm:$0xff]
      %v692 = vld [vmem:[%s685 + $0x30] sm:$0xff]
      %v693 = vld [vmem:[%s685 + $0x38] sm:$0xff]
      %v694 = vld [vmem:[%s685 + $0x40] sm:$0xff]
      %v695 = vld [vmem:[%s685 + $0x48] sm:$0xff]
      %v696 = vld [vmem:[%s685 + $0x50] sm:$0xff]
      %v697 = vld [vmem:[%s685 + $0x58] sm:$0xff]
      %v698 = vld [vmem:[%s685 + $0x60] sm:$0xff]
      %v699 = vld [vmem:[%s685 + $0x68] sm:$0xff]
      %v700 = vld [vmem:[%s685 + $0x70] sm:$0xff]
      %v701 = vld [vmem:[%s685 + $0x78] sm:$0xff]
      %v702 = vld [vmem:[%s685 + $0x80] sm:$0xff]
      %v703 = vld [vmem:[%s685 + $0x88] sm:$0xff]
      %v704 = vld [vmem:[%s685 + $0x90] sm:$0xff]
      %v705 = vld [vmem:[%s685 + $0x98] sm:$0xff]
      %v706 = vld [vmem:[%s685 + $0xa0] sm:$0xff]
      %v707 = vld [vmem:[%s685 + $0xa8] sm:$0xff]
      %v708 = vld [vmem:[%s685 + $0xb0] sm:$0xff]
      %v709 = vld [vmem:[%s685 + $0xb8] sm:$0xff]
      %v710 = vld [vmem:[%s685 + $0xc0] sm:$0xff]
      %v711 = vld [vmem:[%s685 + $0xc8] sm:$0xff]
      %v712 = vld [vmem:[%s685 + $0xd0] sm:$0xff]
      %v713 = vld [vmem:[%s685 + $0xd8] sm:$0xff]
      %v714 = vld [vmem:[%s685 + $0xe0] sm:$0xff]
      %v715 = vld [vmem:[%s685 + $0xe8] sm:$0xff]
      %v716 = vld [vmem:[%s685 + $0xf0] sm:$0xff]
      %v717 = vld [vmem:[%s685 + $0xf8] sm:$0xff]
      %v718 = vpack.c.bf16 %v687, %v686
      %v719 = vpack.c.bf16 %v689, %v688
      %v720 = vpack.c.bf16 %v691, %v690
      %v721 = vpack.c.bf16 %v693, %v692
      %v722 = vpack.c.bf16 %v695, %v694
      %v723 = vpack.c.bf16 %v697, %v696
      %v724 = vpack.c.bf16 %v699, %v698
      %v725 = vpack.c.bf16 %v701, %v700
      %v726 = vpack.c.bf16 %v703, %v702
      %v727 = vpack.c.bf16 %v705, %v704
      %v728 = vpack.c.bf16 %v707, %v706
      %v729 = vpack.c.bf16 %v709, %v708
      %v730 = vpack.c.bf16 %v711, %v710
      %v731 = vpack.c.bf16 %v713, %v712
      %v732 = vpack.c.bf16 %v715, %v714
      %v733 = vpack.c.bf16 %v717, %v716
      %s734 = scalar_lea.vmem %s1, 256
      %v735 = vld [vmem:[%s734] sm:$0xff]
      %v736 = vld [vmem:[%s734 + $0x8] sm:$0xff]
      %v737 = vld [vmem:[%s734 + $0x10] sm:$0xff]
      %v738 = vld [vmem:[%s734 + $0x18] sm:$0xff]
      %v739 = vld [vmem:[%s734 + $0x20] sm:$0xff]
      %v740 = vld [vmem:[%s734 + $0x28] sm:$0xff]
      %v741 = vld [vmem:[%s734 + $0x30] sm:$0xff]
      %v742 = vld [vmem:[%s734 + $0x38] sm:$0xff]
      %v743 = vld [vmem:[%s734 + $0x40] sm:$0xff]
      %v744 = vld [vmem:[%s734 + $0x48] sm:$0xff]
      %v745 = vld [vmem:[%s734 + $0x50] sm:$0xff]
      %v746 = vld [vmem:[%s734 + $0x58] sm:$0xff]
      %v747 = vld [vmem:[%s734 + $0x60] sm:$0xff]
      %v748 = vld [vmem:[%s734 + $0x68] sm:$0xff]
      %v749 = vld [vmem:[%s734 + $0x70] sm:$0xff]
      %v750 = vld [vmem:[%s734 + $0x78] sm:$0xff]
      %v751 = vpack.c.bf16 %v736, %v735
      %v752 = vpack.c.bf16 %v738, %v737
      %v753 = vpack.c.bf16 %v740, %v739
      %v754 = vpack.c.bf16 %v742, %v741
      %v755 = vpack.c.bf16 %v744, %v743
      %v756 = vpack.c.bf16 %v746, %v745
      %v757 = vpack.c.bf16 %v748, %v747
      %v758 = vpack.c.bf16 %v750, %v749
      %759 = vmatprep.subr.bf16.mxu0 0
      %760 = vmatpush1.bf16.msra.mxu0 %v751
      %761 = vmatprep.subr.bf16.mxu0 0
      %762 = vmatpush1.bf16.msra.mxu0 %v752
      %763 = vmatprep.subr.bf16.mxu0 0
      %764 = vmatpush1.bf16.msra.mxu0 %v753
      %765 = vmatprep.subr.bf16.mxu0 0
      %766 = vmatpush1.bf16.msra.mxu0 %v754
      %767 = vmatprep.subr.bf16.mxu0 0
      %768 = vmatpush1.bf16.msra.mxu0 %v755
      %769 = vmatprep.subr.bf16.mxu0 0
      %770 = vmatpush1.bf16.msra.mxu0 %v756
      %771 = vmatprep.subr.bf16.mxu0 0
      %772 = vmatpush1.bf16.msra.mxu0 %v757
      %773 = vmatprep.subr.bf16.mxu0 0
      %774 = vmatpush1.bf16.msra.mxu0 %v758
      %775 = vmatprep.subr.bf16.mxu0 0
      %776 = vmatpush1.bf16.msra.mxu0 0
      %777 = vmatprep.subr.bf16.mxu0 0
      %778 = vmatpush1.bf16.msra.mxu0 0
      %779 = vmatprep.subr.bf16.mxu0 0
      %780 = vmatpush1.bf16.msra.mxu0 0
      %781 = vmatprep.subr.bf16.mxu0 0
      %782 = vmatpush1.bf16.msra.mxu0 0
      %783 = vmatprep.subr.bf16.mxu0 0
      %784 = vmatpush1.bf16.msra.mxu0 0
      %785 = vmatprep.subr.bf16.mxu0 0
      %786 = vmatpush1.bf16.msra.mxu0 0
      %787 = vmatprep.subr.bf16.mxu0 0
      %788 = vmatpush1.bf16.msra.mxu0 0
      %789 = vmatprep.subr.bf16.mxu0 0
      %790 = vmatpush1.bf16.msra.mxu0 0
      %791 = vmatprep.mubr.bf16.mxu0 0
      %792 = vmatmul.mubr.bf16.gmra.mrb[0].mxu0 %v718
      %v793 = vpop.f32.mrb[0].mxu0
      %v794 = vadd.f32 0.0, %v793
      %v795 = vpop.f32.mrb[0].mxu0
      %v796 = vpop.f32.mrb[0].mxu0
      %v797 = vadd.f32 0.0, %v796
      %v798 = vpop.f32.mrb[0].mxu0
      %799 = vmatprep.mubr.bf16.mxu0 0
      %800 = vmatmul.mubr.bf16.gmra.mrb[0].mxu0 %v719
      %v801 = vpop.f32.mrb[0].mxu0
      %v802 = vadd.f32 0.0, %v801
      %v803 = vpop.f32.mrb[0].mxu0
      %v804 = vpop.f32.mrb[0].mxu0
      %v805 = vadd.f32 0.0, %v804
      %v806 = vpop.f32.mrb[0].mxu0
      %807 = vmatprep.mubr.bf16.mxu0 0
      %808 = vmatmul.mubr.bf16.gmra.mrb[0].mxu0 %v720
      %v809 = vpop.f32.mrb[0].mxu0
      %v810 = vadd.f32 0.0, %v809
      %v811 = vpop.f32.mrb[0].mxu0
      %v812 = vpop.f32.mrb[0].mxu0
      %v813 = vadd.f32 0.0, %v812
      %v814 = vpop.f32.mrb[0].mxu0
      %815 = vmatprep.mubr.bf16.mxu0 0
      %816 = vmatmul.mubr.bf16.gmra.mrb[0].mxu0 %v721
      %v817 = vpop.f32.mrb[0].mxu0
      %v818 = vadd.f32 0.0, %v817
      %v819 = vpop.f32.mrb[0].mxu0
      %v820 = vpop.f32.mrb[0].mxu0
      %v821 = vadd.f32 0.0, %v820
      %v822 = vpop.f32.mrb[0].mxu0
      %823 = vmatprep.mubr.bf16.mxu0 0
      %824 = vmatmul.mubr.bf16.gmra.mrb[0].mxu0 %v722
      %v825 = vpop.f32.mrb[0].mxu0
      %v826 = vadd.f32 0.0, %v825
      %v827 = vpop.f32.mrb[0].mxu0
      %v828 = vpop.f32.mrb[0].mxu0
      %v829 = vadd.f32 0.0, %v828
      %v830 = vpop.f32.mrb[0].mxu0
      %831 = vmatprep.mubr.bf16.mxu0 0
      %832 = vmatmul.mubr.bf16.gmra.mrb[0].mxu0 %v723
      %v833 = vpop.f32.mrb[0].mxu0
      %v834 = vadd.f32 0.0, %v833
      %v835 = vpop.f32.mrb[0].mxu0
      %v836 = vpop.f32.mrb[0].mxu0
      %v837 = vadd.f32 0.0, %v836
      %v838 = vpop.f32.mrb[0].mxu0
      %839 = vmatprep.mubr.bf16.mxu0 0
      %840 = vmatmul.mubr.bf16.gmra.mrb[0].mxu0 %v724
      %v841 = vpop.f32.mrb[0].mxu0
      %v842 = vadd.f32 0.0, %v841
      %v843 = vpop.f32.mrb[0].mxu0
      %v844 = vpop.f32.mrb[0].mxu0
      %v845 = vadd.f32 0.0, %v844
      %v846 = vpop.f32.mrb[0].mxu0
      %847 = vmatprep.mubr.bf16.mxu0 0
      %848 = vmatmul.mubr.bf16.gmra.mrb[0].mxu0 %v725
      %v849 = vpop.f32.mrb[0].mxu0
      %v850 = vadd.f32 0.0, %v849
      %v851 = vpop.f32.mrb[0].mxu0
      %v852 = vpop.f32.mrb[0].mxu0
      %v853 = vadd.f32 0.0, %v852
      %v854 = vpop.f32.mrb[0].mxu0
      %855 = vmatprep.mubr.bf16.mxu0 0
      %856 = vmatmul.mubr.bf16.gmra.mrb[0].mxu0 %v726
      %v857 = vpop.f32.mrb[0].mxu0
      %v858 = vadd.f32 0.0, %v857
      %v859 = vpop.f32.mrb[0].mxu0
      %v860 = vpop.f32.mrb[0].mxu0
      %v861 = vadd.f32 0.0, %v860
      %v862 = vpop.f32.mrb[0].mxu0
      %863 = vmatprep.mubr.bf16.mxu0 0
      %864 = vmatmul.mubr.bf16.gmra.mrb[0].mxu0 %v727
      %v865 = vpop.f32.mrb[0].mxu0
      %v866 = vadd.f32 0.0, %v865
      %v867 = vpop.f32.mrb[0].mxu0
      %v868 = vpop.f32.mrb[0].mxu0
      %v869 = vadd.f32 0.0, %v868
      %v870 = vpop.f32.mrb[0].mxu0
      %871 = vmatprep.mubr.bf16.mxu0 0
      %872 = vmatmul.mubr.bf16.gmra.mrb[0].mxu0 %v728
      %v873 = vpop.f32.mrb[0].mxu0
      %v874 = vadd.f32 0.0, %v873
      %v875 = vpop.f32.mrb[0].mxu0
      %v876 = vpop.f32.mrb[0].mxu0
      %v877 = vadd.f32 0.0, %v876
      %v878 = vpop.f32.mrb[0].mxu0
      %879 = vmatprep.mubr.bf16.mxu0 0
      %880 = vmatmul.mubr.bf16.gmra.mrb[0].mxu0 %v729
      %v881 = vpop.f32.mrb[0].mxu0
      %v882 = vadd.f32 0.0, %v881
      %v883 = vpop.f32.mrb[0].mxu0
      %v884 = vpop.f32.mrb[0].mxu0
      %v885 = vadd.f32 0.0, %v884
      %v886 = vpop.f32.mrb[0].mxu0
      %887 = vmatprep.mubr.bf16.mxu0 0
      %888 = vmatmul.mubr.bf16.gmra.mrb[0].mxu0 %v730
      %v889 = vpop.f32.mrb[0].mxu0
      %v890 = vadd.f32 0.0, %v889
      %v891 = vpop.f32.mrb[0].mxu0
      %v892 = vpop.f32.mrb[0].mxu0
      %v893 = vadd.f32 0.0, %v892
      %v894 = vpop.f32.mrb[0].mxu0
      %895 = vmatprep.mubr.bf16.mxu0 0
      %896 = vmatmul.mubr.bf16.gmra.mrb[0].mxu0 %v731
      %v897 = vpop.f32.mrb[0].mxu0
      %v898 = vadd.f32 0.0, %v897
      %v899 = vpop.f32.mrb[0].mxu0
      %v900 = vpop.f32.mrb[0].mxu0
      %v901 = vadd.f32 0.0, %v900
      %v902 = vpop.f32.mrb[0].mxu0
      %903 = vmatprep.mubr.bf16.mxu0 0
      %904 = vmatmul.mubr.bf16.gmra.mrb[0].mxu0 %v732
      %v905 = vpop.f32.mrb[0].mxu0
      %v906 = vadd.f32 0.0, %v905
      %v907 = vpop.f32.mrb[0].mxu0
      %v908 = vpop.f32.mrb[0].mxu0
      %v909 = vadd.f32 0.0, %v908
      %v910 = vpop.f32.mrb[0].mxu0
      %911 = vmatprep.mubr.bf16.mxu0 0
      %912 = vmatmul.mubr.bf16.gmra.mrb[0].mxu0 %v733
      %v913 = vpop.f32.mrb[0].mxu0
      %v914 = vadd.f32 0.0, %v913
      %v915 = vpop.f32.mrb[0].mxu0
      %v916 = vpop.f32.mrb[0].mxu0
      %v917 = vadd.f32 0.0, %v916
      %v918 = vpop.f32.mrb[0].mxu0
      %919 = vdwg.mxu0
      %v920 = vadd.f32 %v558, %v794
      %v921 = vadd.f32 %v561, %v797
      %v922 = vadd.f32 %v566, %v802
      %v923 = vadd.f32 %v569, %v805
      %v924 = vadd.f32 %v574, %v810
      %v925 = vadd.f32 %v577, %v813
      %v926 = vadd.f32 %v582, %v818
      %v927 = vadd.f32 %v585, %v821
      %v928 = vadd.f32 %v590, %v826
      %v929 = vadd.f32 %v593, %v829
      %v930 = vadd.f32 %v598, %v834
      %v931 = vadd.f32 %v601, %v837
      %v932 = vadd.f32 %v606, %v842
      %v933 = vadd.f32 %v609, %v845
      %v934 = vadd.f32 %v614, %v850
      %v935 = vadd.f32 %v617, %v853
      %v936 = vadd.f32 %v622, %v858
      %v937 = vadd.f32 %v625, %v861
      %v938 = vadd.f32 %v630, %v866
      %v939 = vadd.f32 %v633, %v869
      %v940 = vadd.f32 %v638, %v874
      %v941 = vadd.f32 %v641, %v877
      %v942 = vadd.f32 %v646, %v882
      %v943 = vadd.f32 %v649, %v885
      %v944 = vadd.f32 %v654, %v890
      %v945 = vadd.f32 %v657, %v893
      %v946 = vadd.f32 %v662, %v898
      %v947 = vadd.f32 %v665, %v901
      %v948 = vadd.f32 %v670, %v906
      %v949 = vadd.f32 %v673, %v909
      %v950 = vadd.f32 %v678, %v914
      %v951 = vadd.f32 %v681, %v917
      %s952 = sadd.s32 %s213, 18
      %s953 = scalar_lea.vmem %s0, %s952
      %v954 = vld [vmem:[%s953] sm:$0xff]
      %v955 = vld [vmem:[%s953 + $0x8] sm:$0xff]
      %v956 = vld [vmem:[%s953 + $0x10] sm:$0xff]
      %v957 = vld [vmem:[%s953 + $0x18] sm:$0xff]
      %v958 = vld [vmem:[%s953 + $0x20] sm:$0xff]
      %v959 = vld [vmem:[%s953 + $0x28] sm:$0xff]
      %v960 = vld [vmem:[%s953 + $0x30] sm:$0xff]
      %v961 = vld [vmem:[%s953 + $0x38] sm:$0xff]
      %v962 = vld [vmem:[%s953 + $0x40] sm:$0xff]
      %v963 = vld [vmem:[%s953 + $0x48] sm:$0xff]
      %v964 = vld [vmem:[%s953 + $0x50] sm:$0xff]
      %v965 = vld [vmem:[%s953 + $0x58] sm:$0xff]
      %v966 = vld [vmem:[%s953 + $0x60] sm:$0xff]
      %v967 = vld [vmem:[%s953 + $0x68] sm:$0xff]
      %v968 = vld [vmem:[%s953 + $0x70] sm:$0xff]
      %v969 = vld [vmem:[%s953 + $0x78] sm:$0xff]
      %v970 = vld [vmem:[%s953 + $0x80] sm:$0xff]
      %v971 = vld [vmem:[%s953 + $0x88] sm:$0xff]
      %v972 = vld [vmem:[%s953 + $0x90] sm:$0xff]
      %v973 = vld [vmem:[%s953 + $0x98] sm:$0xff]
      %v974 = vld [vmem:[%s953 + $0xa0] sm:$0xff]
      %v975 = vld [vmem:[%s953 + $0xa8] sm:$0xff]
      %v976 = vld [vmem:[%s953 + $0xb0] sm:$0xff]
      %v977 = vld [vmem:[%s953 + $0xb8] sm:$0xff]
      %v978 = vld [vmem:[%s953 + $0xc0] sm:$0xff]
      %v979 = vld [vmem:[%s953 + $0xc8] sm:$0xff]
      %v980 = vld [vmem:[%s953 + $0xd0] sm:$0xff]
      %v981 = vld [vmem:[%s953 + $0xd8] sm:$0xff]
      %v982 = vld [vmem:[%s953 + $0xe0] sm:$0xff]
      %v983 = vld [vmem:[%s953 + $0xe8] sm:$0xff]
      %v984 = vld [vmem:[%s953 + $0xf0] sm:$0xff]
      %v985 = vld [vmem:[%s953 + $0xf8] sm:$0xff]
      %v986 = vpack.c.bf16 %v955, %v954
      %v987 = vpack.c.bf16 %v957, %v956
      %v988 = vpack.c.bf16 %v959, %v958
      %v989 = vpack.c.bf16 %v961, %v960
      %v990 = vpack.c.bf16 %v963, %v962
      %v991 = vpack.c.bf16 %v965, %v964
      %v992 = vpack.c.bf16 %v967, %v966
      %v993 = vpack.c.bf16 %v969, %v968
      %v994 = vpack.c.bf16 %v971, %v970
      %v995 = vpack.c.bf16 %v973, %v972
      %v996 = vpack.c.bf16 %v975, %v974
      %v997 = vpack.c.bf16 %v977, %v976
      %v998 = vpack.c.bf16 %v979, %v978
      %v999 = vpack.c.bf16 %v981, %v980
      %v1000 = vpack.c.bf16 %v983, %v982
      %v1001 = vpack.c.bf16 %v985, %v984
      %s1002 = scalar_lea.vmem %s1, 384
      %v1003 = vld [vmem:[%s1002] sm:$0xff]
      %v1004 = vld [vmem:[%s1002 + $0x8] sm:$0xff]
      %v1005 = vld [vmem:[%s1002 + $0x10] sm:$0xff]
      %v1006 = vld [vmem:[%s1002 + $0x18] sm:$0xff]
      %v1007 = vld [vmem:[%s1002 + $0x20] sm:$0xff]
      %v1008 = vld [vmem:[%s1002 + $0x28] sm:$0xff]
      %v1009 = vld [vmem:[%s1002 + $0x30] sm:$0xff]
      %v1010 = vld [vmem:[%s1002 + $0x38] sm:$0xff]
      %v1011 = vld [vmem:[%s1002 + $0x40] sm:$0xff]
      %v1012 = vld [vmem:[%s1002 + $0x48] sm:$0xff]
      %v1013 = vld [vmem:[%s1002 + $0x50] sm:$0xff]
      %v1014 = vld [vmem:[%s1002 + $0x58] sm:$0xff]
      %v1015 = vld [vmem:[%s1002 + $0x60] sm:$0xff]
      %v1016 = vld [vmem:[%s1002 + $0x68] sm:$0xff]
      %v1017 = vld [vmem:[%s1002 + $0x70] sm:$0xff]
      %v1018 = vld [vmem:[%s1002 + $0x78] sm:$0xff]
      %v1019 = vpack.c.bf16 %v1004, %v1003
      %v1020 = vpack.c.bf16 %v1006, %v1005
      %v1021 = vpack.c.bf16 %v1008, %v1007
      %v1022 = vpack.c.bf16 %v1010, %v1009
      %v1023 = vpack.c.bf16 %v1012, %v1011
      %v1024 = vpack.c.bf16 %v1014, %v1013
      %v1025 = vpack.c.bf16 %v1016, %v1015
      %v1026 = vpack.c.bf16 %v1018, %v1017
      %1027 = vmatprep.subr.bf16.mxu0 0
      %1028 = vmatpush1.bf16.msra.mxu0 %v1019
      %1029 = vmatprep.subr.bf16.mxu0 0
      %1030 = vmatpush1.bf16.msra.mxu0 %v1020
      %1031 = vmatprep.subr.bf16.mxu0 0
      %1032 = vmatpush1.bf16.msra.mxu0 %v1021
      %1033 = vmatprep.subr.bf16.mxu0 0
      %1034 = vmatpush1.bf16.msra.mxu0 %v1022
      %1035 = vmatprep.subr.bf16.mxu0 0
      %1036 = vmatpush1.bf16.msra.mxu0 %v1023
      %1037 = vmatprep.subr.bf16.mxu0 0
      %1038 = vmatpush1.bf16.msra.mxu0 %v1024
      %1039 = vmatprep.subr.bf16.mxu0 0
      %1040 = vmatpush1.bf16.msra.mxu0 %v1025
      %1041 = vmatprep.subr.bf16.mxu0 0
      %1042 = vmatpush1.bf16.msra.mxu0 %v1026
      %1043 = vmatprep.subr.bf16.mxu0 0
      %1044 = vmatpush1.bf16.msra.mxu0 0
      %1045 = vmatprep.subr.bf16.mxu0 0
      %1046 = vmatpush1.bf16.msra.mxu0 0
      %1047 = vmatprep.subr.bf16.mxu0 0
      %1048 = vmatpush1.bf16.msra.mxu0 0
      %1049 = vmatprep.subr.bf16.mxu0 0
      %1050 = vmatpush1.bf16.msra.mxu0 0
      %1051 = vmatprep.subr.bf16.mxu0 0
      %1052 = vmatpush1.bf16.msra.mxu0 0
      %1053 = vmatprep.subr.bf16.mxu0 0
      %1054 = vmatpush1.bf16.msra.mxu0 0
      %1055 = vmatprep.subr.bf16.mxu0 0
      %1056 = vmatpush1.bf16.msra.mxu0 0
      %1057 = vmatprep.subr.bf16.mxu0 0
      %1058 = vmatpush1.bf16.msra.mxu0 0
      %1059 = vmatprep.mubr.bf16.mxu0 0
      %1060 = vmatmul.mubr.bf16.gmra.mrb[0].mxu0 %v986
      %v1061 = vpop.f32.mrb[0].mxu0
      %v1062 = vadd.f32 0.0, %v1061
      %v1063 = vpop.f32.mrb[0].mxu0
      %v1064 = vpop.f32.mrb[0].mxu0
      %v1065 = vadd.f32 0.0, %v1064
      %v1066 = vpop.f32.mrb[0].mxu0
      %1067 = vmatprep.mubr.bf16.mxu0 0
      %1068 = vmatmul.mubr.bf16.gmra.mrb[0].mxu0 %v987
      %v1069 = vpop.f32.mrb[0].mxu0
      %v1070 = vadd.f32 0.0, %v1069
      %v1071 = vpop.f32.mrb[0].mxu0
      %v1072 = vpop.f32.mrb[0].mxu0
      %v1073 = vadd.f32 0.0, %v1072
      %v1074 = vpop.f32.mrb[0].mxu0
      %1075 = vmatprep.mubr.bf16.mxu0 0
      %1076 = vmatmul.mubr.bf16.gmra.mrb[0].mxu0 %v988
      %v1077 = vpop.f32.mrb[0].mxu0
      %v1078 = vadd.f32 0.0, %v1077
      %v1079 = vpop.f32.mrb[0].mxu0
      %v1080 = vpop.f32.mrb[0].mxu0
      %v1081 = vadd.f32 0.0, %v1080
      %v1082 = vpop.f32.mrb[0].mxu0
      %1083 = vmatprep.mubr.bf16.mxu0 0
      %1084 = vmatmul.mubr.bf16.gmra.mrb[0].mxu0 %v989
      %v1085 = vpop.f32.mrb[0].mxu0
      %v1086 = vadd.f32 0.0, %v1085
      %v1087 = vpop.f32.mrb[0].mxu0
      %v1088 = vpop.f32.mrb[0].mxu0
      %v1089 = vadd.f32 0.0, %v1088
      %v1090 = vpop.f32.mrb[0].mxu0
      %1091 = vmatprep.mubr.bf16.mxu0 0
      %1092 = vmatmul.mubr.bf16.gmra.mrb[0].mxu0 %v990
      %v1093 = vpop.f32.mrb[0].mxu0
      %v1094 = vadd.f32 0.0, %v1093
      %v1095 = vpop.f32.mrb[0].mxu0
      %v1096 = vpop.f32.mrb[0].mxu0
      %v1097 = vadd.f32 0.0, %v1096
      %v1098 = vpop.f32.mrb[0].mxu0
      %1099 = vmatprep.mubr.bf16.mxu0 0
      %1100 = vmatmul.mubr.bf16.gmra.mrb[0].mxu0 %v991
      %v1101 = vpop.f32.mrb[0].mxu0
      %v1102 = vadd.f32 0.0, %v1101
      %v1103 = vpop.f32.mrb[0].mxu0
      %v1104 = vpop.f32.mrb[0].mxu0
      %v1105 = vadd.f32 0.0, %v1104
      %v1106 = vpop.f32.mrb[0].mxu0
      %1107 = vmatprep.mubr.bf16.mxu0 0
      %1108 = vmatmul.mubr.bf16.gmra.mrb[0].mxu0 %v992
      %v1109 = vpop.f32.mrb[0].mxu0
      %v1110 = vadd.f32 0.0, %v1109
      %v1111 = vpop.f32.mrb[0].mxu0
      %v1112 = vpop.f32.mrb[0].mxu0
      %v1113 = vadd.f32 0.0, %v1112
      %v1114 = vpop.f32.mrb[0].mxu0
      %1115 = vmatprep.mubr.bf16.mxu0 0
      %1116 = vmatmul.mubr.bf16.gmra.mrb[0].mxu0 %v993
      %v1117 = vpop.f32.mrb[0].mxu0
      %v1118 = vadd.f32 0.0, %v1117
      %v1119 = vpop.f32.mrb[0].mxu0
      %v1120 = vpop.f32.mrb[0].mxu0
      %v1121 = vadd.f32 0.0, %v1120
      %v1122 = vpop.f32.mrb[0].mxu0
      %1123 = vmatprep.mubr.bf16.mxu0 0
      %1124 = vmatmul.mubr.bf16.gmra.mrb[0].mxu0 %v994
      %v1125 = vpop.f32.mrb[0].mxu0
      %v1126 = vadd.f32 0.0, %v1125
      %v1127 = vpop.f32.mrb[0].mxu0
      %v1128 = vpop.f32.mrb[0].mxu0
      %v1129 = vadd.f32 0.0, %v1128
      %v1130 = vpop.f32.mrb[0].mxu0
      %1131 = vmatprep.mubr.bf16.mxu0 0
      %1132 = vmatmul.mubr.bf16.gmra.mrb[0].mxu0 %v995
      %v1133 = vpop.f32.mrb[0].mxu0
      %v1134 = vadd.f32 0.0, %v1133
      %v1135 = vpop.f32.mrb[0].mxu0
      %v1136 = vpop.f32.mrb[0].mxu0
      %v1137 = vadd.f32 0.0, %v1136
      %v1138 = vpop.f32.mrb[0].mxu0
      %1139 = vmatprep.mubr.bf16.mxu0 0
      %1140 = vmatmul.mubr.bf16.gmra.mrb[0].mxu0 %v996
      %v1141 = vpop.f32.mrb[0].mxu0
      %v1142 = vadd.f32 0.0, %v1141
      %v1143 = vpop.f32.mrb[0].mxu0
      %v1144 = vpop.f32.mrb[0].mxu0
      %v1145 = vadd.f32 0.0, %v1144
      %v1146 = vpop.f32.mrb[0].mxu0
      %1147 = vmatprep.mubr.bf16.mxu0 0
      %1148 = vmatmul.mubr.bf16.gmra.mrb[0].mxu0 %v997
      %v1149 = vpop.f32.mrb[0].mxu0
      %v1150 = vadd.f32 0.0, %v1149
      %v1151 = vpop.f32.mrb[0].mxu0
      %v1152 = vpop.f32.mrb[0].mxu0
      %v1153 = vadd.f32 0.0, %v1152
      %v1154 = vpop.f32.mrb[0].mxu0
      %1155 = vmatprep.mubr.bf16.mxu0 0
      %1156 = vmatmul.mubr.bf16.gmra.mrb[0].mxu0 %v998
      %v1157 = vpop.f32.mrb[0].mxu0
      %v1158 = vadd.f32 0.0, %v1157
      %v1159 = vpop.f32.mrb[0].mxu0
      %v1160 = vpop.f32.mrb[0].mxu0
      %v1161 = vadd.f32 0.0, %v1160
      %v1162 = vpop.f32.mrb[0].mxu0
      %1163 = vmatprep.mubr.bf16.mxu0 0
      %1164 = vmatmul.mubr.bf16.gmra.mrb[0].mxu0 %v999
      %v1165 = vpop.f32.mrb[0].mxu0
      %v1166 = vadd.f32 0.0, %v1165
      %v1167 = vpop.f32.mrb[0].mxu0
      %v1168 = vpop.f32.mrb[0].mxu0
      %v1169 = vadd.f32 0.0, %v1168
      %v1170 = vpop.f32.mrb[0].mxu0
      %1171 = vmatprep.mubr.bf16.mxu0 0
      %1172 = vmatmul.mubr.bf16.gmra.mrb[0].mxu0 %v1000
      %v1173 = vpop.f32.mrb[0].mxu0
      %v1174 = vadd.f32 0.0, %v1173
      %v1175 = vpop.f32.mrb[0].mxu0
      %v1176 = vpop.f32.mrb[0].mxu0
      %v1177 = vadd.f32 0.0, %v1176
      %v1178 = vpop.f32.mrb[0].mxu0
      %1179 = vmatprep.mubr.bf16.mxu0 0
      %1180 = vmatmul.mubr.bf16.gmra.mrb[0].mxu0 %v1001
      %v1181 = vpop.f32.mrb[0].mxu0
      %v1182 = vadd.f32 0.0, %v1181
      %v1183 = vpop.f32.mrb[0].mxu0
      %v1184 = vpop.f32.mrb[0].mxu0
      %v1185 = vadd.f32 0.0, %v1184
      %v1186 = vpop.f32.mrb[0].mxu0
      %1187 = vdwg.mxu0
      %v1188 = vadd.f32 %v920, %v1062
      %v1189 = vadd.f32 %v921, %v1065
      %v1190 = vadd.f32 %v922, %v1070
      %v1191 = vadd.f32 %v923, %v1073
      %v1192 = vadd.f32 %v924, %v1078
      %v1193 = vadd.f32 %v925, %v1081
      %v1194 = vadd.f32 %v926, %v1086
      %v1195 = vadd.f32 %v927, %v1089
      %v1196 = vadd.f32 %v928, %v1094
      %v1197 = vadd.f32 %v929, %v1097
      %v1198 = vadd.f32 %v930, %v1102
      %v1199 = vadd.f32 %v931, %v1105
      %v1200 = vadd.f32 %v932, %v1110
      %v1201 = vadd.f32 %v933, %v1113
      %v1202 = vadd.f32 %v934, %v1118
      %v1203 = vadd.f32 %v935, %v1121
      %v1204 = vadd.f32 %v936, %v1126
      %v1205 = vadd.f32 %v937, %v1129
      %v1206 = vadd.f32 %v938, %v1134
      %v1207 = vadd.f32 %v939, %v1137
      %v1208 = vadd.f32 %v940, %v1142
      %v1209 = vadd.f32 %v941, %v1145
      %v1210 = vadd.f32 %v942, %v1150
      %v1211 = vadd.f32 %v943, %v1153
      %v1212 = vadd.f32 %v944, %v1158
      %v1213 = vadd.f32 %v945, %v1161
      %v1214 = vadd.f32 %v946, %v1166
      %v1215 = vadd.f32 %v947, %v1169
      %v1216 = vadd.f32 %v948, %v1174
      %v1217 = vadd.f32 %v949, %v1177
      %v1218 = vadd.f32 %v950, %v1182
      %v1219 = vadd.f32 %v951, %v1185
      %s1220 = sadd.s32 %s213, 19
      %s1221 = scalar_lea.vmem %s0, %s1220
      %v1222 = vld [vmem:[%s1221] sm:$0xff]
      %v1223 = vld [vmem:[%s1221 + $0x8] sm:$0xff]
      %v1224 = vld [vmem:[%s1221 + $0x10] sm:$0xff]
      %v1225 = vld [vmem:[%s1221 + $0x18] sm:$0xff]
      %v1226 = vld [vmem:[%s1221 + $0x20] sm:$0xff]
      %v1227 = vld [vmem:[%s1221 + $0x28] sm:$0xff]
      %v1228 = vld [vmem:[%s1221 + $0x30] sm:$0xff]
      %v1229 = vld [vmem:[%s1221 + $0x38] sm:$0xff]
      %v1230 = vld [vmem:[%s1221 + $0x40] sm:$0xff]
      %v1231 = vld [vmem:[%s1221 + $0x48] sm:$0xff]
      %v1232 = vld [vmem:[%s1221 + $0x50] sm:$0xff]
      %v1233 = vld [vmem:[%s1221 + $0x58] sm:$0xff]
      %v1234 = vld [vmem:[%s1221 + $0x60] sm:$0xff]
      %v1235 = vld [vmem:[%s1221 + $0x68] sm:$0xff]
      %v1236 = vld [vmem:[%s1221 + $0x70] sm:$0xff]
      %v1237 = vld [vmem:[%s1221 + $0x78] sm:$0xff]
      %v1238 = vld [vmem:[%s1221 + $0x80] sm:$0xff]
      %v1239 = vld [vmem:[%s1221 + $0x88] sm:$0xff]
      %v1240 = vld [vmem:[%s1221 + $0x90] sm:$0xff]
      %v1241 = vld [vmem:[%s1221 + $0x98] sm:$0xff]
      %v1242 = vld [vmem:[%s1221 + $0xa0] sm:$0xff]
      %v1243 = vld [vmem:[%s1221 + $0xa8] sm:$0xff]
      %v1244 = vld [vmem:[%s1221 + $0xb0] sm:$0xff]
      %v1245 = vld [vmem:[%s1221 + $0xb8] sm:$0xff]
      %v1246 = vld [vmem:[%s1221 + $0xc0] sm:$0xff]
      %v1247 = vld [vmem:[%s1221 + $0xc8] sm:$0xff]
      %v1248 = vld [vmem:[%s1221 + $0xd0] sm:$0xff]
      %v1249 = vld [vmem:[%s1221 + $0xd8] sm:$0xff]
      %v1250 = vld [vmem:[%s1221 + $0xe0] sm:$0xff]
      %v1251 = vld [vmem:[%s1221 + $0xe8] sm:$0xff]
      %v1252 = vld [vmem:[%s1221 + $0xf0] sm:$0xff]
      %v1253 = vld [vmem:[%s1221 + $0xf8] sm:$0xff]
      %v1254 = vpack.c.bf16 %v1223, %v1222
      %v1255 = vpack.c.bf16 %v1225, %v1224
      %v1256 = vpack.c.bf16 %v1227, %v1226
      %v1257 = vpack.c.bf16 %v1229, %v1228
      %v1258 = vpack.c.bf16 %v1231, %v1230
      %v1259 = vpack.c.bf16 %v1233, %v1232
      %v1260 = vpack.c.bf16 %v1235, %v1234
      %v1261 = vpack.c.bf16 %v1237, %v1236
      %v1262 = vpack.c.bf16 %v1239, %v1238
      %v1263 = vpack.c.bf16 %v1241, %v1240
      %v1264 = vpack.c.bf16 %v1243, %v1242
      %v1265 = vpack.c.bf16 %v1245, %v1244
      %v1266 = vpack.c.bf16 %v1247, %v1246
      %v1267 = vpack.c.bf16 %v1249, %v1248
      %v1268 = vpack.c.bf16 %v1251, %v1250
      %v1269 = vpack.c.bf16 %v1253, %v1252
      %s1270 = scalar_lea.vmem %s1, 512
      %v1271 = vld [vmem:[%s1270] sm:$0xff]
      %v1272 = vld [vmem:[%s1270 + $0x8] sm:$0xff]
      %v1273 = vld [vmem:[%s1270 + $0x10] sm:$0xff]
      %v1274 = vld [vmem:[%s1270 + $0x18] sm:$0xff]
      %v1275 = vld [vmem:[%s1270 + $0x20] sm:$0xff]
      %v1276 = vld [vmem:[%s1270 + $0x28] sm:$0xff]
      %v1277 = vld [vmem:[%s1270 + $0x30] sm:$0xff]
      %v1278 = vld [vmem:[%s1270 + $0x38] sm:$0xff]
      %v1279 = vld [vmem:[%s1270 + $0x40] sm:$0xff]
      %v1280 = vld [vmem:[%s1270 + $0x48] sm:$0xff]
      %v1281 = vld [vmem:[%s1270 + $0x50] sm:$0xff]
      %v1282 = vld [vmem:[%s1270 + $0x58] sm:$0xff]
      %v1283 = vld [vmem:[%s1270 + $0x60] sm:$0xff]
      %v1284 = vld [vmem:[%s1270 + $0x68] sm:$0xff]
      %v1285 = vld [vmem:[%s1270 + $0x70] sm:$0xff]
      %v1286 = vld [vmem:[%s1270 + $0x78] sm:$0xff]
      %v1287 = vpack.c.bf16 %v1272, %v1271
      %v1288 = vpack.c.bf16 %v1274, %v1273
      %v1289 = vpack.c.bf16 %v1276, %v1275
      %v1290 = vpack.c.bf16 %v1278, %v1277
      %v1291 = vpack.c.bf16 %v1280, %v1279
      %v1292 = vpack.c.bf16 %v1282, %v1281
      %v1293 = vpack.c.bf16 %v1284, %v1283
      %v1294 = vpack.c.bf16 %v1286, %v1285
      %1295 = vmatprep.subr.bf16.mxu0 0
      %1296 = vmatpush1.bf16.msra.mxu0 %v1287
      %1297 = vmatprep.subr.bf16.mxu0 0
      %1298 = vmatpush1.bf16.msra.mxu0 %v1288
      %1299 = vmatprep.subr.bf16.mxu0 0
      %1300 = vmatpush1.bf16.msra.mxu0 %v1289
      %1301 = vmatprep.subr.bf16.mxu0 0
      %1302 = vmatpush1.bf16.msra.mxu0 %v1290
      %1303 = vmatprep.subr.bf16.mxu0 0
      %1304 = vmatpush1.bf16.msra.mxu0 %v1291
      %1305 = vmatprep.subr.bf16.mxu0 0
      %1306 = vmatpush1.bf16.msra.mxu0 %v1292
      %1307 = vmatprep.subr.bf16.mxu0 0
      %1308 = vmatpush1.bf16.msra.mxu0 %v1293
      %1309 = vmatprep.subr.bf16.mxu0 0
      %1310 = vmatpush1.bf16.msra.mxu0 %v1294
      %1311 = vmatprep.subr.bf16.mxu0 0
      %1312 = vmatpush1.bf16.msra.mxu0 0
      %1313 = vmatprep.subr.bf16.mxu0 0
      %1314 = vmatpush1.bf16.msra.mxu0 0
      %1315 = vmatprep.subr.bf16.mxu0 0
      %1316 = vmatpush1.bf16.msra.mxu0 0
      %1317 = vmatprep.subr.bf16.mxu0 0
      %1318 = vmatpush1.bf16.msra.mxu0 0
      %1319 = vmatprep.subr.bf16.mxu0 0
      %1320 = vmatpush1.bf16.msra.mxu0 0
      %1321 = vmatprep.subr.bf16.mxu0 0
      %1322 = vmatpush1.bf16.msra.mxu0 0
      %1323 = vmatprep.subr.bf16.mxu0 0
      %1324 = vmatpush1.bf16.msra.mxu0 0
      %1325 = vmatprep.subr.bf16.mxu0 0
      %1326 = vmatpush1.bf16.msra.mxu0 0
      %1327 = vmatprep.mubr.bf16.mxu0 0
      %1328 = vmatmul.mubr.bf16.gmra.mrb[0].mxu0 %v1254
      %v1329 = vpop.f32.mrb[0].mxu0
      %v1330 = vadd.f32 0.0, %v1329
      %v1331 = vpop.f32.mrb[0].mxu0
      %v1332 = vpop.f32.mrb[0].mxu0
      %v1333 = vadd.f32 0.0, %v1332
      %v1334 = vpop.f32.mrb[0].mxu0
      %1335 = vmatprep.mubr.bf16.mxu0 0
      %1336 = vmatmul.mubr.bf16.gmra.mrb[0].mxu0 %v1255
      %v1337 = vpop.f32.mrb[0].mxu0
      %v1338 = vadd.f32 0.0, %v1337
      %v1339 = vpop.f32.mrb[0].mxu0
      %v1340 = vpop.f32.mrb[0].mxu0
      %v1341 = vadd.f32 0.0, %v1340
      %v1342 = vpop.f32.mrb[0].mxu0
      %1343 = vmatprep.mubr.bf16.mxu0 0
      %1344 = vmatmul.mubr.bf16.gmra.mrb[0].mxu0 %v1256
      %v1345 = vpop.f32.mrb[0].mxu0
      %v1346 = vadd.f32 0.0, %v1345
      %v1347 = vpop.f32.mrb[0].mxu0
      %v1348 = vpop.f32.mrb[0].mxu0
      %v1349 = vadd.f32 0.0, %v1348
      %v1350 = vpop.f32.mrb[0].mxu0
      %1351 = vmatprep.mubr.bf16.mxu0 0
      %1352 = vmatmul.mubr.bf16.gmra.mrb[0].mxu0 %v1257
      %v1353 = vpop.f32.mrb[0].mxu0
      %v1354 = vadd.f32 0.0, %v1353
      %v1355 = vpop.f32.mrb[0].mxu0
      %v1356 = vpop.f32.mrb[0].mxu0
      %v1357 = vadd.f32 0.0, %v1356
      %v1358 = vpop.f32.mrb[0].mxu0
      %1359 = vmatprep.mubr.bf16.mxu0 0
      %1360 = vmatmul.mubr.bf16.gmra.mrb[0].mxu0 %v1258
      %v1361 = vpop.f32.mrb[0].mxu0
      %v1362 = vadd.f32 0.0, %v1361
      %v1363 = vpop.f32.mrb[0].mxu0
      %v1364 = vpop.f32.mrb[0].mxu0
      %v1365 = vadd.f32 0.0, %v1364
      %v1366 = vpop.f32.mrb[0].mxu0
      %1367 = vmatprep.mubr.bf16.mxu0 0
      %1368 = vmatmul.mubr.bf16.gmra.mrb[0].mxu0 %v1259
      %v1369 = vpop.f32.mrb[0].mxu0
      %v1370 = vadd.f32 0.0, %v1369
      %v1371 = vpop.f32.mrb[0].mxu0
      %v1372 = vpop.f32.mrb[0].mxu0
      %v1373 = vadd.f32 0.0, %v1372
      %v1374 = vpop.f32.mrb[0].mxu0
      %1375 = vmatprep.mubr.bf16.mxu0 0
      %1376 = vmatmul.mubr.bf16.gmra.mrb[0].mxu0 %v1260
      %v1377 = vpop.f32.mrb[0].mxu0
      %v1378 = vadd.f32 0.0, %v1377
      %v1379 = vpop.f32.mrb[0].mxu0
      %v1380 = vpop.f32.mrb[0].mxu0
      %v1381 = vadd.f32 0.0, %v1380
      %v1382 = vpop.f32.mrb[0].mxu0
      %1383 = vmatprep.mubr.bf16.mxu0 0
      %1384 = vmatmul.mubr.bf16.gmra.mrb[0].mxu0 %v1261
      %v1385 = vpop.f32.mrb[0].mxu0
      %v1386 = vadd.f32 0.0, %v1385
      %v1387 = vpop.f32.mrb[0].mxu0
      %v1388 = vpop.f32.mrb[0].mxu0
      %v1389 = vadd.f32 0.0, %v1388
      %v1390 = vpop.f32.mrb[0].mxu0
      %1391 = vmatprep.mubr.bf16.mxu0 0
      %1392 = vmatmul.mubr.bf16.gmra.mrb[0].mxu0 %v1262
      %v1393 = vpop.f32.mrb[0].mxu0
      %v1394 = vadd.f32 0.0, %v1393
      %v1395 = vpop.f32.mrb[0].mxu0
      %v1396 = vpop.f32.mrb[0].mxu0
      %v1397 = vadd.f32 0.0, %v1396
      %v1398 = vpop.f32.mrb[0].mxu0
      %1399 = vmatprep.mubr.bf16.mxu0 0
      %1400 = vmatmul.mubr.bf16.gmra.mrb[0].mxu0 %v1263
      %v1401 = vpop.f32.mrb[0].mxu0
      %v1402 = vadd.f32 0.0, %v1401
      %v1403 = vpop.f32.mrb[0].mxu0
      %v1404 = vpop.f32.mrb[0].mxu0
      %v1405 = vadd.f32 0.0, %v1404
      %v1406 = vpop.f32.mrb[0].mxu0
      %1407 = vmatprep.mubr.bf16.mxu0 0
      %1408 = vmatmul.mubr.bf16.gmra.mrb[0].mxu0 %v1264
      %v1409 = vpop.f32.mrb[0].mxu0
      %v1410 = vadd.f32 0.0, %v1409
      %v1411 = vpop.f32.mrb[0].mxu0
      %v1412 = vpop.f32.mrb[0].mxu0
      %v1413 = vadd.f32 0.0, %v1412
      %v1414 = vpop.f32.mrb[0].mxu0
      %1415 = vmatprep.mubr.bf16.mxu0 0
      %1416 = vmatmul.mubr.bf16.gmra.mrb[0].mxu0 %v1265
      %v1417 = vpop.f32.mrb[0].mxu0
      %v1418 = vadd.f32 0.0, %v1417
      %v1419 = vpop.f32.mrb[0].mxu0
      %v1420 = vpop.f32.mrb[0].mxu0
      %v1421 = vadd.f32 0.0, %v1420
      %v1422 = vpop.f32.mrb[0].mxu0
      %1423 = vmatprep.mubr.bf16.mxu0 0
      %1424 = vmatmul.mubr.bf16.gmra.mrb[0].mxu0 %v1266
      %v1425 = vpop.f32.mrb[0].mxu0
      %v1426 = vadd.f32 0.0, %v1425
      %v1427 = vpop.f32.mrb[0].mxu0
      %v1428 = vpop.f32.mrb[0].mxu0
      %v1429 = vadd.f32 0.0, %v1428
      %v1430 = vpop.f32.mrb[0].mxu0
      %1431 = vmatprep.mubr.bf16.mxu0 0
      %1432 = vmatmul.mubr.bf16.gmra.mrb[0].mxu0 %v1267
      %v1433 = vpop.f32.mrb[0].mxu0
      %v1434 = vadd.f32 0.0, %v1433
      %v1435 = vpop.f32.mrb[0].mxu0
      %v1436 = vpop.f32.mrb[0].mxu0
      %v1437 = vadd.f32 0.0, %v1436
      %v1438 = vpop.f32.mrb[0].mxu0
      %1439 = vmatprep.mubr.bf16.mxu0 0
      %1440 = vmatmul.mubr.bf16.gmra.mrb[0].mxu0 %v1268
      %v1441 = vpop.f32.mrb[0].mxu0
      %v1442 = vadd.f32 0.0, %v1441
      %v1443 = vpop.f32.mrb[0].mxu0
      %v1444 = vpop.f32.mrb[0].mxu0
      %v1445 = vadd.f32 0.0, %v1444
      %v1446 = vpop.f32.mrb[0].mxu0
      %1447 = vmatprep.mubr.bf16.mxu0 0
      %1448 = vmatmul.mubr.bf16.gmra.mrb[0].mxu0 %v1269
      %v1449 = vpop.f32.mrb[0].mxu0
      %v1450 = vadd.f32 0.0, %v1449
      %v1451 = vpop.f32.mrb[0].mxu0
      %v1452 = vpop.f32.mrb[0].mxu0
      %v1453 = vadd.f32 0.0, %v1452
      %v1454 = vpop.f32.mrb[0].mxu0
      %1455 = vdwg.mxu0
      %v1456 = vadd.f32 %v1188, %v1330
      %v1457 = vadd.f32 %v1189, %v1333
      %v1458 = vadd.f32 %v1190, %v1338
      %v1459 = vadd.f32 %v1191, %v1341
      %v1460 = vadd.f32 %v1192, %v1346
      %v1461 = vadd.f32 %v1193, %v1349
      %v1462 = vadd.f32 %v1194, %v1354
      %v1463 = vadd.f32 %v1195, %v1357
      %v1464 = vadd.f32 %v1196, %v1362
      %v1465 = vadd.f32 %v1197, %v1365
      %v1466 = vadd.f32 %v1198, %v1370
      %v1467 = vadd.f32 %v1199, %v1373
      %v1468 = vadd.f32 %v1200, %v1378
      %v1469 = vadd.f32 %v1201, %v1381
      %v1470 = vadd.f32 %v1202, %v1386
      %v1471 = vadd.f32 %v1203, %v1389
      %v1472 = vadd.f32 %v1204, %v1394
      %v1473 = vadd.f32 %v1205, %v1397
      %v1474 = vadd.f32 %v1206, %v1402
      %v1475 = vadd.f32 %v1207, %v1405
      %v1476 = vadd.f32 %v1208, %v1410
      %v1477 = vadd.f32 %v1209, %v1413
      %v1478 = vadd.f32 %v1210, %v1418
      %v1479 = vadd.f32 %v1211, %v1421
      %v1480 = vadd.f32 %v1212, %v1426
      %v1481 = vadd.f32 %v1213, %v1429
      %v1482 = vadd.f32 %v1214, %v1434
      %v1483 = vadd.f32 %v1215, %v1437
      %v1484 = vadd.f32 %v1216, %v1442
      %v1485 = vadd.f32 %v1217, %v1445
      %v1486 = vadd.f32 %v1218, %v1450
      %v1487 = vadd.f32 %v1219, %v1453
      %s1488 = sadd.s32 %s213, 20
      %s1489 = scalar_lea.vmem %s0, %s1488
      %v1490 = vld [vmem:[%s1489] sm:$0xff]
      %v1491 = vld [vmem:[%s1489 + $0x8] sm:$0xff]
      %v1492 = vld [vmem:[%s1489 + $0x10] sm:$0xff]
      %v1493 = vld [vmem:[%s1489 + $0x18] sm:$0xff]
      %v1494 = vld [vmem:[%s1489 + $0x20] sm:$0xff]
      %v1495 = vld [vmem:[%s1489 + $0x28] sm:$0xff]
      %v1496 = vld [vmem:[%s1489 + $0x30] sm:$0xff]
      %v1497 = vld [vmem:[%s1489 + $0x38] sm:$0xff]
      %v1498 = vld [vmem:[%s1489 + $0x40] sm:$0xff]
      %v1499 = vld [vmem:[%s1489 + $0x48] sm:$0xff]
      %v1500 = vld [vmem:[%s1489 + $0x50] sm:$0xff]
      %v1501 = vld [vmem:[%s1489 + $0x58] sm:$0xff]
      %v1502 = vld [vmem:[%s1489 + $0x60] sm:$0xff]
      %v1503 = vld [vmem:[%s1489 + $0x68] sm:$0xff]
      %v1504 = vld [vmem:[%s1489 + $0x70] sm:$0xff]
      %v1505 = vld [vmem:[%s1489 + $0x78] sm:$0xff]
      %v1506 = vld [vmem:[%s1489 + $0x80] sm:$0xff]
      %v1507 = vld [vmem:[%s1489 + $0x88] sm:$0xff]
      %v1508 = vld [vmem:[%s1489 + $0x90] sm:$0xff]
      %v1509 = vld [vmem:[%s1489 + $0x98] sm:$0xff]
      %v1510 = vld [vmem:[%s1489 + $0xa0] sm:$0xff]
      %v1511 = vld [vmem:[%s1489 + $0xa8] sm:$0xff]
      %v1512 = vld [vmem:[%s1489 + $0xb0] sm:$0xff]
      %v1513 = vld [vmem:[%s1489 + $0xb8] sm:$0xff]
      %v1514 = vld [vmem:[%s1489 + $0xc0] sm:$0xff]
      %v1515 = vld [vmem:[%s1489 + $0xc8] sm:$0xff]
      %v1516 = vld [vmem:[%s1489 + $0xd0] sm:$0xff]
      %v1517 = vld [vmem:[%s1489 + $0xd8] sm:$0xff]
      %v1518 = vld [vmem:[%s1489 + $0xe0] sm:$0xff]
      %v1519 = vld [vmem:[%s1489 + $0xe8] sm:$0xff]
      %v1520 = vld [vmem:[%s1489 + $0xf0] sm:$0xff]
      %v1521 = vld [vmem:[%s1489 + $0xf8] sm:$0xff]
      %v1522 = vpack.c.bf16 %v1491, %v1490
      %v1523 = vpack.c.bf16 %v1493, %v1492
      %v1524 = vpack.c.bf16 %v1495, %v1494
      %v1525 = vpack.c.bf16 %v1497, %v1496
      %v1526 = vpack.c.bf16 %v1499, %v1498
      %v1527 = vpack.c.bf16 %v1501, %v1500
      %v1528 = vpack.c.bf16 %v1503, %v1502
      %v1529 = vpack.c.bf16 %v1505, %v1504
      %v1530 = vpack.c.bf16 %v1507, %v1506
      %v1531 = vpack.c.bf16 %v1509, %v1508
      %v1532 = vpack.c.bf16 %v1511, %v1510
      %v1533 = vpack.c.bf16 %v1513, %v1512
      %v1534 = vpack.c.bf16 %v1515, %v1514
      %v1535 = vpack.c.bf16 %v1517, %v1516
      %v1536 = vpack.c.bf16 %v1519, %v1518
      %v1537 = vpack.c.bf16 %v1521, %v1520
      %s1538 = scalar_lea.vmem %s1, 640
      %v1539 = vld [vmem:[%s1538] sm:$0xff]
      %v1540 = vld [vmem:[%s1538 + $0x8] sm:$0xff]
      %v1541 = vld [vmem:[%s1538 + $0x10] sm:$0xff]
      %v1542 = vld [vmem:[%s1538 + $0x18] sm:$0xff]
      %v1543 = vld [vmem:[%s1538 + $0x20] sm:$0xff]
      %v1544 = vld [vmem:[%s1538 + $0x28] sm:$0xff]
      %v1545 = vld [vmem:[%s1538 + $0x30] sm:$0xff]
      %v1546 = vld [vmem:[%s1538 + $0x38] sm:$0xff]
      %v1547 = vld [vmem:[%s1538 + $0x40] sm:$0xff]
      %v1548 = vld [vmem:[%s1538 + $0x48] sm:$0xff]
      %v1549 = vld [vmem:[%s1538 + $0x50] sm:$0xff]
      %v1550 = vld [vmem:[%s1538 + $0x58] sm:$0xff]
      %v1551 = vld [vmem:[%s1538 + $0x60] sm:$0xff]
      %v1552 = vld [vmem:[%s1538 + $0x68] sm:$0xff]
      %v1553 = vld [vmem:[%s1538 + $0x70] sm:$0xff]
      %v1554 = vld [vmem:[%s1538 + $0x78] sm:$0xff]
      %v1555 = vpack.c.bf16 %v1540, %v1539
      %v1556 = vpack.c.bf16 %v1542, %v1541
      %v1557 = vpack.c.bf16 %v1544, %v1543
      %v1558 = vpack.c.bf16 %v1546, %v1545
      %v1559 = vpack.c.bf16 %v1548, %v1547
      %v1560 = vpack.c.bf16 %v1550, %v1549
      %v1561 = vpack.c.bf16 %v1552, %v1551
      %v1562 = vpack.c.bf16 %v1554, %v1553
      %1563 = vmatprep.subr.bf16.mxu0 0
      %1564 = vmatpush1.bf16.msra.mxu0 %v1555
      %1565 = vmatprep.subr.bf16.mxu0 0
      %1566 = vmatpush1.bf16.msra.mxu0 %v1556
      %1567 = vmatprep.subr.bf16.mxu0 0
      %1568 = vmatpush1.bf16.msra.mxu0 %v1557
      %1569 = vmatprep.subr.bf16.mxu0 0
      %1570 = vmatpush1.bf16.msra.mxu0 %v1558
      %1571 = vmatprep.subr.bf16.mxu0 0
      %1572 = vmatpush1.bf16.msra.mxu0 %v1559
      %1573 = vmatprep.subr.bf16.mxu0 0
      %1574 = vmatpush1.bf16.msra.mxu0 %v1560
      %1575 = vmatprep.subr.bf16.mxu0 0
      %1576 = vmatpush1.bf16.msra.mxu0 %v1561
      %1577 = vmatprep.subr.bf16.mxu0 0
      %1578 = vmatpush1.bf16.msra.mxu0 %v1562
      %1579 = vmatprep.subr.bf16.mxu0 0
      %1580 = vmatpush1.bf16.msra.mxu0 0
      %1581 = vmatprep.subr.bf16.mxu0 0
      %1582 = vmatpush1.bf16.msra.mxu0 0
      %1583 = vmatprep.subr.bf16.mxu0 0
      %1584 = vmatpush1.bf16.msra.mxu0 0
      %1585 = vmatprep.subr.bf16.mxu0 0
      %1586 = vmatpush1.bf16.msra.mxu0 0
      %1587 = vmatprep.subr.bf16.mxu0 0
      %1588 = vmatpush1.bf16.msra.mxu0 0
      %1589 = vmatprep.subr.bf16.mxu0 0
      %1590 = vmatpush1.bf16.msra.mxu0 0
      %1591 = vmatprep.subr.bf16.mxu0 0
      %1592 = vmatpush1.bf16.msra.mxu0 0
      %1593 = vmatprep.subr.bf16.mxu0 0
      %1594 = vmatpush1.bf16.msra.mxu0 0
      %1595 = vmatprep.mubr.bf16.mxu0 0
      %1596 = vmatmul.mubr.bf16.gmra.mrb[0].mxu0 %v1522
      %v1597 = vpop.f32.mrb[0].mxu0
      %v1598 = vadd.f32 0.0, %v1597
      %v1599 = vpop.f32.mrb[0].mxu0
      %v1600 = vpop.f32.mrb[0].mxu0
      %v1601 = vadd.f32 0.0, %v1600
      %v1602 = vpop.f32.mrb[0].mxu0
      %1603 = vmatprep.mubr.bf16.mxu0 0
      %1604 = vmatmul.mubr.bf16.gmra.mrb[0].mxu0 %v1523
      %v1605 = vpop.f32.mrb[0].mxu0
      %v1606 = vadd.f32 0.0, %v1605
      %v1607 = vpop.f32.mrb[0].mxu0
      %v1608 = vpop.f32.mrb[0].mxu0
      %v1609 = vadd.f32 0.0, %v1608
      %v1610 = vpop.f32.mrb[0].mxu0
      %1611 = vmatprep.mubr.bf16.mxu0 0
      %1612 = vmatmul.mubr.bf16.gmra.mrb[0].mxu0 %v1524
      %v1613 = vpop.f32.mrb[0].mxu0
      %v1614 = vadd.f32 0.0, %v1613
      %v1615 = vpop.f32.mrb[0].mxu0
      %v1616 = vpop.f32.mrb[0].mxu0
      %v1617 = vadd.f32 0.0, %v1616
      %v1618 = vpop.f32.mrb[0].mxu0
      %1619 = vmatprep.mubr.bf16.mxu0 0
      %1620 = vmatmul.mubr.bf16.gmra.mrb[0].mxu0 %v1525
      %v1621 = vpop.f32.mrb[0].mxu0
      %v1622 = vadd.f32 0.0, %v1621
      %v1623 = vpop.f32.mrb[0].mxu0
      %v1624 = vpop.f32.mrb[0].mxu0
      %v1625 = vadd.f32 0.0, %v1624
      %v1626 = vpop.f32.mrb[0].mxu0
      %1627 = vmatprep.mubr.bf16.mxu0 0
      %1628 = vmatmul.mubr.bf16.gmra.mrb[0].mxu0 %v1526
      %v1629 = vpop.f32.mrb[0].mxu0
      %v1630 = vadd.f32 0.0, %v1629
      %v1631 = vpop.f32.mrb[0].mxu0
      %v1632 = vpop.f32.mrb[0].mxu0
      %v1633 = vadd.f32 0.0, %v1632
      %v1634 = vpop.f32.mrb[0].mxu0
      %1635 = vmatprep.mubr.bf16.mxu0 0
      %1636 = vmatmul.mubr.bf16.gmra.mrb[0].mxu0 %v1527
      %v1637 = vpop.f32.mrb[0].mxu0
      %v1638 = vadd.f32 0.0, %v1637
      %v1639 = vpop.f32.mrb[0].mxu0
      %v1640 = vpop.f32.mrb[0].mxu0
      %v1641 = vadd.f32 0.0, %v1640
      %v1642 = vpop.f32.mrb[0].mxu0
      %1643 = vmatprep.mubr.bf16.mxu0 0
      %1644 = vmatmul.mubr.bf16.gmra.mrb[0].mxu0 %v1528
      %v1645 = vpop.f32.mrb[0].mxu0
      %v1646 = vadd.f32 0.0, %v1645
      %v1647 = vpop.f32.mrb[0].mxu0
      %v1648 = vpop.f32.mrb[0].mxu0
      %v1649 = vadd.f32 0.0, %v1648
      %v1650 = vpop.f32.mrb[0].mxu0
      %1651 = vmatprep.mubr.bf16.mxu0 0
      %1652 = vmatmul.mubr.bf16.gmra.mrb[0].mxu0 %v1529
      %v1653 = vpop.f32.mrb[0].mxu0
      %v1654 = vadd.f32 0.0, %v1653
      %v1655 = vpop.f32.mrb[0].mxu0
      %v1656 = vpop.f32.mrb[0].mxu0
      %v1657 = vadd.f32 0.0, %v1656
      %v1658 = vpop.f32.mrb[0].mxu0
      %1659 = vmatprep.mubr.bf16.mxu0 0
      %1660 = vmatmul.mubr.bf16.gmra.mrb[0].mxu0 %v1530
      %v1661 = vpop.f32.mrb[0].mxu0
      %v1662 = vadd.f32 0.0, %v1661
      %v1663 = vpop.f32.mrb[0].mxu0
      %v1664 = vpop.f32.mrb[0].mxu0
      %v1665 = vadd.f32 0.0, %v1664
      %v1666 = vpop.f32.mrb[0].mxu0
      %1667 = vmatprep.mubr.bf16.mxu0 0
      %1668 = vmatmul.mubr.bf16.gmra.mrb[0].mxu0 %v1531
      %v1669 = vpop.f32.mrb[0].mxu0
      %v1670 = vadd.f32 0.0, %v1669
      %v1671 = vpop.f32.mrb[0].mxu0
      %v1672 = vpop.f32.mrb[0].mxu0
      %v1673 = vadd.f32 0.0, %v1672
      %v1674 = vpop.f32.mrb[0].mxu0
      %1675 = vmatprep.mubr.bf16.mxu0 0
      %1676 = vmatmul.mubr.bf16.gmra.mrb[0].mxu0 %v1532
      %v1677 = vpop.f32.mrb[0].mxu0
      %v1678 = vadd.f32 0.0, %v1677
      %v1679 = vpop.f32.mrb[0].mxu0
      %v1680 = vpop.f32.mrb[0].mxu0
      %v1681 = vadd.f32 0.0, %v1680
      %v1682 = vpop.f32.mrb[0].mxu0
      %1683 = vmatprep.mubr.bf16.mxu0 0
      %1684 = vmatmul.mubr.bf16.gmra.mrb[0].mxu0 %v1533
      %v1685 = vpop.f32.mrb[0].mxu0
      %v1686 = vadd.f32 0.0, %v1685
      %v1687 = vpop.f32.mrb[0].mxu0
      %v1688 = vpop.f32.mrb[0].mxu0
      %v1689 = vadd.f32 0.0, %v1688
      %v1690 = vpop.f32.mrb[0].mxu0
      %1691 = vmatprep.mubr.bf16.mxu0 0
      %1692 = vmatmul.mubr.bf16.gmra.mrb[0].mxu0 %v1534
      %v1693 = vpop.f32.mrb[0].mxu0
      %v1694 = vadd.f32 0.0, %v1693
      %v1695 = vpop.f32.mrb[0].mxu0
      %v1696 = vpop.f32.mrb[0].mxu0
      %v1697 = vadd.f32 0.0, %v1696
      %v1698 = vpop.f32.mrb[0].mxu0
      %1699 = vmatprep.mubr.bf16.mxu0 0
      %1700 = vmatmul.mubr.bf16.gmra.mrb[0].mxu0 %v1535
      %v1701 = vpop.f32.mrb[0].mxu0
      %v1702 = vadd.f32 0.0, %v1701
      %v1703 = vpop.f32.mrb[0].mxu0
      %v1704 = vpop.f32.mrb[0].mxu0
      %v1705 = vadd.f32 0.0, %v1704
      %v1706 = vpop.f32.mrb[0].mxu0
      %1707 = vmatprep.mubr.bf16.mxu0 0
      %1708 = vmatmul.mubr.bf16.gmra.mrb[0].mxu0 %v1536
      %v1709 = vpop.f32.mrb[0].mxu0
      %v1710 = vadd.f32 0.0, %v1709
      %v1711 = vpop.f32.mrb[0].mxu0
      %v1712 = vpop.f32.mrb[0].mxu0
      %v1713 = vadd.f32 0.0, %v1712
      %v1714 = vpop.f32.mrb[0].mxu0
      %1715 = vmatprep.mubr.bf16.mxu0 0
      %1716 = vmatmul.mubr.bf16.gmra.mrb[0].mxu0 %v1537
      %v1717 = vpop.f32.mrb[0].mxu0
      %v1718 = vadd.f32 0.0, %v1717
      %v1719 = vpop.f32.mrb[0].mxu0
      %v1720 = vpop.f32.mrb[0].mxu0
      %v1721 = vadd.f32 0.0, %v1720
      %v1722 = vpop.f32.mrb[0].mxu0
      %1723 = vdwg.mxu0
      %v1724 = vadd.f32 %v1456, %v1598
      %v1725 = vadd.f32 %v1457, %v1601
      %v1726 = vadd.f32 %v1458, %v1606
      %v1727 = vadd.f32 %v1459, %v1609
      %v1728 = vadd.f32 %v1460, %v1614
      %v1729 = vadd.f32 %v1461, %v1617
      %v1730 = vadd.f32 %v1462, %v1622
      %v1731 = vadd.f32 %v1463, %v1625
      %v1732 = vadd.f32 %v1464, %v1630
      %v1733 = vadd.f32 %v1465, %v1633
      %v1734 = vadd.f32 %v1466, %v1638
      %v1735 = vadd.f32 %v1467, %v1641
      %v1736 = vadd.f32 %v1468, %v1646
      %v1737 = vadd.f32 %v1469, %v1649
      %v1738 = vadd.f32 %v1470, %v1654
      %v1739 = vadd.f32 %v1471, %v1657
      %v1740 = vadd.f32 %v1472, %v1662
      %v1741 = vadd.f32 %v1473, %v1665
      %v1742 = vadd.f32 %v1474, %v1670
      %v1743 = vadd.f32 %v1475, %v1673
      %v1744 = vadd.f32 %v1476, %v1678
      %v1745 = vadd.f32 %v1477, %v1681
      %v1746 = vadd.f32 %v1478, %v1686
      %v1747 = vadd.f32 %v1479, %v1689
      %v1748 = vadd.f32 %v1480, %v1694
      %v1749 = vadd.f32 %v1481, %v1697
      %v1750 = vadd.f32 %v1482, %v1702
      %v1751 = vadd.f32 %v1483, %v1705
      %v1752 = vadd.f32 %v1484, %v1710
      %v1753 = vadd.f32 %v1485, %v1713
      %v1754 = vadd.f32 %v1486, %v1718
      %v1755 = vadd.f32 %v1487, %v1721
      %s1756 = sadd.s32 %s213, 36
      %s1757 = scalar_lea.vmem %s0, %s1756
      %v1758 = vld [vmem:[%s1757] sm:$0xff]
      %v1759 = vld [vmem:[%s1757 + $0x8] sm:$0xff]
      %v1760 = vld [vmem:[%s1757 + $0x10] sm:$0xff]
      %v1761 = vld [vmem:[%s1757 + $0x18] sm:$0xff]
      %v1762 = vld [vmem:[%s1757 + $0x20] sm:$0xff]
      %v1763 = vld [vmem:[%s1757 + $0x28] sm:$0xff]
      %v1764 = vld [vmem:[%s1757 + $0x30] sm:$0xff]
      %v1765 = vld [vmem:[%s1757 + $0x38] sm:$0xff]
      %v1766 = vld [vmem:[%s1757 + $0x40] sm:$0xff]
      %v1767 = vld [vmem:[%s1757 + $0x48] sm:$0xff]
      %v1768 = vld [vmem:[%s1757 + $0x50] sm:$0xff]
      %v1769 = vld [vmem:[%s1757 + $0x58] sm:$0xff]
      %v1770 = vld [vmem:[%s1757 + $0x60] sm:$0xff]
      %v1771 = vld [vmem:[%s1757 + $0x68] sm:$0xff]
      %v1772 = vld [vmem:[%s1757 + $0x70] sm:$0xff]
      %v1773 = vld [vmem:[%s1757 + $0x78] sm:$0xff]
      %v1774 = vld [vmem:[%s1757 + $0x80] sm:$0xff]
      %v1775 = vld [vmem:[%s1757 + $0x88] sm:$0xff]
      %v1776 = vld [vmem:[%s1757 + $0x90] sm:$0xff]
      %v1777 = vld [vmem:[%s1757 + $0x98] sm:$0xff]
      %v1778 = vld [vmem:[%s1757 + $0xa0] sm:$0xff]
      %v1779 = vld [vmem:[%s1757 + $0xa8] sm:$0xff]
      %v1780 = vld [vmem:[%s1757 + $0xb0] sm:$0xff]
      %v1781 = vld [vmem:[%s1757 + $0xb8] sm:$0xff]
      %v1782 = vld [vmem:[%s1757 + $0xc0] sm:$0xff]
      %v1783 = vld [vmem:[%s1757 + $0xc8] sm:$0xff]
      %v1784 = vld [vmem:[%s1757 + $0xd0] sm:$0xff]
      %v1785 = vld [vmem:[%s1757 + $0xd8] sm:$0xff]
      %v1786 = vld [vmem:[%s1757 + $0xe0] sm:$0xff]
      %v1787 = vld [vmem:[%s1757 + $0xe8] sm:$0xff]
      %v1788 = vld [vmem:[%s1757 + $0xf0] sm:$0xff]
      %v1789 = vld [vmem:[%s1757 + $0xf8] sm:$0xff]
      %v1790 = vpack.c.bf16 %v1759, %v1758
      %v1791 = vpack.c.bf16 %v1761, %v1760
      %v1792 = vpack.c.bf16 %v1763, %v1762
      %v1793 = vpack.c.bf16 %v1765, %v1764
      %v1794 = vpack.c.bf16 %v1767, %v1766
      %v1795 = vpack.c.bf16 %v1769, %v1768
      %v1796 = vpack.c.bf16 %v1771, %v1770
      %v1797 = vpack.c.bf16 %v1773, %v1772
      %v1798 = vpack.c.bf16 %v1775, %v1774
      %v1799 = vpack.c.bf16 %v1777, %v1776
      %v1800 = vpack.c.bf16 %v1779, %v1778
      %v1801 = vpack.c.bf16 %v1781, %v1780
      %v1802 = vpack.c.bf16 %v1783, %v1782
      %v1803 = vpack.c.bf16 %v1785, %v1784
      %v1804 = vpack.c.bf16 %v1787, %v1786
      %v1805 = vpack.c.bf16 %v1789, %v1788
      %s1806 = scalar_lea.vmem %s1, 768
      %v1807 = vld [vmem:[%s1806] sm:$0xff]
      %v1808 = vld [vmem:[%s1806 + $0x8] sm:$0xff]
      %v1809 = vld [vmem:[%s1806 + $0x10] sm:$0xff]
      %v1810 = vld [vmem:[%s1806 + $0x18] sm:$0xff]
      %v1811 = vld [vmem:[%s1806 + $0x20] sm:$0xff]
      %v1812 = vld [vmem:[%s1806 + $0x28] sm:$0xff]
      %v1813 = vld [vmem:[%s1806 + $0x30] sm:$0xff]
      %v1814 = vld [vmem:[%s1806 + $0x38] sm:$0xff]
      %v1815 = vld [vmem:[%s1806 + $0x40] sm:$0xff]
      %v1816 = vld [vmem:[%s1806 + $0x48] sm:$0xff]
      %v1817 = vld [vmem:[%s1806 + $0x50] sm:$0xff]
      %v1818 = vld [vmem:[%s1806 + $0x58] sm:$0xff]
      %v1819 = vld [vmem:[%s1806 + $0x60] sm:$0xff]
      %v1820 = vld [vmem:[%s1806 + $0x68] sm:$0xff]
      %v1821 = vld [vmem:[%s1806 + $0x70] sm:$0xff]
      %v1822 = vld [vmem:[%s1806 + $0x78] sm:$0xff]
      %v1823 = vpack.c.bf16 %v1808, %v1807
      %v1824 = vpack.c.bf16 %v1810, %v1809
      %v1825 = vpack.c.bf16 %v1812, %v1811
      %v1826 = vpack.c.bf16 %v1814, %v1813
      %v1827 = vpack.c.bf16 %v1816, %v1815
      %v1828 = vpack.c.bf16 %v1818, %v1817
      %v1829 = vpack.c.bf16 %v1820, %v1819
      %v1830 = vpack.c.bf16 %v1822, %v1821
      %1831 = vmatprep.subr.bf16.mxu0 0
      %1832 = vmatpush1.bf16.msra.mxu0 %v1823
      %1833 = vmatprep.subr.bf16.mxu0 0
      %1834 = vmatpush1.bf16.msra.mxu0 %v1824
      %1835 = vmatprep.subr.bf16.mxu0 0
      %1836 = vmatpush1.bf16.msra.mxu0 %v1825
      %1837 = vmatprep.subr.bf16.mxu0 0
      %1838 = vmatpush1.bf16.msra.mxu0 %v1826
      %1839 = vmatprep.subr.bf16.mxu0 0
      %1840 = vmatpush1.bf16.msra.mxu0 %v1827
      %1841 = vmatprep.subr.bf16.mxu0 0
      %1842 = vmatpush1.bf16.msra.mxu0 %v1828
      %1843 = vmatprep.subr.bf16.mxu0 0
      %1844 = vmatpush1.bf16.msra.mxu0 %v1829
      %1845 = vmatprep.subr.bf16.mxu0 0
      %1846 = vmatpush1.bf16.msra.mxu0 %v1830
      %1847 = vmatprep.subr.bf16.mxu0 0
      %1848 = vmatpush1.bf16.msra.mxu0 0
      %1849 = vmatprep.subr.bf16.mxu0 0
      %1850 = vmatpush1.bf16.msra.mxu0 0
      %1851 = vmatprep.subr.bf16.mxu0 0
      %1852 = vmatpush1.bf16.msra.mxu0 0
      %1853 = vmatprep.subr.bf16.mxu0 0
      %1854 = vmatpush1.bf16.msra.mxu0 0
      %1855 = vmatprep.subr.bf16.mxu0 0
      %1856 = vmatpush1.bf16.msra.mxu0 0
      %1857 = vmatprep.subr.bf16.mxu0 0
      %1858 = vmatpush1.bf16.msra.mxu0 0
      %1859 = vmatprep.subr.bf16.mxu0 0
      %1860 = vmatpush1.bf16.msra.mxu0 0
      %1861 = vmatprep.subr.bf16.mxu0 0
      %1862 = vmatpush1.bf16.msra.mxu0 0
      %1863 = vmatprep.mubr.bf16.mxu0 0
      %1864 = vmatmul.mubr.bf16.gmra.mrb[0].mxu0 %v1790
      %v1865 = vpop.f32.mrb[0].mxu0
      %v1866 = vadd.f32 0.0, %v1865
      %v1867 = vpop.f32.mrb[0].mxu0
      %v1868 = vpop.f32.mrb[0].mxu0
      %v1869 = vadd.f32 0.0, %v1868
      %v1870 = vpop.f32.mrb[0].mxu0
      %1871 = vmatprep.mubr.bf16.mxu0 0
      %1872 = vmatmul.mubr.bf16.gmra.mrb[0].mxu0 %v1791
      %v1873 = vpop.f32.mrb[0].mxu0
      %v1874 = vadd.f32 0.0, %v1873
      %v1875 = vpop.f32.mrb[0].mxu0
      %v1876 = vpop.f32.mrb[0].mxu0
      %v1877 = vadd.f32 0.0, %v1876
      %v1878 = vpop.f32.mrb[0].mxu0
      %1879 = vmatprep.mubr.bf16.mxu0 0
      %1880 = vmatmul.mubr.bf16.gmra.mrb[0].mxu0 %v1792
      %v1881 = vpop.f32.mrb[0].mxu0
      %v1882 = vadd.f32 0.0, %v1881
      %v1883 = vpop.f32.mrb[0].mxu0
      %v1884 = vpop.f32.mrb[0].mxu0
      %v1885 = vadd.f32 0.0, %v1884
      %v1886 = vpop.f32.mrb[0].mxu0
      %1887 = vmatprep.mubr.bf16.mxu0 0
      %1888 = vmatmul.mubr.bf16.gmra.mrb[0].mxu0 %v1793
      %v1889 = vpop.f32.mrb[0].mxu0
      %v1890 = vadd.f32 0.0, %v1889
      %v1891 = vpop.f32.mrb[0].mxu0
      %v1892 = vpop.f32.mrb[0].mxu0
      %v1893 = vadd.f32 0.0, %v1892
      %v1894 = vpop.f32.mrb[0].mxu0
      %1895 = vmatprep.mubr.bf16.mxu0 0
      %1896 = vmatmul.mubr.bf16.gmra.mrb[0].mxu0 %v1794
      %v1897 = vpop.f32.mrb[0].mxu0
      %v1898 = vadd.f32 0.0, %v1897
      %v1899 = vpop.f32.mrb[0].mxu0
      %v1900 = vpop.f32.mrb[0].mxu0
      %v1901 = vadd.f32 0.0, %v1900
      %v1902 = vpop.f32.mrb[0].mxu0
      %1903 = vmatprep.mubr.bf16.mxu0 0
      %1904 = vmatmul.mubr.bf16.gmra.mrb[0].mxu0 %v1795
      %v1905 = vpop.f32.mrb[0].mxu0
      %v1906 = vadd.f32 0.0, %v1905
      %v1907 = vpop.f32.mrb[0].mxu0
      %v1908 = vpop.f32.mrb[0].mxu0
      %v1909 = vadd.f32 0.0, %v1908
      %v1910 = vpop.f32.mrb[0].mxu0
      %1911 = vmatprep.mubr.bf16.mxu0 0
      %1912 = vmatmul.mubr.bf16.gmra.mrb[0].mxu0 %v1796
      %v1913 = vpop.f32.mrb[0].mxu0
      %v1914 = vadd.f32 0.0, %v1913
      %v1915 = vpop.f32.mrb[0].mxu0
      %v1916 = vpop.f32.mrb[0].mxu0
      %v1917 = vadd.f32 0.0, %v1916
      %v1918 = vpop.f32.mrb[0].mxu0
      %1919 = vmatprep.mubr.bf16.mxu0 0
      %1920 = vmatmul.mubr.bf16.gmra.mrb[0].mxu0 %v1797
      %v1921 = vpop.f32.mrb[0].mxu0
      %v1922 = vadd.f32 0.0, %v1921
      %v1923 = vpop.f32.mrb[0].mxu0
      %v1924 = vpop.f32.mrb[0].mxu0
      %v1925 = vadd.f32 0.0, %v1924
      %v1926 = vpop.f32.mrb[0].mxu0
      %1927 = vmatprep.mubr.bf16.mxu0 0
      %1928 = vmatmul.mubr.bf16.gmra.mrb[0].mxu0 %v1798
      %v1929 = vpop.f32.mrb[0].mxu0
      %v1930 = vadd.f32 0.0, %v1929
      %v1931 = vpop.f32.mrb[0].mxu0
      %v1932 = vpop.f32.mrb[0].mxu0
      %v1933 = vadd.f32 0.0, %v1932
      %v1934 = vpop.f32.mrb[0].mxu0
      %1935 = vmatprep.mubr.bf16.mxu0 0
      %1936 = vmatmul.mubr.bf16.gmra.mrb[0].mxu0 %v1799
      %v1937 = vpop.f32.mrb[0].mxu0
      %v1938 = vadd.f32 0.0, %v1937
      %v1939 = vpop.f32.mrb[0].mxu0
      %v1940 = vpop.f32.mrb[0].mxu0
      %v1941 = vadd.f32 0.0, %v1940
      %v1942 = vpop.f32.mrb[0].mxu0
      %1943 = vmatprep.mubr.bf16.mxu0 0
      %1944 = vmatmul.mubr.bf16.gmra.mrb[0].mxu0 %v1800
      %v1945 = vpop.f32.mrb[0].mxu0
      %v1946 = vadd.f32 0.0, %v1945
      %v1947 = vpop.f32.mrb[0].mxu0
      %v1948 = vpop.f32.mrb[0].mxu0
      %v1949 = vadd.f32 0.0, %v1948
      %v1950 = vpop.f32.mrb[0].mxu0
      %1951 = vmatprep.mubr.bf16.mxu0 0
      %1952 = vmatmul.mubr.bf16.gmra.mrb[0].mxu0 %v1801
      %v1953 = vpop.f32.mrb[0].mxu0
      %v1954 = vadd.f32 0.0, %v1953
      %v1955 = vpop.f32.mrb[0].mxu0
      %v1956 = vpop.f32.mrb[0].mxu0
      %v1957 = vadd.f32 0.0, %v1956
      %v1958 = vpop.f32.mrb[0].mxu0
      %1959 = vmatprep.mubr.bf16.mxu0 0
      %1960 = vmatmul.mubr.bf16.gmra.mrb[0].mxu0 %v1802
      %v1961 = vpop.f32.mrb[0].mxu0
      %v1962 = vadd.f32 0.0, %v1961
      %v1963 = vpop.f32.mrb[0].mxu0
      %v1964 = vpop.f32.mrb[0].mxu0
      %v1965 = vadd.f32 0.0, %v1964
      %v1966 = vpop.f32.mrb[0].mxu0
      %1967 = vmatprep.mubr.bf16.mxu0 0
      %1968 = vmatmul.mubr.bf16.gmra.mrb[0].mxu0 %v1803
      %v1969 = vpop.f32.mrb[0].mxu0
      %v1970 = vadd.f32 0.0, %v1969
      %v1971 = vpop.f32.mrb[0].mxu0
      %v1972 = vpop.f32.mrb[0].mxu0
      %v1973 = vadd.f32 0.0, %v1972
      %v1974 = vpop.f32.mrb[0].mxu0
      %1975 = vmatprep.mubr.bf16.mxu0 0
      %1976 = vmatmul.mubr.bf16.gmra.mrb[0].mxu0 %v1804
      %v1977 = vpop.f32.mrb[0].mxu0
      %v1978 = vadd.f32 0.0, %v1977
      %v1979 = vpop.f32.mrb[0].mxu0
      %v1980 = vpop.f32.mrb[0].mxu0
      %v1981 = vadd.f32 0.0, %v1980
      %v1982 = vpop.f32.mrb[0].mxu0
      %1983 = vmatprep.mubr.bf16.mxu0 0
      %1984 = vmatmul.mubr.bf16.gmra.mrb[0].mxu0 %v1805
      %v1985 = vpop.f32.mrb[0].mxu0
      %v1986 = vadd.f32 0.0, %v1985
      %v1987 = vpop.f32.mrb[0].mxu0
      %v1988 = vpop.f32.mrb[0].mxu0
      %v1989 = vadd.f32 0.0, %v1988
      %v1990 = vpop.f32.mrb[0].mxu0
      %1991 = vdwg.mxu0
      %v1992 = vadd.f32 %v1724, %v1866
      %v1993 = vadd.f32 %v1725, %v1869
      %v1994 = vadd.f32 %v1726, %v1874
      %v1995 = vadd.f32 %v1727, %v1877
      %v1996 = vadd.f32 %v1728, %v1882
      %v1997 = vadd.f32 %v1729, %v1885
      %v1998 = vadd.f32 %v1730, %v1890
      %v1999 = vadd.f32 %v1731, %v1893
      %v2000 = vadd.f32 %v1732, %v1898
      %v2001 = vadd.f32 %v1733, %v1901
      %v2002 = vadd.f32 %v1734, %v1906
      %v2003 = vadd.f32 %v1735, %v1909
      %v2004 = vadd.f32 %v1736, %v1914
      %v2005 = vadd.f32 %v1737, %v1917
      %v2006 = vadd.f32 %v1738, %v1922
      %v2007 = vadd.f32 %v1739, %v1925
      %v2008 = vadd.f32 %v1740, %v1930
      %v2009 = vadd.f32 %v1741, %v1933
      %v2010 = vadd.f32 %v1742, %v1938
      %v2011 = vadd.f32 %v1743, %v1941
      %v2012 = vadd.f32 %v1744, %v1946
      %v2013 = vadd.f32 %v1745, %v1949
      %v2014 = vadd.f32 %v1746, %v1954
      %v2015 = vadd.f32 %v1747, %v1957
      %v2016 = vadd.f32 %v1748, %v1962
      %v2017 = vadd.f32 %v1749, %v1965
      %v2018 = vadd.f32 %v1750, %v1970
      %v2019 = vadd.f32 %v1751, %v1973
      %v2020 = vadd.f32 %v1752, %v1978
      %v2021 = vadd.f32 %v1753, %v1981
      %v2022 = vadd.f32 %v1754, %v1986
      %v2023 = vadd.f32 %v1755, %v1989
      %s2024 = sadd.s32 %s213, 37
      %s2025 = scalar_lea.vmem %s0, %s2024
      %v2026 = vld [vmem:[%s2025] sm:$0xff]
      %v2027 = vld [vmem:[%s2025 + $0x8] sm:$0xff]
      %v2028 = vld [vmem:[%s2025 + $0x10] sm:$0xff]
      %v2029 = vld [vmem:[%s2025 + $0x18] sm:$0xff]
      %v2030 = vld [vmem:[%s2025 + $0x20] sm:$0xff]
      %v2031 = vld [vmem:[%s2025 + $0x28] sm:$0xff]
      %v2032 = vld [vmem:[%s2025 + $0x30] sm:$0xff]
      %v2033 = vld [vmem:[%s2025 + $0x38] sm:$0xff]
      %v2034 = vld [vmem:[%s2025 + $0x40] sm:$0xff]
      %v2035 = vld [vmem:[%s2025 + $0x48] sm:$0xff]
      %v2036 = vld [vmem:[%s2025 + $0x50] sm:$0xff]
      %v2037 = vld [vmem:[%s2025 + $0x58] sm:$0xff]
      %v2038 = vld [vmem:[%s2025 + $0x60] sm:$0xff]
      %v2039 = vld [vmem:[%s2025 + $0x68] sm:$0xff]
      %v2040 = vld [vmem:[%s2025 + $0x70] sm:$0xff]
      %v2041 = vld [vmem:[%s2025 + $0x78] sm:$0xff]
      %v2042 = vld [vmem:[%s2025 + $0x80] sm:$0xff]
      %v2043 = vld [vmem:[%s2025 + $0x88] sm:$0xff]
      %v2044 = vld [vmem:[%s2025 + $0x90] sm:$0xff]
      %v2045 = vld [vmem:[%s2025 + $0x98] sm:$0xff]
      %v2046 = vld [vmem:[%s2025 + $0xa0] sm:$0xff]
      %v2047 = vld [vmem:[%s2025 + $0xa8] sm:$0xff]
      %v2048 = vld [vmem:[%s2025 + $0xb0] sm:$0xff]
      %v2049 = vld [vmem:[%s2025 + $0xb8] sm:$0xff]
      %v2050 = vld [vmem:[%s2025 + $0xc0] sm:$0xff]
      %v2051 = vld [vmem:[%s2025 + $0xc8] sm:$0xff]
      %v2052 = vld [vmem:[%s2025 + $0xd0] sm:$0xff]
      %v2053 = vld [vmem:[%s2025 + $0xd8] sm:$0xff]
      %v2054 = vld [vmem:[%s2025 + $0xe0] sm:$0xff]
      %v2055 = vld [vmem:[%s2025 + $0xe8] sm:$0xff]
      %v2056 = vld [vmem:[%s2025 + $0xf0] sm:$0xff]
      %v2057 = vld [vmem:[%s2025 + $0xf8] sm:$0xff]
      %v2058 = vpack.c.bf16 %v2027, %v2026
      %v2059 = vpack.c.bf16 %v2029, %v2028
      %v2060 = vpack.c.bf16 %v2031, %v2030
      %v2061 = vpack.c.bf16 %v2033, %v2032
      %v2062 = vpack.c.bf16 %v2035, %v2034
      %v2063 = vpack.c.bf16 %v2037, %v2036
      %v2064 = vpack.c.bf16 %v2039, %v2038
      %v2065 = vpack.c.bf16 %v2041, %v2040
      %v2066 = vpack.c.bf16 %v2043, %v2042
      %v2067 = vpack.c.bf16 %v2045, %v2044
      %v2068 = vpack.c.bf16 %v2047, %v2046
      %v2069 = vpack.c.bf16 %v2049, %v2048
      %v2070 = vpack.c.bf16 %v2051, %v2050
      %v2071 = vpack.c.bf16 %v2053, %v2052
      %v2072 = vpack.c.bf16 %v2055, %v2054
      %v2073 = vpack.c.bf16 %v2057, %v2056
      %s2074 = scalar_lea.vmem %s1, 896
      %v2075 = vld [vmem:[%s2074] sm:$0xff]
      %v2076 = vld [vmem:[%s2074 + $0x8] sm:$0xff]
      %v2077 = vld [vmem:[%s2074 + $0x10] sm:$0xff]
      %v2078 = vld [vmem:[%s2074 + $0x18] sm:$0xff]
      %v2079 = vld [vmem:[%s2074 + $0x20] sm:$0xff]
      %v2080 = vld [vmem:[%s2074 + $0x28] sm:$0xff]
      %v2081 = vld [vmem:[%s2074 + $0x30] sm:$0xff]
      %v2082 = vld [vmem:[%s2074 + $0x38] sm:$0xff]
      %v2083 = vld [vmem:[%s2074 + $0x40] sm:$0xff]
      %v2084 = vld [vmem:[%s2074 + $0x48] sm:$0xff]
      %v2085 = vld [vmem:[%s2074 + $0x50] sm:$0xff]
      %v2086 = vld [vmem:[%s2074 + $0x58] sm:$0xff]
      %v2087 = vld [vmem:[%s2074 + $0x60] sm:$0xff]
      %v2088 = vld [vmem:[%s2074 + $0x68] sm:$0xff]
      %v2089 = vld [vmem:[%s2074 + $0x70] sm:$0xff]
      %v2090 = vld [vmem:[%s2074 + $0x78] sm:$0xff]
      %v2091 = vpack.c.bf16 %v2076, %v2075
      %v2092 = vpack.c.bf16 %v2078, %v2077
      %v2093 = vpack.c.bf16 %v2080, %v2079
      %v2094 = vpack.c.bf16 %v2082, %v2081
      %v2095 = vpack.c.bf16 %v2084, %v2083
      %v2096 = vpack.c.bf16 %v2086, %v2085
      %v2097 = vpack.c.bf16 %v2088, %v2087
      %v2098 = vpack.c.bf16 %v2090, %v2089
      %2099 = vmatprep.subr.bf16.mxu0 0
      %2100 = vmatpush1.bf16.msra.mxu0 %v2091
      %2101 = vmatprep.subr.bf16.mxu0 0
      %2102 = vmatpush1.bf16.msra.mxu0 %v2092
      %2103 = vmatprep.subr.bf16.mxu0 0
      %2104 = vmatpush1.bf16.msra.mxu0 %v2093
      %2105 = vmatprep.subr.bf16.mxu0 0
      %2106 = vmatpush1.bf16.msra.mxu0 %v2094
      %2107 = vmatprep.subr.bf16.mxu0 0
      %2108 = vmatpush1.bf16.msra.mxu0 %v2095
      %2109 = vmatprep.subr.bf16.mxu0 0
      %2110 = vmatpush1.bf16.msra.mxu0 %v2096
      %2111 = vmatprep.subr.bf16.mxu0 0
      %2112 = vmatpush1.bf16.msra.mxu0 %v2097
      %2113 = vmatprep.subr.bf16.mxu0 0
      %2114 = vmatpush1.bf16.msra.mxu0 %v2098
      %2115 = vmatprep.subr.bf16.mxu0 0
      %2116 = vmatpush1.bf16.msra.mxu0 0
      %2117 = vmatprep.subr.bf16.mxu0 0
      %2118 = vmatpush1.bf16.msra.mxu0 0
      %2119 = vmatprep.subr.bf16.mxu0 0
      %2120 = vmatpush1.bf16.msra.mxu0 0
      %2121 = vmatprep.subr.bf16.mxu0 0
      %2122 = vmatpush1.bf16.msra.mxu0 0
      %2123 = vmatprep.subr.bf16.mxu0 0
      %2124 = vmatpush1.bf16.msra.mxu0 0
      %2125 = vmatprep.subr.bf16.mxu0 0
      %2126 = vmatpush1.bf16.msra.mxu0 0
      %2127 = vmatprep.subr.bf16.mxu0 0
      %2128 = vmatpush1.bf16.msra.mxu0 0
      %2129 = vmatprep.subr.bf16.mxu0 0
      %2130 = vmatpush1.bf16.msra.mxu0 0
      %2131 = vmatprep.mubr.bf16.mxu0 0
      %2132 = vmatmul.mubr.bf16.gmra.mrb[0].mxu0 %v2058
      %v2133 = vpop.f32.mrb[0].mxu0
      %v2134 = vadd.f32 0.0, %v2133
      %v2135 = vpop.f32.mrb[0].mxu0
      %v2136 = vpop.f32.mrb[0].mxu0
      %v2137 = vadd.f32 0.0, %v2136
      %v2138 = vpop.f32.mrb[0].mxu0
      %2139 = vmatprep.mubr.bf16.mxu0 0
      %2140 = vmatmul.mubr.bf16.gmra.mrb[0].mxu0 %v2059
      %v2141 = vpop.f32.mrb[0].mxu0
      %v2142 = vadd.f32 0.0, %v2141
      %v2143 = vpop.f32.mrb[0].mxu0
      %v2144 = vpop.f32.mrb[0].mxu0
      %v2145 = vadd.f32 0.0, %v2144
      %v2146 = vpop.f32.mrb[0].mxu0
      %2147 = vmatprep.mubr.bf16.mxu0 0
      %2148 = vmatmul.mubr.bf16.gmra.mrb[0].mxu0 %v2060
      %v2149 = vpop.f32.mrb[0].mxu0
      %v2150 = vadd.f32 0.0, %v2149
      %v2151 = vpop.f32.mrb[0].mxu0
      %v2152 = vpop.f32.mrb[0].mxu0
      %v2153 = vadd.f32 0.0, %v2152
      %v2154 = vpop.f32.mrb[0].mxu0
      %2155 = vmatprep.mubr.bf16.mxu0 0
      %2156 = vmatmul.mubr.bf16.gmra.mrb[0].mxu0 %v2061
      %v2157 = vpop.f32.mrb[0].mxu0
      %v2158 = vadd.f32 0.0, %v2157
      %v2159 = vpop.f32.mrb[0].mxu0
      %v2160 = vpop.f32.mrb[0].mxu0
      %v2161 = vadd.f32 0.0, %v2160
      %v2162 = vpop.f32.mrb[0].mxu0
      %2163 = vmatprep.mubr.bf16.mxu0 0
      %2164 = vmatmul.mubr.bf16.gmra.mrb[0].mxu0 %v2062
      %v2165 = vpop.f32.mrb[0].mxu0
      %v2166 = vadd.f32 0.0, %v2165
      %v2167 = vpop.f32.mrb[0].mxu0
      %v2168 = vpop.f32.mrb[0].mxu0
      %v2169 = vadd.f32 0.0, %v2168
      %v2170 = vpop.f32.mrb[0].mxu0
      %2171 = vmatprep.mubr.bf16.mxu0 0
      %2172 = vmatmul.mubr.bf16.gmra.mrb[0].mxu0 %v2063
      %v2173 = vpop.f32.mrb[0].mxu0
      %v2174 = vadd.f32 0.0, %v2173
      %v2175 = vpop.f32.mrb[0].mxu0
      %v2176 = vpop.f32.mrb[0].mxu0
      %v2177 = vadd.f32 0.0, %v2176
      %v2178 = vpop.f32.mrb[0].mxu0
      %2179 = vmatprep.mubr.bf16.mxu0 0
      %2180 = vmatmul.mubr.bf16.gmra.mrb[0].mxu0 %v2064
      %v2181 = vpop.f32.mrb[0].mxu0
      %v2182 = vadd.f32 0.0, %v2181
      %v2183 = vpop.f32.mrb[0].mxu0
      %v2184 = vpop.f32.mrb[0].mxu0
      %v2185 = vadd.f32 0.0, %v2184
      %v2186 = vpop.f32.mrb[0].mxu0
      %2187 = vmatprep.mubr.bf16.mxu0 0
      %2188 = vmatmul.mubr.bf16.gmra.mrb[0].mxu0 %v2065
      %v2189 = vpop.f32.mrb[0].mxu0
      %v2190 = vadd.f32 0.0, %v2189
      %v2191 = vpop.f32.mrb[0].mxu0
      %v2192 = vpop.f32.mrb[0].mxu0
      %v2193 = vadd.f32 0.0, %v2192
      %v2194 = vpop.f32.mrb[0].mxu0
      %2195 = vmatprep.mubr.bf16.mxu0 0
      %2196 = vmatmul.mubr.bf16.gmra.mrb[0].mxu0 %v2066
      %v2197 = vpop.f32.mrb[0].mxu0
      %v2198 = vadd.f32 0.0, %v2197
      %v2199 = vpop.f32.mrb[0].mxu0
      %v2200 = vpop.f32.mrb[0].mxu0
      %v2201 = vadd.f32 0.0, %v2200
      %v2202 = vpop.f32.mrb[0].mxu0
      %2203 = vmatprep.mubr.bf16.mxu0 0
      %2204 = vmatmul.mubr.bf16.gmra.mrb[0].mxu0 %v2067
      %v2205 = vpop.f32.mrb[0].mxu0
      %v2206 = vadd.f32 0.0, %v2205
      %v2207 = vpop.f32.mrb[0].mxu0
      %v2208 = vpop.f32.mrb[0].mxu0
      %v2209 = vadd.f32 0.0, %v2208
      %v2210 = vpop.f32.mrb[0].mxu0
      %2211 = vmatprep.mubr.bf16.mxu0 0
      %2212 = vmatmul.mubr.bf16.gmra.mrb[0].mxu0 %v2068
      %v2213 = vpop.f32.mrb[0].mxu0
      %v2214 = vadd.f32 0.0, %v2213
      %v2215 = vpop.f32.mrb[0].mxu0
      %v2216 = vpop.f32.mrb[0].mxu0
      %v2217 = vadd.f32 0.0, %v2216
      %v2218 = vpop.f32.mrb[0].mxu0
      %2219 = vmatprep.mubr.bf16.mxu0 0
      %2220 = vmatmul.mubr.bf16.gmra.mrb[0].mxu0 %v2069
      %v2221 = vpop.f32.mrb[0].mxu0
      %v2222 = vadd.f32 0.0, %v2221
      %v2223 = vpop.f32.mrb[0].mxu0
      %v2224 = vpop.f32.mrb[0].mxu0
      %v2225 = vadd.f32 0.0, %v2224
      %v2226 = vpop.f32.mrb[0].mxu0
      %2227 = vmatprep.mubr.bf16.mxu0 0
      %2228 = vmatmul.mubr.bf16.gmra.mrb[0].mxu0 %v2070
      %v2229 = vpop.f32.mrb[0].mxu0
      %v2230 = vadd.f32 0.0, %v2229
      %v2231 = vpop.f32.mrb[0].mxu0
      %v2232 = vpop.f32.mrb[0].mxu0
      %v2233 = vadd.f32 0.0, %v2232
      %v2234 = vpop.f32.mrb[0].mxu0
      %2235 = vmatprep.mubr.bf16.mxu0 0
      %2236 = vmatmul.mubr.bf16.gmra.mrb[0].mxu0 %v2071
      %v2237 = vpop.f32.mrb[0].mxu0
      %v2238 = vadd.f32 0.0, %v2237
      %v2239 = vpop.f32.mrb[0].mxu0
      %v2240 = vpop.f32.mrb[0].mxu0
      %v2241 = vadd.f32 0.0, %v2240
      %v2242 = vpop.f32.mrb[0].mxu0
      %2243 = vmatprep.mubr.bf16.mxu0 0
      %2244 = vmatmul.mubr.bf16.gmra.mrb[0].mxu0 %v2072
      %v2245 = vpop.f32.mrb[0].mxu0
      %v2246 = vadd.f32 0.0, %v2245
      %v2247 = vpop.f32.mrb[0].mxu0
      %v2248 = vpop.f32.mrb[0].mxu0
      %v2249 = vadd.f32 0.0, %v2248
      %v2250 = vpop.f32.mrb[0].mxu0
      %2251 = vmatprep.mubr.bf16.mxu0 0
      %2252 = vmatmul.mubr.bf16.gmra.mrb[0].mxu0 %v2073
      %v2253 = vpop.f32.mrb[0].mxu0
      %v2254 = vadd.f32 0.0, %v2253
      %v2255 = vpop.f32.mrb[0].mxu0
      %v2256 = vpop.f32.mrb[0].mxu0
      %v2257 = vadd.f32 0.0, %v2256
      %v2258 = vpop.f32.mrb[0].mxu0
      %2259 = vdwg.mxu0
      %v2260 = vadd.f32 %v1992, %v2134
      %v2261 = vadd.f32 %v1993, %v2137
      %v2262 = vadd.f32 %v1994, %v2142
      %v2263 = vadd.f32 %v1995, %v2145
      %v2264 = vadd.f32 %v1996, %v2150
      %v2265 = vadd.f32 %v1997, %v2153
      %v2266 = vadd.f32 %v1998, %v2158
      %v2267 = vadd.f32 %v1999, %v2161
      %v2268 = vadd.f32 %v2000, %v2166
      %v2269 = vadd.f32 %v2001, %v2169
      %v2270 = vadd.f32 %v2002, %v2174
      %v2271 = vadd.f32 %v2003, %v2177
      %v2272 = vadd.f32 %v2004, %v2182
      %v2273 = vadd.f32 %v2005, %v2185
      %v2274 = vadd.f32 %v2006, %v2190
      %v2275 = vadd.f32 %v2007, %v2193
      %v2276 = vadd.f32 %v2008, %v2198
      %v2277 = vadd.f32 %v2009, %v2201
      %v2278 = vadd.f32 %v2010, %v2206
      %v2279 = vadd.f32 %v2011, %v2209
      %v2280 = vadd.f32 %v2012, %v2214
      %v2281 = vadd.f32 %v2013, %v2217
      %v2282 = vadd.f32 %v2014, %v2222
      %v2283 = vadd.f32 %v2015, %v2225
      %v2284 = vadd.f32 %v2016, %v2230
      %v2285 = vadd.f32 %v2017, %v2233
      %v2286 = vadd.f32 %v2018, %v2238
      %v2287 = vadd.f32 %v2019, %v2241
      %v2288 = vadd.f32 %v2020, %v2246
      %v2289 = vadd.f32 %v2021, %v2249
      %v2290 = vadd.f32 %v2022, %v2254
      %v2291 = vadd.f32 %v2023, %v2257
      %s2292 = sadd.s32 %s213, 38
      %s2293 = scalar_lea.vmem %s0, %s2292
      %v2294 = vld [vmem:[%s2293] sm:$0xff]
      %v2295 = vld [vmem:[%s2293 + $0x8] sm:$0xff]
      %v2296 = vld [vmem:[%s2293 + $0x10] sm:$0xff]
      %v2297 = vld [vmem:[%s2293 + $0x18] sm:$0xff]
      %v2298 = vld [vmem:[%s2293 + $0x20] sm:$0xff]
      %v2299 = vld [vmem:[%s2293 + $0x28] sm:$0xff]
      %v2300 = vld [vmem:[%s2293 + $0x30] sm:$0xff]
      %v2301 = vld [vmem:[%s2293 + $0x38] sm:$0xff]
      %v2302 = vld [vmem:[%s2293 + $0x40] sm:$0xff]
      %v2303 = vld [vmem:[%s2293 + $0x48] sm:$0xff]
      %v2304 = vld [vmem:[%s2293 + $0x50] sm:$0xff]
      %v2305 = vld [vmem:[%s2293 + $0x58] sm:$0xff]
      %v2306 = vld [vmem:[%s2293 + $0x60] sm:$0xff]
      %v2307 = vld [vmem:[%s2293 + $0x68] sm:$0xff]
      %v2308 = vld [vmem:[%s2293 + $0x70] sm:$0xff]
      %v2309 = vld [vmem:[%s2293 + $0x78] sm:$0xff]
      %v2310 = vld [vmem:[%s2293 + $0x80] sm:$0xff]
      %v2311 = vld [vmem:[%s2293 + $0x88] sm:$0xff]
      %v2312 = vld [vmem:[%s2293 + $0x90] sm:$0xff]
      %v2313 = vld [vmem:[%s2293 + $0x98] sm:$0xff]
      %v2314 = vld [vmem:[%s2293 + $0xa0] sm:$0xff]
      %v2315 = vld [vmem:[%s2293 + $0xa8] sm:$0xff]
      %v2316 = vld [vmem:[%s2293 + $0xb0] sm:$0xff]
      %v2317 = vld [vmem:[%s2293 + $0xb8] sm:$0xff]
      %v2318 = vld [vmem:[%s2293 + $0xc0] sm:$0xff]
      %v2319 = vld [vmem:[%s2293 + $0xc8] sm:$0xff]
      %v2320 = vld [vmem:[%s2293 + $0xd0] sm:$0xff]
      %v2321 = vld [vmem:[%s2293 + $0xd8] sm:$0xff]
      %v2322 = vld [vmem:[%s2293 + $0xe0] sm:$0xff]
      %v2323 = vld [vmem:[%s2293 + $0xe8] sm:$0xff]
      %v2324 = vld [vmem:[%s2293 + $0xf0] sm:$0xff]
      %v2325 = vld [vmem:[%s2293 + $0xf8] sm:$0xff]
      %v2326 = vpack.c.bf16 %v2295, %v2294
      %v2327 = vpack.c.bf16 %v2297, %v2296
      %v2328 = vpack.c.bf16 %v2299, %v2298
      %v2329 = vpack.c.bf16 %v2301, %v2300
      %v2330 = vpack.c.bf16 %v2303, %v2302
      %v2331 = vpack.c.bf16 %v2305, %v2304
      %v2332 = vpack.c.bf16 %v2307, %v2306
      %v2333 = vpack.c.bf16 %v2309, %v2308
      %v2334 = vpack.c.bf16 %v2311, %v2310
      %v2335 = vpack.c.bf16 %v2313, %v2312
      %v2336 = vpack.c.bf16 %v2315, %v2314
      %v2337 = vpack.c.bf16 %v2317, %v2316
      %v2338 = vpack.c.bf16 %v2319, %v2318
      %v2339 = vpack.c.bf16 %v2321, %v2320
      %v2340 = vpack.c.bf16 %v2323, %v2322
      %v2341 = vpack.c.bf16 %v2325, %v2324
      %s2342 = scalar_lea.vmem %s1, 1024
      %v2343 = vld [vmem:[%s2342] sm:$0xff]
      %v2344 = vld [vmem:[%s2342 + $0x8] sm:$0xff]
      %v2345 = vld [vmem:[%s2342 + $0x10] sm:$0xff]
      %v2346 = vld [vmem:[%s2342 + $0x18] sm:$0xff]
      %v2347 = vld [vmem:[%s2342 + $0x20] sm:$0xff]
      %v2348 = vld [vmem:[%s2342 + $0x28] sm:$0xff]
      %v2349 = vld [vmem:[%s2342 + $0x30] sm:$0xff]
      %v2350 = vld [vmem:[%s2342 + $0x38] sm:$0xff]
      %v2351 = vld [vmem:[%s2342 + $0x40] sm:$0xff]
      %v2352 = vld [vmem:[%s2342 + $0x48] sm:$0xff]
      %v2353 = vld [vmem:[%s2342 + $0x50] sm:$0xff]
      %v2354 = vld [vmem:[%s2342 + $0x58] sm:$0xff]
      %v2355 = vld [vmem:[%s2342 + $0x60] sm:$0xff]
      %v2356 = vld [vmem:[%s2342 + $0x68] sm:$0xff]
      %v2357 = vld [vmem:[%s2342 + $0x70] sm:$0xff]
      %v2358 = vld [vmem:[%s2342 + $0x78] sm:$0xff]
      %v2359 = vpack.c.bf16 %v2344, %v2343
      %v2360 = vpack.c.bf16 %v2346, %v2345
      %v2361 = vpack.c.bf16 %v2348, %v2347
      %v2362 = vpack.c.bf16 %v2350, %v2349
      %v2363 = vpack.c.bf16 %v2352, %v2351
      %v2364 = vpack.c.bf16 %v2354, %v2353
      %v2365 = vpack.c.bf16 %v2356, %v2355
      %v2366 = vpack.c.bf16 %v2358, %v2357
      %2367 = vmatprep.subr.bf16.mxu0 0
      %2368 = vmatpush1.bf16.msra.mxu0 %v2359
      %2369 = vmatprep.subr.bf16.mxu0 0
      %2370 = vmatpush1.bf16.msra.mxu0 %v2360
      %2371 = vmatprep.subr.bf16.mxu0 0
      %2372 = vmatpush1.bf16.msra.mxu0 %v2361
      %2373 = vmatprep.subr.bf16.mxu0 0
      %2374 = vmatpush1.bf16.msra.mxu0 %v2362
      %2375 = vmatprep.subr.bf16.mxu0 0
      %2376 = vmatpush1.bf16.msra.mxu0 %v2363
      %2377 = vmatprep.subr.bf16.mxu0 0
      %2378 = vmatpush1.bf16.msra.mxu0 %v2364
      %2379 = vmatprep.subr.bf16.mxu0 0
      %2380 = vmatpush1.bf16.msra.mxu0 %v2365
      %2381 = vmatprep.subr.bf16.mxu0 0
      %2382 = vmatpush1.bf16.msra.mxu0 %v2366
      %2383 = vmatprep.subr.bf16.mxu0 0
      %2384 = vmatpush1.bf16.msra.mxu0 0
      %2385 = vmatprep.subr.bf16.mxu0 0
      %2386 = vmatpush1.bf16.msra.mxu0 0
      %2387 = vmatprep.subr.bf16.mxu0 0
      %2388 = vmatpush1.bf16.msra.mxu0 0
      %2389 = vmatprep.subr.bf16.mxu0 0
      %2390 = vmatpush1.bf16.msra.mxu0 0
      %2391 = vmatprep.subr.bf16.mxu0 0
      %2392 = vmatpush1.bf16.msra.mxu0 0
      %2393 = vmatprep.subr.bf16.mxu0 0
      %2394 = vmatpush1.bf16.msra.mxu0 0
      %2395 = vmatprep.subr.bf16.mxu0 0
      %2396 = vmatpush1.bf16.msra.mxu0 0
      %2397 = vmatprep.subr.bf16.mxu0 0
      %2398 = vmatpush1.bf16.msra.mxu0 0
      %2399 = vmatprep.mubr.bf16.mxu0 0
      %2400 = vmatmul.mubr.bf16.gmra.mrb[0].mxu0 %v2326
      %v2401 = vpop.f32.mrb[0].mxu0
      %v2402 = vadd.f32 0.0, %v2401
      %v2403 = vpop.f32.mrb[0].mxu0
      %v2404 = vpop.f32.mrb[0].mxu0
      %v2405 = vadd.f32 0.0, %v2404
      %v2406 = vpop.f32.mrb[0].mxu0
      %2407 = vmatprep.mubr.bf16.mxu0 0
      %2408 = vmatmul.mubr.bf16.gmra.mrb[0].mxu0 %v2327
      %v2409 = vpop.f32.mrb[0].mxu0
      %v2410 = vadd.f32 0.0, %v2409
      %v2411 = vpop.f32.mrb[0].mxu0
      %v2412 = vpop.f32.mrb[0].mxu0
      %v2413 = vadd.f32 0.0, %v2412
      %v2414 = vpop.f32.mrb[0].mxu0
      %2415 = vmatprep.mubr.bf16.mxu0 0
      %2416 = vmatmul.mubr.bf16.gmra.mrb[0].mxu0 %v2328
      %v2417 = vpop.f32.mrb[0].mxu0
      %v2418 = vadd.f32 0.0, %v2417
      %v2419 = vpop.f32.mrb[0].mxu0
      %v2420 = vpop.f32.mrb[0].mxu0
      %v2421 = vadd.f32 0.0, %v2420
      %v2422 = vpop.f32.mrb[0].mxu0
      %2423 = vmatprep.mubr.bf16.mxu0 0
      %2424 = vmatmul.mubr.bf16.gmra.mrb[0].mxu0 %v2329
      %v2425 = vpop.f32.mrb[0].mxu0
      %v2426 = vadd.f32 0.0, %v2425
      %v2427 = vpop.f32.mrb[0].mxu0
      %v2428 = vpop.f32.mrb[0].mxu0
      %v2429 = vadd.f32 0.0, %v2428
      %v2430 = vpop.f32.mrb[0].mxu0
      %2431 = vmatprep.mubr.bf16.mxu0 0
      %2432 = vmatmul.mubr.bf16.gmra.mrb[0].mxu0 %v2330
      %v2433 = vpop.f32.mrb[0].mxu0
      %v2434 = vadd.f32 0.0, %v2433
      %v2435 = vpop.f32.mrb[0].mxu0
      %v2436 = vpop.f32.mrb[0].mxu0
      %v2437 = vadd.f32 0.0, %v2436
      %v2438 = vpop.f32.mrb[0].mxu0
      %2439 = vmatprep.mubr.bf16.mxu0 0
      %2440 = vmatmul.mubr.bf16.gmra.mrb[0].mxu0 %v2331
      %v2441 = vpop.f32.mrb[0].mxu0
      %v2442 = vadd.f32 0.0, %v2441
      %v2443 = vpop.f32.mrb[0].mxu0
      %v2444 = vpop.f32.mrb[0].mxu0
      %v2445 = vadd.f32 0.0, %v2444
      %v2446 = vpop.f32.mrb[0].mxu0
      %2447 = vmatprep.mubr.bf16.mxu0 0
      %2448 = vmatmul.mubr.bf16.gmra.mrb[0].mxu0 %v2332
      %v2449 = vpop.f32.mrb[0].mxu0
      %v2450 = vadd.f32 0.0, %v2449
      %v2451 = vpop.f32.mrb[0].mxu0
      %v2452 = vpop.f32.mrb[0].mxu0
      %v2453 = vadd.f32 0.0, %v2452
      %v2454 = vpop.f32.mrb[0].mxu0
      %2455 = vmatprep.mubr.bf16.mxu0 0
      %2456 = vmatmul.mubr.bf16.gmra.mrb[0].mxu0 %v2333
      %v2457 = vpop.f32.mrb[0].mxu0
      %v2458 = vadd.f32 0.0, %v2457
      %v2459 = vpop.f32.mrb[0].mxu0
      %v2460 = vpop.f32.mrb[0].mxu0
      %v2461 = vadd.f32 0.0, %v2460
      %v2462 = vpop.f32.mrb[0].mxu0
      %2463 = vmatprep.mubr.bf16.mxu0 0
      %2464 = vmatmul.mubr.bf16.gmra.mrb[0].mxu0 %v2334
      %v2465 = vpop.f32.mrb[0].mxu0
      %v2466 = vadd.f32 0.0, %v2465
      %v2467 = vpop.f32.mrb[0].mxu0
      %v2468 = vpop.f32.mrb[0].mxu0
      %v2469 = vadd.f32 0.0, %v2468
      %v2470 = vpop.f32.mrb[0].mxu0
      %2471 = vmatprep.mubr.bf16.mxu0 0
      %2472 = vmatmul.mubr.bf16.gmra.mrb[0].mxu0 %v2335
      %v2473 = vpop.f32.mrb[0].mxu0
      %v2474 = vadd.f32 0.0, %v2473
      %v2475 = vpop.f32.mrb[0].mxu0
      %v2476 = vpop.f32.mrb[0].mxu0
      %v2477 = vadd.f32 0.0, %v2476
      %v2478 = vpop.f32.mrb[0].mxu0
      %2479 = vmatprep.mubr.bf16.mxu0 0
      %2480 = vmatmul.mubr.bf16.gmra.mrb[0].mxu0 %v2336
      %v2481 = vpop.f32.mrb[0].mxu0
      %v2482 = vadd.f32 0.0, %v2481
      %v2483 = vpop.f32.mrb[0].mxu0
      %v2484 = vpop.f32.mrb[0].mxu0
      %v2485 = vadd.f32 0.0, %v2484
      %v2486 = vpop.f32.mrb[0].mxu0
      %2487 = vmatprep.mubr.bf16.mxu0 0
      %2488 = vmatmul.mubr.bf16.gmra.mrb[0].mxu0 %v2337
      %v2489 = vpop.f32.mrb[0].mxu0
      %v2490 = vadd.f32 0.0, %v2489
      %v2491 = vpop.f32.mrb[0].mxu0
      %v2492 = vpop.f32.mrb[0].mxu0
      %v2493 = vadd.f32 0.0, %v2492
      %v2494 = vpop.f32.mrb[0].mxu0
      %2495 = vmatprep.mubr.bf16.mxu0 0
      %2496 = vmatmul.mubr.bf16.gmra.mrb[0].mxu0 %v2338
      %v2497 = vpop.f32.mrb[0].mxu0
      %v2498 = vadd.f32 0.0, %v2497
      %v2499 = vpop.f32.mrb[0].mxu0
      %v2500 = vpop.f32.mrb[0].mxu0
      %v2501 = vadd.f32 0.0, %v2500
      %v2502 = vpop.f32.mrb[0].mxu0
      %2503 = vmatprep.mubr.bf16.mxu0 0
      %2504 = vmatmul.mubr.bf16.gmra.mrb[0].mxu0 %v2339
      %v2505 = vpop.f32.mrb[0].mxu0
      %v2506 = vadd.f32 0.0, %v2505
      %v2507 = vpop.f32.mrb[0].mxu0
      %v2508 = vpop.f32.mrb[0].mxu0
      %v2509 = vadd.f32 0.0, %v2508
      %v2510 = vpop.f32.mrb[0].mxu0
      %2511 = vmatprep.mubr.bf16.mxu0 0
      %2512 = vmatmul.mubr.bf16.gmra.mrb[0].mxu0 %v2340
      %v2513 = vpop.f32.mrb[0].mxu0
      %v2514 = vadd.f32 0.0, %v2513
      %v2515 = vpop.f32.mrb[0].mxu0
      %v2516 = vpop.f32.mrb[0].mxu0
      %v2517 = vadd.f32 0.0, %v2516
      %v2518 = vpop.f32.mrb[0].mxu0
      %2519 = vmatprep.mubr.bf16.mxu0 0
      %2520 = vmatmul.mubr.bf16.gmra.mrb[0].mxu0 %v2341
      %v2521 = vpop.f32.mrb[0].mxu0
      %v2522 = vadd.f32 0.0, %v2521
      %v2523 = vpop.f32.mrb[0].mxu0
      %v2524 = vpop.f32.mrb[0].mxu0
      %v2525 = vadd.f32 0.0, %v2524
      %v2526 = vpop.f32.mrb[0].mxu0
      %2527 = vdwg.mxu0
      %v2528 = vadd.f32 %v2260, %v2402
      %v2529 = vadd.f32 %v2261, %v2405
      %v2530 = vadd.f32 %v2262, %v2410
      %v2531 = vadd.f32 %v2263, %v2413
      %v2532 = vadd.f32 %v2264, %v2418
      %v2533 = vadd.f32 %v2265, %v2421
      %v2534 = vadd.f32 %v2266, %v2426
      %v2535 = vadd.f32 %v2267, %v2429
      %v2536 = vadd.f32 %v2268, %v2434
      %v2537 = vadd.f32 %v2269, %v2437
      %v2538 = vadd.f32 %v2270, %v2442
      %v2539 = vadd.f32 %v2271, %v2445
      %v2540 = vadd.f32 %v2272, %v2450
      %v2541 = vadd.f32 %v2273, %v2453
      %v2542 = vadd.f32 %v2274, %v2458
      %v2543 = vadd.f32 %v2275, %v2461
      %v2544 = vadd.f32 %v2276, %v2466
      %v2545 = vadd.f32 %v2277, %v2469
      %v2546 = vadd.f32 %v2278, %v2474
      %v2547 = vadd.f32 %v2279, %v2477
      %v2548 = vadd.f32 %v2280, %v2482
      %v2549 = vadd.f32 %v2281, %v2485
      %v2550 = vadd.f32 %v2282, %v2490
      %v2551 = vadd.f32 %v2283, %v2493
      %v2552 = vadd.f32 %v2284, %v2498
      %v2553 = vadd.f32 %v2285, %v2501
      %v2554 = vadd.f32 %v2286, %v2506
      %v2555 = vadd.f32 %v2287, %v2509
      %v2556 = vadd.f32 %v2288, %v2514
      %v2557 = vadd.f32 %v2289, %v2517
      %v2558 = vadd.f32 %v2290, %v2522
      %v2559 = vadd.f32 %v2291, %v2525
      %2560 = vst [vmem:[%s206] sm:$0xff] %v2528
      %2561 = vst [vmem:[%s206 + $0x8] sm:$0xff] %v2529
      %2562 = vst [vmem:[%s206 + $0x10] sm:$0xff] %v2530
      %2563 = vst [vmem:[%s206 + $0x18] sm:$0xff] %v2531
      %2564 = vst [vmem:[%s206 + $0x20] sm:$0xff] %v2532
      %2565 = vst [vmem:[%s206 + $0x28] sm:$0xff] %v2533
      %2566 = vst [vmem:[%s206 + $0x30] sm:$0xff] %v2534
      %2567 = vst [vmem:[%s206 + $0x38] sm:$0xff] %v2535
      %2568 = vst [vmem:[%s206 + $0x40] sm:$0xff] %v2536
      %2569 = vst [vmem:[%s206 + $0x48] sm:$0xff] %v2537
      %2570 = vst [vmem:[%s206 + $0x50] sm:$0xff] %v2538
      %2571 = vst [vmem:[%s206 + $0x58] sm:$0xff] %v2539
      %2572 = vst [vmem:[%s206 + $0x60] sm:$0xff] %v2540
      %2573 = vst [vmem:[%s206 + $0x68] sm:$0xff] %v2541
      %2574 = vst [vmem:[%s206 + $0x70] sm:$0xff] %v2542
      %2575 = vst [vmem:[%s206 + $0x78] sm:$0xff] %v2543
      %2576 = vst [vmem:[%s206 + $0x80] sm:$0xff] %v2544
      %2577 = vst [vmem:[%s206 + $0x88] sm:$0xff] %v2545
      %2578 = vst [vmem:[%s206 + $0x90] sm:$0xff] %v2546
      %2579 = vst [vmem:[%s206 + $0x98] sm:$0xff] %v2547
      %2580 = vst [vmem:[%s206 + $0xa0] sm:$0xff] %v2548
      %2581 = vst [vmem:[%s206 + $0xa8] sm:$0xff] %v2549
      %2582 = vst [vmem:[%s206 + $0xb0] sm:$0xff] %v2550
      %2583 = vst [vmem:[%s206 + $0xb8] sm:$0xff] %v2551
      %2584 = vst [vmem:[%s206 + $0xc0] sm:$0xff] %v2552
      %2585 = vst [vmem:[%s206 + $0xc8] sm:$0xff] %v2553
      %2586 = vst [vmem:[%s206 + $0xd0] sm:$0xff] %v2554
      %2587 = vst [vmem:[%s206 + $0xd8] sm:$0xff] %v2555
      %2588 = vst [vmem:[%s206 + $0xe0] sm:$0xff] %v2556
      %2589 = vst [vmem:[%s206 + $0xe8] sm:$0xff] %v2557
      %2590 = vst [vmem:[%s206 + $0xf0] sm:$0xff] %v2558
      %2591 = vst [vmem:[%s206 + $0xf8] sm:$0xff] %v2559
      %v2592 = vld [vmem:[%s200] sm:$0xff]
      %v2593 = vld [vmem:[%s200 + $0x8] sm:$0xff]
      %v2594 = vld [vmem:[%s200 + $0x10] sm:$0xff]
      %v2595 = vld [vmem:[%s200 + $0x18] sm:$0xff]
      %v2596 = vld [vmem:[%s200 + $0x20] sm:$0xff]
      %v2597 = vld [vmem:[%s200 + $0x28] sm:$0xff]
      %v2598 = vld [vmem:[%s200 + $0x30] sm:$0xff]
      %v2599 = vld [vmem:[%s200 + $0x38] sm:$0xff]
      %v2600 = vld [vmem:[%s200 + $0x40] sm:$0xff]
      %v2601 = vld [vmem:[%s200 + $0x48] sm:$0xff]
      %v2602 = vld [vmem:[%s200 + $0x50] sm:$0xff]
      %v2603 = vld [vmem:[%s200 + $0x58] sm:$0xff]
      %v2604 = vld [vmem:[%s200 + $0x60] sm:$0xff]
      %v2605 = vld [vmem:[%s200 + $0x68] sm:$0xff]
      %v2606 = vld [vmem:[%s200 + $0x70] sm:$0xff]
      %v2607 = vld [vmem:[%s200 + $0x78] sm:$0xff]
      %v2608 = vld [vmem:[%s200 + $0x80] sm:$0xff]
      %v2609 = vld [vmem:[%s200 + $0x88] sm:$0xff]
      %v2610 = vld [vmem:[%s200 + $0x90] sm:$0xff]
      %v2611 = vld [vmem:[%s200 + $0x98] sm:$0xff]
      %v2612 = vld [vmem:[%s200 + $0xa0] sm:$0xff]
      %v2613 = vld [vmem:[%s200 + $0xa8] sm:$0xff]
      %v2614 = vld [vmem:[%s200 + $0xb0] sm:$0xff]
      %v2615 = vld [vmem:[%s200 + $0xb8] sm:$0xff]
      %v2616 = vld [vmem:[%s200 + $0xc0] sm:$0xff]
      %v2617 = vld [vmem:[%s200 + $0xc8] sm:$0xff]
      %v2618 = vld [vmem:[%s200 + $0xd0] sm:$0xff]
      %v2619 = vld [vmem:[%s200 + $0xd8] sm:$0xff]
      %v2620 = vld [vmem:[%s200 + $0xe0] sm:$0xff]
      %v2621 = vld [vmem:[%s200 + $0xe8] sm:$0xff]
      %v2622 = vld [vmem:[%s200 + $0xf0] sm:$0xff]
      %v2623 = vld [vmem:[%s200 + $0xf8] sm:$0xff]
      %2625 = vset.pattern.permute.xlu0 0
      %2626 = vperm.xlu0 %2625, %v2592
      %v2627 = vpop.permute.xlu0 %2626
      %2630 = vset.pattern.permute.xlu0 0
      %2631 = vperm.xlu0 %2630, %v2593
      %v2632 = vpop.permute.xlu0 %2631
      %2635 = vset.pattern.permute.xlu0 0
      %2636 = vperm.xlu0 %2635, %v2594
      %v2637 = vpop.permute.xlu0 %2636
      %2640 = vset.pattern.permute.xlu0 0
      %2641 = vperm.xlu0 %2640, %v2595
      %v2642 = vpop.permute.xlu0 %2641
      %2645 = vset.pattern.permute.xlu0 0
      %2646 = vperm.xlu0 %2645, %v2596
      %v2647 = vpop.permute.xlu0 %2646
      %2650 = vset.pattern.permute.xlu0 0
      %2651 = vperm.xlu0 %2650, %v2597
      %v2652 = vpop.permute.xlu0 %2651
      %2655 = vset.pattern.permute.xlu0 0
      %2656 = vperm.xlu0 %2655, %v2598
      %v2657 = vpop.permute.xlu0 %2656
      %2660 = vset.pattern.permute.xlu0 0
      %2661 = vperm.xlu0 %2660, %v2599
      %v2662 = vpop.permute.xlu0 %2661
      %2665 = vset.pattern.permute.xlu0 0
      %2666 = vperm.xlu0 %2665, %v2600
      %v2667 = vpop.permute.xlu0 %2666
      %2670 = vset.pattern.permute.xlu0 0
      %2671 = vperm.xlu0 %2670, %v2601
      %v2672 = vpop.permute.xlu0 %2671
      %2675 = vset.pattern.permute.xlu0 0
      %2676 = vperm.xlu0 %2675, %v2602
      %v2677 = vpop.permute.xlu0 %2676
      %2680 = vset.pattern.permute.xlu0 0
      %2681 = vperm.xlu0 %2680, %v2603
      %v2682 = vpop.permute.xlu0 %2681
      %2685 = vset.pattern.permute.xlu0 0
      %2686 = vperm.xlu0 %2685, %v2604
      %v2687 = vpop.permute.xlu0 %2686
      %2690 = vset.pattern.permute.xlu0 0
      %2691 = vperm.xlu0 %2690, %v2605
      %v2692 = vpop.permute.xlu0 %2691
      %2695 = vset.pattern.permute.xlu0 0
      %2696 = vperm.xlu0 %2695, %v2606
      %v2697 = vpop.permute.xlu0 %2696
      %2700 = vset.pattern.permute.xlu0 0
      %2701 = vperm.xlu0 %2700, %v2607
      %v2702 = vpop.permute.xlu0 %2701
      %2705 = vset.pattern.permute.xlu0 0
      %2706 = vperm.xlu0 %2705, %v2608
      %v2707 = vpop.permute.xlu0 %2706
      %2710 = vset.pattern.permute.xlu0 0
      %2711 = vperm.xlu0 %2710, %v2609
      %v2712 = vpop.permute.xlu0 %2711
      %2715 = vset.pattern.permute.xlu0 0
      %2716 = vperm.xlu0 %2715, %v2610
      %v2717 = vpop.permute.xlu0 %2716
      %2720 = vset.pattern.permute.xlu0 0
      %2721 = vperm.xlu0 %2720, %v2611
      %v2722 = vpop.permute.xlu0 %2721
      %2725 = vset.pattern.permute.xlu0 0
      %2726 = vperm.xlu0 %2725, %v2612
      %v2727 = vpop.permute.xlu0 %2726
      %2730 = vset.pattern.permute.xlu0 0
      %2731 = vperm.xlu0 %2730, %v2613
      %v2732 = vpop.permute.xlu0 %2731
      %2735 = vset.pattern.permute.xlu0 0
      %2736 = vperm.xlu0 %2735, %v2614
      %v2737 = vpop.permute.xlu0 %2736
      %2740 = vset.pattern.permute.xlu0 0
      %2741 = vperm.xlu0 %2740, %v2615
      %v2742 = vpop.permute.xlu0 %2741
      %2745 = vset.pattern.permute.xlu0 0
      %2746 = vperm.xlu0 %2745, %v2616
      %v2747 = vpop.permute.xlu0 %2746
      %2750 = vset.pattern.permute.xlu0 0
      %2751 = vperm.xlu0 %2750, %v2617
      %v2752 = vpop.permute.xlu0 %2751
      %2755 = vset.pattern.permute.xlu0 0
      %2756 = vperm.xlu0 %2755, %v2618
      %v2757 = vpop.permute.xlu0 %2756
      %2760 = vset.pattern.permute.xlu0 0
      %2761 = vperm.xlu0 %2760, %v2619
      %v2762 = vpop.permute.xlu0 %2761
      %2765 = vset.pattern.permute.xlu0 0
      %2766 = vperm.xlu0 %2765, %v2620
      %v2767 = vpop.permute.xlu0 %2766
      %2770 = vset.pattern.permute.xlu0 0
      %2771 = vperm.xlu0 %2770, %v2621
      %v2772 = vpop.permute.xlu0 %2771
      %2775 = vset.pattern.permute.xlu0 0
      %2776 = vperm.xlu0 %2775, %v2622
      %v2777 = vpop.permute.xlu0 %2776
      %2780 = vset.pattern.permute.xlu0 0
      %2781 = vperm.xlu0 %2780, %v2623
      %v2782 = vpop.permute.xlu0 %2781
      %v2784 = vmul.f32 %v2528, %v2627
      %v2785 = vmul.f32 %v2529, %v2632
      %v2786 = vmul.f32 %v2530, %v2637
      %v2787 = vmul.f32 %v2531, %v2642
      %v2788 = vmul.f32 %v2532, %v2647
      %v2789 = vmul.f32 %v2533, %v2652
      %v2790 = vmul.f32 %v2534, %v2657
      %v2791 = vmul.f32 %v2535, %v2662
      %v2792 = vmul.f32 %v2536, %v2667
      %v2793 = vmul.f32 %v2537, %v2672
      %v2794 = vmul.f32 %v2538, %v2677
      %v2795 = vmul.f32 %v2539, %v2682
      %v2796 = vmul.f32 %v2540, %v2687
      %v2797 = vmul.f32 %v2541, %v2692
      %v2798 = vmul.f32 %v2542, %v2697
      %v2799 = vmul.f32 %v2543, %v2702
      %v2800 = vmul.f32 %v2544, %v2707
      %v2801 = vmul.f32 %v2545, %v2712
      %v2802 = vmul.f32 %v2546, %v2717
      %v2803 = vmul.f32 %v2547, %v2722
      %v2804 = vmul.f32 %v2548, %v2727
      %v2805 = vmul.f32 %v2549, %v2732
      %v2806 = vmul.f32 %v2550, %v2737
      %v2807 = vmul.f32 %v2551, %v2742
      %v2808 = vmul.f32 %v2552, %v2747
      %v2809 = vmul.f32 %v2553, %v2752
      %v2810 = vmul.f32 %v2554, %v2757
      %v2811 = vmul.f32 %v2555, %v2762
      %v2812 = vmul.f32 %v2556, %v2767
      %v2813 = vmul.f32 %v2557, %v2772
      %v2814 = vmul.f32 %v2558, %v2777
      %v2815 = vmul.f32 %v2559, %v2782
      %v2816 = vadd.f32 %v2784, %v2785
      %v2817 = vadd.f32 %v2816, %v2786
      %v2818 = vadd.f32 %v2817, %v2787
      %v2819 = vadd.f32 %v2818, %v2788
      %v2820 = vadd.f32 %v2819, %v2789
      %v2821 = vadd.f32 %v2820, %v2790
      %v2822 = vadd.f32 %v2821, %v2791
      %v2823 = vadd.f32 %v2822, %v2792
      %v2824 = vadd.f32 %v2823, %v2793
      %v2825 = vadd.f32 %v2824, %v2794
      %v2826 = vadd.f32 %v2825, %v2795
      %v2827 = vadd.f32 %v2826, %v2796
      %v2828 = vadd.f32 %v2827, %v2797
      %v2829 = vadd.f32 %v2828, %v2798
      %v2830 = vadd.f32 %v2829, %v2799
      %v2831 = vadd.f32 %v2830, %v2800
      %v2832 = vadd.f32 %v2831, %v2801
      %v2833 = vadd.f32 %v2832, %v2802
      %v2834 = vadd.f32 %v2833, %v2803
      %v2835 = vadd.f32 %v2834, %v2804
      %v2836 = vadd.f32 %v2835, %v2805
      %v2837 = vadd.f32 %v2836, %v2806
      %v2838 = vadd.f32 %v2837, %v2807
      %v2839 = vadd.f32 %v2838, %v2808
      %v2840 = vadd.f32 %v2839, %v2809
      %v2841 = vadd.f32 %v2840, %v2810
      %v2842 = vadd.f32 %v2841, %v2811
      %v2843 = vadd.f32 %v2842, %v2812
      %v2844 = vadd.f32 %v2843, %v2813
      %v2845 = vadd.f32 %v2844, %v2814
      %v2846 = vadd.f32 %v2845, %v2815
      %v2847 = vrot.slane %v2846, 4
      %v2848 = vadd.f32 %v2846, %v2847
      %v2849 = vrot.slane %v2848, 2
      %v2850 = vadd.f32 %v2848, %v2849
      %v2851 = vrot.slane %v2850, 1
      %v2852 = vadd.f32 %v2850, %v2851
      %v2853 = vmul.f32 %v2784, %v2528
      %v2854 = vmul.f32 %v2785, %v2529
      %v2855 = vmul.f32 %v2786, %v2530
      %v2856 = vmul.f32 %v2787, %v2531
      %v2857 = vmul.f32 %v2788, %v2532
      %v2858 = vmul.f32 %v2789, %v2533
      %v2859 = vmul.f32 %v2790, %v2534
      %v2860 = vmul.f32 %v2791, %v2535
      %v2861 = vmul.f32 %v2792, %v2536
      %v2862 = vmul.f32 %v2793, %v2537
      %v2863 = vmul.f32 %v2794, %v2538
      %v2864 = vmul.f32 %v2795, %v2539
      %v2865 = vmul.f32 %v2796, %v2540
      %v2866 = vmul.f32 %v2797, %v2541
      %v2867 = vmul.f32 %v2798, %v2542
      %v2868 = vmul.f32 %v2799, %v2543
      %v2869 = vmul.f32 %v2800, %v2544
      %v2870 = vmul.f32 %v2801, %v2545
      %v2871 = vmul.f32 %v2802, %v2546
      %v2872 = vmul.f32 %v2803, %v2547
      %v2873 = vmul.f32 %v2804, %v2548
      %v2874 = vmul.f32 %v2805, %v2549
      %v2875 = vmul.f32 %v2806, %v2550
      %v2876 = vmul.f32 %v2807, %v2551
      %v2877 = vmul.f32 %v2808, %v2552
      %v2878 = vmul.f32 %v2809, %v2553
      %v2879 = vmul.f32 %v2810, %v2554
      %v2880 = vmul.f32 %v2811, %v2555
      %v2881 = vmul.f32 %v2812, %v2556
      %v2882 = vmul.f32 %v2813, %v2557
      %v2883 = vmul.f32 %v2814, %v2558
      %v2884 = vmul.f32 %v2815, %v2559
      %v2885 = vadd.f32 %v2853, %v2854
      %v2886 = vadd.f32 %v2885, %v2855
      %v2887 = vadd.f32 %v2886, %v2856
      %v2888 = vadd.f32 %v2887, %v2857
      %v2889 = vadd.f32 %v2888, %v2858
      %v2890 = vadd.f32 %v2889, %v2859
      %v2891 = vadd.f32 %v2890, %v2860
      %v2892 = vadd.f32 %v2891, %v2861
      %v2893 = vadd.f32 %v2892, %v2862
      %v2894 = vadd.f32 %v2893, %v2863
      %v2895 = vadd.f32 %v2894, %v2864
      %v2896 = vadd.f32 %v2895, %v2865
      %v2897 = vadd.f32 %v2896, %v2866
      %v2898 = vadd.f32 %v2897, %v2867
      %v2899 = vadd.f32 %v2898, %v2868
      %v2900 = vadd.f32 %v2899, %v2869
      %v2901 = vadd.f32 %v2900, %v2870
      %v2902 = vadd.f32 %v2901, %v2871
      %v2903 = vadd.f32 %v2902, %v2872
      %v2904 = vadd.f32 %v2903, %v2873
      %v2905 = vadd.f32 %v2904, %v2874
      %v2906 = vadd.f32 %v2905, %v2875
      %v2907 = vadd.f32 %v2906, %v2876
      %v2908 = vadd.f32 %v2907, %v2877
      %v2909 = vadd.f32 %v2908, %v2878
      %v2910 = vadd.f32 %v2909, %v2879
      %v2911 = vadd.f32 %v2910, %v2880
      %v2912 = vadd.f32 %v2911, %v2881
      %v2913 = vadd.f32 %v2912, %v2882
      %v2914 = vadd.f32 %v2913, %v2883
      %v2915 = vadd.f32 %v2914, %v2884
      %v2916 = vrot.slane %v2915, 4
      %v2917 = vadd.f32 %v2915, %v2916
      %v2918 = vrot.slane %v2917, 2
      %v2919 = vadd.f32 %v2917, %v2918
      %v2920 = vrot.slane %v2919, 1
      %v2921 = vadd.f32 %v2919, %v2920
      %vm2922 = vcmask 1040384
      %v2923 = vsel %vm2922, %v2852, %v2921
      %vm2924 = vcmask 1041408
      %v2925 = vsel %vm2924, %v2923, 0.0
      %2926 = vst [vmem:[%s211] sm:$0xff] %v2925
      %s2927 = smul.u32 32, %s16
      %p2928 = scmp.lt.s32.totalorder %s2927, 95
      %s2929 = scalar_select %p2928, %s2927, 95
      %s2930 = smul.addr %s2929, 8
      %s2931 = scalar_lea.vmem %s3, %s2930
      %p2932 = scmp.lt.s32.totalorder %s16, 2
      %s2933 = scalar_select %p2932, %s16, 2
      %s2934 = smul.addr %s2933, 8
      %s2935 = scalar_lea.vmem %s4, %s2934
      // Predicated region
      $region33: #{conv_block_forward.6} parent=31 // pred_check
        %p2936 = pneg %p102
      $region34: #{conv_block_forward.6} parent=31 // pred_check_branch
        %2938 = sbr.rel (%p2936) target = $region36
      $region35: #{conv_block_forward.6} parent=31 // pred_region
        %s2939 = smul.u32 32, %s16
      $region36: #{conv_block_forward.6} parent=31 // pred_fallthru
        _
      // Predicated region
      $region37: #{conv_block_forward.6} parent=31 // pred_check
        %p2940 = pneg %p128
      $region38: #{conv_block_forward.6} parent=31 // pred_check_branch
        %2942 = sbr.rel (%p2940) target = $region40
      $region39: #{conv_block_forward.6} parent=31 // pred_region
        _
      $region40: #{conv_block_forward.6} parent=31 // pred_fallthru
        _
    $region32: #{conv_block_forward.6} parent=5 // pred_fallthru
      _
    %p2943 = scmp.le.s32.totalorder 2, %s11
    // Predicated region
    $region41: #{conv_block_forward.6} parent=5 // pred_check
      %p2944 = pneg %p2943
    $region42: #{conv_block_forward.6} parent=5 // pred_check_branch
      %2946 = sbr.rel (%p2944) target = $region44
    $region43: #{conv_block_forward.6} parent=5 // pred_region
      %s2947 = ssub.s32 %s11, 2
      // Predicated region
      $region45: #{conv_block_forward.6} parent=43 // pred_check
        %p2948 = pneg %p108
      $region46: #{conv_block_forward.6} parent=43 // pred_check_branch
        %2950 = sbr.rel (%p2948) target = $region48
      $region47: #{conv_block_forward.6} parent=43 // pred_region
        %s2951 = smul.u32 32, %s17
        %p2952 = scmp.lt.s32.totalorder %s2951, 95
        %s2953 = scalar_select %p2952, %s2951, 95
        %s2954 = smul.addr %s2953, 8
        %s2955 = scalar_lea.vmem %s3, %s2954
      $region48: #{conv_block_forward.6} parent=43 // pred_fallthru
        _
      // Predicated region
      $region49: #{conv_block_forward.6} parent=43 // pred_check
        %p2956 = pneg %p134
      $region50: #{conv_block_forward.6} parent=43 // pred_check_branch
        %2958 = sbr.rel (%p2956) target = $region52
      $region51: #{conv_block_forward.6} parent=43 // pred_region
        %p2959 = scmp.lt.s32.totalorder %s17, 2
        %s2960 = scalar_select %p2959, %s17, 2
        %s2961 = smul.addr %s2960, 8
        %s2962 = scalar_lea.vmem %s4, %s2961
      $region52: #{conv_block_forward.6} parent=43 // pred_fallthru
        _
    $region44: #{conv_block_forward.6} parent=5 // pred_fallthru
      _
  $region6: #{conv_block_forward.6} parent=0 // loop_footer
    %s15 = sadd.s32 1, %s11
  $region7: #{conv_block_forward.6} parent=0 // loop_footer_branch
    %10 = sbr.rel target = $region3
  $region8: #{conv_block_forward.6} parent=0 // loop_exit
    _

</llo_original>
